<compile_context>
chip_gen: v7x
topology: tpu7x:2x2x1
jax: 0.10.0
libtpu: 0.0.40
codegen_flags: <defaults>
</compile_context>

<pallas_src>
import functools
import math

import jax
import jax.numpy as jnp
from jax.experimental import pallas as pl
from jax.experimental.pallas import tpu as pltpu

LANE = 128  # TPU lane width; all channel dims are padded to a multiple of this.


def _round_up(x, m=LANE):
    return ((x + m - 1) // m) * m


def _hardswish(x):
    # PyTorch nn.Hardswish: x * relu6(x + 3) / 6
    return x * jnp.clip(x + 3.0, 0.0, 6.0) * (1.0 / 6.0)


def _leaky(x):
    return jnp.where(x > 0, x, 0.1 * x)


# ---------------------------------------------------------------------------
# Kernel 1: pointwise (1x1) conv == (M, Cin) @ (Cin, Cout), folded-BN affine,
#           Hardswish.  Used for BottleneckCSP.cv1 and Bottleneck.cv1.
# ---------------------------------------------------------------------------
def _pw_kernel(x_ref, w_ref, s_ref, b_ref, o_ref, *, act):
    y = jnp.dot(x_ref[...], w_ref[...], preferred_element_type=jnp.float32)
    y = y * s_ref[...] + b_ref[...]
    if act == "hardswish":
        y = _hardswish(y)
    elif act == "leaky":
        y = _leaky(y)
    o_ref[...] = y.astype(o_ref.dtype)


def pw_conv(x2, w, scale, bias, act="hardswish", tile_m=512):
    M, Cin = x2.shape
    Cout = w.shape[1]
    tm = min(tile_m, M)  # tile_m is a multiple of 8; tm==M uses the full-dim rule
    return pl.pallas_call(
        functools.partial(_pw_kernel, act=act),
        out_shape=jax.ShapeDtypeStruct((M, Cout), x2.dtype),
        grid=(pl.cdiv(M, tm),),
        in_specs=[
            pl.BlockSpec((tm, Cin), lambda i: (i, 0)),
            pl.BlockSpec((Cin, Cout), lambda i: (0, 0)),
            pl.BlockSpec((1, Cout), lambda i: (0, 0)),
            pl.BlockSpec((1, Cout), lambda i: (0, 0)),
        ],
        out_specs=pl.BlockSpec((tm, Cout), lambda i: (i, 0)),
        compiler_params=pltpu.CompilerParams(dimension_semantics=("parallel",)),
    )(x2, w, scale, bias)


# ---------------------------------------------------------------------------
# Kernel 2: 3x3 conv (pad=1, stride=1) + folded BN + Hardswish (+ residual).
#           Tiled over (batch, H-tiles); halo rows come from a 2-row BlockSpec
#           on the same zero-padded input tensor.
# ---------------------------------------------------------------------------
def _conv3x3_kernel(xm_ref, xh_ref, w_ref, s_ref, b_ref, *rest, add):
    if add:
        res_ref, o_ref = rest
    else:
        (o_ref,) = rest
    _, th, Wp, Cin = xm_ref.shape
    W = Wp - 2
    Cout = o_ref.shape[-1]

    # (th + 2, Wp, Cin) padded-input rows covering this output tile + halo.
    xt = jnp.concatenate([xm_ref[0], xh_ref[0]], axis=0)

    acc = jnp.zeros((th * W, Cout), jnp.float32)
    for kh in range(3):
        for kw in range(3):
            win = xt[kh:kh + th, kw:kw + W, :].reshape(th * W, Cin)
            acc = acc + jnp.dot(win, w_ref[kh, kw],
                                preferred_element_type=jnp.float32)
    y = acc * s_ref[...] + b_ref[...]
    y = _hardswish(y).reshape(th, W, Cout)
    if add:
        y = y + res_ref[0].astype(jnp.float32)
    o_ref[0] = y.astype(o_ref.dtype)


def conv3x3_bn_hswish(xp, w, scale, bias, residual, out_h, th):
    """xp: (N, Hpad, Wp, Cin) zero-padded input, data at rows [1,1+H), cols [1,1+W)."""
    N, Hpad, Wp, Cin = xp.shape
    W = Wp - 2
    Cout = w.shape[-1]
    H = out_h
    n_h = pl.cdiv(H, th)
    add = residual is not None
    assert th % 2 == 0 and Hpad >= n_h * th + 2

    in_specs = [
        # main th rows of the padded input for this tile
        pl.BlockSpec((1, th, Wp, Cin), lambda n, h: (n, h, 0, 0)),
        # 2 halo rows immediately after the main rows
        pl.BlockSpec((1, 2, Wp, Cin), lambda n, h: (n, (h + 1) * (th // 2), 0, 0)),
        pl.BlockSpec((3, 3, Cin, Cout), lambda n, h: (0, 0, 0, 0)),
        pl.BlockSpec((1, Cout), lambda n, h: (0, 0)),
        pl.BlockSpec((1, Cout), lambda n, h: (0, 0)),
    ]
    args = [xp, xp, w, scale, bias]
    if add:
        in_specs.append(pl.BlockSpec((1, th, W, Cout), lambda n, h: (n, h, 0, 0)))
        args.append(residual)

    return pl.pallas_call(
        functools.partial(_conv3x3_kernel, add=add),
        out_shape=jax.ShapeDtypeStruct((N, H, W, Cout), xp.dtype),
        grid=(N, n_h),
        in_specs=in_specs,
        out_specs=pl.BlockSpec((1, th, W, Cout), lambda n, h: (n, h, 0, 0)),
        compiler_params=pltpu.CompilerParams(
            dimension_semantics=("parallel", "parallel")),
    )(*args)


# ---------------------------------------------------------------------------
# Kernel 3: fused CSP tail.
#   y1 = leaky(bn1(a @ cv3_w)); y2 = leaky(bn2(x @ cv2_w))
#   out = hardswish(bn4(y1 @ W4a + y2 @ W4b))
# (== hardswish(cv4.bn(cv4.conv(leaky(bn(cat(cv3(a), cv2(x))))))) exactly.)
# ---------------------------------------------------------------------------
def _head_kernel(a_ref, x_ref, w3_ref, w2_ref, s1_ref, b1_ref, s2_ref, b2_ref,
                 w4a_ref, w4b_ref, s4_ref, b4_ref, o_ref):
    cdt = w4a_ref.dtype
    y1 = jnp.dot(a_ref[...], w3_ref[...], preferred_element_type=jnp.float32)
    y1 = _leaky(y1 * s1_ref[...] + b1_ref[...])
    y2 = jnp.dot(x_ref[...], w2_ref[...], preferred_element_type=jnp.float32)
    y2 = _leaky(y2 * s2_ref[...] + b2_ref[...])
    z = jnp.dot(y1.astype(cdt), w4a_ref[...], preferred_element_type=jnp.float32)
    z = z + jnp.dot(y2.astype(cdt), w4b_ref[...], preferred_element_type=jnp.float32)
    z = z * s4_ref[...] + b4_ref[...]
    o_ref[...] = _hardswish(z).astype(o_ref.dtype)


def csp_head(a, x2, p, tile_m=512, out_dtype=jnp.float32):
    M, c_p = a.shape
    c1p = x2.shape[1]
    c2p = p["w4a"].shape[1]
    tm = min(tile_m, M)
    in_specs = [
        pl.BlockSpec((tm, c_p), lambda i: (i, 0)),
        pl.BlockSpec((tm, c1p), lambda i: (i, 0)),
        pl.BlockSpec((c_p, c_p), lambda i: (0, 0)),
        pl.BlockSpec((c1p, c_p), lambda i: (0, 0)),
        pl.BlockSpec((1, c_p), lambda i: (0, 0)),
        pl.BlockSpec((1, c_p), lambda i: (0, 0)),
        pl.BlockSpec((1, c_p), lambda i: (0, 0)),
        pl.BlockSpec((1, c_p), lambda i: (0, 0)),
        pl.BlockSpec((c_p, c2p), lambda i: (0, 0)),
        pl.BlockSpec((c_p, c2p), lambda i: (0, 0)),
        pl.BlockSpec((1, c2p), lambda i: (0, 0)),
        pl.BlockSpec((1, c2p), lambda i: (0, 0)),
    ]
    return pl.pallas_call(
        _head_kernel,
        out_shape=jax.ShapeDtypeStruct((M, c2p), out_dtype),
        grid=(pl.cdiv(M, tm),),
        in_specs=in_specs,
        out_specs=pl.BlockSpec((tm, c2p), lambda i: (i, 0)),
        compiler_params=pltpu.CompilerParams(dimension_semantics=("parallel",)),
    )(a, x2, p["cv3_w"], p["cv2_w"], p["bn1_s"], p["bn1_b"],
      p["bn2_s"], p["bn2_b"], p["w4a"], p["w4b"], p["cv4_s"], p["cv4_b"])


# ---------------------------------------------------------------------------
# Parameter init (deterministic, synthetic), in f32, unpadded.
# Conv weights stored as (Cin, Cout) / (kh, kw, Cin, Cout); eval-mode BN folded
# to per-channel (scale, bias).
# ---------------------------------------------------------------------------
def init_params(key, c1, c2, n=1, e=0.5):
    c_ = int(c2 * e)
    keys = iter(jax.random.split(key, 128))

    def conv_w(cin, cout, k=1):
        fan = cin * k * k
        std = 1.0 / math.sqrt(fan)
        shape = (cin, cout) if k == 1 else (k, k, cin, cout)
        return std * jax.random.normal(next(keys), shape, jnp.float32)

    def bn_fold(c):
        gamma = 1.0 + 0.1 * jax.random.normal(next(keys), (1, c), jnp.float32)
        beta = 0.1 * jax.random.normal(next(keys), (1, c), jnp.float32)
        mean = 0.1 * jax.random.normal(next(keys), (1, c), jnp.float32)
        var = jnp.abs(1.0 + 0.1 * jax.random.normal(next(keys), (1, c), jnp.float32))
        scale = gamma * jax.lax.rsqrt(var + 1e-5)
        bias = beta - mean * scale
        return scale, bias

    p = {"c1": c1, "c_": c_, "c2": c2}
    p["cv1_w"] = conv_w(c1, c_)
    p["cv1_s"], p["cv1_b"] = bn_fold(c_)
    p["cv2_w"] = conv_w(c1, c_)            # plain conv, no BN/act
    p["cv3_w"] = conv_w(c_, c_)            # plain conv, no BN/act
    p["cv4_w"] = conv_w(2 * c_, c2)
    p["cv4_s"], p["cv4_b"] = bn_fold(c2)
    p["bn_s"], p["bn_b"] = bn_fold(2 * c_)
    blocks = []
    for _ in range(n):
        blk = {}
        blk["cv1_w"] = conv_w(c_, c_)            # Bottleneck.cv1 (e=1.0)
        blk["cv1_s"], blk["cv1_b"] = bn_fold(c_)
        blk["cv2_w"] = conv_w(c_, c_, k=3)       # Bottleneck.cv2 3x3
        blk["cv2_s"], blk["cv2_b"] = bn_fold(c_)
        blocks.append(blk)
    p["m"] = blocks
    return p


# ---------------------------------------------------------------------------
# Prepare params for the Pallas path: pad channels to lane multiples (zeros),
# split the CSP-tail bn / cv4 weights for the fused head, cast weights to the
# matmul compute dtype (scale/bias stay f32).
# ---------------------------------------------------------------------------
def prepare_params(p, compute_dtype=jnp.bfloat16):
    c1, c_, c2 = p["c1"], p["c_"], p["c2"]
    c1p, c_p, c2p = _round_up(c1), _round_up(c_), _round_up(c2)
    cd = compute_dtype

    def pad_w(w, r, c):
        return jnp.pad(w, ((0, r - w.shape[0]), (0, c - w.shape[1]))).astype(cd)

    def pad_sb(v, c):
        return jnp.pad(v, ((0, 0), (0, c - v.shape[1])))  # zeros -> padded lanes stay 0

    q = {"c1": c1, "c_": c_, "c2": c2, "c1p": c1p, "c_p": c_p, "c2p": c2p,
         "compute_dtype": cd}
    q["cv1_w"] = pad_w(p["cv1_w"], c1p, c_p)
    q["cv1_s"], q["cv1_b"] = pad_sb(p["cv1_s"], c_p), pad_sb(p["cv1_b"], c_p)
    q["cv3_w"] = pad_w(p["cv3_w"], c_p, c_p)
    q["cv2_w"] = pad_w(p["cv2_w"], c1p, c_p)
    # self.bn split into the cv3 (first c_) and cv2 (last c_) halves
    q["bn1_s"], q["bn1_b"] = pad_sb(p["bn_s"][:, :c_], c_p), pad_sb(p["bn_b"][:, :c_], c_p)
    q["bn2_s"], q["bn2_b"] = pad_sb(p["bn_s"][:, c_:], c_p), pad_sb(p["bn_b"][:, c_:], c_p)
    # cv4 weight rows split to match: cat(y1, y2) @ W4 == y1 @ W4a + y2 @ W4b
    q["w4a"] = pad_w(p["cv4_w"][:c_], c_p, c2p)
    q["w4b"] = pad_w(p["cv4_w"][c_:], c_p, c2p)
    q["cv4_s"], q["cv4_b"] = pad_sb(p["cv4_s"], c2p), pad_sb(p["cv4_b"], c2p)
    blocks = []
    for blk in p["m"]:
        b = {}
        b["cv1_w"] = pad_w(blk["cv1_w"], c_p, c_p)
        b["cv1_s"], b["cv1_b"] = pad_sb(blk["cv1_s"], c_p), pad_sb(blk["cv1_b"], c_p)
        b["cv2_w"] = jnp.pad(blk["cv2_w"],
                             ((0, 0), (0, 0), (0, c_p - c_), (0, c_p - c_))).astype(cd)
        b["cv2_s"], b["cv2_b"] = pad_sb(blk["cv2_s"], c_p), pad_sb(blk["cv2_b"], c_p)
        blocks.append(b)
    q["m"] = blocks
    return q


# ---------------------------------------------------------------------------
# Full BottleneckCSP forward.  Input/output are NCHW (like PyTorch).
# ---------------------------------------------------------------------------
def bottleneck_csp(x_nchw, params, *, tile_m=512, th=8):
    c1, c_, c2 = params["c1"], params["c_"], params["c2"]
    c1p, c_p = params["c1p"], params["c_p"]
    cd = params["compute_dtype"]

    x = jnp.transpose(x_nchw, (0, 2, 3, 1))  # NCHW -> NHWC
    N, H, W, _ = x.shape
    M = N * H * W
    x2 = jnp.pad(x.reshape(M, c1), ((0, 0), (0, c1p - c1))).astype(cd)

    # cv1: 1x1 conv + BN + Hardswish
    a = pw_conv(x2, params["cv1_w"], params["cv1_s"], params["cv1_b"],
                act="hardswish", tile_m=tile_m)

    # m: n x Bottleneck(c_, c_, shortcut=True, e=1.0)
    th_ = max(2, min(th, H))
    th_ -= th_ % 2
    n_h = pl.cdiv(H, th_)
    hpad = n_h * th_ + 2
    for blk in params["m"]:
        t = pw_conv(a, blk["cv1_w"], blk["cv1_s"], blk["cv1_b"],
                    act="hardswish", tile_m=tile_m)
        xp = jnp.pad(t.reshape(N, H, W, c_p),
                     ((0, 0), (1, hpad - H - 1), (1, 1), (0, 0)))
        a = conv3x3_bn_hswish(xp, blk["cv2_w"], blk["cv2_s"], blk["cv2_b"],
                              residual=a.reshape(N, H, W, c_p),
                              out_h=H, th=th_).reshape(M, c_p)

    # fused tail: cv3 + cv2 + bn + LeakyReLU + cv4 (conv+BN+Hardswish), no concat
    out = csp_head(a, x2, params, tile_m=tile_m, out_dtype=x_nchw.dtype)
    out = out[:, :c2].reshape(N, H, W, c2)
    return jnp.transpose(out, (0, 3, 1, 2))  # NHWC -> NCHW


# ---------------------------------------------------------------------------
# Pure-JAX f32 reference (matches the PyTorch module with folded eval-mode BN).
# ---------------------------------------------------------------------------
def reference_forward(x_nchw, p):
    x = jnp.transpose(x_nchw, (0, 2, 3, 1)).astype(jnp.float32)

    def c1x1(t, w):
        return jnp.einsum("nhwc,cd->nhwd", t, w)

    def aff(t, s, b):
        return t * s.reshape(1, 1, 1, -1) + b.reshape(1, 1, 1, -1)

    a = _hardswish(aff(c1x1(x, p["cv1_w"]), p["cv1_s"], p["cv1_b"]))
    for blk in p["m"]:
        t1 = _hardswish(aff(c1x1(a, blk["cv1_w"]), blk["cv1_s"], blk["cv1_b"]))
        t2 = jax.lax.conv_general_dilated(
            t1, blk["cv2_w"], (1, 1), "SAME",
            dimension_numbers=("NHWC", "HWIO", "NHWC"))
        a = a + _hardswish(aff(t2, blk["cv2_s"], blk["cv2_b"]))
    y1 = c1x1(a, p["cv3_w"])
    y2 = c1x1(x, p["cv2_w"])
    z = _leaky(aff(jnp.concatenate([y1, y2], axis=-1), p["bn_s"], p["bn_b"]))
    out = _hardswish(aff(c1x1(z, p["cv4_w"]), p["cv4_s"], p["cv4_b"]))
    return jnp.transpose(out, (0, 3, 1, 2))


if __name__ == "__main__":
    key = jax.random.PRNGKey(0)
    kx, kp = jax.random.split(key)
    c1, c2, n = 4, 4, 1
    x = jax.random.normal(kx, (2, c1, 16, 16), jnp.float32)  # NCHW like PyTorch

    raw = init_params(kp, c1, c2, n=n, e=0.5)
    prepared = prepare_params(raw, compute_dtype=jnp.bfloat16)

    fwd = jax.jit(lambda xx: bottleneck_csp(xx, prepared))
    out = fwd(x)
    jax.block_until_ready(out)

    assert out.shape == (2, c2, 16, 16), out.shape
    assert bool(jnp.all(jnp.isfinite(out)))

    ref = reference_forward(x, raw)
    max_err = float(jnp.max(jnp.abs(out - ref)))
    assert jnp.allclose(out, ref, rtol=5e-2, atol=5e-2), max_err  # bf16 vs f32 ref

    print("KERNEL_OK")
</pallas_src>

<mosaic_0001>
module attributes {stable_mosaic.version = 11 : i64} {
  func.func @_pw_kernel(%arg0: i32, %arg1: memref<512x128xbf16, #tpu.memory_space<vmem>>, %arg2: memref<128x128xbf16, #tpu.memory_space<vmem>>, %arg3: memref<1x128xf32, #tpu.memory_space<vmem>>, %arg4: memref<1x128xf32, #tpu.memory_space<vmem>>, %arg5: memref<512x128xbf16, #tpu.memory_space<vmem>>) attributes {dimension_semantics = [#tpu.dimension_semantics<parallel>], iteration_bounds = array<i64: 1>, scalar_prefetch = 0 : i64, scratch_operands = 0 : i64, tpu.core_type = #tpu.core_type<tc>, window_params = [{transform_indices = @transform_0, window_bounds = array<i64: 512, 128>}, {pipeline_mode = #tpu.pipeline_mode<synchronous>, transform_indices = @transform_1, window_bounds = array<i64: 128, 128>}, {pipeline_mode = #tpu.pipeline_mode<synchronous>, transform_indices = @transform_2, window_bounds = array<i64: 1, 128>}, {pipeline_mode = #tpu.pipeline_mode<synchronous>, transform_indices = @transform_3, window_bounds = array<i64: 1, 128>}, {transform_indices = @transform_4, window_bounds = array<i64: 512, 128>}]} {
    %c0 = arith.constant 0 : index
    %c0_0 = arith.constant 0 : index
    %0 = vector.load %arg1[%c0, %c0_0] : memref<512x128xbf16, #tpu.memory_space<vmem>>, vector<512x128xbf16>
    %c0_1 = arith.constant 0 : index
    %c0_2 = arith.constant 0 : index
    %1 = vector.load %arg2[%c0_1, %c0_2] : memref<128x128xbf16, #tpu.memory_space<vmem>>, vector<128x128xbf16>
    %cst = arith.constant dense<0.000000e+00> : vector<512x128xf32>
    %2 = tpu.matmul %0, %1, %cst {dimension_numbers = #tpu.dot_dimension_numbers<[1], [0], [0], [1], [0, 0, 1, 1], [], []>} : vector<512x128xbf16>, vector<128x128xbf16>, vector<512x128xf32> -> vector<512x128xf32>
    %c0_3 = arith.constant 0 : index
    %c0_4 = arith.constant 0 : index
    %3 = vector.load %arg3[%c0_3, %c0_4] : memref<1x128xf32, #tpu.memory_space<vmem>>, vector<1x128xf32>
    %4 = vector.broadcast %3 : vector<1x128xf32> to vector<512x128xf32>
    %5 = arith.mulf %2, %4 : vector<512x128xf32>
    %c0_5 = arith.constant 0 : index
    %c0_6 = arith.constant 0 : index
    %6 = vector.load %arg4[%c0_5, %c0_6] : memref<1x128xf32, #tpu.memory_space<vmem>>, vector<1x128xf32>
    %7 = vector.broadcast %6 : vector<1x128xf32> to vector<512x128xf32>
    %8 = arith.addf %5, %7 : vector<512x128xf32>
    %cst_7 = arith.constant 3.000000e+00 : f32
    %9 = vector.broadcast %cst_7 : f32 to vector<512x128xf32>
    %10 = arith.addf %8, %9 : vector<512x128xf32>
    %cst_8 = arith.constant 0.000000e+00 : f32
    %cst_9 = arith.constant 6.000000e+00 : f32
    %11 = vector.broadcast %cst_8 : f32 to vector<512x128xf32>
    %12 = arith.maximumf %11, %10 : vector<512x128xf32>
    %13 = vector.broadcast %cst_9 : f32 to vector<512x128xf32>
    %14 = arith.minimumf %13, %12 : vector<512x128xf32>
    %15 = arith.mulf %8, %14 : vector<512x128xf32>
    %cst_10 = arith.constant 0.166666672 : f32
    %16 = vector.broadcast %cst_10 : f32 to vector<512x128xf32>
    %17 = arith.mulf %15, %16 : vector<512x128xf32>
    %18 = arith.truncf %17 : vector<512x128xf32> to vector<512x128xbf16>
    %c0_11 = arith.constant 0 : index
    %c0_12 = arith.constant 0 : index
    %19 = vector.load %arg5[%c0_11, %c0_12] : memref<512x128xbf16, #tpu.memory_space<vmem>>, vector<512x128xbf16>
    tpu.vector_store %arg5[%c0_11, %c0_12], %18 {strides = array<i32>} : memref<512x128xbf16, #tpu.memory_space<vmem>>, vector<512x128xbf16>,
    return
  }
  func.func @transform_0(%arg0: i32) -> (i32, i32) {
    %c0_i32 = arith.constant 0 : i32
    %c0_i32_0 = arith.constant 0 : i32
    return %arg0, %c0_i32 : i32, i32
  }
  func.func @transform_1(%arg0: i32) -> (i32, i32) {
    %c0_i32 = arith.constant 0 : i32
    %c0_i32_0 = arith.constant 0 : i32
    %c0_i32_1 = arith.constant 0 : i32
    return %c0_i32, %c0_i32_0 : i32, i32
  }
  func.func @transform_2(%arg0: i32) -> (i32, i32) {
    %c0_i32 = arith.constant 0 : i32
    %c0_i32_0 = arith.constant 0 : i32
    %c0_i32_1 = arith.constant 0 : i32
    return %c0_i32, %c0_i32_0 : i32, i32
  }
  func.func @transform_3(%arg0: i32) -> (i32, i32) {
    %c0_i32 = arith.constant 0 : i32
    %c0_i32_0 = arith.constant 0 : i32
    %c0_i32_1 = arith.constant 0 : i32
    return %c0_i32, %c0_i32_0 : i32, i32
  }
  func.func @transform_4(%arg0: i32) -> (i32, i32) {
    %c0_i32 = arith.constant 0 : i32
    %c0_i32_0 = arith.constant 0 : i32
    return %arg0, %c0_i32 : i32, i32
  }
}

module attributes {stable_mosaic.version = 11 : i64} {
  func.func @_conv3x3_kernel(%arg0: i32, %arg1: i32, %arg2: memref<1x8x18x128xbf16, #tpu.memory_space<vmem>>, %arg3: memref<1x2x18x128xbf16, #tpu.memory_space<vmem>>, %arg4: memref<3x3x128x128xbf16, #tpu.memory_space<vmem>>, %arg5: memref<1x128xf32, #tpu.memory_space<vmem>>, %arg6: memref<1x128xf32, #tpu.memory_space<vmem>>, %arg7: memref<1x8x16x128xbf16, #tpu.memory_space<vmem>>, %arg8: memref<1x8x16x128xbf16, #tpu.memory_space<vmem>>) attributes {dimension_semantics = [#tpu.dimension_semantics<parallel>, #tpu.dimension_semantics<parallel>], iteration_bounds = array<i64: 2, 2>, scalar_prefetch = 0 : i64, scratch_operands = 0 : i64, tpu.core_type = #tpu.core_type<tc>, window_params = [{transform_indices = @transform_0, window_bounds = array<i64: 1, 8, 18, 128>}, {transform_indices = @transform_1, window_bounds = array<i64: 1, 2, 18, 128>}, {pipeline_mode = #tpu.pipeline_mode<synchronous>, transform_indices = @transform_2, window_bounds = array<i64: 3, 3, 128, 128>}, {pipeline_mode = #tpu.pipeline_mode<synchronous>, transform_indices = @transform_3, window_bounds = array<i64: 1, 128>}, {pipeline_mode = #tpu.pipeline_mode<synchronous>, transform_indices = @transform_4, window_bounds = array<i64: 1, 128>}, {transform_indices = @transform_5, window_bounds = array<i64: 1, 8, 16, 128>}, {transform_indices = @transform_6, window_bounds = array<i64: 1, 8, 16, 128>}]} {
    %c0 = arith.constant 0 : index
    %c0_0 = arith.constant 0 : index
    %c0_1 = arith.constant 0 : index
    %c0_2 = arith.constant 0 : index
    %0 = vector.load %arg2[%c0, %c0_0, %c0_1, %c0_2] : memref<1x8x18x128xbf16, #tpu.memory_space<vmem>>, vector<1x8x18x128xbf16>
    %1 = vector.shape_cast %0 : vector<1x8x18x128xbf16> to vector<8x18x128xbf16>
    %c0_3 = arith.constant 0 : index
    %c0_4 = arith.constant 0 : index
    %c0_5 = arith.constant 0 : index
    %c0_6 = arith.constant 0 : index
    %2 = vector.load %arg3[%c0_3, %c0_4, %c0_5, %c0_6] : memref<1x2x18x128xbf16, #tpu.memory_space<vmem>>, vector<1x2x18x128xbf16>
    %3 = vector.shape_cast %2 : vector<1x2x18x128xbf16> to vector<2x18x128xbf16>
    %4 = tpu.concatenate %1, %3 in 0 : vector<8x18x128xbf16>, vector<2x18x128xbf16> -> vector<10x18x128xbf16>
    %cst = arith.constant 0.000000e+00 : f32
    %5 = vector.broadcast %cst : f32 to vector<128x128xf32>
    %6 = vector.extract_strided_slice %4 {offsets = [0, 0, 0], sizes = [8, 16, 128], strides = [1, 1, 1]} : vector<10x18x128xbf16> to vector<8x16x128xbf16>
    %7 = vector.shape_cast %6 : vector<8x16x128xbf16> to vector<128x128xbf16>
    %c0_7 = arith.constant 0 : index
    %c0_8 = arith.constant 0 : index
    %c0_9 = arith.constant 0 : index
    %c0_10 = arith.constant 0 : index
    %8 = vector.load %arg4[%c0_7, %c0_8, %c0_9, %c0_10] : memref<3x3x128x128xbf16, #tpu.memory_space<vmem>>, vector<1x1x128x128xbf16>
    %9 = vector.shape_cast %8 : vector<1x1x128x128xbf16> to vector<128x128xbf16>
    %cst_11 = arith.constant dense<0.000000e+00> : vector<128x128xf32>
    %10 = tpu.matmul %7, %9, %cst_11 {dimension_numbers = #tpu.dot_dimension_numbers<[1], [0], [0], [1], [0, 0, 1, 1], [], []>} : vector<128x128xbf16>, vector<128x128xbf16>, vector<128x128xf32> -> vector<128x128xf32>
    %11 = arith.addf %5, %10 : vector<128x128xf32>
    %12 = vector.extract_strided_slice %4 {offsets = [0, 1, 0], sizes = [8, 16, 128], strides = [1, 1, 1]} : vector<10x18x128xbf16> to vector<8x16x128xbf16>
    %13 = vector.shape_cast %12 : vector<8x16x128xbf16> to vector<128x128xbf16>
    %c0_12 = arith.constant 0 : index
    %c1 = arith.constant 1 : index
    %c0_13 = arith.constant 0 : index
    %c0_14 = arith.constant 0 : index
    %14 = vector.load %arg4[%c0_12, %c1, %c0_13, %c0_14] : memref<3x3x128x128xbf16, #tpu.memory_space<vmem>>, vector<1x1x128x128xbf16>
    %15 = vector.shape_cast %14 : vector<1x1x128x128xbf16> to vector<128x128xbf16>
    %cst_15 = arith.constant dense<0.000000e+00> : vector<128x128xf32>
    %16 = tpu.matmul %13, %15, %cst_15 {dimension_numbers = #tpu.dot_dimension_numbers<[1], [0], [0], [1], [0, 0, 1, 1], [], []>} : vector<128x128xbf16>, vector<128x128xbf16>, vector<128x128xf32> -> vector<128x128xf32>
    %17 = arith.addf %11, %16 : vector<128x128xf32>
    %18 = vector.extract_strided_slice %4 {offsets = [0, 2, 0], sizes = [8, 16, 128], strides = [1, 1, 1]} : vector<10x18x128xbf16> to vector<8x16x128xbf16>
    %19 = vector.shape_cast %18 : vector<8x16x128xbf16> to vector<128x128xbf16>
    %c0_16 = arith.constant 0 : index
    %c2 = arith.constant 2 : index
    %c0_17 = arith.constant 0 : index
    %c0_18 = arith.constant 0 : index
    %20 = vector.load %arg4[%c0_16, %c2, %c0_17, %c0_18] : memref<3x3x128x128xbf16, #tpu.memory_space<vmem>>, vector<1x1x128x128xbf16>
    %21 = vector.shape_cast %20 : vector<1x1x128x128xbf16> to vector<128x128xbf16>
    %cst_19 = arith.constant dense<0.000000e+00> : vector<128x128xf32>
    %22 = tpu.matmul %19, %21, %cst_19 {dimension_numbers = #tpu.dot_dimension_numbers<[1], [0], [0], [1], [0, 0, 1, 1], [], []>} : vector<128x128xbf16>, vector<128x128xbf16>, vector<128x128xf32> -> vector<128x128xf32>
    %23 = arith.addf %17, %22 : vector<128x128xf32>
    %24 = vector.extract_strided_slice %4 {offsets = [1, 0, 0], sizes = [8, 16, 128], strides = [1, 1, 1]} : vector<10x18x128xbf16> to vector<8x16x128xbf16>
    %25 = vector.shape_cast %24 : vector<8x16x128xbf16> to vector<128x128xbf16>
    %c1_20 = arith.constant 1 : index
    %c0_21 = arith.constant 0 : index
    %c0_22 = arith.constant 0 : index
    %c0_23 = arith.constant 0 : index
    %26 = vector.load %arg4[%c1_20, %c0_21, %c0_22, %c0_23] : memref<3x3x128x128xbf16, #tpu.memory_space<vmem>>, vector<1x1x128x128xbf16>
    %27 = vector.shape_cast %26 : vector<1x1x128x128xbf16> to vector<128x128xbf16>
    %cst_24 = arith.constant dense<0.000000e+00> : vector<128x128xf32>
    %28 = tpu.matmul %25, %27, %cst_24 {dimension_numbers = #tpu.dot_dimension_numbers<[1], [0], [0], [1], [0, 0, 1, 1], [], []>} : vector<128x128xbf16>, vector<128x128xbf16>, vector<128x128xf32> -> vector<128x128xf32>
    %29 = arith.addf %23, %28 : vector<128x128xf32>
    %30 = vector.extract_strided_slice %4 {offsets = [1, 1, 0], sizes = [8, 16, 128], strides = [1, 1, 1]} : vector<10x18x128xbf16> to vector<8x16x128xbf16>
    %31 = vector.shape_cast %30 : vector<8x16x128xbf16> to vector<128x128xbf16>
    %c1_25 = arith.constant 1 : index
    %c1_26 = arith.constant 1 : index
    %c0_27 = arith.constant 0 : index
    %c0_28 = arith.constant 0 : index
    %32 = vector.load %arg4[%c1_25, %c1_26, %c0_27, %c0_28] : memref<3x3x128x128xbf16, #tpu.memory_space<vmem>>, vector<1x1x128x128xbf16>
    %33 = vector.shape_cast %32 : vector<1x1x128x128xbf16> to vector<128x128xbf16>
    %cst_29 = arith.constant dense<0.000000e+00> : vector<128x128xf32>
    %34 = tpu.matmul %31, %33, %cst_29 {dimension_numbers = #tpu.dot_dimension_numbers<[1], [0], [0], [1], [0, 0, 1, 1], [], []>} : vector<128x128xbf16>, vector<128x128xbf16>, vector<128x128xf32> -> vector<128x128xf32>
    %35 = arith.addf %29, %34 : vector<128x128xf32>
    %36 = vector.extract_strided_slice %4 {offsets = [1, 2, 0], sizes = [8, 16, 128], strides = [1, 1, 1]} : vector<10x18x128xbf16> to vector<8x16x128xbf16>
    %37 = vector.shape_cast %36 : vector<8x16x128xbf16> to vector<128x128xbf16>
    %c1_30 = arith.constant 1 : index
    %c2_31 = arith.constant 2 : index
    %c0_32 = arith.constant 0 : index
    %c0_33 = arith.constant 0 : index
    %38 = vector.load %arg4[%c1_30, %c2_31, %c0_32, %c0_33] : memref<3x3x128x128xbf16, #tpu.memory_space<vmem>>, vector<1x1x128x128xbf16>
    %39 = vector.shape_cast %38 : vector<1x1x128x128xbf16> to vector<128x128xbf16>
    %cst_34 = arith.constant dense<0.000000e+00> : vector<128x128xf32>
    %40 = tpu.matmul %37, %39, %cst_34 {dimension_numbers = #tpu.dot_dimension_numbers<[1], [0], [0], [1], [0, 0, 1, 1], [], []>} : vector<128x128xbf16>, vector<128x128xbf16>, vector<128x128xf32> -> vector<128x128xf32>
    %41 = arith.addf %35, %40 : vector<128x128xf32>
    %42 = vector.extract_strided_slice %4 {offsets = [2, 0, 0], sizes = [8, 16, 128], strides = [1, 1, 1]} : vector<10x18x128xbf16> to vector<8x16x128xbf16>
    %43 = vector.shape_cast %42 : vector<8x16x128xbf16> to vector<128x128xbf16>
    %c2_35 = arith.constant 2 : index
    %c0_36 = arith.constant 0 : index
    %c0_37 = arith.constant 0 : index
    %c0_38 = arith.constant 0 : index
    %44 = vector.load %arg4[%c2_35, %c0_36, %c0_37, %c0_38] : memref<3x3x128x128xbf16, #tpu.memory_space<vmem>>, vector<1x1x128x128xbf16>
    %45 = vector.shape_cast %44 : vector<1x1x128x128xbf16> to vector<128x128xbf16>
    %cst_39 = arith.constant dense<0.000000e+00> : vector<128x128xf32>
    %46 = tpu.matmul %43, %45, %cst_39 {dimension_numbers = #tpu.dot_dimension_numbers<[1], [0], [0], [1], [0, 0, 1, 1], [], []>} : vector<128x128xbf16>, vector<128x128xbf16>, vector<128x128xf32> -> vector<128x128xf32>
    %47 = arith.addf %41, %46 : vector<128x128xf32>
    %48 = vector.extract_strided_slice %4 {offsets = [2, 1, 0], sizes = [8, 16, 128], strides = [1, 1, 1]} : vector<10x18x128xbf16> to vector<8x16x128xbf16>
    %49 = vector.shape_cast %48 : vector<8x16x128xbf16> to vector<128x128xbf16>
    %c2_40 = arith.constant 2 : index
    %c1_41 = arith.constant 1 : index
    %c0_42 = arith.constant 0 : index
    %c0_43 = arith.constant 0 : index
    %50 = vector.load %arg4[%c2_40, %c1_41, %c0_42, %c0_43] : memref<3x3x128x128xbf16, #tpu.memory_space<vmem>>, vector<1x1x128x128xbf16>
    %51 = vector.shape_cast %50 : vector<1x1x128x128xbf16> to vector<128x128xbf16>
    %cst_44 = arith.constant dense<0.000000e+00> : vector<128x128xf32>
    %52 = tpu.matmul %49, %51, %cst_44 {dimension_numbers = #tpu.dot_dimension_numbers<[1], [0], [0], [1], [0, 0, 1, 1], [], []>} : vector<128x128xbf16>, vector<128x128xbf16>, vector<128x128xf32> -> vector<128x128xf32>
    %53 = arith.addf %47, %52 : vector<128x128xf32>
    %54 = vector.extract_strided_slice %4 {offsets = [2, 2, 0], sizes = [8, 16, 128], strides = [1, 1, 1]} : vector<10x18x128xbf16> to vector<8x16x128xbf16>
    %55 = vector.shape_cast %54 : vector<8x16x128xbf16> to vector<128x128xbf16>
    %c2_45 = arith.constant 2 : index
    %c2_46 = arith.constant 2 : index
    %c0_47 = arith.constant 0 : index
    %c0_48 = arith.constant 0 : index
    %56 = vector.load %arg4[%c2_45, %c2_46, %c0_47, %c0_48] : memref<3x3x128x128xbf16, #tpu.memory_space<vmem>>, vector<1x1x128x128xbf16>
    %57 = vector.shape_cast %56 : vector<1x1x128x128xbf16> to vector<128x128xbf16>
    %cst_49 = arith.constant dense<0.000000e+00> : vector<128x128xf32>
    %58 = tpu.matmul %55, %57, %cst_49 {dimension_numbers = #tpu.dot_dimension_numbers<[1], [0], [0], [1], [0, 0, 1, 1], [], []>} : vector<128x128xbf16>, vector<128x128xbf16>, vector<128x128xf32> -> vector<128x128xf32>
    %59 = arith.addf %53, %58 : vector<128x128xf32>
    %c0_50 = arith.constant 0 : index
    %c0_51 = arith.constant 0 : index
    %60 = vector.load %arg5[%c0_50, %c0_51] : memref<1x128xf32, #tpu.memory_space<vmem>>, vector<1x128xf32>
    %61 = vector.broadcast %60 : vector<1x128xf32> to vector<128x128xf32>
    %62 = arith.mulf %59, %61 : vector<128x128xf32>
    %c0_52 = arith.constant 0 : index
    %c0_53 = arith.constant 0 : index
    %63 = vector.load %arg6[%c0_52, %c0_53] : memref<1x128xf32, #tpu.memory_space<vmem>>, vector<1x128xf32>
    %64 = vector.broadcast %63 : vector<1x128xf32> to vector<128x128xf32>
    %65 = arith.addf %62, %64 : vector<128x128xf32>
    %cst_54 = arith.constant 3.000000e+00 : f32
    %66 = vector.broadcast %cst_54 : f32 to vector<128x128xf32>
    %67 = arith.addf %65, %66 : vector<128x128xf32>
    %cst_55 = arith.constant 0.000000e+00 : f32
    %cst_56 = arith.constant 6.000000e+00 : f32
    %68 = vector.broadcast %cst_55 : f32 to vector<128x128xf32>
    %69 = arith.maximumf %68, %67 : vector<128x128xf32>
    %70 = vector.broadcast %cst_56 : f32 to vector<128x128xf32>
    %71 = arith.minimumf %70, %69 : vector<128x128xf32>
    %72 = arith.mulf %65, %71 : vector<128x128xf32>
    %cst_57 = arith.constant 0.166666672 : f32
    %73 = vector.broadcast %cst_57 : f32 to vector<128x128xf32>
    %74 = arith.mulf %72, %73 : vector<128x128xf32>
    %75 = vector.shape_cast %74 : vector<128x128xf32> to vector<8x16x128xf32>
    %c0_58 = arith.constant 0 : index
    %c0_59 = arith.constant 0 : index
    %c0_60 = arith.constant 0 : index
    %c0_61 = arith.constant 0 : index
    %76 = vector.load %arg7[%c0_58, %c0_59, %c0_60, %c0_61] : memref<1x8x16x128xbf16, #tpu.memory_space<vmem>>, vector<1x8x16x128xbf16>
    %77 = vector.shape_cast %76 : vector<1x8x16x128xbf16> to vector<8x16x128xbf16>
    %78 = arith.extf %77 : vector<8x16x128xbf16> to vector<8x16x128xf32>
    %79 = arith.addf %75, %78 : vector<8x16x128xf32>
    %80 = arith.truncf %79 : vector<8x16x128xf32> to vector<8x16x128xbf16>
    %c0_62 = arith.constant 0 : index
    %c0_63 = arith.constant 0 : index
    %c0_64 = arith.constant 0 : index
    %c0_65 = arith.constant 0 : index
    %81 = vector.load %arg8[%c0_62, %c0_63, %c0_64, %c0_65] : memref<1x8x16x128xbf16, #tpu.memory_space<vmem>>, vector<1x8x16x128xbf16>
    %82 = vector.shape_cast %81 : vector<1x8x16x128xbf16> to vector<8x16x128xbf16>
    %83 = vector.shape_cast %80 : vector<8x16x128xbf16> to vector<1x8x16x128xbf16>
    tpu.vector_store %arg8[%c0_62, %c0_63, %c0_64, %c0_65], %83 {strides = array<i32>} : memref<1x8x16x128xbf16, #tpu.memory_space<vmem>>, vector<1x8x16x128xbf16>,
    return
  }
  func.func @transform_0(%arg0: i32, %arg1: i32) -> (i32, i32, i32, i32) {
    %c0_i32 = arith.constant 0 : i32
    %c0_i32_0 = arith.constant 0 : i32
    %c0_i32_1 = arith.constant 0 : i32
    return %arg0, %arg1, %c0_i32, %c0_i32_0 : i32, i32, i32, i32
  }
  func.func @transform_1(%arg0: i32, %arg1: i32) -> (i32, i32, i32, i32) {
    %c1_i32 = arith.constant 1 : i32
    %0 = arith.addi %arg1, %c1_i32 : i32
    %c4_i32 = arith.constant 4 : i32
    %1 = arith.muli %0, %c4_i32 : i32
    %c0_i32 = arith.constant 0 : i32
    %c0_i32_0 = arith.constant 0 : i32
    %c0_i32_1 = arith.constant 0 : i32
    return %arg0, %1, %c0_i32, %c0_i32_0 : i32, i32, i32, i32
  }
  func.func @transform_2(%arg0: i32, %arg1: i32) -> (i32, i32, i32, i32) {
    %c0_i32 = arith.constant 0 : i32
    %c0_i32_0 = arith.constant 0 : i32
    %c0_i32_1 = arith.constant 0 : i32
    %c0_i32_2 = arith.constant 0 : i32
    %c0_i32_3 = arith.constant 0 : i32
    return %c0_i32, %c0_i32_0, %c0_i32_1, %c0_i32_2 : i32, i32, i32, i32
  }
  func.func @transform_3(%arg0: i32, %arg1: i32) -> (i32, i32) {
    %c0_i32 = arith.constant 0 : i32
    %c0_i32_0 = arith.constant 0 : i32
    %c0_i32_1 = arith.constant 0 : i32
    return %c0_i32, %c0_i32_0 : i32, i32
  }
  func.func @transform_4(%arg0: i32, %arg1: i32) -> (i32, i32) {
    %c0_i32 = arith.constant 0 : i32
    %c0_i32_0 = arith.constant 0 : i32
    %c0_i32_1 = arith.constant 0 : i32
    return %c0_i32, %c0_i32_0 : i32, i32
  }
  func.func @transform_5(%arg0: i32, %arg1: i32) -> (i32, i32, i32, i32) {
    %c0_i32 = arith.constant 0 : i32
    %c0_i32_0 = arith.constant 0 : i32
    %c0_i32_1 = arith.constant 0 : i32
    return %arg0, %arg1, %c0_i32, %c0_i32_0 : i32, i32, i32, i32
  }
  func.func @transform_6(%arg0: i32, %arg1: i32) -> (i32, i32, i32, i32) {
    %c0_i32 = arith.constant 0 : i32
    %c0_i32_0 = arith.constant 0 : i32
    %c0_i32_1 = arith.constant 0 : i32
    return %arg0, %arg1, %c0_i32, %c0_i32_0 : i32, i32, i32, i32
  }
}

module attributes {stable_mosaic.version = 11 : i64} {
  func.func @_head_kernel(%arg0: i32, %arg1: memref<512x128xbf16, #tpu.memory_space<vmem>>, %arg2: memref<512x128xbf16, #tpu.memory_space<vmem>>, %arg3: memref<128x128xbf16, #tpu.memory_space<vmem>>, %arg4: memref<128x128xbf16, #tpu.memory_space<vmem>>, %arg5: memref<1x128xf32, #tpu.memory_space<vmem>>, %arg6: memref<1x128xf32, #tpu.memory_space<vmem>>, %arg7: memref<1x128xf32, #tpu.memory_space<vmem>>, %arg8: memref<1x128xf32, #tpu.memory_space<vmem>>, %arg9: memref<128x128xbf16, #tpu.memory_space<vmem>>, %arg10: memref<128x128xbf16, #tpu.memory_space<vmem>>, %arg11: memref<1x128xf32, #tpu.memory_space<vmem>>, %arg12: memref<1x128xf32, #tpu.memory_space<vmem>>, %arg13: memref<512x128xf32, #tpu.memory_space<vmem>>) attributes {dimension_semantics = [#tpu.dimension_semantics<parallel>], iteration_bounds = array<i64: 1>, scalar_prefetch = 0 : i64, scratch_operands = 0 : i64, tpu.core_type = #tpu.core_type<tc>, window_params = [{transform_indices = @transform_0, window_bounds = array<i64: 512, 128>}, {transform_indices = @transform_1, window_bounds = array<i64: 512, 128>}, {pipeline_mode = #tpu.pipeline_mode<synchronous>, transform_indices = @transform_2, window_bounds = array<i64: 128, 128>}, {pipeline_mode = #tpu.pipeline_mode<synchronous>, transform_indices = @transform_3, window_bounds = array<i64: 128, 128>}, {pipeline_mode = #tpu.pipeline_mode<synchronous>, transform_indices = @transform_4, window_bounds = array<i64: 1, 128>}, {pipeline_mode = #tpu.pipeline_mode<synchronous>, transform_indices = @transform_5, window_bounds = array<i64: 1, 128>}, {pipeline_mode = #tpu.pipeline_mode<synchronous>, transform_indices = @transform_6, window_bounds = array<i64: 1, 128>}, {pipeline_mode = #tpu.pipeline_mode<synchronous>, transform_indices = @transform_7, window_bounds = array<i64: 1, 128>}, {pipeline_mode = #tpu.pipeline_mode<synchronous>, transform_indices = @transform_8, window_bounds = array<i64: 128, 128>}, {pipeline_mode = #tpu.pipeline_mode<synchronous>, transform_indices = @transform_9, window_bounds = array<i64: 128, 128>}, {pipeline_mode = #tpu.pipeline_mode<synchronous>, transform_indices = @transform_10, window_bounds = array<i64: 1, 128>}, {pipeline_mode = #tpu.pipeline_mode<synchronous>, transform_indices = @transform_11, window_bounds = array<i64: 1, 128>}, {transform_indices = @transform_12, window_bounds = array<i64: 512, 128>}]} {
    %c0 = arith.constant 0 : index
    %c0_0 = arith.constant 0 : index
    %0 = vector.load %arg1[%c0, %c0_0] : memref<512x128xbf16, #tpu.memory_space<vmem>>, vector<512x128xbf16>
    %c0_1 = arith.constant 0 : index
    %c0_2 = arith.constant 0 : index
    %1 = vector.load %arg3[%c0_1, %c0_2] : memref<128x128xbf16, #tpu.memory_space<vmem>>, vector<128x128xbf16>
    %cst = arith.constant dense<0.000000e+00> : vector<512x128xf32>
    %2 = tpu.matmul %0, %1, %cst {dimension_numbers = #tpu.dot_dimension_numbers<[1], [0], [0], [1], [0, 0, 1, 1], [], []>} : vector<512x128xbf16>, vector<128x128xbf16>, vector<512x128xf32> -> vector<512x128xf32>
    %c0_3 = arith.constant 0 : index
    %c0_4 = arith.constant 0 : index
    %3 = vector.load %arg5[%c0_3, %c0_4] : memref<1x128xf32, #tpu.memory_space<vmem>>, vector<1x128xf32>
    %4 = vector.broadcast %3 : vector<1x128xf32> to vector<512x128xf32>
    %5 = arith.mulf %2, %4 : vector<512x128xf32>
    %c0_5 = arith.constant 0 : index
    %c0_6 = arith.constant 0 : index
    %6 = vector.load %arg6[%c0_5, %c0_6] : memref<1x128xf32, #tpu.memory_space<vmem>>, vector<1x128xf32>
    %7 = vector.broadcast %6 : vector<1x128xf32> to vector<512x128xf32>
    %8 = arith.addf %5, %7 : vector<512x128xf32>
    %cst_7 = arith.constant 0.000000e+00 : f32
    %9 = vector.broadcast %cst_7 : f32 to vector<512x128xf32>
    %10 = arith.cmpf ogt, %8, %9 : vector<512x128xf32>
    %cst_8 = arith.constant 1.000000e-01 : f32
    %11 = vector.broadcast %cst_8 : f32 to vector<512x128xf32>
    %12 = arith.mulf %11, %8 : vector<512x128xf32>
    %13 = arith.select %10, %8, %12 : vector<512x128xi1>, vector<512x128xf32>
    %c0_9 = arith.constant 0 : index
    %c0_10 = arith.constant 0 : index
    %14 = vector.load %arg2[%c0_9, %c0_10] : memref<512x128xbf16, #tpu.memory_space<vmem>>, vector<512x128xbf16>
    %c0_11 = arith.constant 0 : index
    %c0_12 = arith.constant 0 : index
    %15 = vector.load %arg4[%c0_11, %c0_12] : memref<128x128xbf16, #tpu.memory_space<vmem>>, vector<128x128xbf16>
    %cst_13 = arith.constant dense<0.000000e+00> : vector<512x128xf32>
    %16 = tpu.matmul %14, %15, %cst_13 {dimension_numbers = #tpu.dot_dimension_numbers<[1], [0], [0], [1], [0, 0, 1, 1], [], []>} : vector<512x128xbf16>, vector<128x128xbf16>, vector<512x128xf32> -> vector<512x128xf32>
    %c0_14 = arith.constant 0 : index
    %c0_15 = arith.constant 0 : index
    %17 = vector.load %arg7[%c0_14, %c0_15] : memref<1x128xf32, #tpu.memory_space<vmem>>, vector<1x128xf32>
    %18 = vector.broadcast %17 : vector<1x128xf32> to vector<512x128xf32>
    %19 = arith.mulf %16, %18 : vector<512x128xf32>
    %c0_16 = arith.constant 0 : index
    %c0_17 = arith.constant 0 : index
    %20 = vector.load %arg8[%c0_16, %c0_17] : memref<1x128xf32, #tpu.memory_space<vmem>>, vector<1x128xf32>
    %21 = vector.broadcast %20 : vector<1x128xf32> to vector<512x128xf32>
    %22 = arith.addf %19, %21 : vector<512x128xf32>
    %cst_18 = arith.constant 0.000000e+00 : f32
    %23 = vector.broadcast %cst_18 : f32 to vector<512x128xf32>
    %24 = arith.cmpf ogt, %22, %23 : vector<512x128xf32>
    %cst_19 = arith.constant 1.000000e-01 : f32
    %25 = vector.broadcast %cst_19 : f32 to vector<512x128xf32>
    %26 = arith.mulf %25, %22 : vector<512x128xf32>
    %27 = arith.select %24, %22, %26 : vector<512x128xi1>, vector<512x128xf32>
    %28 = arith.truncf %13 : vector<512x128xf32> to vector<512x128xbf16>
    %c0_20 = arith.constant 0 : index
    %c0_21 = arith.constant 0 : index
    %29 = vector.load %arg9[%c0_20, %c0_21] : memref<128x128xbf16, #tpu.memory_space<vmem>>, vector<128x128xbf16>
    %cst_22 = arith.constant dense<0.000000e+00> : vector<512x128xf32>
    %30 = tpu.matmul %28, %29, %cst_22 {dimension_numbers = #tpu.dot_dimension_numbers<[1], [0], [0], [1], [0, 0, 1, 1], [], []>} : vector<512x128xbf16>, vector<128x128xbf16>, vector<512x128xf32> -> vector<512x128xf32>
    %31 = arith.truncf %27 : vector<512x128xf32> to vector<512x128xbf16>
    %c0_23 = arith.constant 0 : index
    %c0_24 = arith.constant 0 : index
    %32 = vector.load %arg10[%c0_23, %c0_24] : memref<128x128xbf16, #tpu.memory_space<vmem>>, vector<128x128xbf16>
    %cst_25 = arith.constant dense<0.000000e+00> : vector<512x128xf32>
    %33 = tpu.matmul %31, %32, %cst_25 {dimension_numbers = #tpu.dot_dimension_numbers<[1], [0], [0], [1], [0, 0, 1, 1], [], []>} : vector<512x128xbf16>, vector<128x128xbf16>, vector<512x128xf32> -> vector<512x128xf32>
    %34 = arith.addf %30, %33 : vector<512x128xf32>
    %c0_26 = arith.constant 0 : index
    %c0_27 = arith.constant 0 : index
    %35 = vector.load %arg11[%c0_26, %c0_27] : memref<1x128xf32, #tpu.memory_space<vmem>>, vector<1x128xf32>
    %36 = vector.broadcast %35 : vector<1x128xf32> to vector<512x128xf32>
    %37 = arith.mulf %34, %36 : vector<512x128xf32>
    %c0_28 = arith.constant 0 : index
    %c0_29 = arith.constant 0 : index
    %38 = vector.load %arg12[%c0_28, %c0_29] : memref<1x128xf32, #tpu.memory_space<vmem>>, vector<1x128xf32>
    %39 = vector.broadcast %38 : vector<1x128xf32> to vector<512x128xf32>
    %40 = arith.addf %37, %39 : vector<512x128xf32>
    %cst_30 = arith.constant 3.000000e+00 : f32
    %41 = vector.broadcast %cst_30 : f32 to vector<512x128xf32>
    %42 = arith.addf %40, %41 : vector<512x128xf32>
    %cst_31 = arith.constant 0.000000e+00 : f32
    %cst_32 = arith.constant 6.000000e+00 : f32
    %43 = vector.broadcast %cst_31 : f32 to vector<512x128xf32>
    %44 = arith.maximumf %43, %42 : vector<512x128xf32>
    %45 = vector.broadcast %cst_32 : f32 to vector<512x128xf32>
    %46 = arith.minimumf %45, %44 : vector<512x128xf32>
    %47 = arith.mulf %40, %46 : vector<512x128xf32>
    %cst_33 = arith.constant 0.166666672 : f32
    %48 = vector.broadcast %cst_33 : f32 to vector<512x128xf32>
    %49 = arith.mulf %47, %48 : vector<512x128xf32>
    %c0_34 = arith.constant 0 : index
    %c0_35 = arith.constant 0 : index
    %50 = vector.load %arg13[%c0_34, %c0_35] : memref<512x128xf32, #tpu.memory_space<vmem>>, vector<512x128xf32>
    tpu.vector_store %arg13[%c0_34, %c0_35], %49 {strides = array<i32>} : memref<512x128xf32, #tpu.memory_space<vmem>>, vector<512x128xf32>,
    return
  }
  func.func @transform_0(%arg0: i32) -> (i32, i32) {
    %c0_i32 = arith.constant 0 : i32
    %c0_i32_0 = arith.constant 0 : i32
    return %arg0, %c0_i32 : i32, i32
  }
  func.func @transform_1(%arg0: i32) -> (i32, i32) {
    %c0_i32 = arith.constant 0 : i32
    %c0_i32_0 = arith.constant 0 : i32
    return %arg0, %c0_i32 : i32, i32
  }
  func.func @transform_2(%arg0: i32) -> (i32, i32) {
    %c0_i32 = arith.constant 0 : i32
    %c0_i32_0 = arith.constant 0 : i32
    %c0_i32_1 = arith.constant 0 : i32
    return %c0_i32, %c0_i32_0 : i32, i32
  }
  func.func @transform_3(%arg0: i32) -> (i32, i32) {
    %c0_i32 = arith.constant 0 : i32
    %c0_i32_0 = arith.constant 0 : i32
    %c0_i32_1 = arith.constant 0 : i32
    return %c0_i32, %c0_i32_0 : i32, i32
  }
  func.func @transform_4(%arg0: i32) -> (i32, i32) {
    %c0_i32 = arith.constant 0 : i32
    %c0_i32_0 = arith.constant 0 : i32
    %c0_i32_1 = arith.constant 0 : i32
    return %c0_i32, %c0_i32_0 : i32, i32
  }
  func.func @transform_5(%arg0: i32) -> (i32, i32) {
    %c0_i32 = arith.constant 0 : i32
    %c0_i32_0 = arith.constant 0 : i32
    %c0_i32_1 = arith.constant 0 : i32
    return %c0_i32, %c0_i32_0 : i32, i32
  }
  func.func @transform_6(%arg0: i32) -> (i32, i32) {
    %c0_i32 = arith.constant 0 : i32
    %c0_i32_0 = arith.constant 0 : i32
    %c0_i32_1 = arith.constant 0 : i32
    return %c0_i32, %c0_i32_0 : i32, i32
  }
  func.func @transform_7(%arg0: i32) -> (i32, i32) {
    %c0_i32 = arith.constant 0 : i32
    %c0_i32_0 = arith.constant 0 : i32
    %c0_i32_1 = arith.constant 0 : i32
    return %c0_i32, %c0_i32_0 : i32, i32
  }
  func.func @transform_8(%arg0: i32) -> (i32, i32) {
    %c0_i32 = arith.constant 0 : i32
    %c0_i32_0 = arith.constant 0 : i32
    %c0_i32_1 = arith.constant 0 : i32
    return %c0_i32, %c0_i32_0 : i32, i32
  }
  func.func @transform_9(%arg0: i32) -> (i32, i32) {
    %c0_i32 = arith.constant 0 : i32
    %c0_i32_0 = arith.constant 0 : i32
    %c0_i32_1 = arith.constant 0 : i32
    return %c0_i32, %c0_i32_0 : i32, i32
  }
  func.func @transform_10(%arg0: i32) -> (i32, i32) {
    %c0_i32 = arith.constant 0 : i32
    %c0_i32_0 = arith.constant 0 : i32
    %c0_i32_1 = arith.constant 0 : i32
    return %c0_i32, %c0_i32_0 : i32, i32
  }
  func.func @transform_11(%arg0: i32) -> (i32, i32) {
    %c0_i32 = arith.constant 0 : i32
    %c0_i32_0 = arith.constant 0 : i32
    %c0_i32_1 = arith.constant 0 : i32
    return %c0_i32, %c0_i32_0 : i32, i32
  }
  func.func @transform_12(%arg0: i32) -> (i32, i32) {
    %c0_i32 = arith.constant 0 : i32
    %c0_i32_0 = arith.constant 0 : i32
    return %arg0, %c0_i32 : i32, i32
  }
}

</mosaic_0001>

<llo_original>
// kernel: _lambda_.4
$region0: #{_lambda_.4}
  #allocation0 [shape = 'u32[]', space=smem, size = 0x4, offset = 0x4, fixed_abs, tag = 'smem constant byte address 0x4 - core index']
  #allocation1 [shape = 'u32[144,128]{1,0:T(1,128)}', space=vmem, size = 0x12000, scoped, tag = 'internal scratch']
  %s0 = inlined_call_operand.vmem [shape: bf16[512,128], index: 0, kind: input, shape index: {}]
  %s1 = inlined_call_operand.vmem [shape: bf16[128,128], index: 1, kind: input, shape index: {}]
  %s2 = inlined_call_operand.vmem [shape: f32[1,128], index: 2, kind: input, shape index: {}]
  %s3 = inlined_call_operand.vmem [shape: f32[1,128], index: 3, kind: input, shape index: {}]
  %s4 = inlined_call_operand.vmem [shape: bf16[512,128], index: 4, kind: output, shape index: {}]
  %s5 = sld [smem:[#allocation0]]
  $region26: #{_lambda_.4} parent=0
    _
  %s7 = ssub.s32 1, %s5
  %s8 = scalar_select 0, %s7, %s5
  // Predicated region
  $region2: #{_lambda_.4} parent=0 // pred_check
    _
  $region3: #{_lambda_.4} parent=0 // pred_check_branch
    %10 = sbr.rel (0) target = $region5
  $region4: #{_lambda_.4} parent=0 // pred_region
    _
  $region5: #{_lambda_.4} parent=0 // pred_fallthru
    _
  // Predicated region
  $region6: #{_lambda_.4} parent=0 // pred_check
    _
  $region7: #{_lambda_.4} parent=0 // pred_check_branch
    %12 = sbr.rel (0) target = $region9
  $region8: #{_lambda_.4} parent=0 // pred_region
    _
  $region9: #{_lambda_.4} parent=0 // pred_fallthru
    _
  // Predicated region
  $region10: #{_lambda_.4} parent=0 // pred_check
    _
  $region11: #{_lambda_.4} parent=0 // pred_check_branch
    %14 = sbr.rel (0) target = $region13
  $region12: #{_lambda_.4} parent=0 // pred_region
    _
  $region13: #{_lambda_.4} parent=0 // pred_fallthru
    _
  // Predicated region
  $region14: #{_lambda_.4} parent=0 // pred_check
    _
  $region15: #{_lambda_.4} parent=0 // pred_check_branch
    %16 = sbr.rel (0) target = $region17
  $region16: #{_lambda_.4} parent=0 // pred_region
    _
  $region17: #{_lambda_.4} parent=0 // pred_fallthru
    _
  %v18 = vld [vmem:[%s0] sm:$0xf]
  %v19 = vld [vmem:[%s0 + $0x4] sm:$0xf]
  %v20 = vld [vmem:[%s0 + $0x8] sm:$0xf]
  %v21 = vld [vmem:[%s0 + $0xc] sm:$0xf]
  %v22 = vld [vmem:[%s0 + $0x10] sm:$0xf]
  %v23 = vld [vmem:[%s0 + $0x14] sm:$0xf]
  %v24 = vld [vmem:[%s0 + $0x18] sm:$0xf]
  %v25 = vld [vmem:[%s0 + $0x1c] sm:$0xf]
  %v26 = vld [vmem:[%s0 + $0x20] sm:$0xf]
  %v27 = vld [vmem:[%s0 + $0x24] sm:$0xf]
  %v28 = vld [vmem:[%s0 + $0x28] sm:$0xf]
  %v29 = vld [vmem:[%s0 + $0x2c] sm:$0xf]
  %v30 = vld [vmem:[%s0 + $0x30] sm:$0xf]
  %v31 = vld [vmem:[%s0 + $0x34] sm:$0xf]
  %v32 = vld [vmem:[%s0 + $0x38] sm:$0xf]
  %v33 = vld [vmem:[%s0 + $0x3c] sm:$0xf]
  %v34 = vld [vmem:[%s0 + $0x40] sm:$0xf]
  %v35 = vld [vmem:[%s0 + $0x44] sm:$0xf]
  %v36 = vld [vmem:[%s0 + $0x48] sm:$0xf]
  %v37 = vld [vmem:[%s0 + $0x4c] sm:$0xf]
  %v38 = vld [vmem:[%s0 + $0x50] sm:$0xf]
  %v39 = vld [vmem:[%s0 + $0x54] sm:$0xf]
  %v40 = vld [vmem:[%s0 + $0x58] sm:$0xf]
  %v41 = vld [vmem:[%s0 + $0x5c] sm:$0xf]
  %v42 = vld [vmem:[%s0 + $0x60] sm:$0xf]
  %v43 = vld [vmem:[%s0 + $0x64] sm:$0xf]
  %v44 = vld [vmem:[%s0 + $0x68] sm:$0xf]
  %v45 = vld [vmem:[%s0 + $0x6c] sm:$0xf]
  %v46 = vld [vmem:[%s0 + $0x70] sm:$0xf]
  %v47 = vld [vmem:[%s0 + $0x74] sm:$0xf]
  %v48 = vld [vmem:[%s0 + $0x78] sm:$0xf]
  %v49 = vld [vmem:[%s0 + $0x7c] sm:$0xf]
  %v50 = vld [vmem:[%s0 + $0x80] sm:$0xf]
  %v51 = vld [vmem:[%s0 + $0x84] sm:$0xf]
  %v52 = vld [vmem:[%s0 + $0x88] sm:$0xf]
  %v53 = vld [vmem:[%s0 + $0x8c] sm:$0xf]
  %v54 = vld [vmem:[%s0 + $0x90] sm:$0xf]
  %v55 = vld [vmem:[%s0 + $0x94] sm:$0xf]
  %v56 = vld [vmem:[%s0 + $0x98] sm:$0xf]
  %v57 = vld [vmem:[%s0 + $0x9c] sm:$0xf]
  %v58 = vld [vmem:[%s0 + $0xa0] sm:$0xf]
  %v59 = vld [vmem:[%s0 + $0xa4] sm:$0xf]
  %v60 = vld [vmem:[%s0 + $0xa8] sm:$0xf]
  %v61 = vld [vmem:[%s0 + $0xac] sm:$0xf]
  %v62 = vld [vmem:[%s0 + $0xb0] sm:$0xf]
  %v63 = vld [vmem:[%s0 + $0xb4] sm:$0xf]
  %v64 = vld [vmem:[%s0 + $0xb8] sm:$0xf]
  %v65 = vld [vmem:[%s0 + $0xbc] sm:$0xf]
  %v66 = vld [vmem:[%s0 + $0xc0] sm:$0xf]
  %v67 = vld [vmem:[%s0 + $0xc4] sm:$0xf]
  %v68 = vld [vmem:[%s0 + $0xc8] sm:$0xf]
  %v69 = vld [vmem:[%s0 + $0xcc] sm:$0xf]
  %v70 = vld [vmem:[%s0 + $0xd0] sm:$0xf]
  %v71 = vld [vmem:[%s0 + $0xd4] sm:$0xf]
  %v72 = vld [vmem:[%s0 + $0xd8] sm:$0xf]
  %v73 = vld [vmem:[%s0 + $0xdc] sm:$0xf]
  %v74 = vld [vmem:[%s0 + $0xe0] sm:$0xf]
  %v75 = vld [vmem:[%s0 + $0xe4] sm:$0xf]
  %v76 = vld [vmem:[%s0 + $0xe8] sm:$0xf]
  %v77 = vld [vmem:[%s0 + $0xec] sm:$0xf]
  %v78 = vld [vmem:[%s0 + $0xf0] sm:$0xf]
  %v79 = vld [vmem:[%s0 + $0xf4] sm:$0xf]
  %v80 = vld [vmem:[%s0 + $0xf8] sm:$0xf]
  %v81 = vld [vmem:[%s0 + $0xfc] sm:$0xf]
  %v82 = vld [vmem:[%s1] sm:$0xf]
  %v83 = vld [vmem:[%s1 + $0x4] sm:$0xf]
  %v84 = vld [vmem:[%s1 + $0x8] sm:$0xf]
  %v85 = vld [vmem:[%s1 + $0xc] sm:$0xf]
  %v86 = vld [vmem:[%s1 + $0x10] sm:$0xf]
  %v87 = vld [vmem:[%s1 + $0x14] sm:$0xf]
  %v88 = vld [vmem:[%s1 + $0x18] sm:$0xf]
  %v89 = vld [vmem:[%s1 + $0x1c] sm:$0xf]
  %v90 = vld [vmem:[%s1 + $0x20] sm:$0xf]
  %v91 = vld [vmem:[%s1 + $0x24] sm:$0xf]
  %v92 = vld [vmem:[%s1 + $0x28] sm:$0xf]
  %v93 = vld [vmem:[%s1 + $0x2c] sm:$0xf]
  %v94 = vld [vmem:[%s1 + $0x30] sm:$0xf]
  %v95 = vld [vmem:[%s1 + $0x34] sm:$0xf]
  %v96 = vld [vmem:[%s1 + $0x38] sm:$0xf]
  %v97 = vld [vmem:[%s1 + $0x3c] sm:$0xf]
  %v162 = vunpack.c.l.b16 %v18
  %v163 = vunpack.c.l.b16 %v19
  %v164 = vunpack.c.l.b16 %v20
  %v165 = vunpack.c.l.b16 %v21
  %v166 = vunpack.c.l.b16 %v22
  %v167 = vunpack.c.l.b16 %v23
  %v168 = vunpack.c.l.b16 %v24
  %v169 = vunpack.c.l.b16 %v25
  %v170 = vunpack.c.l.b16 %v26
  %v171 = vunpack.c.l.b16 %v27
  %v172 = vunpack.c.l.b16 %v28
  %v173 = vunpack.c.l.b16 %v29
  %v174 = vunpack.c.l.b16 %v30
  %v175 = vunpack.c.l.b16 %v31
  %v176 = vunpack.c.l.b16 %v32
  %v177 = vunpack.c.l.b16 %v33
  %v178 = vunpack.c.l.b16 %v34
  %v179 = vunpack.c.l.b16 %v35
  %v180 = vunpack.c.l.b16 %v36
  %v181 = vunpack.c.l.b16 %v37
  %v182 = vunpack.c.l.b16 %v38
  %v183 = vunpack.c.l.b16 %v39
  %v184 = vunpack.c.l.b16 %v40
  %v185 = vunpack.c.l.b16 %v41
  %v186 = vunpack.c.l.b16 %v42
  %v187 = vunpack.c.l.b16 %v43
  %v188 = vunpack.c.l.b16 %v44
  %v189 = vunpack.c.l.b16 %v45
  %v190 = vunpack.c.l.b16 %v46
  %v191 = vunpack.c.l.b16 %v47
  %v192 = vunpack.c.l.b16 %v48
  %v193 = vunpack.c.l.b16 %v49
  %v194 = vunpack.c.l.b16 %v50
  %v195 = vunpack.c.l.b16 %v51
  %v196 = vunpack.c.l.b16 %v52
  %v197 = vunpack.c.l.b16 %v53
  %v198 = vunpack.c.l.b16 %v54
  %v199 = vunpack.c.l.b16 %v55
  %v200 = vunpack.c.l.b16 %v56
  %v201 = vunpack.c.l.b16 %v57
  %v202 = vunpack.c.l.b16 %v58
  %v203 = vunpack.c.l.b16 %v59
  %v204 = vunpack.c.l.b16 %v60
  %v205 = vunpack.c.l.b16 %v61
  %v206 = vunpack.c.l.b16 %v62
  %v207 = vunpack.c.l.b16 %v63
  %v208 = vunpack.c.l.b16 %v64
  %v209 = vunpack.c.l.b16 %v65
  %v210 = vunpack.c.l.b16 %v66
  %v211 = vunpack.c.l.b16 %v67
  %v212 = vunpack.c.l.b16 %v68
  %v213 = vunpack.c.l.b16 %v69
  %v214 = vunpack.c.l.b16 %v70
  %v215 = vunpack.c.l.b16 %v71
  %v216 = vunpack.c.l.b16 %v72
  %v217 = vunpack.c.l.b16 %v73
  %v218 = vunpack.c.l.b16 %v74
  %v219 = vunpack.c.l.b16 %v75
  %v220 = vunpack.c.l.b16 %v76
  %v221 = vunpack.c.l.b16 %v77
  %v222 = vunpack.c.l.b16 %v78
  %v223 = vunpack.c.l.b16 %v79
  %v224 = vunpack.c.l.b16 %v80
  %v225 = vunpack.c.l.b16 %v81
  %v226 = vpack.c.b16 %v163, %v162
  %v227 = vpack.c.b16 %v165, %v164
  %v228 = vpack.c.b16 %v167, %v166
  %v229 = vpack.c.b16 %v169, %v168
  %v230 = vpack.c.b16 %v171, %v170
  %v231 = vpack.c.b16 %v173, %v172
  %v232 = vpack.c.b16 %v175, %v174
  %v233 = vpack.c.b16 %v177, %v176
  %v234 = vpack.c.b16 %v179, %v178
  %v235 = vpack.c.b16 %v181, %v180
  %v236 = vpack.c.b16 %v183, %v182
  %v237 = vpack.c.b16 %v185, %v184
  %v238 = vpack.c.b16 %v187, %v186
  %v239 = vpack.c.b16 %v189, %v188
  %v240 = vpack.c.b16 %v191, %v190
  %v241 = vpack.c.b16 %v193, %v192
  %v242 = vpack.c.b16 %v195, %v194
  %v243 = vpack.c.b16 %v197, %v196
  %v244 = vpack.c.b16 %v199, %v198
  %v245 = vpack.c.b16 %v201, %v200
  %v246 = vpack.c.b16 %v203, %v202
  %v247 = vpack.c.b16 %v205, %v204
  %v248 = vpack.c.b16 %v207, %v206
  %v249 = vpack.c.b16 %v209, %v208
  %v250 = vpack.c.b16 %v211, %v210
  %v251 = vpack.c.b16 %v213, %v212
  %v252 = vpack.c.b16 %v215, %v214
  %v253 = vpack.c.b16 %v217, %v216
  %v254 = vpack.c.b16 %v219, %v218
  %v255 = vpack.c.b16 %v221, %v220
  %v256 = vpack.c.b16 %v223, %v222
  %v257 = vpack.c.b16 %v225, %v224
  %v306 = vunpack.c.l.b16 %v82
  %v307 = vunpack.c.l.b16 %v83
  %v308 = vunpack.c.l.b16 %v84
  %v309 = vunpack.c.l.b16 %v85
  %v310 = vunpack.c.l.b16 %v86
  %v311 = vunpack.c.l.b16 %v87
  %v312 = vunpack.c.l.b16 %v88
  %v313 = vunpack.c.l.b16 %v89
  %v314 = vunpack.c.l.b16 %v90
  %v315 = vunpack.c.l.b16 %v91
  %v316 = vunpack.c.l.b16 %v92
  %v317 = vunpack.c.l.b16 %v93
  %v318 = vunpack.c.l.b16 %v94
  %v319 = vunpack.c.l.b16 %v95
  %v320 = vunpack.c.l.b16 %v96
  %v321 = vunpack.c.l.b16 %v97
  %v322 = vpack.c.b16 %v307, %v306
  %v323 = vpack.c.b16 %v309, %v308
  %v324 = vpack.c.b16 %v311, %v310
  %v325 = vpack.c.b16 %v313, %v312
  %v326 = vpack.c.b16 %v315, %v314
  %v327 = vpack.c.b16 %v317, %v316
  %v328 = vpack.c.b16 %v319, %v318
  %v329 = vpack.c.b16 %v321, %v320
  %338 = vmatprep.subr.bf16.mxu0 0
  %339 = vmatpush1.bf16.msra.mxu0 %v322
  %340 = vmatprep.subr.bf16.mxu0 0
  %341 = vmatpush1.bf16.msra.mxu0 %v323
  %342 = vmatprep.subr.bf16.mxu0 0
  %343 = vmatpush1.bf16.msra.mxu0 %v324
  %344 = vmatprep.subr.bf16.mxu0 0
  %345 = vmatpush1.bf16.msra.mxu0 %v325
  %346 = vmatprep.subr.bf16.mxu0 0
  %347 = vmatpush1.bf16.msra.mxu0 %v326
  %348 = vmatprep.subr.bf16.mxu0 0
  %349 = vmatpush1.bf16.msra.mxu0 %v327
  %350 = vmatprep.subr.bf16.mxu0 0
  %351 = vmatpush1.bf16.msra.mxu0 %v328
  %352 = vmatprep.subr.bf16.mxu0 0
  %353 = vmatpush1.bf16.msra.mxu0 %v329
  %354 = vmatprep.subr.bf16.mxu0 0
  %355 = vmatpush1.bf16.msra.mxu0 0
  %356 = vmatprep.subr.bf16.mxu0 0
  %357 = vmatpush1.bf16.msra.mxu0 0
  %358 = vmatprep.subr.bf16.mxu0 0
  %359 = vmatpush1.bf16.msra.mxu0 0
  %360 = vmatprep.subr.bf16.mxu0 0
  %361 = vmatpush1.bf16.msra.mxu0 0
  %362 = vmatprep.subr.bf16.mxu0 0
  %363 = vmatpush1.bf16.msra.mxu0 0
  %364 = vmatprep.subr.bf16.mxu0 0
  %365 = vmatpush1.bf16.msra.mxu0 0
  %366 = vmatprep.subr.bf16.mxu0 0
  %367 = vmatpush1.bf16.msra.mxu0 0
  %368 = vmatprep.subr.bf16.mxu0 0
  %369 = vmatpush1.bf16.msra.mxu0 0
  %370 = vmatprep.mubr.bf16.mxu0 0
  %371 = vmatmul.mubr.bf16.gmra.mrb[0].mxu0 %v226
  %v372 = vpop.f32.mrb[0].mxu0
  %v373 = vadd.f32 0.0, %v372
  %v374 = vpop.f32.mrb[0].mxu0
  %v375 = vpop.f32.mrb[0].mxu0
  %v376 = vadd.f32 0.0, %v375
  %v377 = vpop.f32.mrb[0].mxu0
  %378 = vmatprep.mubr.bf16.mxu0 0
  %379 = vmatmul.mubr.bf16.gmra.mrb[0].mxu0 %v227
  %v380 = vpop.f32.mrb[0].mxu0
  %v381 = vadd.f32 0.0, %v380
  %v382 = vpop.f32.mrb[0].mxu0
  %v383 = vpop.f32.mrb[0].mxu0
  %v384 = vadd.f32 0.0, %v383
  %v385 = vpop.f32.mrb[0].mxu0
  %386 = vmatprep.mubr.bf16.mxu0 0
  %387 = vmatmul.mubr.bf16.gmra.mrb[0].mxu0 %v228
  %v388 = vpop.f32.mrb[0].mxu0
  %v389 = vadd.f32 0.0, %v388
  %v390 = vpop.f32.mrb[0].mxu0
  %v391 = vpop.f32.mrb[0].mxu0
  %v392 = vadd.f32 0.0, %v391
  %v393 = vpop.f32.mrb[0].mxu0
  %394 = vmatprep.mubr.bf16.mxu0 0
  %395 = vmatmul.mubr.bf16.gmra.mrb[0].mxu0 %v229
  %v396 = vpop.f32.mrb[0].mxu0
  %v397 = vadd.f32 0.0, %v396
  %v398 = vpop.f32.mrb[0].mxu0
  %v399 = vpop.f32.mrb[0].mxu0
  %v400 = vadd.f32 0.0, %v399
  %v401 = vpop.f32.mrb[0].mxu0
  %402 = vmatprep.mubr.bf16.mxu0 0
  %403 = vmatmul.mubr.bf16.gmra.mrb[0].mxu0 %v230
  %v404 = vpop.f32.mrb[0].mxu0
  %v405 = vadd.f32 0.0, %v404
  %v406 = vpop.f32.mrb[0].mxu0
  %v407 = vpop.f32.mrb[0].mxu0
  %v408 = vadd.f32 0.0, %v407
  %v409 = vpop.f32.mrb[0].mxu0
  %410 = vmatprep.mubr.bf16.mxu0 0
  %411 = vmatmul.mubr.bf16.gmra.mrb[0].mxu0 %v231
  %v412 = vpop.f32.mrb[0].mxu0
  %v413 = vadd.f32 0.0, %v412
  %v414 = vpop.f32.mrb[0].mxu0
  %v415 = vpop.f32.mrb[0].mxu0
  %v416 = vadd.f32 0.0, %v415
  %v417 = vpop.f32.mrb[0].mxu0
  %418 = vmatprep.mubr.bf16.mxu0 0
  %419 = vmatmul.mubr.bf16.gmra.mrb[0].mxu0 %v232
  %v420 = vpop.f32.mrb[0].mxu0
  %v421 = vadd.f32 0.0, %v420
  %v422 = vpop.f32.mrb[0].mxu0
  %v423 = vpop.f32.mrb[0].mxu0
  %v424 = vadd.f32 0.0, %v423
  %v425 = vpop.f32.mrb[0].mxu0
  %426 = vmatprep.mubr.bf16.mxu0 0
  %427 = vmatmul.mubr.bf16.gmra.mrb[0].mxu0 %v233
  %v428 = vpop.f32.mrb[0].mxu0
  %v429 = vadd.f32 0.0, %v428
  %v430 = vpop.f32.mrb[0].mxu0
  %v431 = vpop.f32.mrb[0].mxu0
  %v432 = vadd.f32 0.0, %v431
  %v433 = vpop.f32.mrb[0].mxu0
  %434 = vmatprep.mubr.bf16.mxu0 0
  %435 = vmatmul.mubr.bf16.gmra.mrb[0].mxu0 %v234
  %v436 = vpop.f32.mrb[0].mxu0
  %v437 = vadd.f32 0.0, %v436
  %v438 = vpop.f32.mrb[0].mxu0
  %v439 = vpop.f32.mrb[0].mxu0
  %v440 = vadd.f32 0.0, %v439
  %v441 = vpop.f32.mrb[0].mxu0
  %442 = vmatprep.mubr.bf16.mxu0 0
  %443 = vmatmul.mubr.bf16.gmra.mrb[0].mxu0 %v235
  %v444 = vpop.f32.mrb[0].mxu0
  %v445 = vadd.f32 0.0, %v444
  %v446 = vpop.f32.mrb[0].mxu0
  %v447 = vpop.f32.mrb[0].mxu0
  %v448 = vadd.f32 0.0, %v447
  %v449 = vpop.f32.mrb[0].mxu0
  %450 = vmatprep.mubr.bf16.mxu0 0
  %451 = vmatmul.mubr.bf16.gmra.mrb[0].mxu0 %v236
  %v452 = vpop.f32.mrb[0].mxu0
  %v453 = vadd.f32 0.0, %v452
  %v454 = vpop.f32.mrb[0].mxu0
  %v455 = vpop.f32.mrb[0].mxu0
  %v456 = vadd.f32 0.0, %v455
  %v457 = vpop.f32.mrb[0].mxu0
  %458 = vmatprep.mubr.bf16.mxu0 0
  %459 = vmatmul.mubr.bf16.gmra.mrb[0].mxu0 %v237
  %v460 = vpop.f32.mrb[0].mxu0
  %v461 = vadd.f32 0.0, %v460
  %v462 = vpop.f32.mrb[0].mxu0
  %v463 = vpop.f32.mrb[0].mxu0
  %v464 = vadd.f32 0.0, %v463
  %v465 = vpop.f32.mrb[0].mxu0
  %466 = vmatprep.mubr.bf16.mxu0 0
  %467 = vmatmul.mubr.bf16.gmra.mrb[0].mxu0 %v238
  %v468 = vpop.f32.mrb[0].mxu0
  %v469 = vadd.f32 0.0, %v468
  %v470 = vpop.f32.mrb[0].mxu0
  %v471 = vpop.f32.mrb[0].mxu0
  %v472 = vadd.f32 0.0, %v471
  %v473 = vpop.f32.mrb[0].mxu0
  %474 = vmatprep.mubr.bf16.mxu0 0
  %475 = vmatmul.mubr.bf16.gmra.mrb[0].mxu0 %v239
  %v476 = vpop.f32.mrb[0].mxu0
  %v477 = vadd.f32 0.0, %v476
  %v478 = vpop.f32.mrb[0].mxu0
  %v479 = vpop.f32.mrb[0].mxu0
  %v480 = vadd.f32 0.0, %v479
  %v481 = vpop.f32.mrb[0].mxu0
  %482 = vmatprep.mubr.bf16.mxu0 0
  %483 = vmatmul.mubr.bf16.gmra.mrb[0].mxu0 %v240
  %v484 = vpop.f32.mrb[0].mxu0
  %v485 = vadd.f32 0.0, %v484
  %v486 = vpop.f32.mrb[0].mxu0
  %v487 = vpop.f32.mrb[0].mxu0
  %v488 = vadd.f32 0.0, %v487
  %v489 = vpop.f32.mrb[0].mxu0
  %490 = vmatprep.mubr.bf16.mxu0 0
  %491 = vmatmul.mubr.bf16.gmra.mrb[0].mxu0 %v241
  %v492 = vpop.f32.mrb[0].mxu0
  %v493 = vadd.f32 0.0, %v492
  %v494 = vpop.f32.mrb[0].mxu0
  %v495 = vpop.f32.mrb[0].mxu0
  %v496 = vadd.f32 0.0, %v495
  %v497 = vpop.f32.mrb[0].mxu0
  %498 = vmatprep.mubr.bf16.mxu0 0
  %499 = vmatmul.mubr.bf16.gmra.mrb[0].mxu0 %v242
  %v500 = vpop.f32.mrb[0].mxu0
  %v501 = vadd.f32 0.0, %v500
  %v502 = vpop.f32.mrb[0].mxu0
  %v503 = vpop.f32.mrb[0].mxu0
  %v504 = vadd.f32 0.0, %v503
  %v505 = vpop.f32.mrb[0].mxu0
  %506 = vmatprep.mubr.bf16.mxu0 0
  %507 = vmatmul.mubr.bf16.gmra.mrb[0].mxu0 %v243
  %v508 = vpop.f32.mrb[0].mxu0
  %v509 = vadd.f32 0.0, %v508
  %v510 = vpop.f32.mrb[0].mxu0
  %v511 = vpop.f32.mrb[0].mxu0
  %v512 = vadd.f32 0.0, %v511
  %v513 = vpop.f32.mrb[0].mxu0
  %514 = vmatprep.mubr.bf16.mxu0 0
  %515 = vmatmul.mubr.bf16.gmra.mrb[0].mxu0 %v244
  %v516 = vpop.f32.mrb[0].mxu0
  %v517 = vadd.f32 0.0, %v516
  %v518 = vpop.f32.mrb[0].mxu0
  %v519 = vpop.f32.mrb[0].mxu0
  %v520 = vadd.f32 0.0, %v519
  %v521 = vpop.f32.mrb[0].mxu0
  %522 = vmatprep.mubr.bf16.mxu0 0
  %523 = vmatmul.mubr.bf16.gmra.mrb[0].mxu0 %v245
  %v524 = vpop.f32.mrb[0].mxu0
  %v525 = vadd.f32 0.0, %v524
  %v526 = vpop.f32.mrb[0].mxu0
  %v527 = vpop.f32.mrb[0].mxu0
  %v528 = vadd.f32 0.0, %v527
  %v529 = vpop.f32.mrb[0].mxu0
  %530 = vmatprep.mubr.bf16.mxu0 0
  %531 = vmatmul.mubr.bf16.gmra.mrb[0].mxu0 %v246
  %v532 = vpop.f32.mrb[0].mxu0
  %v533 = vadd.f32 0.0, %v532
  %v534 = vpop.f32.mrb[0].mxu0
  %v535 = vpop.f32.mrb[0].mxu0
  %v536 = vadd.f32 0.0, %v535
  %v537 = vpop.f32.mrb[0].mxu0
  %538 = vmatprep.mubr.bf16.mxu0 0
  %539 = vmatmul.mubr.bf16.gmra.mrb[0].mxu0 %v247
  %v540 = vpop.f32.mrb[0].mxu0
  %v541 = vadd.f32 0.0, %v540
  %v542 = vpop.f32.mrb[0].mxu0
  %v543 = vpop.f32.mrb[0].mxu0
  %v544 = vadd.f32 0.0, %v543
  %v545 = vpop.f32.mrb[0].mxu0
  %546 = vmatprep.mubr.bf16.mxu0 0
  %547 = vmatmul.mubr.bf16.gmra.mrb[0].mxu0 %v248
  %v548 = vpop.f32.mrb[0].mxu0
  %v549 = vadd.f32 0.0, %v548
  %v550 = vpop.f32.mrb[0].mxu0
  %v551 = vpop.f32.mrb[0].mxu0
  %v552 = vadd.f32 0.0, %v551
  %v553 = vpop.f32.mrb[0].mxu0
  %554 = vmatprep.mubr.bf16.mxu0 0
  %555 = vmatmul.mubr.bf16.gmra.mrb[0].mxu0 %v249
  %v556 = vpop.f32.mrb[0].mxu0
  %v557 = vadd.f32 0.0, %v556
  %v558 = vpop.f32.mrb[0].mxu0
  %v559 = vpop.f32.mrb[0].mxu0
  %v560 = vadd.f32 0.0, %v559
  %v561 = vpop.f32.mrb[0].mxu0
  %562 = vmatprep.mubr.bf16.mxu0 0
  %563 = vmatmul.mubr.bf16.gmra.mrb[0].mxu0 %v250
  %v564 = vpop.f32.mrb[0].mxu0
  %v565 = vadd.f32 0.0, %v564
  %v566 = vpop.f32.mrb[0].mxu0
  %v567 = vpop.f32.mrb[0].mxu0
  %v568 = vadd.f32 0.0, %v567
  %v569 = vpop.f32.mrb[0].mxu0
  %570 = vmatprep.mubr.bf16.mxu0 0
  %571 = vmatmul.mubr.bf16.gmra.mrb[0].mxu0 %v251
  %v572 = vpop.f32.mrb[0].mxu0
  %v573 = vadd.f32 0.0, %v572
  %v574 = vpop.f32.mrb[0].mxu0
  %v575 = vpop.f32.mrb[0].mxu0
  %v576 = vadd.f32 0.0, %v575
  %v577 = vpop.f32.mrb[0].mxu0
  %578 = vmatprep.mubr.bf16.mxu0 0
  %579 = vmatmul.mubr.bf16.gmra.mrb[0].mxu0 %v252
  %v580 = vpop.f32.mrb[0].mxu0
  %v581 = vadd.f32 0.0, %v580
  %v582 = vpop.f32.mrb[0].mxu0
  %v583 = vpop.f32.mrb[0].mxu0
  %v584 = vadd.f32 0.0, %v583
  %v585 = vpop.f32.mrb[0].mxu0
  %586 = vmatprep.mubr.bf16.mxu0 0
  %587 = vmatmul.mubr.bf16.gmra.mrb[0].mxu0 %v253
  %v588 = vpop.f32.mrb[0].mxu0
  %v589 = vadd.f32 0.0, %v588
  %v590 = vpop.f32.mrb[0].mxu0
  %v591 = vpop.f32.mrb[0].mxu0
  %v592 = vadd.f32 0.0, %v591
  %v593 = vpop.f32.mrb[0].mxu0
  %594 = vmatprep.mubr.bf16.mxu0 0
  %595 = vmatmul.mubr.bf16.gmra.mrb[0].mxu0 %v254
  %v596 = vpop.f32.mrb[0].mxu0
  %v597 = vadd.f32 0.0, %v596
  %v598 = vpop.f32.mrb[0].mxu0
  %v599 = vpop.f32.mrb[0].mxu0
  %v600 = vadd.f32 0.0, %v599
  %v601 = vpop.f32.mrb[0].mxu0
  %602 = vmatprep.mubr.bf16.mxu0 0
  %603 = vmatmul.mubr.bf16.gmra.mrb[0].mxu0 %v255
  %v604 = vpop.f32.mrb[0].mxu0
  %v605 = vadd.f32 0.0, %v604
  %v606 = vpop.f32.mrb[0].mxu0
  %v607 = vpop.f32.mrb[0].mxu0
  %v608 = vadd.f32 0.0, %v607
  %v609 = vpop.f32.mrb[0].mxu0
  %610 = vmatprep.mubr.bf16.mxu0 0
  %611 = vmatmul.mubr.bf16.gmra.mrb[0].mxu0 %v256
  %v612 = vpop.f32.mrb[0].mxu0
  %v613 = vadd.f32 0.0, %v612
  %v614 = vpop.f32.mrb[0].mxu0
  %v615 = vpop.f32.mrb[0].mxu0
  %v616 = vadd.f32 0.0, %v615
  %v617 = vpop.f32.mrb[0].mxu0
  %618 = vmatprep.mubr.bf16.mxu0 0
  %619 = vmatmul.mubr.bf16.gmra.mrb[0].mxu0 %v257
  %v620 = vpop.f32.mrb[0].mxu0
  %v621 = vadd.f32 0.0, %v620
  %v622 = vpop.f32.mrb[0].mxu0
  %v623 = vpop.f32.mrb[0].mxu0
  %v624 = vadd.f32 0.0, %v623
  %v625 = vpop.f32.mrb[0].mxu0
  %626 = vdwg.mxu0
  %v627 = vld [vmem:[%s2] sm:$0x1]
  %v629 = vlaneseq
  %v630 = vshrl.u32 %v629, 7
  %v631 = vsub.s32 0, %v630
  %v632 = vrot.slane %v627, %v631
  %v634 = vmul.f32 %v373, %v632
  %v635 = vmul.f32 %v376, %v632
  %v636 = vmul.f32 %v381, %v632
  %v637 = vmul.f32 %v384, %v632
  %v638 = vmul.f32 %v389, %v632
  %v639 = vmul.f32 %v392, %v632
  %v640 = vmul.f32 %v397, %v632
  %v641 = vmul.f32 %v400, %v632
  %v642 = vmul.f32 %v405, %v632
  %v643 = vmul.f32 %v408, %v632
  %v644 = vmul.f32 %v413, %v632
  %v645 = vmul.f32 %v416, %v632
  %v646 = vmul.f32 %v421, %v632
  %v647 = vmul.f32 %v424, %v632
  %v648 = vmul.f32 %v429, %v632
  %v649 = vmul.f32 %v432, %v632
  %v650 = vmul.f32 %v437, %v632
  %v651 = vmul.f32 %v440, %v632
  %v652 = vmul.f32 %v445, %v632
  %v653 = vmul.f32 %v448, %v632
  %v654 = vmul.f32 %v453, %v632
  %v655 = vmul.f32 %v456, %v632
  %v656 = vmul.f32 %v461, %v632
  %v657 = vmul.f32 %v464, %v632
  %v658 = vmul.f32 %v469, %v632
  %v659 = vmul.f32 %v472, %v632
  %v660 = vmul.f32 %v477, %v632
  %v661 = vmul.f32 %v480, %v632
  %v662 = vmul.f32 %v485, %v632
  %v663 = vmul.f32 %v488, %v632
  %v664 = vmul.f32 %v493, %v632
  %v665 = vmul.f32 %v496, %v632
  %v666 = vmul.f32 %v501, %v632
  %v667 = vmul.f32 %v504, %v632
  %v668 = vmul.f32 %v509, %v632
  %v669 = vmul.f32 %v512, %v632
  %v670 = vmul.f32 %v517, %v632
  %v671 = vmul.f32 %v520, %v632
  %v672 = vmul.f32 %v525, %v632
  %v673 = vmul.f32 %v528, %v632
  %v674 = vmul.f32 %v533, %v632
  %v675 = vmul.f32 %v536, %v632
  %v676 = vmul.f32 %v541, %v632
  %v677 = vmul.f32 %v544, %v632
  %v678 = vmul.f32 %v549, %v632
  %v679 = vmul.f32 %v552, %v632
  %v680 = vmul.f32 %v557, %v632
  %v681 = vmul.f32 %v560, %v632
  %v682 = vmul.f32 %v565, %v632
  %v683 = vmul.f32 %v568, %v632
  %v684 = vmul.f32 %v573, %v632
  %v685 = vmul.f32 %v576, %v632
  %v686 = vmul.f32 %v581, %v632
  %v687 = vmul.f32 %v584, %v632
  %v688 = vmul.f32 %v589, %v632
  %v689 = vmul.f32 %v592, %v632
  %v690 = vmul.f32 %v597, %v632
  %v691 = vmul.f32 %v600, %v632
  %v692 = vmul.f32 %v605, %v632
  %v693 = vmul.f32 %v608, %v632
  %v694 = vmul.f32 %v613, %v632
  %v695 = vmul.f32 %v616, %v632
  %v696 = vmul.f32 %v621, %v632
  %v697 = vmul.f32 %v624, %v632
  %v698 = vld [vmem:[%s3] sm:$0x1]
  %v700 = vlaneseq
  %v701 = vshrl.u32 %v700, 7
  %v702 = vsub.s32 0, %v701
  %v703 = vrot.slane %v698, %v702
  %v705 = vadd.f32 %v634, %v703
  %v706 = vadd.f32 %v635, %v703
  %v707 = vadd.f32 %v636, %v703
  %v708 = vadd.f32 %v637, %v703
  %v709 = vadd.f32 %v638, %v703
  %v710 = vadd.f32 %v639, %v703
  %v711 = vadd.f32 %v640, %v703
  %v712 = vadd.f32 %v641, %v703
  %v713 = vadd.f32 %v642, %v703
  %v714 = vadd.f32 %v643, %v703
  %v715 = vadd.f32 %v644, %v703
  %v716 = vadd.f32 %v645, %v703
  %v717 = vadd.f32 %v646, %v703
  %v718 = vadd.f32 %v647, %v703
  %v719 = vadd.f32 %v648, %v703
  %v720 = vadd.f32 %v649, %v703
  %v721 = vadd.f32 %v650, %v703
  %v722 = vadd.f32 %v651, %v703
  %v723 = vadd.f32 %v652, %v703
  %v724 = vadd.f32 %v653, %v703
  %v725 = vadd.f32 %v654, %v703
  %v726 = vadd.f32 %v655, %v703
  %v727 = vadd.f32 %v656, %v703
  %v728 = vadd.f32 %v657, %v703
  %v729 = vadd.f32 %v658, %v703
  %v730 = vadd.f32 %v659, %v703
  %v731 = vadd.f32 %v660, %v703
  %v732 = vadd.f32 %v661, %v703
  %v733 = vadd.f32 %v662, %v703
  %v734 = vadd.f32 %v663, %v703
  %v735 = vadd.f32 %v664, %v703
  %v736 = vadd.f32 %v665, %v703
  %v737 = vadd.f32 %v666, %v703
  %v738 = vadd.f32 %v667, %v703
  %v739 = vadd.f32 %v668, %v703
  %v740 = vadd.f32 %v669, %v703
  %v741 = vadd.f32 %v670, %v703
  %v742 = vadd.f32 %v671, %v703
  %v743 = vadd.f32 %v672, %v703
  %v744 = vadd.f32 %v673, %v703
  %v745 = vadd.f32 %v674, %v703
  %v746 = vadd.f32 %v675, %v703
  %v747 = vadd.f32 %v676, %v703
  %v748 = vadd.f32 %v677, %v703
  %v749 = vadd.f32 %v678, %v703
  %v750 = vadd.f32 %v679, %v703
  %v751 = vadd.f32 %v680, %v703
  %v752 = vadd.f32 %v681, %v703
  %v753 = vadd.f32 %v682, %v703
  %v754 = vadd.f32 %v683, %v703
  %v755 = vadd.f32 %v684, %v703
  %v756 = vadd.f32 %v685, %v703
  %v757 = vadd.f32 %v686, %v703
  %v758 = vadd.f32 %v687, %v703
  %v759 = vadd.f32 %v688, %v703
  %v760 = vadd.f32 %v689, %v703
  %v761 = vadd.f32 %v690, %v703
  %v762 = vadd.f32 %v691, %v703
  %v763 = vadd.f32 %v692, %v703
  %v764 = vadd.f32 %v693, %v703
  %v765 = vadd.f32 %v694, %v703
  %v766 = vadd.f32 %v695, %v703
  %v767 = vadd.f32 %v696, %v703
  %v768 = vadd.f32 %v697, %v703
  %v769 = vadd.f32 %v705, 3.0
  %v770 = vadd.f32 %v706, 3.0
  %v771 = vadd.f32 %v707, 3.0
  %v772 = vadd.f32 %v708, 3.0
  %v773 = vadd.f32 %v709, 3.0
  %v774 = vadd.f32 %v710, 3.0
  %v775 = vadd.f32 %v711, 3.0
  %v776 = vadd.f32 %v712, 3.0
  %v777 = vadd.f32 %v713, 3.0
  %v778 = vadd.f32 %v714, 3.0
  %v779 = vadd.f32 %v715, 3.0
  %v780 = vadd.f32 %v716, 3.0
  %v781 = vadd.f32 %v717, 3.0
  %v782 = vadd.f32 %v718, 3.0
  %v783 = vadd.f32 %v719, 3.0
  %v784 = vadd.f32 %v720, 3.0
  %v785 = vadd.f32 %v721, 3.0
  %v786 = vadd.f32 %v722, 3.0
  %v787 = vadd.f32 %v723, 3.0
  %v788 = vadd.f32 %v724, 3.0
  %v789 = vadd.f32 %v725, 3.0
  %v790 = vadd.f32 %v726, 3.0
  %v791 = vadd.f32 %v727, 3.0
  %v792 = vadd.f32 %v728, 3.0
  %v793 = vadd.f32 %v729, 3.0
  %v794 = vadd.f32 %v730, 3.0
  %v795 = vadd.f32 %v731, 3.0
  %v796 = vadd.f32 %v732, 3.0
  %v797 = vadd.f32 %v733, 3.0
  %v798 = vadd.f32 %v734, 3.0
  %v799 = vadd.f32 %v735, 3.0
  %v800 = vadd.f32 %v736, 3.0
  %v801 = vadd.f32 %v737, 3.0
  %v802 = vadd.f32 %v738, 3.0
  %v803 = vadd.f32 %v739, 3.0
  %v804 = vadd.f32 %v740, 3.0
  %v805 = vadd.f32 %v741, 3.0
  %v806 = vadd.f32 %v742, 3.0
  %v807 = vadd.f32 %v743, 3.0
  %v808 = vadd.f32 %v744, 3.0
  %v809 = vadd.f32 %v745, 3.0
  %v810 = vadd.f32 %v746, 3.0
  %v811 = vadd.f32 %v747, 3.0
  %v812 = vadd.f32 %v748, 3.0
  %v813 = vadd.f32 %v749, 3.0
  %v814 = vadd.f32 %v750, 3.0
  %v815 = vadd.f32 %v751, 3.0
  %v816 = vadd.f32 %v752, 3.0
  %v817 = vadd.f32 %v753, 3.0
  %v818 = vadd.f32 %v754, 3.0
  %v819 = vadd.f32 %v755, 3.0
  %v820 = vadd.f32 %v756, 3.0
  %v821 = vadd.f32 %v757, 3.0
  %v822 = vadd.f32 %v758, 3.0
  %v823 = vadd.f32 %v759, 3.0
  %v824 = vadd.f32 %v760, 3.0
  %v825 = vadd.f32 %v761, 3.0
  %v826 = vadd.f32 %v762, 3.0
  %v827 = vadd.f32 %v763, 3.0
  %v828 = vadd.f32 %v764, 3.0
  %v829 = vadd.f32 %v765, 3.0
  %v830 = vadd.f32 %v766, 3.0
  %v831 = vadd.f32 %v767, 3.0
  %v832 = vadd.f32 %v768, 3.0
  %v833 = vmax.f32 %v769, 0.0
  %v834 = vmax.f32 %v770, 0.0
  %v835 = vmax.f32 %v771, 0.0
  %v836 = vmax.f32 %v772, 0.0
  %v837 = vmax.f32 %v773, 0.0
  %v838 = vmax.f32 %v774, 0.0
  %v839 = vmax.f32 %v775, 0.0
  %v840 = vmax.f32 %v776, 0.0
  %v841 = vmax.f32 %v777, 0.0
  %v842 = vmax.f32 %v778, 0.0
  %v843 = vmax.f32 %v779, 0.0
  %v844 = vmax.f32 %v780, 0.0
  %v845 = vmax.f32 %v781, 0.0
  %v846 = vmax.f32 %v782, 0.0
  %v847 = vmax.f32 %v783, 0.0
  %v848 = vmax.f32 %v784, 0.0
  %v849 = vmax.f32 %v785, 0.0
  %v850 = vmax.f32 %v786, 0.0
  %v851 = vmax.f32 %v787, 0.0
  %v852 = vmax.f32 %v788, 0.0
  %v853 = vmax.f32 %v789, 0.0
  %v854 = vmax.f32 %v790, 0.0
  %v855 = vmax.f32 %v791, 0.0
  %v856 = vmax.f32 %v792, 0.0
  %v857 = vmax.f32 %v793, 0.0
  %v858 = vmax.f32 %v794, 0.0
  %v859 = vmax.f32 %v795, 0.0
  %v860 = vmax.f32 %v796, 0.0
  %v861 = vmax.f32 %v797, 0.0
  %v862 = vmax.f32 %v798, 0.0
  %v863 = vmax.f32 %v799, 0.0
  %v864 = vmax.f32 %v800, 0.0
  %v865 = vmax.f32 %v801, 0.0
  %v866 = vmax.f32 %v802, 0.0
  %v867 = vmax.f32 %v803, 0.0
  %v868 = vmax.f32 %v804, 0.0
  %v869 = vmax.f32 %v805, 0.0
  %v870 = vmax.f32 %v806, 0.0
  %v871 = vmax.f32 %v807, 0.0
  %v872 = vmax.f32 %v808, 0.0
  %v873 = vmax.f32 %v809, 0.0
  %v874 = vmax.f32 %v810, 0.0
  %v875 = vmax.f32 %v811, 0.0
  %v876 = vmax.f32 %v812, 0.0
  %v877 = vmax.f32 %v813, 0.0
  %v878 = vmax.f32 %v814, 0.0
  %v879 = vmax.f32 %v815, 0.0
  %v880 = vmax.f32 %v816, 0.0
  %v881 = vmax.f32 %v817, 0.0
  %v882 = vmax.f32 %v818, 0.0
  %v883 = vmax.f32 %v819, 0.0
  %v884 = vmax.f32 %v820, 0.0
  %v885 = vmax.f32 %v821, 0.0
  %v886 = vmax.f32 %v822, 0.0
  %v887 = vmax.f32 %v823, 0.0
  %v888 = vmax.f32 %v824, 0.0
  %v889 = vmax.f32 %v825, 0.0
  %v890 = vmax.f32 %v826, 0.0
  %v891 = vmax.f32 %v827, 0.0
  %v892 = vmax.f32 %v828, 0.0
  %v893 = vmax.f32 %v829, 0.0
  %v894 = vmax.f32 %v830, 0.0
  %v895 = vmax.f32 %v831, 0.0
  %v896 = vmax.f32 %v832, 0.0
  %v897 = vmin.f32 %v833, 6.0
  %v898 = vmin.f32 %v834, 6.0
  %v899 = vmin.f32 %v835, 6.0
  %v900 = vmin.f32 %v836, 6.0
  %v901 = vmin.f32 %v837, 6.0
  %v902 = vmin.f32 %v838, 6.0
  %v903 = vmin.f32 %v839, 6.0
  %v904 = vmin.f32 %v840, 6.0
  %v905 = vmin.f32 %v841, 6.0
  %v906 = vmin.f32 %v842, 6.0
  %v907 = vmin.f32 %v843, 6.0
  %v908 = vmin.f32 %v844, 6.0
  %v909 = vmin.f32 %v845, 6.0
  %v910 = vmin.f32 %v846, 6.0
  %v911 = vmin.f32 %v847, 6.0
  %v912 = vmin.f32 %v848, 6.0
  %v913 = vmin.f32 %v849, 6.0
  %v914 = vmin.f32 %v850, 6.0
  %v915 = vmin.f32 %v851, 6.0
  %v916 = vmin.f32 %v852, 6.0
  %v917 = vmin.f32 %v853, 6.0
  %v918 = vmin.f32 %v854, 6.0
  %v919 = vmin.f32 %v855, 6.0
  %v920 = vmin.f32 %v856, 6.0
  %v921 = vmin.f32 %v857, 6.0
  %v922 = vmin.f32 %v858, 6.0
  %v923 = vmin.f32 %v859, 6.0
  %v924 = vmin.f32 %v860, 6.0
  %v925 = vmin.f32 %v861, 6.0
  %v926 = vmin.f32 %v862, 6.0
  %v927 = vmin.f32 %v863, 6.0
  %v928 = vmin.f32 %v864, 6.0
  %v929 = vmin.f32 %v865, 6.0
  %v930 = vmin.f32 %v866, 6.0
  %v931 = vmin.f32 %v867, 6.0
  %v932 = vmin.f32 %v868, 6.0
  %v933 = vmin.f32 %v869, 6.0
  %v934 = vmin.f32 %v870, 6.0
  %v935 = vmin.f32 %v871, 6.0
  %v936 = vmin.f32 %v872, 6.0
  %v937 = vmin.f32 %v873, 6.0
  %v938 = vmin.f32 %v874, 6.0
  %v939 = vmin.f32 %v875, 6.0
  %v940 = vmin.f32 %v876, 6.0
  %v941 = vmin.f32 %v877, 6.0
  %v942 = vmin.f32 %v878, 6.0
  %v943 = vmin.f32 %v879, 6.0
  %v944 = vmin.f32 %v880, 6.0
  %v945 = vmin.f32 %v881, 6.0
  %v946 = vmin.f32 %v882, 6.0
  %v947 = vmin.f32 %v883, 6.0
  %v948 = vmin.f32 %v884, 6.0
  %v949 = vmin.f32 %v885, 6.0
  %v950 = vmin.f32 %v886, 6.0
  %v951 = vmin.f32 %v887, 6.0
  %v952 = vmin.f32 %v888, 6.0
  %v953 = vmin.f32 %v889, 6.0
  %v954 = vmin.f32 %v890, 6.0
  %v955 = vmin.f32 %v891, 6.0
  %v956 = vmin.f32 %v892, 6.0
  %v957 = vmin.f32 %v893, 6.0
  %v958 = vmin.f32 %v894, 6.0
  %v959 = vmin.f32 %v895, 6.0
  %v960 = vmin.f32 %v896, 6.0
  %v961 = vmul.f32 %v705, %v897
  %v962 = vmul.f32 %v706, %v898
  %v963 = vmul.f32 %v707, %v899
  %v964 = vmul.f32 %v708, %v900
  %v965 = vmul.f32 %v709, %v901
  %v966 = vmul.f32 %v710, %v902
  %v967 = vmul.f32 %v711, %v903
  %v968 = vmul.f32 %v712, %v904
  %v969 = vmul.f32 %v713, %v905
  %v970 = vmul.f32 %v714, %v906
  %v971 = vmul.f32 %v715, %v907
  %v972 = vmul.f32 %v716, %v908
  %v973 = vmul.f32 %v717, %v909
  %v974 = vmul.f32 %v718, %v910
  %v975 = vmul.f32 %v719, %v911
  %v976 = vmul.f32 %v720, %v912
  %v977 = vmul.f32 %v721, %v913
  %v978 = vmul.f32 %v722, %v914
  %v979 = vmul.f32 %v723, %v915
  %v980 = vmul.f32 %v724, %v916
  %v981 = vmul.f32 %v725, %v917
  %v982 = vmul.f32 %v726, %v918
  %v983 = vmul.f32 %v727, %v919
  %v984 = vmul.f32 %v728, %v920
  %v985 = vmul.f32 %v729, %v921
  %v986 = vmul.f32 %v730, %v922
  %v987 = vmul.f32 %v731, %v923
  %v988 = vmul.f32 %v732, %v924
  %v989 = vmul.f32 %v733, %v925
  %v990 = vmul.f32 %v734, %v926
  %v991 = vmul.f32 %v735, %v927
  %v992 = vmul.f32 %v736, %v928
  %v993 = vmul.f32 %v737, %v929
  %v994 = vmul.f32 %v738, %v930
  %v995 = vmul.f32 %v739, %v931
  %v996 = vmul.f32 %v740, %v932
  %v997 = vmul.f32 %v741, %v933
  %v998 = vmul.f32 %v742, %v934
  %v999 = vmul.f32 %v743, %v935
  %v1000 = vmul.f32 %v744, %v936
  %v1001 = vmul.f32 %v745, %v937
  %v1002 = vmul.f32 %v746, %v938
  %v1003 = vmul.f32 %v747, %v939
  %v1004 = vmul.f32 %v748, %v940
  %v1005 = vmul.f32 %v749, %v941
  %v1006 = vmul.f32 %v750, %v942
  %v1007 = vmul.f32 %v751, %v943
  %v1008 = vmul.f32 %v752, %v944
  %v1009 = vmul.f32 %v753, %v945
  %v1010 = vmul.f32 %v754, %v946
  %v1011 = vmul.f32 %v755, %v947
  %v1012 = vmul.f32 %v756, %v948
  %v1013 = vmul.f32 %v757, %v949
  %v1014 = vmul.f32 %v758, %v950
  %v1015 = vmul.f32 %v759, %v951
  %v1016 = vmul.f32 %v760, %v952
  %v1017 = vmul.f32 %v761, %v953
  %v1018 = vmul.f32 %v762, %v954
  %v1019 = vmul.f32 %v763, %v955
  %v1020 = vmul.f32 %v764, %v956
  %v1021 = vmul.f32 %v765, %v957
  %v1022 = vmul.f32 %v766, %v958
  %v1023 = vmul.f32 %v767, %v959
  %v1024 = vmul.f32 %v768, %v960
  %v1025 = vmul.f32 %v961, 0.16666667
  %v1026 = vmul.f32 %v962, 0.16666667
  %v1027 = vmul.f32 %v963, 0.16666667
  %v1028 = vmul.f32 %v964, 0.16666667
  %v1029 = vmul.f32 %v965, 0.16666667
  %v1030 = vmul.f32 %v966, 0.16666667
  %v1031 = vmul.f32 %v967, 0.16666667
  %v1032 = vmul.f32 %v968, 0.16666667
  %v1033 = vmul.f32 %v969, 0.16666667
  %v1034 = vmul.f32 %v970, 0.16666667
  %v1035 = vmul.f32 %v971, 0.16666667
  %v1036 = vmul.f32 %v972, 0.16666667
  %v1037 = vmul.f32 %v973, 0.16666667
  %v1038 = vmul.f32 %v974, 0.16666667
  %v1039 = vmul.f32 %v975, 0.16666667
  %v1040 = vmul.f32 %v976, 0.16666667
  %v1041 = vmul.f32 %v977, 0.16666667
  %v1042 = vmul.f32 %v978, 0.16666667
  %v1043 = vmul.f32 %v979, 0.16666667
  %v1044 = vmul.f32 %v980, 0.16666667
  %v1045 = vmul.f32 %v981, 0.16666667
  %v1046 = vmul.f32 %v982, 0.16666667
  %v1047 = vmul.f32 %v983, 0.16666667
  %v1048 = vmul.f32 %v984, 0.16666667
  %v1049 = vmul.f32 %v985, 0.16666667
  %v1050 = vmul.f32 %v986, 0.16666667
  %v1051 = vmul.f32 %v987, 0.16666667
  %v1052 = vmul.f32 %v988, 0.16666667
  %v1053 = vmul.f32 %v989, 0.16666667
  %v1054 = vmul.f32 %v990, 0.16666667
  %v1055 = vmul.f32 %v991, 0.16666667
  %v1056 = vmul.f32 %v992, 0.16666667
  %v1057 = vmul.f32 %v993, 0.16666667
  %v1058 = vmul.f32 %v994, 0.16666667
  %v1059 = vmul.f32 %v995, 0.16666667
  %v1060 = vmul.f32 %v996, 0.16666667
  %v1061 = vmul.f32 %v997, 0.16666667
  %v1062 = vmul.f32 %v998, 0.16666667
  %v1063 = vmul.f32 %v999, 0.16666667
  %v1064 = vmul.f32 %v1000, 0.16666667
  %v1065 = vmul.f32 %v1001, 0.16666667
  %v1066 = vmul.f32 %v1002, 0.16666667
  %v1067 = vmul.f32 %v1003, 0.16666667
  %v1068 = vmul.f32 %v1004, 0.16666667
  %v1069 = vmul.f32 %v1005, 0.16666667
  %v1070 = vmul.f32 %v1006, 0.16666667
  %v1071 = vmul.f32 %v1007, 0.16666667
  %v1072 = vmul.f32 %v1008, 0.16666667
  %v1073 = vmul.f32 %v1009, 0.16666667
  %v1074 = vmul.f32 %v1010, 0.16666667
  %v1075 = vmul.f32 %v1011, 0.16666667
  %v1076 = vmul.f32 %v1012, 0.16666667
  %v1077 = vmul.f32 %v1013, 0.16666667
  %v1078 = vmul.f32 %v1014, 0.16666667
  %v1079 = vmul.f32 %v1015, 0.16666667
  %v1080 = vmul.f32 %v1016, 0.16666667
  %v1081 = vmul.f32 %v1017, 0.16666667
  %v1082 = vmul.f32 %v1018, 0.16666667
  %v1083 = vmul.f32 %v1019, 0.16666667
  %v1084 = vmul.f32 %v1020, 0.16666667
  %v1085 = vmul.f32 %v1021, 0.16666667
  %v1086 = vmul.f32 %v1022, 0.16666667
  %v1087 = vmul.f32 %v1023, 0.16666667
  %v1088 = vmul.f32 %v1024, 0.16666667
  %v1089 = vpack.c.bf16 %v1026, %v1025
  %v1090 = vpack.c.bf16 %v1028, %v1027
  %v1091 = vpack.c.bf16 %v1030, %v1029
  %v1092 = vpack.c.bf16 %v1032, %v1031
  %v1093 = vpack.c.bf16 %v1034, %v1033
  %v1094 = vpack.c.bf16 %v1036, %v1035
  %v1095 = vpack.c.bf16 %v1038, %v1037
  %v1096 = vpack.c.bf16 %v1040, %v1039
  %v1097 = vpack.c.bf16 %v1042, %v1041
  %v1098 = vpack.c.bf16 %v1044, %v1043
  %v1099 = vpack.c.bf16 %v1046, %v1045
  %v1100 = vpack.c.bf16 %v1048, %v1047
  %v1101 = vpack.c.bf16 %v1050, %v1049
  %v1102 = vpack.c.bf16 %v1052, %v1051
  %v1103 = vpack.c.bf16 %v1054, %v1053
  %v1104 = vpack.c.bf16 %v1056, %v1055
  %v1105 = vpack.c.bf16 %v1058, %v1057
  %v1106 = vpack.c.bf16 %v1060, %v1059
  %v1107 = vpack.c.bf16 %v1062, %v1061
  %v1108 = vpack.c.bf16 %v1064, %v1063
  %v1109 = vpack.c.bf16 %v1066, %v1065
  %v1110 = vpack.c.bf16 %v1068, %v1067
  %v1111 = vpack.c.bf16 %v1070, %v1069
  %v1112 = vpack.c.bf16 %v1072, %v1071
  %v1113 = vpack.c.bf16 %v1074, %v1073
  %v1114 = vpack.c.bf16 %v1076, %v1075
  %v1115 = vpack.c.bf16 %v1078, %v1077
  %v1116 = vpack.c.bf16 %v1080, %v1079
  %v1117 = vpack.c.bf16 %v1082, %v1081
  %v1118 = vpack.c.bf16 %v1084, %v1083
  %v1119 = vpack.c.bf16 %v1086, %v1085
  %v1120 = vpack.c.bf16 %v1088, %v1087
  %v1153 = vunpack.c.l.b16 %v1089
  %v1154 = vunpack.c.h.b16 %v1089
  %v1155 = vunpack.c.l.b16 %v1090
  %v1156 = vunpack.c.h.b16 %v1090
  %v1157 = vunpack.c.l.b16 %v1091
  %v1158 = vunpack.c.h.b16 %v1091
  %v1159 = vunpack.c.l.b16 %v1092
  %v1160 = vunpack.c.h.b16 %v1092
  %v1161 = vunpack.c.l.b16 %v1093
  %v1162 = vunpack.c.h.b16 %v1093
  %v1163 = vunpack.c.l.b16 %v1094
  %v1164 = vunpack.c.h.b16 %v1094
  %v1165 = vunpack.c.l.b16 %v1095
  %v1166 = vunpack.c.h.b16 %v1095
  %v1167 = vunpack.c.l.b16 %v1096
  %v1168 = vunpack.c.h.b16 %v1096
  %v1169 = vunpack.c.l.b16 %v1097
  %v1170 = vunpack.c.h.b16 %v1097
  %v1171 = vunpack.c.l.b16 %v1098
  %v1172 = vunpack.c.h.b16 %v1098
  %v1173 = vunpack.c.l.b16 %v1099
  %v1174 = vunpack.c.h.b16 %v1099
  %v1175 = vunpack.c.l.b16 %v1100
  %v1176 = vunpack.c.h.b16 %v1100
  %v1177 = vunpack.c.l.b16 %v1101
  %v1178 = vunpack.c.h.b16 %v1101
  %v1179 = vunpack.c.l.b16 %v1102
  %v1180 = vunpack.c.h.b16 %v1102
  %v1181 = vunpack.c.l.b16 %v1103
  %v1182 = vunpack.c.h.b16 %v1103
  %v1183 = vunpack.c.l.b16 %v1104
  %v1184 = vunpack.c.h.b16 %v1104
  %v1185 = vunpack.c.l.b16 %v1105
  %v1186 = vunpack.c.h.b16 %v1105
  %v1187 = vunpack.c.l.b16 %v1106
  %v1188 = vunpack.c.h.b16 %v1106
  %v1189 = vunpack.c.l.b16 %v1107
  %v1190 = vunpack.c.h.b16 %v1107
  %v1191 = vunpack.c.l.b16 %v1108
  %v1192 = vunpack.c.h.b16 %v1108
  %v1193 = vunpack.c.l.b16 %v1109
  %v1194 = vunpack.c.h.b16 %v1109
  %v1195 = vunpack.c.l.b16 %v1110
  %v1196 = vunpack.c.h.b16 %v1110
  %v1197 = vunpack.c.l.b16 %v1111
  %v1198 = vunpack.c.h.b16 %v1111
  %v1199 = vunpack.c.l.b16 %v1112
  %v1200 = vunpack.c.h.b16 %v1112
  %v1201 = vunpack.c.l.b16 %v1113
  %v1202 = vunpack.c.h.b16 %v1113
  %v1203 = vunpack.c.l.b16 %v1114
  %v1204 = vunpack.c.h.b16 %v1114
  %v1205 = vunpack.c.l.b16 %v1115
  %v1206 = vunpack.c.h.b16 %v1115
  %v1207 = vunpack.c.l.b16 %v1116
  %v1208 = vunpack.c.h.b16 %v1116
  %v1209 = vunpack.c.l.b16 %v1117
  %v1210 = vunpack.c.h.b16 %v1117
  %v1211 = vunpack.c.l.b16 %v1118
  %v1212 = vunpack.c.h.b16 %v1118
  %v1213 = vunpack.c.l.b16 %v1119
  %v1214 = vunpack.c.h.b16 %v1119
  %v1215 = vunpack.c.l.b16 %v1120
  %v1216 = vunpack.c.h.b16 %v1120
  %v1217 = vpack.c.b16 %v1153, %v1153
  %v1218 = vpack.c.b16 %v1154, %v1154
  %v1219 = vpack.c.b16 %v1155, %v1155
  %v1220 = vpack.c.b16 %v1156, %v1156
  %v1221 = vpack.c.b16 %v1157, %v1157
  %v1222 = vpack.c.b16 %v1158, %v1158
  %v1223 = vpack.c.b16 %v1159, %v1159
  %v1224 = vpack.c.b16 %v1160, %v1160
  %v1225 = vpack.c.b16 %v1161, %v1161
  %v1226 = vpack.c.b16 %v1162, %v1162
  %v1227 = vpack.c.b16 %v1163, %v1163
  %v1228 = vpack.c.b16 %v1164, %v1164
  %v1229 = vpack.c.b16 %v1165, %v1165
  %v1230 = vpack.c.b16 %v1166, %v1166
  %v1231 = vpack.c.b16 %v1167, %v1167
  %v1232 = vpack.c.b16 %v1168, %v1168
  %v1233 = vpack.c.b16 %v1169, %v1169
  %v1234 = vpack.c.b16 %v1170, %v1170
  %v1235 = vpack.c.b16 %v1171, %v1171
  %v1236 = vpack.c.b16 %v1172, %v1172
  %v1237 = vpack.c.b16 %v1173, %v1173
  %v1238 = vpack.c.b16 %v1174, %v1174
  %v1239 = vpack.c.b16 %v1175, %v1175
  %v1240 = vpack.c.b16 %v1176, %v1176
  %v1241 = vpack.c.b16 %v1177, %v1177
  %v1242 = vpack.c.b16 %v1178, %v1178
  %v1243 = vpack.c.b16 %v1179, %v1179
  %v1244 = vpack.c.b16 %v1180, %v1180
  %v1245 = vpack.c.b16 %v1181, %v1181
  %v1246 = vpack.c.b16 %v1182, %v1182
  %v1247 = vpack.c.b16 %v1183, %v1183
  %v1248 = vpack.c.b16 %v1184, %v1184
  %v1249 = vpack.c.b16 %v1185, %v1185
  %v1250 = vpack.c.b16 %v1186, %v1186
  %v1251 = vpack.c.b16 %v1187, %v1187
  %v1252 = vpack.c.b16 %v1188, %v1188
  %v1253 = vpack.c.b16 %v1189, %v1189
  %v1254 = vpack.c.b16 %v1190, %v1190
  %v1255 = vpack.c.b16 %v1191, %v1191
  %v1256 = vpack.c.b16 %v1192, %v1192
  %v1257 = vpack.c.b16 %v1193, %v1193
  %v1258 = vpack.c.b16 %v1194, %v1194
  %v1259 = vpack.c.b16 %v1195, %v1195
  %v1260 = vpack.c.b16 %v1196, %v1196
  %v1261 = vpack.c.b16 %v1197, %v1197
  %v1262 = vpack.c.b16 %v1198, %v1198
  %v1263 = vpack.c.b16 %v1199, %v1199
  %v1264 = vpack.c.b16 %v1200, %v1200
  %v1265 = vpack.c.b16 %v1201, %v1201
  %v1266 = vpack.c.b16 %v1202, %v1202
  %v1267 = vpack.c.b16 %v1203, %v1203
  %v1268 = vpack.c.b16 %v1204, %v1204
  %v1269 = vpack.c.b16 %v1205, %v1205
  %v1270 = vpack.c.b16 %v1206, %v1206
  %v1271 = vpack.c.b16 %v1207, %v1207
  %v1272 = vpack.c.b16 %v1208, %v1208
  %v1273 = vpack.c.b16 %v1209, %v1209
  %v1274 = vpack.c.b16 %v1210, %v1210
  %v1275 = vpack.c.b16 %v1211, %v1211
  %v1276 = vpack.c.b16 %v1212, %v1212
  %v1277 = vpack.c.b16 %v1213, %v1213
  %v1278 = vpack.c.b16 %v1214, %v1214
  %v1279 = vpack.c.b16 %v1215, %v1215
  %v1280 = vpack.c.b16 %v1216, %v1216
  %1345 = vst [vmem:[%s4] sm:$0xf] %v1217
  %1346 = vst [vmem:[%s4 + $0x4] sm:$0xf] %v1218
  %1347 = vst [vmem:[%s4 + $0x8] sm:$0xf] %v1219
  %1348 = vst [vmem:[%s4 + $0xc] sm:$0xf] %v1220
  %1349 = vst [vmem:[%s4 + $0x10] sm:$0xf] %v1221
  %1350 = vst [vmem:[%s4 + $0x14] sm:$0xf] %v1222
  %1351 = vst [vmem:[%s4 + $0x18] sm:$0xf] %v1223
  %1352 = vst [vmem:[%s4 + $0x1c] sm:$0xf] %v1224
  %1353 = vst [vmem:[%s4 + $0x20] sm:$0xf] %v1225
  %1354 = vst [vmem:[%s4 + $0x24] sm:$0xf] %v1226
  %1355 = vst [vmem:[%s4 + $0x28] sm:$0xf] %v1227
  %1356 = vst [vmem:[%s4 + $0x2c] sm:$0xf] %v1228
  %1357 = vst [vmem:[%s4 + $0x30] sm:$0xf] %v1229
  %1358 = vst [vmem:[%s4 + $0x34] sm:$0xf] %v1230
  %1359 = vst [vmem:[%s4 + $0x38] sm:$0xf] %v1231
  %1360 = vst [vmem:[%s4 + $0x3c] sm:$0xf] %v1232
  %1361 = vst [vmem:[%s4 + $0x40] sm:$0xf] %v1233
  %1362 = vst [vmem:[%s4 + $0x44] sm:$0xf] %v1234
  %1363 = vst [vmem:[%s4 + $0x48] sm:$0xf] %v1235
  %1364 = vst [vmem:[%s4 + $0x4c] sm:$0xf] %v1236
  %1365 = vst [vmem:[%s4 + $0x50] sm:$0xf] %v1237
  %1366 = vst [vmem:[%s4 + $0x54] sm:$0xf] %v1238
  %1367 = vst [vmem:[%s4 + $0x58] sm:$0xf] %v1239
  %1368 = vst [vmem:[%s4 + $0x5c] sm:$0xf] %v1240
  %1369 = vst [vmem:[%s4 + $0x60] sm:$0xf] %v1241
  %1370 = vst [vmem:[%s4 + $0x64] sm:$0xf] %v1242
  %1371 = vst [vmem:[%s4 + $0x68] sm:$0xf] %v1243
  %1372 = vst [vmem:[%s4 + $0x6c] sm:$0xf] %v1244
  %1373 = vst [vmem:[%s4 + $0x70] sm:$0xf] %v1245
  %1374 = vst [vmem:[%s4 + $0x74] sm:$0xf] %v1246
  %1375 = vst [vmem:[%s4 + $0x78] sm:$0xf] %v1247
  %1376 = vst [vmem:[%s4 + $0x7c] sm:$0xf] %v1248
  %1377 = vst [vmem:[%s4 + $0x80] sm:$0xf] %v1249
  %1378 = vst [vmem:[%s4 + $0x84] sm:$0xf] %v1250
  %1379 = vst [vmem:[%s4 + $0x88] sm:$0xf] %v1251
  %1380 = vst [vmem:[%s4 + $0x8c] sm:$0xf] %v1252
  %1381 = vst [vmem:[%s4 + $0x90] sm:$0xf] %v1253
  %1382 = vst [vmem:[%s4 + $0x94] sm:$0xf] %v1254
  %1383 = vst [vmem:[%s4 + $0x98] sm:$0xf] %v1255
  %1384 = vst [vmem:[%s4 + $0x9c] sm:$0xf] %v1256
  %1385 = vst [vmem:[%s4 + $0xa0] sm:$0xf] %v1257
  %1386 = vst [vmem:[%s4 + $0xa4] sm:$0xf] %v1258
  %1387 = vst [vmem:[%s4 + $0xa8] sm:$0xf] %v1259
  %1388 = vst [vmem:[%s4 + $0xac] sm:$0xf] %v1260
  %1389 = vst [vmem:[%s4 + $0xb0] sm:$0xf] %v1261
  %1390 = vst [vmem:[%s4 + $0xb4] sm:$0xf] %v1262
  %1391 = vst [vmem:[%s4 + $0xb8] sm:$0xf] %v1263
  %1392 = vst [vmem:[%s4 + $0xbc] sm:$0xf] %v1264
  %1393 = vst [vmem:[%s4 + $0xc0] sm:$0xf] %v1265
  %1394 = vst [vmem:[%s4 + $0xc4] sm:$0xf] %v1266
  %1395 = vst [vmem:[%s4 + $0xc8] sm:$0xf] %v1267
  %1396 = vst [vmem:[%s4 + $0xcc] sm:$0xf] %v1268
  %1397 = vst [vmem:[%s4 + $0xd0] sm:$0xf] %v1269
  %1398 = vst [vmem:[%s4 + $0xd4] sm:$0xf] %v1270
  %1399 = vst [vmem:[%s4 + $0xd8] sm:$0xf] %v1271
  %1400 = vst [vmem:[%s4 + $0xdc] sm:$0xf] %v1272
  %1401 = vst [vmem:[%s4 + $0xe0] sm:$0xf] %v1273
  %1402 = vst [vmem:[%s4 + $0xe4] sm:$0xf] %v1274
  %1403 = vst [vmem:[%s4 + $0xe8] sm:$0xf] %v1275
  %1404 = vst [vmem:[%s4 + $0xec] sm:$0xf] %v1276
  %1405 = vst [vmem:[%s4 + $0xf0] sm:$0xf] %v1277
  %1406 = vst [vmem:[%s4 + $0xf4] sm:$0xf] %v1278
  %1407 = vst [vmem:[%s4 + $0xf8] sm:$0xf] %v1279
  %1408 = vst [vmem:[%s4 + $0xfc] sm:$0xf] %v1280
  // Predicated region
  $region18: #{_lambda_.4} parent=0 // pred_check
    _
  $region19: #{_lambda_.4} parent=0 // pred_check_branch
    %1410 = sbr.rel (0) target = $region21
  $region20: #{_lambda_.4} parent=0 // pred_region
    _
  $region21: #{_lambda_.4} parent=0 // pred_fallthru
    _
  // Predicated region
  $region22: #{_lambda_.4} parent=0 // pred_check
    _
  $region23: #{_lambda_.4} parent=0 // pred_check_branch
    %1412 = sbr.rel (0) target = $region25
  $region24: #{_lambda_.4} parent=0 // pred_region
    _
  $region25: #{_lambda_.4} parent=0 // pred_fallthru
    _

// kernel: _lambda_.6
$region0: #{_lambda_.6}
  #allocation0 [shape = 'u32[]', space=smem, size = 0x4, offset = 0x4, fixed_abs, tag = 'smem constant byte address 0x4 - core index']
  #allocation1 [shape = 'u32[144,128]{1,0:T(1,128)}', space=vmem, size = 0x12000, scoped, tag = 'internal scratch']
  %s0 = inlined_call_operand.vmem [shape: bf16[2,18,18,128], index: 0, kind: input, shape index: {}, may-alias: {0,1}]
  %s1 = inlined_call_operand.vmem [shape: bf16[2,18,18,128], index: 1, kind: input, shape index: {}, may-alias: {0,1}]
  %s2 = inlined_call_operand.vmem [shape: bf16[3,3,128,128], index: 2, kind: input, shape index: {}]
  %s3 = inlined_call_operand.vmem [shape: f32[1,128], index: 3, kind: input, shape index: {}]
  %s4 = inlined_call_operand.vmem [shape: f32[1,128], index: 4, kind: input, shape index: {}]
  %s5 = inlined_call_operand.vmem [shape: bf16[2,16,16,128], index: 5, kind: input, shape index: {}]
  %s6 = inlined_call_operand.vmem [shape: bf16[2,16,16,128], index: 6, kind: output, shape index: {}]
  %s7 = sld [smem:[#allocation0]]
  $region57: #{_lambda_.6} parent=0
    _
  %s9 = ssub.s32 1, %s7
  %s10 = scalar_select 0, %s9, %s7
  loop: start=0, step=1, limit=6
  $region2: #{_lambda_.6} parent=0 // loop_pre_header
    _
  $region3: #{_lambda_.6} parent=0 // loop_header
    %s12 = sphi 0, %s16
    %p13 = scmp.ge.s32.totalorder %s12, 6
    %s19 = sphi 0, %s31
    %s20 = sphi 0, %s27
    %s21 = sphi 0, %s19
    %s22 = sphi 0, %s20
    %s23 = sphi 0, %s21
    %s24 = sphi 0, %s22
    %s36 = sphi 0, %s38
    %s39 = sphi 0, %s36
    %s40 = sphi 0, %s39
    %s56 = sphi 0, %s40
    %s68 = sphi 0, %s70
    %s71 = sphi 0, %s68
    %s72 = sphi 0, %s71
    %s88 = sphi 0, %s72
    %s92 = sphi 0, %s92
    %s94 = sphi 0, %s92
    %s95 = sphi 0, %s94
    %s109 = sphi 0, %s95
    %s113 = sphi 0, %s113
    %s115 = sphi 0, %s113
    %s116 = sphi 0, %s115
    %s130 = sphi 0, %s116
    %s134 = sphi 0, %s134
    %s136 = sphi 0, %s134
    %s137 = sphi 0, %s136
    %s151 = sphi 0, %s137
    %s159 = sphi 0, %s161
    %s162 = sphi 0, %s159
    %s163 = sphi 0, %s162
    %s179 = sphi 0, %s163
    %s187 = sphi 0, %s189
    %s190 = sphi 0, %s187
    %s191 = sphi 0, %s190
    %s207 = sphi 0, %s191
  $region4: #{_lambda_.6} parent=0 // loop_header_branch
    %15 = sbr.rel (%p13) target = $region8
  $region5: #{_lambda_.6} parent=0 // loop_body
    %s17 = ssub.s32 %s12, 1
    %s18 = ssub.s32 %s12, 2
    %s25 = sadd.s32 1, %s20
    %p26 = scmp.ge.s32.totalorder %s25, 2
    %s27 = scalar_select %p26, 0, %s25
    %s28 = sadd.s32 1, %s19
    %s29 = scalar_select %p26, %s28, %s19
    %p30 = scmp.ge.s32.totalorder %s29, 2
    %s31 = scalar_select %p30, 0, %s29
    %s32 = ssub.s32 %s19, %s31
    %s33 = ssub.s32 %s20, %s27
    %s34 = sor.u32 %s32, %s33
    %p35 = scmp.eq.s32.totalorder %s34, 0
    %s37 = sadd.s32 %s36, 1
    %s38 = scalar_select %p35, %s36, %s37
    %p41 = pneg %p35
    %p42 = scmp.eq.s32.totalorder %s12, 3
    %p43 = por %p41, %p42
    %p44 = scmp.ne.s32.totalorder %s36, %s39
    %p45 = scmp.eq.s32.totalorder %s12, 0
    %p46 = por %p44, %p45
    %p47 = scmp.ne.s32.totalorder %s36, %s39
    %p48 = scmp.eq.s32.totalorder %s17, 3
    %p49 = por %p47, %p48
    %p50 = scmp.ne.s32.totalorder %s39, %s40
    %p51 = scmp.eq.s32.totalorder %s17, 0
    %p52 = por %p50, %p51
    %p53 = scmp.ne.s32.totalorder %s39, %s40
    %p54 = scmp.eq.s32.totalorder %s18, 3
    %p55 = por %p53, %p54
    %p57 = scmp.ne.s32.totalorder %s40, %s56
    %p58 = scmp.eq.s32.totalorder %s18, 0
    %p59 = por %p57, %p58
    %s60 = sadd.s32 %s20, 1
    %s61 = smul.u32 %s60, 4
    %s62 = sadd.s32 %s27, 1
    %s63 = smul.u32 %s62, 4
    %s64 = ssub.s32 %s19, %s31
    %s65 = ssub.s32 %s61, %s63
    %s66 = sor.u32 %s64, %s65
    %p67 = scmp.eq.s32.totalorder %s66, 0
    %s69 = sadd.s32 %s68, 1
    %s70 = scalar_select %p67, %s68, %s69
    %p73 = pneg %p67
    %p74 = scmp.eq.s32.totalorder %s12, 3
    %p75 = por %p73, %p74
    %p76 = scmp.ne.s32.totalorder %s68, %s71
    %p77 = scmp.eq.s32.totalorder %s12, 0
    %p78 = por %p76, %p77
    %p79 = scmp.ne.s32.totalorder %s68, %s71
    %p80 = scmp.eq.s32.totalorder %s17, 3
    %p81 = por %p79, %p80
    %p82 = scmp.ne.s32.totalorder %s71, %s72
    %p83 = scmp.eq.s32.totalorder %s17, 0
    %p84 = por %p82, %p83
    %p85 = scmp.ne.s32.totalorder %s71, %s72
    %p86 = scmp.eq.s32.totalorder %s18, 3
    %p87 = por %p85, %p86
    %p89 = scmp.ne.s32.totalorder %s72, %s88
    %p90 = scmp.eq.s32.totalorder %s18, 0
    %p91 = por %p89, %p90
    %s93 = sadd.s32 %s92, 1
    %p96 = scmp.eq.s32.totalorder %s12, 3
    %p97 = scmp.ne.s32.totalorder %s92, %s94
    %p98 = scmp.eq.s32.totalorder %s12, 0
    %p99 = por %p97, %p98
    %p100 = scmp.ne.s32.totalorder %s92, %s94
    %p101 = scmp.eq.s32.totalorder %s17, 3
    %p102 = por %p100, %p101
    %p103 = scmp.ne.s32.totalorder %s94, %s95
    %p104 = scmp.eq.s32.totalorder %s17, 0
    %p105 = por %p103, %p104
    %p106 = scmp.ne.s32.totalorder %s94, %s95
    %p107 = scmp.eq.s32.totalorder %s18, 3
    %p108 = por %p106, %p107
    %p110 = scmp.ne.s32.totalorder %s95, %s109
    %p111 = scmp.eq.s32.totalorder %s18, 0
    %p112 = por %p110, %p111
    %s114 = sadd.s32 %s113, 1
    %p117 = scmp.eq.s32.totalorder %s12, 3
    %p118 = scmp.ne.s32.totalorder %s113, %s115
    %p119 = scmp.eq.s32.totalorder %s12, 0
    %p120 = por %p118, %p119
    %p121 = scmp.ne.s32.totalorder %s113, %s115
    %p122 = scmp.eq.s32.totalorder %s17, 3
    %p123 = por %p121, %p122
    %p124 = scmp.ne.s32.totalorder %s115, %s116
    %p125 = scmp.eq.s32.totalorder %s17, 0
    %p126 = por %p124, %p125
    %p127 = scmp.ne.s32.totalorder %s115, %s116
    %p128 = scmp.eq.s32.totalorder %s18, 3
    %p129 = por %p127, %p128
    %p131 = scmp.ne.s32.totalorder %s116, %s130
    %p132 = scmp.eq.s32.totalorder %s18, 0
    %p133 = por %p131, %p132
    %s135 = sadd.s32 %s134, 1
    %p138 = scmp.eq.s32.totalorder %s12, 3
    %p139 = scmp.ne.s32.totalorder %s134, %s136
    %p140 = scmp.eq.s32.totalorder %s12, 0
    %p141 = por %p139, %p140
    %p142 = scmp.ne.s32.totalorder %s134, %s136
    %p143 = scmp.eq.s32.totalorder %s17, 3
    %p144 = por %p142, %p143
    %p145 = scmp.ne.s32.totalorder %s136, %s137
    %p146 = scmp.eq.s32.totalorder %s17, 0
    %p147 = por %p145, %p146
    %p148 = scmp.ne.s32.totalorder %s136, %s137
    %p149 = scmp.eq.s32.totalorder %s18, 3
    %p150 = por %p148, %p149
    %p152 = scmp.ne.s32.totalorder %s137, %s151
    %p153 = scmp.eq.s32.totalorder %s18, 0
    %p154 = por %p152, %p153
    %s155 = ssub.s32 %s19, %s31
    %s156 = ssub.s32 %s20, %s27
    %s157 = sor.u32 %s155, %s156
    %p158 = scmp.eq.s32.totalorder %s157, 0
    %s160 = sadd.s32 %s159, 1
    %s161 = scalar_select %p158, %s159, %s160
    %p164 = pneg %p158
    %p165 = scmp.eq.s32.totalorder %s12, 3
    %p166 = por %p164, %p165
    %p167 = scmp.ne.s32.totalorder %s159, %s162
    %p168 = scmp.eq.s32.totalorder %s12, 0
    %p169 = por %p167, %p168
    %p170 = scmp.ne.s32.totalorder %s159, %s162
    %p171 = scmp.eq.s32.totalorder %s17, 3
    %p172 = por %p170, %p171
    %p173 = scmp.ne.s32.totalorder %s162, %s163
    %p174 = scmp.eq.s32.totalorder %s17, 0
    %p175 = por %p173, %p174
    %p176 = scmp.ne.s32.totalorder %s162, %s163
    %p177 = scmp.eq.s32.totalorder %s18, 3
    %p178 = por %p176, %p177
    %p180 = scmp.ne.s32.totalorder %s163, %s179
    %p181 = scmp.eq.s32.totalorder %s18, 0
    %p182 = por %p180, %p181
    %s183 = ssub.s32 %s19, %s31
    %s184 = ssub.s32 %s20, %s27
    %s185 = sor.u32 %s183, %s184
    %p186 = scmp.eq.s32.totalorder %s185, 0
    %s188 = sadd.s32 %s187, 1
    %s189 = scalar_select %p186, %s187, %s188
    %p192 = pneg %p186
    %p193 = scmp.eq.s32.totalorder %s12, 3
    %p194 = por %p192, %p193
    %p195 = scmp.ne.s32.totalorder %s187, %s190
    %p196 = scmp.eq.s32.totalorder %s12, 0
    %p197 = por %p195, %p196
    %p198 = scmp.ne.s32.totalorder %s187, %s190
    %p199 = scmp.eq.s32.totalorder %s17, 3
    %p200 = por %p198, %p199
    %p201 = scmp.ne.s32.totalorder %s190, %s191
    %p202 = scmp.eq.s32.totalorder %s17, 0
    %p203 = por %p201, %p202
    %p204 = scmp.ne.s32.totalorder %s190, %s191
    %p205 = scmp.eq.s32.totalorder %s18, 3
    %p206 = por %p204, %p205
    %p208 = scmp.ne.s32.totalorder %s191, %s207
    %p209 = scmp.eq.s32.totalorder %s18, 0
    %p210 = por %p208, %p209
    %p211 = scmp.le.s32.totalorder 1, %s12
    %p212 = scmp.lt.s32.totalorder %s12, 5
    %p213 = pnand %p211, %p212
    %p214 = pneg %p213
    // Predicated region
    $region9: #{_lambda_.6} parent=5 // pred_check
      _
    $region10: #{_lambda_.6} parent=5 // pred_check_branch
      %216 = sbr.rel (%p213) target = $region12
    $region11: #{_lambda_.6} parent=5 // pred_region
      %s217 = ssub.s32 %s12, 1
      // Predicated region
      $region13: #{_lambda_.6} parent=11 // pred_check
        %p218 = pneg %p105
      $region14: #{_lambda_.6} parent=11 // pred_check_branch
        %220 = sbr.rel (%p218) target = $region16
      $region15: #{_lambda_.6} parent=11 // pred_region
        _
      $region16: #{_lambda_.6} parent=11 // pred_fallthru
        _
      // Predicated region
      $region17: #{_lambda_.6} parent=11 // pred_check
        %p221 = pneg %p126
      $region18: #{_lambda_.6} parent=11 // pred_check_branch
        %223 = sbr.rel (%p221) target = $region20
      $region19: #{_lambda_.6} parent=11 // pred_region
        _
      $region20: #{_lambda_.6} parent=11 // pred_fallthru
        _
      // Predicated region
      $region21: #{_lambda_.6} parent=11 // pred_check
        %p224 = pneg %p147
      $region22: #{_lambda_.6} parent=11 // pred_check_branch
        %226 = sbr.rel (%p224) target = $region24
      $region23: #{_lambda_.6} parent=11 // pred_region
        _
      $region24: #{_lambda_.6} parent=11 // pred_fallthru
        _
    $region12: #{_lambda_.6} parent=5 // pred_fallthru
      _
    %p227 = scmp.lt.s32.totalorder %s12, 4
    // Predicated region
    $region25: #{_lambda_.6} parent=5 // pred_check
      %p228 = pneg %p227
    $region26: #{_lambda_.6} parent=5 // pred_check_branch
      %230 = sbr.rel (%p228) target = $region28
    $region27: #{_lambda_.6} parent=5 // pred_region
      // Predicated region
      $region29: #{_lambda_.6} parent=27 // pred_check
        %p231 = pneg %p46
      $region30: #{_lambda_.6} parent=27 // pred_check_branch
        %233 = sbr.rel (%p231) target = $region32
      $region31: #{_lambda_.6} parent=27 // pred_region
        %s234 = smul.u32 8, %s20
        %s235 = ssub.s32 18, %s234
        %p236 = scmp.lt.s32.totalorder %s235, 8
        %s237 = scalar_select %p236, %s235, 8
        %s238 = smul.u32 64, %s237
        %s239 = smul.u32 %s238, 3
        %p240 = scmp.lt.s32.totalorder %s19, 1
        %s241 = scalar_select %p240, %s19, 1
        %p242 = scmp.lt.s32.totalorder %s234, 17
        %s243 = scalar_select %p242, %s234, 17
        %s244 = smul.addr %s243, 3
        %s245 = smul.addr %s241, 54
        %s246 = sadd.s32 %s244, %s245
        %s247 = smul.addr %s246, 4
        %s248 = scalar_lea.vmem %s0, %s247
        %s249 = smul.u32 8, %s20
        %s250 = ssub.s32 18, %s249
        %p251 = scmp.lt.s32.totalorder %s250, 8
        %s252 = scalar_select %p251, %s250, 8
        %s253 = smul.u32 64, %s252
        %s254 = smul.u32 %s253, 3
      $region32: #{_lambda_.6} parent=27 // pred_fallthru
        _
      // Predicated region
      $region33: #{_lambda_.6} parent=27 // pred_check
        %p255 = pneg %p78
      $region34: #{_lambda_.6} parent=27 // pred_check_branch
        %257 = sbr.rel (%p255) target = $region36
      $region35: #{_lambda_.6} parent=27 // pred_region
        %s258 = sadd.s32 %s20, 1
        %s259 = smul.u32 %s258, 4
        %s260 = smul.u32 2, %s259
        %p261 = scmp.lt.s32.totalorder %s19, 1
        %s262 = scalar_select %p261, %s19, 1
        %p263 = scmp.lt.s32.totalorder %s260, 17
        %s264 = scalar_select %p263, %s260, 17
        %s265 = smul.addr %s264, 3
        %s266 = smul.addr %s262, 54
        %s267 = sadd.s32 %s265, %s266
        %s268 = smul.addr %s267, 4
        %s269 = scalar_lea.vmem %s1, %s268
        %s270 = sadd.s32 %s20, 1
        %s271 = smul.u32 %s270, 4
        %s272 = smul.u32 2, %s271
      $region36: #{_lambda_.6} parent=27 // pred_fallthru
        _
      // Predicated region
      $region37: #{_lambda_.6} parent=27 // pred_check
        %p273 = pneg %p169
      $region38: #{_lambda_.6} parent=27 // pred_check_branch
        %275 = sbr.rel (%p273) target = $region40
      $region39: #{_lambda_.6} parent=27 // pred_region
        %s276 = smul.u32 8, %s20
        %p277 = scmp.lt.s32.totalorder %s19, 1
        %s278 = scalar_select %p277, %s19, 1
        %p279 = scmp.lt.s32.totalorder %s276, 15
        %s280 = scalar_select %p279, %s276, 15
        %s281 = smul.addr %s280, 2
        %s282 = smul.addr %s278, 32
        %s283 = sadd.s32 %s281, %s282
        %s284 = smul.addr %s283, 4
        %s285 = scalar_lea.vmem %s5, %s284
        %s286 = smul.u32 8, %s20
      $region40: #{_lambda_.6} parent=27 // pred_fallthru
        _
    $region28: #{_lambda_.6} parent=5 // pred_fallthru
      _
    %p287 = scmp.le.s32.totalorder 1, %s12
    %p288 = scmp.lt.s32.totalorder %s12, 5
    %p289 = pnand %p287, %p288
    %p290 = pneg %p289
    // Predicated region
    $region41: #{_lambda_.6} parent=5 // pred_check
      _
    $region42: #{_lambda_.6} parent=5 // pred_check_branch
      %292 = sbr.rel (%p289) target = $region44
    $region43: #{_lambda_.6} parent=5 // pred_region
      %s293 = ssub.s32 %s12, 1
      %s294 = smul.u32 8, %s22
      %s295 = ssub.s32 18, %s294
      %p296 = scmp.lt.s32.totalorder %s295, 8
      %s297 = scalar_select %p296, %s295, 8
      %s298 = smul.u32 64, %s297
      %s299 = smul.u32 %s298, 3
      %p300 = scmp.lt.s32.totalorder %s21, 1
      %s301 = scalar_select %p300, %s21, 1
      %p302 = scmp.lt.s32.totalorder %s294, 17
      %s303 = scalar_select %p302, %s294, 17
      %s304 = smul.addr %s303, 3
      %s305 = smul.addr %s301, 54
      %s306 = sadd.s32 %s304, %s305
      %s307 = smul.addr %s306, 4
      %s308 = scalar_lea.vmem %s0, %s307
      %p309 = pneg %p52
      %p310 = pneg %p49
      %s311 = sadd.s32 %s22, 1
      %s312 = smul.u32 %s311, 4
      %s313 = smul.u32 2, %s312
      %p314 = scmp.lt.s32.totalorder %s21, 1
      %s315 = scalar_select %p314, %s21, 1
      %p316 = scmp.lt.s32.totalorder %s313, 17
      %s317 = scalar_select %p316, %s313, 17
      %s318 = smul.addr %s317, 3
      %s319 = smul.addr %s315, 54
      %s320 = sadd.s32 %s318, %s319
      %s321 = smul.addr %s320, 4
      %s322 = scalar_lea.vmem %s1, %s321
      %p323 = pneg %p84
      %p324 = pneg %p81
      %p325 = pneg %p105
      %p326 = pneg %p102
      %p327 = pneg %p126
      %p328 = pneg %p123
      %p329 = pneg %p147
      %p330 = pneg %p144
      %s331 = smul.u32 8, %s22
      %p332 = scmp.lt.s32.totalorder %s21, 1
      %s333 = scalar_select %p332, %s21, 1
      %p334 = scmp.lt.s32.totalorder %s331, 15
      %s335 = scalar_select %p334, %s331, 15
      %s336 = smul.addr %s335, 2
      %s337 = smul.addr %s333, 32
      %s338 = sadd.s32 %s336, %s337
      %s339 = smul.addr %s338, 4
      %s340 = scalar_lea.vmem %s5, %s339
      %p341 = pneg %p175
      %p342 = pneg %p172
      %p343 = pneg %p203
      %p344 = pneg %p200
      %s345 = smul.u32 8, %s22
      %p346 = scmp.lt.s32.totalorder %s21, 1
      %s347 = scalar_select %p346, %s21, 1
      %p348 = scmp.lt.s32.totalorder %s345, 15
      %s349 = scalar_select %p348, %s345, 15
      %s350 = smul.addr %s349, 2
      %s351 = smul.addr %s347, 32
      %s352 = sadd.s32 %s350, %s351
      %s353 = smul.addr %s352, 4
      %s354 = scalar_lea.vmem %s6, %s353
      %s355 = smul.u32 8, %s22
      %s356 = ssub.s32 18, %s355
      %p357 = scmp.lt.s32.totalorder %s356, 8
      %s358 = scalar_select %p357, %s356, 8
      %s359 = smul.u32 64, %s358
      %s360 = smul.u32 %s359, 3
      %p361 = scmp.lt.s32.totalorder %s21, 1
      %s362 = scalar_select %p361, %s21, 1
      %p363 = scmp.lt.s32.totalorder %s355, 17
      %s364 = scalar_select %p363, %s355, 17
      %s365 = smul.addr %s364, 3
      %s366 = smul.addr %s362, 54
      %s367 = sadd.s32 %s365, %s366
      %s368 = smul.addr %s367, 4
      %s369 = scalar_lea.vmem %s0, %s368
      %s370 = smul.u32 8, %s22
      %s371 = ssub.s32 18, %s370
      %p372 = scmp.lt.s32.totalorder %s371, 8
      %s373 = scalar_select %p372, %s371, 8
      %s374 = smul.u32 64, %s373
      %s375 = smul.u32 %s374, 3
      %s376 = sadd.s32 %s22, 1
      %s377 = smul.u32 %s376, 4
      %s378 = smul.u32 2, %s377
      %p379 = scmp.lt.s32.totalorder %s21, 1
      %s380 = scalar_select %p379, %s21, 1
      %p381 = scmp.lt.s32.totalorder %s378, 17
      %s382 = scalar_select %p381, %s378, 17
      %s383 = smul.addr %s382, 3
      %s384 = smul.addr %s380, 54
      %s385 = sadd.s32 %s383, %s384
      %s386 = smul.addr %s385, 4
      %s387 = scalar_lea.vmem %s1, %s386
      %s388 = sadd.s32 %s22, 1
      %s389 = smul.u32 %s388, 4
      %s390 = smul.u32 2, %s389
      %s391 = smul.u32 8, %s22
      %p392 = scmp.lt.s32.totalorder %s21, 1
      %s393 = scalar_select %p392, %s21, 1
      %p394 = scmp.lt.s32.totalorder %s391, 15
      %s395 = scalar_select %p394, %s391, 15
      %s396 = smul.addr %s395, 2
      %s397 = smul.addr %s393, 32
      %s398 = sadd.s32 %s396, %s397
      %s399 = smul.addr %s398, 4
      %s400 = scalar_lea.vmem %s5, %s399
      %s401 = smul.u32 8, %s22
      %s402 = smul.u32 8, %s22
      %p403 = scmp.lt.s32.totalorder %s21, 1
      %s404 = scalar_select %p403, %s21, 1
      %p405 = scmp.lt.s32.totalorder %s402, 15
      %s406 = scalar_select %p405, %s402, 15
      %s407 = smul.addr %s406, 2
      %s408 = smul.addr %s404, 32
      %s409 = sadd.s32 %s407, %s408
      %s410 = smul.addr %s409, 4
      %s411 = scalar_lea.vmem %s6, %s410
      %s412 = smul.u32 8, %s22
      %v414 = vld [vmem:[%s369] sm:$0xf]
      %v415 = vld [vmem:[%s369 + $0x4] sm:$0xf]
      %v416 = vld [vmem:[%s369 + $0x8] sm:$0x1]
      %v417 = vld [vmem:[%s369 + $0xc] sm:$0xf]
      %v418 = vld [vmem:[%s369 + $0x10] sm:$0xf]
      %v419 = vld [vmem:[%s369 + $0x14] sm:$0x1]
      %v420 = vld [vmem:[%s369 + $0x18] sm:$0xf]
      %v421 = vld [vmem:[%s369 + $0x1c] sm:$0xf]
      %v422 = vld [vmem:[%s369 + $0x20] sm:$0x1]
      %v423 = vld [vmem:[%s369 + $0x24] sm:$0xf]
      %v424 = vld [vmem:[%s369 + $0x28] sm:$0xf]
      %v425 = vld [vmem:[%s369 + $0x2c] sm:$0x1]
      %v426 = vld [vmem:[%s369 + $0x30] sm:$0xf]
      %v427 = vld [vmem:[%s369 + $0x34] sm:$0xf]
      %v428 = vld [vmem:[%s369 + $0x38] sm:$0x1]
      %v429 = vld [vmem:[%s369 + $0x3c] sm:$0xf]
      %v430 = vld [vmem:[%s369 + $0x40] sm:$0xf]
      %v431 = vld [vmem:[%s369 + $0x44] sm:$0x1]
      %v432 = vld [vmem:[%s369 + $0x48] sm:$0xf]
      %v433 = vld [vmem:[%s369 + $0x4c] sm:$0xf]
      %v434 = vld [vmem:[%s369 + $0x50] sm:$0x1]
      %v435 = vld [vmem:[%s369 + $0x54] sm:$0xf]
      %v436 = vld [vmem:[%s369 + $0x58] sm:$0xf]
      %v437 = vld [vmem:[%s369 + $0x5c] sm:$0x1]
      %v438 = vld [vmem:[%s387] sm:$0xf]
      %v439 = vld [vmem:[%s387 + $0x4] sm:$0xf]
      %v440 = vld [vmem:[%s387 + $0x8] sm:$0x1]
      %v441 = vld [vmem:[%s387 + $0xc] sm:$0xf]
      %v442 = vld [vmem:[%s387 + $0x10] sm:$0xf]
      %v443 = vld [vmem:[%s387 + $0x14] sm:$0x1]
      %v444 = vld [vmem:[%s2] sm:$0xf]
      %v445 = vld [vmem:[%s2 + $0x4] sm:$0xf]
      %v446 = vld [vmem:[%s2 + $0x8] sm:$0xf]
      %v447 = vld [vmem:[%s2 + $0xc] sm:$0xf]
      %v448 = vld [vmem:[%s2 + $0x10] sm:$0xf]
      %v449 = vld [vmem:[%s2 + $0x14] sm:$0xf]
      %v450 = vld [vmem:[%s2 + $0x18] sm:$0xf]
      %v451 = vld [vmem:[%s2 + $0x1c] sm:$0xf]
      %v452 = vld [vmem:[%s2 + $0x20] sm:$0xf]
      %v453 = vld [vmem:[%s2 + $0x24] sm:$0xf]
      %v454 = vld [vmem:[%s2 + $0x28] sm:$0xf]
      %v455 = vld [vmem:[%s2 + $0x2c] sm:$0xf]
      %v456 = vld [vmem:[%s2 + $0x30] sm:$0xf]
      %v457 = vld [vmem:[%s2 + $0x34] sm:$0xf]
      %v458 = vld [vmem:[%s2 + $0x38] sm:$0xf]
      %v459 = vld [vmem:[%s2 + $0x3c] sm:$0xf]
      %vm460 = vsmask.f32 3328
      %vm461 = vsmask.f32 7440
      %vm462 = vmor %vm460, %vm461
      %v464 = vshrl.u32 %v414, 16
      %v466 = vrot.slane %v464, 4
      %v467 = vshll.u32 %v414, 16
      %v469 = vrot.slane %v467, 5
      %v470 = vor.u32 %v466, %v469
      %v471 = vrot.slane %v470, 4
      %v473 = vshll.u32 %v415, 16
      %v475 = vrot.slane %v473, 5
      %v476 = vsel %vm462, %v471, %v475
      %v477 = vshrl.u32 %v415, 16
      %v479 = vrot.slane %v477, 4
      %v480 = vor.u32 %v479, %v475
      %v481 = vrot.slane %v480, 4
      %v483 = vshll.u32 %v416, 16
      %v485 = vrot.slane %v483, 5
      %v486 = vsel %vm462, %v481, %v485
      %v488 = vshrl.u32 %v417, 16
      %v490 = vrot.slane %v488, 4
      %v491 = vshll.u32 %v417, 16
      %v493 = vrot.slane %v491, 5
      %v494 = vor.u32 %v490, %v493
      %v495 = vrot.slane %v494, 4
      %v497 = vshll.u32 %v418, 16
      %v499 = vrot.slane %v497, 5
      %v500 = vsel %vm462, %v495, %v499
      %v501 = vshrl.u32 %v418, 16
      %v503 = vrot.slane %v501, 4
      %v504 = vor.u32 %v503, %v499
      %v505 = vrot.slane %v504, 4
      %v507 = vshll.u32 %v419, 16
      %v509 = vrot.slane %v507, 5
      %v510 = vsel %vm462, %v505, %v509
      %v512 = vshrl.u32 %v420, 16
      %v514 = vrot.slane %v512, 4
      %v515 = vshll.u32 %v420, 16
      %v517 = vrot.slane %v515, 5
      %v518 = vor.u32 %v514, %v517
      %v519 = vrot.slane %v518, 4
      %v521 = vshll.u32 %v421, 16
      %v523 = vrot.slane %v521, 5
      %v524 = vsel %vm462, %v519, %v523
      %v525 = vshrl.u32 %v421, 16
      %v527 = vrot.slane %v525, 4
      %v528 = vor.u32 %v527, %v523
      %v529 = vrot.slane %v528, 4
      %v531 = vshll.u32 %v422, 16
      %v533 = vrot.slane %v531, 5
      %v534 = vsel %vm462, %v529, %v533
      %v536 = vshrl.u32 %v423, 16
      %v538 = vrot.slane %v536, 4
      %v539 = vshll.u32 %v423, 16
      %v541 = vrot.slane %v539, 5
      %v542 = vor.u32 %v538, %v541
      %v543 = vrot.slane %v542, 4
      %v545 = vshll.u32 %v424, 16
      %v547 = vrot.slane %v545, 5
      %v548 = vsel %vm462, %v543, %v547
      %v549 = vshrl.u32 %v424, 16
      %v551 = vrot.slane %v549, 4
      %v552 = vor.u32 %v551, %v547
      %v553 = vrot.slane %v552, 4
      %v555 = vshll.u32 %v425, 16
      %v557 = vrot.slane %v555, 5
      %v558 = vsel %vm462, %v553, %v557
      %v560 = vshrl.u32 %v426, 16
      %v562 = vrot.slane %v560, 4
      %v563 = vshll.u32 %v426, 16
      %v565 = vrot.slane %v563, 5
      %v566 = vor.u32 %v562, %v565
      %v567 = vrot.slane %v566, 4
      %v569 = vshll.u32 %v427, 16
      %v571 = vrot.slane %v569, 5
      %v572 = vsel %vm462, %v567, %v571
      %v573 = vshrl.u32 %v427, 16
      %v575 = vrot.slane %v573, 4
      %v576 = vor.u32 %v575, %v571
      %v577 = vrot.slane %v576, 4
      %v579 = vshll.u32 %v428, 16
      %v581 = vrot.slane %v579, 5
      %v582 = vsel %vm462, %v577, %v581
      %v584 = vshrl.u32 %v429, 16
      %v586 = vrot.slane %v584, 4
      %v587 = vshll.u32 %v429, 16
      %v589 = vrot.slane %v587, 5
      %v590 = vor.u32 %v586, %v589
      %v591 = vrot.slane %v590, 4
      %v593 = vshll.u32 %v430, 16
      %v595 = vrot.slane %v593, 5
      %v596 = vsel %vm462, %v591, %v595
      %v597 = vshrl.u32 %v430, 16
      %v599 = vrot.slane %v597, 4
      %v600 = vor.u32 %v599, %v595
      %v601 = vrot.slane %v600, 4
      %v603 = vshll.u32 %v431, 16
      %v605 = vrot.slane %v603, 5
      %v606 = vsel %vm462, %v601, %v605
      %v608 = vshrl.u32 %v432, 16
      %v610 = vrot.slane %v608, 4
      %v611 = vshll.u32 %v432, 16
      %v613 = vrot.slane %v611, 5
      %v614 = vor.u32 %v610, %v613
      %v615 = vrot.slane %v614, 4
      %v617 = vshll.u32 %v433, 16
      %v619 = vrot.slane %v617, 5
      %v620 = vsel %vm462, %v615, %v619
      %v621 = vshrl.u32 %v433, 16
      %v623 = vrot.slane %v621, 4
      %v624 = vor.u32 %v623, %v619
      %v625 = vrot.slane %v624, 4
      %v627 = vshll.u32 %v434, 16
      %v629 = vrot.slane %v627, 5
      %v630 = vsel %vm462, %v625, %v629
      %v632 = vshrl.u32 %v435, 16
      %v634 = vrot.slane %v632, 4
      %v635 = vshll.u32 %v435, 16
      %v637 = vrot.slane %v635, 5
      %v638 = vor.u32 %v634, %v637
      %v639 = vrot.slane %v638, 4
      %v641 = vshll.u32 %v436, 16
      %v643 = vrot.slane %v641, 5
      %v644 = vsel %vm462, %v639, %v643
      %v645 = vshrl.u32 %v436, 16
      %v647 = vrot.slane %v645, 4
      %v648 = vor.u32 %v647, %v643
      %v649 = vrot.slane %v648, 4
      %v651 = vshll.u32 %v437, 16
      %v653 = vrot.slane %v651, 5
      %v654 = vsel %vm462, %v649, %v653
      %s655 = scalar_lea.vmem %s2, 64
      %v656 = vld [vmem:[%s655] sm:$0xf]
      %v657 = vld [vmem:[%s655 + $0x4] sm:$0xf]
      %v658 = vld [vmem:[%s655 + $0x8] sm:$0xf]
      %v659 = vld [vmem:[%s655 + $0xc] sm:$0xf]
      %v660 = vld [vmem:[%s655 + $0x10] sm:$0xf]
      %v661 = vld [vmem:[%s655 + $0x14] sm:$0xf]
      %v662 = vld [vmem:[%s655 + $0x18] sm:$0xf]
      %v663 = vld [vmem:[%s655 + $0x1c] sm:$0xf]
      %v664 = vld [vmem:[%s655 + $0x20] sm:$0xf]
      %v665 = vld [vmem:[%s655 + $0x24] sm:$0xf]
      %v666 = vld [vmem:[%s655 + $0x28] sm:$0xf]
      %v667 = vld [vmem:[%s655 + $0x2c] sm:$0xf]
      %v668 = vld [vmem:[%s655 + $0x30] sm:$0xf]
      %v669 = vld [vmem:[%s655 + $0x34] sm:$0xf]
      %v670 = vld [vmem:[%s655 + $0x38] sm:$0xf]
      %v671 = vld [vmem:[%s655 + $0x3c] sm:$0xf]
      %v672 = vunpack.c.l.b16 %v476
      %v673 = vunpack.c.l.b16 %v486
      %v674 = vunpack.c.l.b16 %v500
      %v675 = vunpack.c.l.b16 %v510
      %v676 = vunpack.c.l.b16 %v524
      %v677 = vunpack.c.l.b16 %v534
      %v678 = vunpack.c.l.b16 %v548
      %v679 = vunpack.c.l.b16 %v558
      %v680 = vunpack.c.l.b16 %v572
      %v681 = vunpack.c.l.b16 %v582
      %v682 = vunpack.c.l.b16 %v596
      %v683 = vunpack.c.l.b16 %v606
      %v684 = vunpack.c.l.b16 %v620
      %v685 = vunpack.c.l.b16 %v630
      %v686 = vunpack.c.l.b16 %v644
      %v687 = vunpack.c.l.b16 %v654
      %v688 = vpack.c.b16 %v673, %v672
      %v689 = vpack.c.b16 %v675, %v674
      %v690 = vpack.c.b16 %v677, %v676
      %v691 = vpack.c.b16 %v679, %v678
      %v692 = vpack.c.b16 %v681, %v680
      %v693 = vpack.c.b16 %v683, %v682
      %v694 = vpack.c.b16 %v685, %v684
      %v695 = vpack.c.b16 %v687, %v686
      %v720 = vunpack.c.l.b16 %v656
      %v721 = vunpack.c.l.b16 %v657
      %v722 = vunpack.c.l.b16 %v658
      %v723 = vunpack.c.l.b16 %v659
      %v724 = vunpack.c.l.b16 %v660
      %v725 = vunpack.c.l.b16 %v661
      %v726 = vunpack.c.l.b16 %v662
      %v727 = vunpack.c.l.b16 %v663
      %v728 = vunpack.c.l.b16 %v664
      %v729 = vunpack.c.l.b16 %v665
      %v730 = vunpack.c.l.b16 %v666
      %v731 = vunpack.c.l.b16 %v667
      %v732 = vunpack.c.l.b16 %v668
      %v733 = vunpack.c.l.b16 %v669
      %v734 = vunpack.c.l.b16 %v670
      %v735 = vunpack.c.l.b16 %v671
      %v736 = vpack.c.b16 %v721, %v720
      %v737 = vpack.c.b16 %v723, %v722
      %v738 = vpack.c.b16 %v725, %v724
      %v739 = vpack.c.b16 %v727, %v726
      %v740 = vpack.c.b16 %v729, %v728
      %v741 = vpack.c.b16 %v731, %v730
      %v742 = vpack.c.b16 %v733, %v732
      %v743 = vpack.c.b16 %v735, %v734
      %752 = vmatprep.subr.bf16.mxu0 0
      %753 = vmatpush1.bf16.msra.mxu0 %v736
      %754 = vmatprep.subr.bf16.mxu0 0
      %755 = vmatpush1.bf16.msra.mxu0 %v737
      %756 = vmatprep.subr.bf16.mxu0 0
      %757 = vmatpush1.bf16.msra.mxu0 %v738
      %758 = vmatprep.subr.bf16.mxu0 0
      %759 = vmatpush1.bf16.msra.mxu0 %v739
      %760 = vmatprep.subr.bf16.mxu0 0
      %761 = vmatpush1.bf16.msra.mxu0 %v740
      %762 = vmatprep.subr.bf16.mxu0 0
      %763 = vmatpush1.bf16.msra.mxu0 %v741
      %764 = vmatprep.subr.bf16.mxu0 0
      %765 = vmatpush1.bf16.msra.mxu0 %v742
      %766 = vmatprep.subr.bf16.mxu0 0
      %767 = vmatpush1.bf16.msra.mxu0 %v743
      %768 = vmatprep.subr.bf16.mxu0 0
      %769 = vmatpush1.bf16.msra.mxu0 0
      %770 = vmatprep.subr.bf16.mxu0 0
      %771 = vmatpush1.bf16.msra.mxu0 0
      %772 = vmatprep.subr.bf16.mxu0 0
      %773 = vmatpush1.bf16.msra.mxu0 0
      %774 = vmatprep.subr.bf16.mxu0 0
      %775 = vmatpush1.bf16.msra.mxu0 0
      %776 = vmatprep.subr.bf16.mxu0 0
      %777 = vmatpush1.bf16.msra.mxu0 0
      %778 = vmatprep.subr.bf16.mxu0 0
      %779 = vmatpush1.bf16.msra.mxu0 0
      %780 = vmatprep.subr.bf16.mxu0 0
      %781 = vmatpush1.bf16.msra.mxu0 0
      %782 = vmatprep.subr.bf16.mxu0 0
      %783 = vmatpush1.bf16.msra.mxu0 0
      %784 = vmatprep.mubr.bf16.mxu0 0
      %785 = vmatmul.mubr.bf16.gmra.mrb[0].mxu0 %v688
      %v786 = vpop.f32.mrb[0].mxu0
      %v787 = vadd.f32 0.0, %v786
      %v788 = vpop.f32.mrb[0].mxu0
      %v789 = vpop.f32.mrb[0].mxu0
      %v790 = vadd.f32 0.0, %v789
      %v791 = vpop.f32.mrb[0].mxu0
      %792 = vmatprep.mubr.bf16.mxu0 0
      %793 = vmatmul.mubr.bf16.gmra.mrb[0].mxu0 %v689
      %v794 = vpop.f32.mrb[0].mxu0
      %v795 = vadd.f32 0.0, %v794
      %v796 = vpop.f32.mrb[0].mxu0
      %v797 = vpop.f32.mrb[0].mxu0
      %v798 = vadd.f32 0.0, %v797
      %v799 = vpop.f32.mrb[0].mxu0
      %800 = vmatprep.mubr.bf16.mxu0 0
      %801 = vmatmul.mubr.bf16.gmra.mrb[0].mxu0 %v690
      %v802 = vpop.f32.mrb[0].mxu0
      %v803 = vadd.f32 0.0, %v802
      %v804 = vpop.f32.mrb[0].mxu0
      %v805 = vpop.f32.mrb[0].mxu0
      %v806 = vadd.f32 0.0, %v805
      %v807 = vpop.f32.mrb[0].mxu0
      %808 = vmatprep.mubr.bf16.mxu0 0
      %809 = vmatmul.mubr.bf16.gmra.mrb[0].mxu0 %v691
      %v810 = vpop.f32.mrb[0].mxu0
      %v811 = vadd.f32 0.0, %v810
      %v812 = vpop.f32.mrb[0].mxu0
      %v813 = vpop.f32.mrb[0].mxu0
      %v814 = vadd.f32 0.0, %v813
      %v815 = vpop.f32.mrb[0].mxu0
      %816 = vmatprep.mubr.bf16.mxu0 0
      %817 = vmatmul.mubr.bf16.gmra.mrb[0].mxu0 %v692
      %v818 = vpop.f32.mrb[0].mxu0
      %v819 = vadd.f32 0.0, %v818
      %v820 = vpop.f32.mrb[0].mxu0
      %v821 = vpop.f32.mrb[0].mxu0
      %v822 = vadd.f32 0.0, %v821
      %v823 = vpop.f32.mrb[0].mxu0
      %824 = vmatprep.mubr.bf16.mxu0 0
      %825 = vmatmul.mubr.bf16.gmra.mrb[0].mxu0 %v693
      %v826 = vpop.f32.mrb[0].mxu0
      %v827 = vadd.f32 0.0, %v826
      %v828 = vpop.f32.mrb[0].mxu0
      %v829 = vpop.f32.mrb[0].mxu0
      %v830 = vadd.f32 0.0, %v829
      %v831 = vpop.f32.mrb[0].mxu0
      %832 = vmatprep.mubr.bf16.mxu0 0
      %833 = vmatmul.mubr.bf16.gmra.mrb[0].mxu0 %v694
      %v834 = vpop.f32.mrb[0].mxu0
      %v835 = vadd.f32 0.0, %v834
      %v836 = vpop.f32.mrb[0].mxu0
      %v837 = vpop.f32.mrb[0].mxu0
      %v838 = vadd.f32 0.0, %v837
      %v839 = vpop.f32.mrb[0].mxu0
      %840 = vmatprep.mubr.bf16.mxu0 0
      %841 = vmatmul.mubr.bf16.gmra.mrb[0].mxu0 %v695
      %v842 = vpop.f32.mrb[0].mxu0
      %v843 = vadd.f32 0.0, %v842
      %v844 = vpop.f32.mrb[0].mxu0
      %v845 = vpop.f32.mrb[0].mxu0
      %v846 = vadd.f32 0.0, %v845
      %v847 = vpop.f32.mrb[0].mxu0
      %848 = vdwg.mxu0
      %v865 = vunpack.c.l.b16 %v414
      %v866 = vunpack.c.l.b16 %v415
      %v867 = vunpack.c.l.b16 %v417
      %v868 = vunpack.c.l.b16 %v418
      %v869 = vunpack.c.l.b16 %v420
      %v870 = vunpack.c.l.b16 %v421
      %v871 = vunpack.c.l.b16 %v423
      %v872 = vunpack.c.l.b16 %v424
      %v873 = vunpack.c.l.b16 %v426
      %v874 = vunpack.c.l.b16 %v427
      %v875 = vunpack.c.l.b16 %v429
      %v876 = vunpack.c.l.b16 %v430
      %v877 = vunpack.c.l.b16 %v432
      %v878 = vunpack.c.l.b16 %v433
      %v879 = vunpack.c.l.b16 %v435
      %v880 = vunpack.c.l.b16 %v436
      %v881 = vpack.c.b16 %v866, %v865
      %v882 = vpack.c.b16 %v868, %v867
      %v883 = vpack.c.b16 %v870, %v869
      %v884 = vpack.c.b16 %v872, %v871
      %v885 = vpack.c.b16 %v874, %v873
      %v886 = vpack.c.b16 %v876, %v875
      %v887 = vpack.c.b16 %v878, %v877
      %v888 = vpack.c.b16 %v880, %v879
      %v913 = vunpack.c.l.b16 %v444
      %v914 = vunpack.c.l.b16 %v445
      %v915 = vunpack.c.l.b16 %v446
      %v916 = vunpack.c.l.b16 %v447
      %v917 = vunpack.c.l.b16 %v448
      %v918 = vunpack.c.l.b16 %v449
      %v919 = vunpack.c.l.b16 %v450
      %v920 = vunpack.c.l.b16 %v451
      %v921 = vunpack.c.l.b16 %v452
      %v922 = vunpack.c.l.b16 %v453
      %v923 = vunpack.c.l.b16 %v454
      %v924 = vunpack.c.l.b16 %v455
      %v925 = vunpack.c.l.b16 %v456
      %v926 = vunpack.c.l.b16 %v457
      %v927 = vunpack.c.l.b16 %v458
      %v928 = vunpack.c.l.b16 %v459
      %v929 = vpack.c.b16 %v914, %v913
      %v930 = vpack.c.b16 %v916, %v915
      %v931 = vpack.c.b16 %v918, %v917
      %v932 = vpack.c.b16 %v920, %v919
      %v933 = vpack.c.b16 %v922, %v921
      %v934 = vpack.c.b16 %v924, %v923
      %v935 = vpack.c.b16 %v926, %v925
      %v936 = vpack.c.b16 %v928, %v927
      %945 = vmatprep.subr.bf16.mxu0 0
      %946 = vmatpush1.bf16.msra.mxu0 %v929
      %947 = vmatprep.subr.bf16.mxu0 0
      %948 = vmatpush1.bf16.msra.mxu0 %v930
      %949 = vmatprep.subr.bf16.mxu0 0
      %950 = vmatpush1.bf16.msra.mxu0 %v931
      %951 = vmatprep.subr.bf16.mxu0 0
      %952 = vmatpush1.bf16.msra.mxu0 %v932
      %953 = vmatprep.subr.bf16.mxu0 0
      %954 = vmatpush1.bf16.msra.mxu0 %v933
      %955 = vmatprep.subr.bf16.mxu0 0
      %956 = vmatpush1.bf16.msra.mxu0 %v934
      %957 = vmatprep.subr.bf16.mxu0 0
      %958 = vmatpush1.bf16.msra.mxu0 %v935
      %959 = vmatprep.subr.bf16.mxu0 0
      %960 = vmatpush1.bf16.msra.mxu0 %v936
      %961 = vmatprep.subr.bf16.mxu0 0
      %962 = vmatpush1.bf16.msra.mxu0 0
      %963 = vmatprep.subr.bf16.mxu0 0
      %964 = vmatpush1.bf16.msra.mxu0 0
      %965 = vmatprep.subr.bf16.mxu0 0
      %966 = vmatpush1.bf16.msra.mxu0 0
      %967 = vmatprep.subr.bf16.mxu0 0
      %968 = vmatpush1.bf16.msra.mxu0 0
      %969 = vmatprep.subr.bf16.mxu0 0
      %970 = vmatpush1.bf16.msra.mxu0 0
      %971 = vmatprep.subr.bf16.mxu0 0
      %972 = vmatpush1.bf16.msra.mxu0 0
      %973 = vmatprep.subr.bf16.mxu0 0
      %974 = vmatpush1.bf16.msra.mxu0 0
      %975 = vmatprep.subr.bf16.mxu0 0
      %976 = vmatpush1.bf16.msra.mxu0 0
      %977 = vmatprep.mubr.bf16.mxu0 0
      %978 = vmatmul.mubr.bf16.gmra.mrb[0].mxu0 %v881
      %v979 = vpop.f32.mrb[0].mxu0
      %v980 = vadd.f32 %v787, %v979
      %v981 = vpop.f32.mrb[0].mxu0
      %v982 = vpop.f32.mrb[0].mxu0
      %v983 = vadd.f32 %v790, %v982
      %v984 = vpop.f32.mrb[0].mxu0
      %985 = vmatprep.mubr.bf16.mxu0 0
      %986 = vmatmul.mubr.bf16.gmra.mrb[0].mxu0 %v882
      %v987 = vpop.f32.mrb[0].mxu0
      %v988 = vadd.f32 %v795, %v987
      %v989 = vpop.f32.mrb[0].mxu0
      %v990 = vpop.f32.mrb[0].mxu0
      %v991 = vadd.f32 %v798, %v990
      %v992 = vpop.f32.mrb[0].mxu0
      %993 = vmatprep.mubr.bf16.mxu0 0
      %994 = vmatmul.mubr.bf16.gmra.mrb[0].mxu0 %v883
      %v995 = vpop.f32.mrb[0].mxu0
      %v996 = vadd.f32 %v803, %v995
      %v997 = vpop.f32.mrb[0].mxu0
      %v998 = vpop.f32.mrb[0].mxu0
      %v999 = vadd.f32 %v806, %v998
      %v1000 = vpop.f32.mrb[0].mxu0
      %1001 = vmatprep.mubr.bf16.mxu0 0
      %1002 = vmatmul.mubr.bf16.gmra.mrb[0].mxu0 %v884
      %v1003 = vpop.f32.mrb[0].mxu0
      %v1004 = vadd.f32 %v811, %v1003
      %v1005 = vpop.f32.mrb[0].mxu0
      %v1006 = vpop.f32.mrb[0].mxu0
      %v1007 = vadd.f32 %v814, %v1006
      %v1008 = vpop.f32.mrb[0].mxu0
      %1009 = vmatprep.mubr.bf16.mxu0 0
      %1010 = vmatmul.mubr.bf16.gmra.mrb[0].mxu0 %v885
      %v1011 = vpop.f32.mrb[0].mxu0
      %v1012 = vadd.f32 %v819, %v1011
      %v1013 = vpop.f32.mrb[0].mxu0
      %v1014 = vpop.f32.mrb[0].mxu0
      %v1015 = vadd.f32 %v822, %v1014
      %v1016 = vpop.f32.mrb[0].mxu0
      %1017 = vmatprep.mubr.bf16.mxu0 0
      %1018 = vmatmul.mubr.bf16.gmra.mrb[0].mxu0 %v886
      %v1019 = vpop.f32.mrb[0].mxu0
      %v1020 = vadd.f32 %v827, %v1019
      %v1021 = vpop.f32.mrb[0].mxu0
      %v1022 = vpop.f32.mrb[0].mxu0
      %v1023 = vadd.f32 %v830, %v1022
      %v1024 = vpop.f32.mrb[0].mxu0
      %1025 = vmatprep.mubr.bf16.mxu0 0
      %1026 = vmatmul.mubr.bf16.gmra.mrb[0].mxu0 %v887
      %v1027 = vpop.f32.mrb[0].mxu0
      %v1028 = vadd.f32 %v835, %v1027
      %v1029 = vpop.f32.mrb[0].mxu0
      %v1030 = vpop.f32.mrb[0].mxu0
      %v1031 = vadd.f32 %v838, %v1030
      %v1032 = vpop.f32.mrb[0].mxu0
      %1033 = vmatprep.mubr.bf16.mxu0 0
      %1034 = vmatmul.mubr.bf16.gmra.mrb[0].mxu0 %v888
      %v1035 = vpop.f32.mrb[0].mxu0
      %v1036 = vadd.f32 %v843, %v1035
      %v1037 = vpop.f32.mrb[0].mxu0
      %v1038 = vpop.f32.mrb[0].mxu0
      %v1039 = vadd.f32 %v846, %v1038
      %v1040 = vpop.f32.mrb[0].mxu0
      %1041 = vdwg.mxu0
      %vm1050 = vcmask 1042432
      %vm1051 = vcmask 1046532
      %vm1052 = vmor %vm1050, %vm1051
      %v1053 = vrot.slane %v414, 5
      %v1054 = vrot.slane %v1053, 4
      %v1055 = vrot.slane %v415, 5
      %v1056 = vsel %vm1052, %v1054, %v1055
      %v1057 = vrot.slane %v1055, 4
      %v1058 = vrot.slane %v416, 5
      %v1059 = vsel %vm1052, %v1057, %v1058
      %v1060 = vrot.slane %v417, 5
      %v1061 = vrot.slane %v1060, 4
      %v1062 = vrot.slane %v418, 5
      %v1063 = vsel %vm1052, %v1061, %v1062
      %v1064 = vrot.slane %v1062, 4
      %v1065 = vrot.slane %v419, 5
      %v1066 = vsel %vm1052, %v1064, %v1065
      %v1067 = vrot.slane %v420, 5
      %v1068 = vrot.slane %v1067, 4
      %v1069 = vrot.slane %v421, 5
      %v1070 = vsel %vm1052, %v1068, %v1069
      %v1071 = vrot.slane %v1069, 4
      %v1072 = vrot.slane %v422, 5
      %v1073 = vsel %vm1052, %v1071, %v1072
      %v1074 = vrot.slane %v423, 5
      %v1075 = vrot.slane %v1074, 4
      %v1076 = vrot.slane %v424, 5
      %v1077 = vsel %vm1052, %v1075, %v1076
      %v1078 = vrot.slane %v1076, 4
      %v1079 = vrot.slane %v425, 5
      %v1080 = vsel %vm1052, %v1078, %v1079
      %v1081 = vrot.slane %v426, 5
      %v1082 = vrot.slane %v1081, 4
      %v1083 = vrot.slane %v427, 5
      %v1084 = vsel %vm1052, %v1082, %v1083
      %v1085 = vrot.slane %v1083, 4
      %v1086 = vrot.slane %v428, 5
      %v1087 = vsel %vm1052, %v1085, %v1086
      %v1088 = vrot.slane %v429, 5
      %v1089 = vrot.slane %v1088, 4
      %v1090 = vrot.slane %v430, 5
      %v1091 = vsel %vm1052, %v1089, %v1090
      %v1092 = vrot.slane %v1090, 4
      %v1093 = vrot.slane %v431, 5
      %v1094 = vsel %vm1052, %v1092, %v1093
      %v1095 = vrot.slane %v432, 5
      %v1096 = vrot.slane %v1095, 4
      %v1097 = vrot.slane %v433, 5
      %v1098 = vsel %vm1052, %v1096, %v1097
      %v1099 = vrot.slane %v1097, 4
      %v1100 = vrot.slane %v434, 5
      %v1101 = vsel %vm1052, %v1099, %v1100
      %v1102 = vrot.slane %v435, 5
      %v1103 = vrot.slane %v1102, 4
      %v1104 = vrot.slane %v436, 5
      %v1105 = vsel %vm1052, %v1103, %v1104
      %v1106 = vrot.slane %v1104, 4
      %v1107 = vrot.slane %v437, 5
      %v1108 = vsel %vm1052, %v1106, %v1107
      %s1109 = scalar_lea.vmem %s2, 128
      %v1110 = vld [vmem:[%s1109] sm:$0xf]
      %v1111 = vld [vmem:[%s1109 + $0x4] sm:$0xf]
      %v1112 = vld [vmem:[%s1109 + $0x8] sm:$0xf]
      %v1113 = vld [vmem:[%s1109 + $0xc] sm:$0xf]
      %v1114 = vld [vmem:[%s1109 + $0x10] sm:$0xf]
      %v1115 = vld [vmem:[%s1109 + $0x14] sm:$0xf]
      %v1116 = vld [vmem:[%s1109 + $0x18] sm:$0xf]
      %v1117 = vld [vmem:[%s1109 + $0x1c] sm:$0xf]
      %v1118 = vld [vmem:[%s1109 + $0x20] sm:$0xf]
      %v1119 = vld [vmem:[%s1109 + $0x24] sm:$0xf]
      %v1120 = vld [vmem:[%s1109 + $0x28] sm:$0xf]
      %v1121 = vld [vmem:[%s1109 + $0x2c] sm:$0xf]
      %v1122 = vld [vmem:[%s1109 + $0x30] sm:$0xf]
      %v1123 = vld [vmem:[%s1109 + $0x34] sm:$0xf]
      %v1124 = vld [vmem:[%s1109 + $0x38] sm:$0xf]
      %v1125 = vld [vmem:[%s1109 + $0x3c] sm:$0xf]
      %v1126 = vunpack.c.l.b16 %v1056
      %v1127 = vunpack.c.l.b16 %v1059
      %v1128 = vunpack.c.l.b16 %v1063
      %v1129 = vunpack.c.l.b16 %v1066
      %v1130 = vunpack.c.l.b16 %v1070
      %v1131 = vunpack.c.l.b16 %v1073
      %v1132 = vunpack.c.l.b16 %v1077
      %v1133 = vunpack.c.l.b16 %v1080
      %v1134 = vunpack.c.l.b16 %v1084
      %v1135 = vunpack.c.l.b16 %v1087
      %v1136 = vunpack.c.l.b16 %v1091
      %v1137 = vunpack.c.l.b16 %v1094
      %v1138 = vunpack.c.l.b16 %v1098
      %v1139 = vunpack.c.l.b16 %v1101
      %v1140 = vunpack.c.l.b16 %v1105
      %v1141 = vunpack.c.l.b16 %v1108
      %v1142 = vpack.c.b16 %v1127, %v1126
      %v1143 = vpack.c.b16 %v1129, %v1128
      %v1144 = vpack.c.b16 %v1131, %v1130
      %v1145 = vpack.c.b16 %v1133, %v1132
      %v1146 = vpack.c.b16 %v1135, %v1134
      %v1147 = vpack.c.b16 %v1137, %v1136
      %v1148 = vpack.c.b16 %v1139, %v1138
      %v1149 = vpack.c.b16 %v1141, %v1140
      %v1174 = vunpack.c.l.b16 %v1110
      %v1175 = vunpack.c.l.b16 %v1111
      %v1176 = vunpack.c.l.b16 %v1112
      %v1177 = vunpack.c.l.b16 %v1113
      %v1178 = vunpack.c.l.b16 %v1114
      %v1179 = vunpack.c.l.b16 %v1115
      %v1180 = vunpack.c.l.b16 %v1116
      %v1181 = vunpack.c.l.b16 %v1117
      %v1182 = vunpack.c.l.b16 %v1118
      %v1183 = vunpack.c.l.b16 %v1119
      %v1184 = vunpack.c.l.b16 %v1120
      %v1185 = vunpack.c.l.b16 %v1121
      %v1186 = vunpack.c.l.b16 %v1122
      %v1187 = vunpack.c.l.b16 %v1123
      %v1188 = vunpack.c.l.b16 %v1124
      %v1189 = vunpack.c.l.b16 %v1125
      %v1190 = vpack.c.b16 %v1175, %v1174
      %v1191 = vpack.c.b16 %v1177, %v1176
      %v1192 = vpack.c.b16 %v1179, %v1178
      %v1193 = vpack.c.b16 %v1181, %v1180
      %v1194 = vpack.c.b16 %v1183, %v1182
      %v1195 = vpack.c.b16 %v1185, %v1184
      %v1196 = vpack.c.b16 %v1187, %v1186
      %v1197 = vpack.c.b16 %v1189, %v1188
      %1206 = vmatprep.subr.bf16.mxu0 0
      %1207 = vmatpush1.bf16.msra.mxu0 %v1190
      %1208 = vmatprep.subr.bf16.mxu0 0
      %1209 = vmatpush1.bf16.msra.mxu0 %v1191
      %1210 = vmatprep.subr.bf16.mxu0 0
      %1211 = vmatpush1.bf16.msra.mxu0 %v1192
      %1212 = vmatprep.subr.bf16.mxu0 0
      %1213 = vmatpush1.bf16.msra.mxu0 %v1193
      %1214 = vmatprep.subr.bf16.mxu0 0
      %1215 = vmatpush1.bf16.msra.mxu0 %v1194
      %1216 = vmatprep.subr.bf16.mxu0 0
      %1217 = vmatpush1.bf16.msra.mxu0 %v1195
      %1218 = vmatprep.subr.bf16.mxu0 0
      %1219 = vmatpush1.bf16.msra.mxu0 %v1196
      %1220 = vmatprep.subr.bf16.mxu0 0
      %1221 = vmatpush1.bf16.msra.mxu0 %v1197
      %1222 = vmatprep.subr.bf16.mxu0 0
      %1223 = vmatpush1.bf16.msra.mxu0 0
      %1224 = vmatprep.subr.bf16.mxu0 0
      %1225 = vmatpush1.bf16.msra.mxu0 0
      %1226 = vmatprep.subr.bf16.mxu0 0
      %1227 = vmatpush1.bf16.msra.mxu0 0
      %1228 = vmatprep.subr.bf16.mxu0 0
      %1229 = vmatpush1.bf16.msra.mxu0 0
      %1230 = vmatprep.subr.bf16.mxu0 0
      %1231 = vmatpush1.bf16.msra.mxu0 0
      %1232 = vmatprep.subr.bf16.mxu0 0
      %1233 = vmatpush1.bf16.msra.mxu0 0
      %1234 = vmatprep.subr.bf16.mxu0 0
      %1235 = vmatpush1.bf16.msra.mxu0 0
      %1236 = vmatprep.subr.bf16.mxu0 0
      %1237 = vmatpush1.bf16.msra.mxu0 0
      %1238 = vmatprep.mubr.bf16.mxu0 0
      %1239 = vmatmul.mubr.bf16.gmra.mrb[0].mxu0 %v1142
      %v1240 = vpop.f32.mrb[0].mxu0
      %v1241 = vadd.f32 0.0, %v1240
      %v1242 = vpop.f32.mrb[0].mxu0
      %v1243 = vpop.f32.mrb[0].mxu0
      %v1244 = vadd.f32 0.0, %v1243
      %v1245 = vpop.f32.mrb[0].mxu0
      %1246 = vmatprep.mubr.bf16.mxu0 0
      %1247 = vmatmul.mubr.bf16.gmra.mrb[0].mxu0 %v1143
      %v1248 = vpop.f32.mrb[0].mxu0
      %v1249 = vadd.f32 0.0, %v1248
      %v1250 = vpop.f32.mrb[0].mxu0
      %v1251 = vpop.f32.mrb[0].mxu0
      %v1252 = vadd.f32 0.0, %v1251
      %v1253 = vpop.f32.mrb[0].mxu0
      %1254 = vmatprep.mubr.bf16.mxu0 0
      %1255 = vmatmul.mubr.bf16.gmra.mrb[0].mxu0 %v1144
      %v1256 = vpop.f32.mrb[0].mxu0
      %v1257 = vadd.f32 0.0, %v1256
      %v1258 = vpop.f32.mrb[0].mxu0
      %v1259 = vpop.f32.mrb[0].mxu0
      %v1260 = vadd.f32 0.0, %v1259
      %v1261 = vpop.f32.mrb[0].mxu0
      %1262 = vmatprep.mubr.bf16.mxu0 0
      %1263 = vmatmul.mubr.bf16.gmra.mrb[0].mxu0 %v1145
      %v1264 = vpop.f32.mrb[0].mxu0
      %v1265 = vadd.f32 0.0, %v1264
      %v1266 = vpop.f32.mrb[0].mxu0
      %v1267 = vpop.f32.mrb[0].mxu0
      %v1268 = vadd.f32 0.0, %v1267
      %v1269 = vpop.f32.mrb[0].mxu0
      %1270 = vmatprep.mubr.bf16.mxu0 0
      %1271 = vmatmul.mubr.bf16.gmra.mrb[0].mxu0 %v1146
      %v1272 = vpop.f32.mrb[0].mxu0
      %v1273 = vadd.f32 0.0, %v1272
      %v1274 = vpop.f32.mrb[0].mxu0
      %v1275 = vpop.f32.mrb[0].mxu0
      %v1276 = vadd.f32 0.0, %v1275
      %v1277 = vpop.f32.mrb[0].mxu0
      %1278 = vmatprep.mubr.bf16.mxu0 0
      %1279 = vmatmul.mubr.bf16.gmra.mrb[0].mxu0 %v1147
      %v1280 = vpop.f32.mrb[0].mxu0
      %v1281 = vadd.f32 0.0, %v1280
      %v1282 = vpop.f32.mrb[0].mxu0
      %v1283 = vpop.f32.mrb[0].mxu0
      %v1284 = vadd.f32 0.0, %v1283
      %v1285 = vpop.f32.mrb[0].mxu0
      %1286 = vmatprep.mubr.bf16.mxu0 0
      %1287 = vmatmul.mubr.bf16.gmra.mrb[0].mxu0 %v1148
      %v1288 = vpop.f32.mrb[0].mxu0
      %v1289 = vadd.f32 0.0, %v1288
      %v1290 = vpop.f32.mrb[0].mxu0
      %v1291 = vpop.f32.mrb[0].mxu0
      %v1292 = vadd.f32 0.0, %v1291
      %v1293 = vpop.f32.mrb[0].mxu0
      %1294 = vmatprep.mubr.bf16.mxu0 0
      %1295 = vmatmul.mubr.bf16.gmra.mrb[0].mxu0 %v1149
      %v1296 = vpop.f32.mrb[0].mxu0
      %v1297 = vadd.f32 0.0, %v1296
      %v1298 = vpop.f32.mrb[0].mxu0
      %v1299 = vpop.f32.mrb[0].mxu0
      %v1300 = vadd.f32 0.0, %v1299
      %v1301 = vpop.f32.mrb[0].mxu0
      %1302 = vdwg.mxu0
      %v1303 = vadd.f32 %v980, %v1241
      %v1304 = vadd.f32 %v983, %v1244
      %v1305 = vadd.f32 %v988, %v1249
      %v1306 = vadd.f32 %v991, %v1252
      %v1307 = vadd.f32 %v996, %v1257
      %v1308 = vadd.f32 %v999, %v1260
      %v1309 = vadd.f32 %v1004, %v1265
      %v1310 = vadd.f32 %v1007, %v1268
      %v1311 = vadd.f32 %v1012, %v1273
      %v1312 = vadd.f32 %v1015, %v1276
      %v1313 = vadd.f32 %v1020, %v1281
      %v1314 = vadd.f32 %v1023, %v1284
      %v1315 = vadd.f32 %v1028, %v1289
      %v1316 = vadd.f32 %v1031, %v1292
      %v1317 = vadd.f32 %v1036, %v1297
      %v1318 = vadd.f32 %v1039, %v1300
      %s1319 = scalar_lea.vmem %s2, 192
      %v1320 = vld [vmem:[%s1319] sm:$0xf]
      %v1321 = vld [vmem:[%s1319 + $0x4] sm:$0xf]
      %v1322 = vld [vmem:[%s1319 + $0x8] sm:$0xf]
      %v1323 = vld [vmem:[%s1319 + $0xc] sm:$0xf]
      %v1324 = vld [vmem:[%s1319 + $0x10] sm:$0xf]
      %v1325 = vld [vmem:[%s1319 + $0x14] sm:$0xf]
      %v1326 = vld [vmem:[%s1319 + $0x18] sm:$0xf]
      %v1327 = vld [vmem:[%s1319 + $0x1c] sm:$0xf]
      %v1328 = vld [vmem:[%s1319 + $0x20] sm:$0xf]
      %v1329 = vld [vmem:[%s1319 + $0x24] sm:$0xf]
      %v1330 = vld [vmem:[%s1319 + $0x28] sm:$0xf]
      %v1331 = vld [vmem:[%s1319 + $0x2c] sm:$0xf]
      %v1332 = vld [vmem:[%s1319 + $0x30] sm:$0xf]
      %v1333 = vld [vmem:[%s1319 + $0x34] sm:$0xf]
      %v1334 = vld [vmem:[%s1319 + $0x38] sm:$0xf]
      %v1335 = vld [vmem:[%s1319 + $0x3c] sm:$0xf]
      %v1338 = vunpack.c.l.b16 %v438
      %v1339 = vunpack.c.l.b16 %v439
      %v1340 = vpack.c.b16 %v1339, %v1338
      %v1358 = vunpack.c.l.b16 %v1320
      %v1359 = vunpack.c.l.b16 %v1321
      %v1360 = vunpack.c.l.b16 %v1322
      %v1361 = vunpack.c.l.b16 %v1323
      %v1362 = vunpack.c.l.b16 %v1324
      %v1363 = vunpack.c.l.b16 %v1325
      %v1364 = vunpack.c.l.b16 %v1326
      %v1365 = vunpack.c.l.b16 %v1327
      %v1366 = vunpack.c.l.b16 %v1328
      %v1367 = vunpack.c.l.b16 %v1329
      %v1368 = vunpack.c.l.b16 %v1330
      %v1369 = vunpack.c.l.b16 %v1331
      %v1370 = vunpack.c.l.b16 %v1332
      %v1371 = vunpack.c.l.b16 %v1333
      %v1372 = vunpack.c.l.b16 %v1334
      %v1373 = vunpack.c.l.b16 %v1335
      %v1374 = vpack.c.b16 %v1359, %v1358
      %v1375 = vpack.c.b16 %v1361, %v1360
      %v1376 = vpack.c.b16 %v1363, %v1362
      %v1377 = vpack.c.b16 %v1365, %v1364
      %v1378 = vpack.c.b16 %v1367, %v1366
      %v1379 = vpack.c.b16 %v1369, %v1368
      %v1380 = vpack.c.b16 %v1371, %v1370
      %v1381 = vpack.c.b16 %v1373, %v1372
      %1390 = vmatprep.subr.bf16.mxu0 0
      %1391 = vmatpush1.bf16.msra.mxu0 %v1374
      %1392 = vmatprep.subr.bf16.mxu0 0
      %1393 = vmatpush1.bf16.msra.mxu0 %v1375
      %1394 = vmatprep.subr.bf16.mxu0 0
      %1395 = vmatpush1.bf16.msra.mxu0 %v1376
      %1396 = vmatprep.subr.bf16.mxu0 0
      %1397 = vmatpush1.bf16.msra.mxu0 %v1377
      %1398 = vmatprep.subr.bf16.mxu0 0
      %1399 = vmatpush1.bf16.msra.mxu0 %v1378
      %1400 = vmatprep.subr.bf16.mxu0 0
      %1401 = vmatpush1.bf16.msra.mxu0 %v1379
      %1402 = vmatprep.subr.bf16.mxu0 0
      %1403 = vmatpush1.bf16.msra.mxu0 %v1380
      %1404 = vmatprep.subr.bf16.mxu0 0
      %1405 = vmatpush1.bf16.msra.mxu0 %v1381
      %1406 = vmatprep.subr.bf16.mxu0 0
      %1407 = vmatpush1.bf16.msra.mxu0 0
      %1408 = vmatprep.subr.bf16.mxu0 0
      %1409 = vmatpush1.bf16.msra.mxu0 0
      %1410 = vmatprep.subr.bf16.mxu0 0
      %1411 = vmatpush1.bf16.msra.mxu0 0
      %1412 = vmatprep.subr.bf16.mxu0 0
      %1413 = vmatpush1.bf16.msra.mxu0 0
      %1414 = vmatprep.subr.bf16.mxu0 0
      %1415 = vmatpush1.bf16.msra.mxu0 0
      %1416 = vmatprep.subr.bf16.mxu0 0
      %1417 = vmatpush1.bf16.msra.mxu0 0
      %1418 = vmatprep.subr.bf16.mxu0 0
      %1419 = vmatpush1.bf16.msra.mxu0 0
      %1420 = vmatprep.subr.bf16.mxu0 0
      %1421 = vmatpush1.bf16.msra.mxu0 0
      %1422 = vmatprep.mubr.bf16.mxu0 0
      %1423 = vmatmul.mubr.bf16.gmra.mrb[0].mxu0 %v882
      %v1424 = vpop.f32.mrb[0].mxu0
      %v1425 = vadd.f32 0.0, %v1424
      %v1426 = vpop.f32.mrb[0].mxu0
      %v1427 = vpop.f32.mrb[0].mxu0
      %v1428 = vadd.f32 0.0, %v1427
      %v1429 = vpop.f32.mrb[0].mxu0
      %1430 = vmatprep.mubr.bf16.mxu0 0
      %1431 = vmatmul.mubr.bf16.gmra.mrb[0].mxu0 %v883
      %v1432 = vpop.f32.mrb[0].mxu0
      %v1433 = vadd.f32 0.0, %v1432
      %v1434 = vpop.f32.mrb[0].mxu0
      %v1435 = vpop.f32.mrb[0].mxu0
      %v1436 = vadd.f32 0.0, %v1435
      %v1437 = vpop.f32.mrb[0].mxu0
      %1438 = vmatprep.mubr.bf16.mxu0 0
      %1439 = vmatmul.mubr.bf16.gmra.mrb[0].mxu0 %v884
      %v1440 = vpop.f32.mrb[0].mxu0
      %v1441 = vadd.f32 0.0, %v1440
      %v1442 = vpop.f32.mrb[0].mxu0
      %v1443 = vpop.f32.mrb[0].mxu0
      %v1444 = vadd.f32 0.0, %v1443
      %v1445 = vpop.f32.mrb[0].mxu0
      %1446 = vmatprep.mubr.bf16.mxu0 0
      %1447 = vmatmul.mubr.bf16.gmra.mrb[0].mxu0 %v885
      %v1448 = vpop.f32.mrb[0].mxu0
      %v1449 = vadd.f32 0.0, %v1448
      %v1450 = vpop.f32.mrb[0].mxu0
      %v1451 = vpop.f32.mrb[0].mxu0
      %v1452 = vadd.f32 0.0, %v1451
      %v1453 = vpop.f32.mrb[0].mxu0
      %1454 = vmatprep.mubr.bf16.mxu0 0
      %1455 = vmatmul.mubr.bf16.gmra.mrb[0].mxu0 %v886
      %v1456 = vpop.f32.mrb[0].mxu0
      %v1457 = vadd.f32 0.0, %v1456
      %v1458 = vpop.f32.mrb[0].mxu0
      %v1459 = vpop.f32.mrb[0].mxu0
      %v1460 = vadd.f32 0.0, %v1459
      %v1461 = vpop.f32.mrb[0].mxu0
      %1462 = vmatprep.mubr.bf16.mxu0 0
      %1463 = vmatmul.mubr.bf16.gmra.mrb[0].mxu0 %v887
      %v1464 = vpop.f32.mrb[0].mxu0
      %v1465 = vadd.f32 0.0, %v1464
      %v1466 = vpop.f32.mrb[0].mxu0
      %v1467 = vpop.f32.mrb[0].mxu0
      %v1468 = vadd.f32 0.0, %v1467
      %v1469 = vpop.f32.mrb[0].mxu0
      %1470 = vmatprep.mubr.bf16.mxu0 0
      %1471 = vmatmul.mubr.bf16.gmra.mrb[0].mxu0 %v888
      %v1472 = vpop.f32.mrb[0].mxu0
      %v1473 = vadd.f32 0.0, %v1472
      %v1474 = vpop.f32.mrb[0].mxu0
      %v1475 = vpop.f32.mrb[0].mxu0
      %v1476 = vadd.f32 0.0, %v1475
      %v1477 = vpop.f32.mrb[0].mxu0
      %1478 = vmatprep.mubr.bf16.mxu0 0
      %1479 = vmatmul.mubr.bf16.gmra.mrb[0].mxu0 %v1340
      %v1480 = vpop.f32.mrb[0].mxu0
      %v1481 = vadd.f32 0.0, %v1480
      %v1482 = vpop.f32.mrb[0].mxu0
      %v1483 = vpop.f32.mrb[0].mxu0
      %v1484 = vadd.f32 0.0, %v1483
      %v1485 = vpop.f32.mrb[0].mxu0
      %1486 = vdwg.mxu0
      %v1487 = vadd.f32 %v1303, %v1425
      %v1488 = vadd.f32 %v1304, %v1428
      %v1489 = vadd.f32 %v1305, %v1433
      %v1490 = vadd.f32 %v1306, %v1436
      %v1491 = vadd.f32 %v1307, %v1441
      %v1492 = vadd.f32 %v1308, %v1444
      %v1493 = vadd.f32 %v1309, %v1449
      %v1494 = vadd.f32 %v1310, %v1452
      %v1495 = vadd.f32 %v1311, %v1457
      %v1496 = vadd.f32 %v1312, %v1460
      %v1497 = vadd.f32 %v1313, %v1465
      %v1498 = vadd.f32 %v1314, %v1468
      %v1499 = vadd.f32 %v1315, %v1473
      %v1500 = vadd.f32 %v1316, %v1476
      %v1501 = vadd.f32 %v1317, %v1481
      %v1502 = vadd.f32 %v1318, %v1484
      %v1504 = vshrl.u32 %v438, 16
      %v1506 = vrot.slane %v1504, 4
      %v1507 = vshll.u32 %v438, 16
      %v1509 = vrot.slane %v1507, 5
      %v1510 = vor.u32 %v1506, %v1509
      %v1511 = vrot.slane %v1510, 4
      %v1513 = vshll.u32 %v439, 16
      %v1515 = vrot.slane %v1513, 5
      %v1516 = vsel %vm462, %v1511, %v1515
      %v1517 = vshrl.u32 %v439, 16
      %v1519 = vrot.slane %v1517, 4
      %v1520 = vor.u32 %v1519, %v1515
      %v1521 = vrot.slane %v1520, 4
      %v1523 = vshll.u32 %v440, 16
      %v1525 = vrot.slane %v1523, 5
      %v1526 = vsel %vm462, %v1521, %v1525
      %s1527 = scalar_lea.vmem %s2, 256
      %v1528 = vld [vmem:[%s1527] sm:$0xf]
      %v1529 = vld [vmem:[%s1527 + $0x4] sm:$0xf]
      %v1530 = vld [vmem:[%s1527 + $0x8] sm:$0xf]
      %v1531 = vld [vmem:[%s1527 + $0xc] sm:$0xf]
      %v1532 = vld [vmem:[%s1527 + $0x10] sm:$0xf]
      %v1533 = vld [vmem:[%s1527 + $0x14] sm:$0xf]
      %v1534 = vld [vmem:[%s1527 + $0x18] sm:$0xf]
      %v1535 = vld [vmem:[%s1527 + $0x1c] sm:$0xf]
      %v1536 = vld [vmem:[%s1527 + $0x20] sm:$0xf]
      %v1537 = vld [vmem:[%s1527 + $0x24] sm:$0xf]
      %v1538 = vld [vmem:[%s1527 + $0x28] sm:$0xf]
      %v1539 = vld [vmem:[%s1527 + $0x2c] sm:$0xf]
      %v1540 = vld [vmem:[%s1527 + $0x30] sm:$0xf]
      %v1541 = vld [vmem:[%s1527 + $0x34] sm:$0xf]
      %v1542 = vld [vmem:[%s1527 + $0x38] sm:$0xf]
      %v1543 = vld [vmem:[%s1527 + $0x3c] sm:$0xf]
      %v1544 = vunpack.c.l.b16 %v1516
      %v1545 = vunpack.c.l.b16 %v1526
      %v1546 = vpack.c.b16 %v1545, %v1544
      %v1564 = vunpack.c.l.b16 %v1528
      %v1565 = vunpack.c.l.b16 %v1529
      %v1566 = vunpack.c.l.b16 %v1530
      %v1567 = vunpack.c.l.b16 %v1531
      %v1568 = vunpack.c.l.b16 %v1532
      %v1569 = vunpack.c.l.b16 %v1533
      %v1570 = vunpack.c.l.b16 %v1534
      %v1571 = vunpack.c.l.b16 %v1535
      %v1572 = vunpack.c.l.b16 %v1536
      %v1573 = vunpack.c.l.b16 %v1537
      %v1574 = vunpack.c.l.b16 %v1538
      %v1575 = vunpack.c.l.b16 %v1539
      %v1576 = vunpack.c.l.b16 %v1540
      %v1577 = vunpack.c.l.b16 %v1541
      %v1578 = vunpack.c.l.b16 %v1542
      %v1579 = vunpack.c.l.b16 %v1543
      %v1580 = vpack.c.b16 %v1565, %v1564
      %v1581 = vpack.c.b16 %v1567, %v1566
      %v1582 = vpack.c.b16 %v1569, %v1568
      %v1583 = vpack.c.b16 %v1571, %v1570
      %v1584 = vpack.c.b16 %v1573, %v1572
      %v1585 = vpack.c.b16 %v1575, %v1574
      %v1586 = vpack.c.b16 %v1577, %v1576
      %v1587 = vpack.c.b16 %v1579, %v1578
      %1596 = vmatprep.subr.bf16.mxu0 0
      %1597 = vmatpush1.bf16.msra.mxu0 %v1580
      %1598 = vmatprep.subr.bf16.mxu0 0
      %1599 = vmatpush1.bf16.msra.mxu0 %v1581
      %1600 = vmatprep.subr.bf16.mxu0 0
      %1601 = vmatpush1.bf16.msra.mxu0 %v1582
      %1602 = vmatprep.subr.bf16.mxu0 0
      %1603 = vmatpush1.bf16.msra.mxu0 %v1583
      %1604 = vmatprep.subr.bf16.mxu0 0
      %1605 = vmatpush1.bf16.msra.mxu0 %v1584
      %1606 = vmatprep.subr.bf16.mxu0 0
      %1607 = vmatpush1.bf16.msra.mxu0 %v1585
      %1608 = vmatprep.subr.bf16.mxu0 0
      %1609 = vmatpush1.bf16.msra.mxu0 %v1586
      %1610 = vmatprep.subr.bf16.mxu0 0
      %1611 = vmatpush1.bf16.msra.mxu0 %v1587
      %1612 = vmatprep.subr.bf16.mxu0 0
      %1613 = vmatpush1.bf16.msra.mxu0 0
      %1614 = vmatprep.subr.bf16.mxu0 0
      %1615 = vmatpush1.bf16.msra.mxu0 0
      %1616 = vmatprep.subr.bf16.mxu0 0
      %1617 = vmatpush1.bf16.msra.mxu0 0
      %1618 = vmatprep.subr.bf16.mxu0 0
      %1619 = vmatpush1.bf16.msra.mxu0 0
      %1620 = vmatprep.subr.bf16.mxu0 0
      %1621 = vmatpush1.bf16.msra.mxu0 0
      %1622 = vmatprep.subr.bf16.mxu0 0
      %1623 = vmatpush1.bf16.msra.mxu0 0
      %1624 = vmatprep.subr.bf16.mxu0 0
      %1625 = vmatpush1.bf16.msra.mxu0 0
      %1626 = vmatprep.subr.bf16.mxu0 0
      %1627 = vmatpush1.bf16.msra.mxu0 0
      %1628 = vmatprep.mubr.bf16.mxu0 0
      %1629 = vmatmul.mubr.bf16.gmra.mrb[0].mxu0 %v689
      %v1630 = vpop.f32.mrb[0].mxu0
      %v1631 = vadd.f32 0.0, %v1630
      %v1632 = vpop.f32.mrb[0].mxu0
      %v1633 = vpop.f32.mrb[0].mxu0
      %v1634 = vadd.f32 0.0, %v1633
      %v1635 = vpop.f32.mrb[0].mxu0
      %1636 = vmatprep.mubr.bf16.mxu0 0
      %1637 = vmatmul.mubr.bf16.gmra.mrb[0].mxu0 %v690
      %v1638 = vpop.f32.mrb[0].mxu0
      %v1639 = vadd.f32 0.0, %v1638
      %v1640 = vpop.f32.mrb[0].mxu0
      %v1641 = vpop.f32.mrb[0].mxu0
      %v1642 = vadd.f32 0.0, %v1641
      %v1643 = vpop.f32.mrb[0].mxu0
      %1644 = vmatprep.mubr.bf16.mxu0 0
      %1645 = vmatmul.mubr.bf16.gmra.mrb[0].mxu0 %v691
      %v1646 = vpop.f32.mrb[0].mxu0
      %v1647 = vadd.f32 0.0, %v1646
      %v1648 = vpop.f32.mrb[0].mxu0
      %v1649 = vpop.f32.mrb[0].mxu0
      %v1650 = vadd.f32 0.0, %v1649
      %v1651 = vpop.f32.mrb[0].mxu0
      %1652 = vmatprep.mubr.bf16.mxu0 0
      %1653 = vmatmul.mubr.bf16.gmra.mrb[0].mxu0 %v692
      %v1654 = vpop.f32.mrb[0].mxu0
      %v1655 = vadd.f32 0.0, %v1654
      %v1656 = vpop.f32.mrb[0].mxu0
      %v1657 = vpop.f32.mrb[0].mxu0
      %v1658 = vadd.f32 0.0, %v1657
      %v1659 = vpop.f32.mrb[0].mxu0
      %1660 = vmatprep.mubr.bf16.mxu0 0
      %1661 = vmatmul.mubr.bf16.gmra.mrb[0].mxu0 %v693
      %v1662 = vpop.f32.mrb[0].mxu0
      %v1663 = vadd.f32 0.0, %v1662
      %v1664 = vpop.f32.mrb[0].mxu0
      %v1665 = vpop.f32.mrb[0].mxu0
      %v1666 = vadd.f32 0.0, %v1665
      %v1667 = vpop.f32.mrb[0].mxu0
      %1668 = vmatprep.mubr.bf16.mxu0 0
      %1669 = vmatmul.mubr.bf16.gmra.mrb[0].mxu0 %v694
      %v1670 = vpop.f32.mrb[0].mxu0
      %v1671 = vadd.f32 0.0, %v1670
      %v1672 = vpop.f32.mrb[0].mxu0
      %v1673 = vpop.f32.mrb[0].mxu0
      %v1674 = vadd.f32 0.0, %v1673
      %v1675 = vpop.f32.mrb[0].mxu0
      %1676 = vmatprep.mubr.bf16.mxu0 0
      %1677 = vmatmul.mubr.bf16.gmra.mrb[0].mxu0 %v695
      %v1678 = vpop.f32.mrb[0].mxu0
      %v1679 = vadd.f32 0.0, %v1678
      %v1680 = vpop.f32.mrb[0].mxu0
      %v1681 = vpop.f32.mrb[0].mxu0
      %v1682 = vadd.f32 0.0, %v1681
      %v1683 = vpop.f32.mrb[0].mxu0
      %1684 = vmatprep.mubr.bf16.mxu0 0
      %1685 = vmatmul.mubr.bf16.gmra.mrb[0].mxu0 %v1546
      %v1686 = vpop.f32.mrb[0].mxu0
      %v1687 = vadd.f32 0.0, %v1686
      %v1688 = vpop.f32.mrb[0].mxu0
      %v1689 = vpop.f32.mrb[0].mxu0
      %v1690 = vadd.f32 0.0, %v1689
      %v1691 = vpop.f32.mrb[0].mxu0
      %1692 = vdwg.mxu0
      %v1693 = vadd.f32 %v1487, %v1631
      %v1694 = vadd.f32 %v1488, %v1634
      %v1695 = vadd.f32 %v1489, %v1639
      %v1696 = vadd.f32 %v1490, %v1642
      %v1697 = vadd.f32 %v1491, %v1647
      %v1698 = vadd.f32 %v1492, %v1650
      %v1699 = vadd.f32 %v1493, %v1655
      %v1700 = vadd.f32 %v1494, %v1658
      %v1701 = vadd.f32 %v1495, %v1663
      %v1702 = vadd.f32 %v1496, %v1666
      %v1703 = vadd.f32 %v1497, %v1671
      %v1704 = vadd.f32 %v1498, %v1674
      %v1705 = vadd.f32 %v1499, %v1679
      %v1706 = vadd.f32 %v1500, %v1682
      %v1707 = vadd.f32 %v1501, %v1687
      %v1708 = vadd.f32 %v1502, %v1690
      %v1710 = vrot.slane %v438, 5
      %v1711 = vrot.slane %v1710, 4
      %v1712 = vrot.slane %v439, 5
      %v1713 = vsel %vm1052, %v1711, %v1712
      %v1714 = vrot.slane %v1712, 4
      %v1715 = vrot.slane %v440, 5
      %v1716 = vsel %vm1052, %v1714, %v1715
      %s1717 = scalar_lea.vmem %s2, 320
      %v1718 = vld [vmem:[%s1717] sm:$0xf]
      %v1719 = vld [vmem:[%s1717 + $0x4] sm:$0xf]
      %v1720 = vld [vmem:[%s1717 + $0x8] sm:$0xf]
      %v1721 = vld [vmem:[%s1717 + $0xc] sm:$0xf]
      %v1722 = vld [vmem:[%s1717 + $0x10] sm:$0xf]
      %v1723 = vld [vmem:[%s1717 + $0x14] sm:$0xf]
      %v1724 = vld [vmem:[%s1717 + $0x18] sm:$0xf]
      %v1725 = vld [vmem:[%s1717 + $0x1c] sm:$0xf]
      %v1726 = vld [vmem:[%s1717 + $0x20] sm:$0xf]
      %v1727 = vld [vmem:[%s1717 + $0x24] sm:$0xf]
      %v1728 = vld [vmem:[%s1717 + $0x28] sm:$0xf]
      %v1729 = vld [vmem:[%s1717 + $0x2c] sm:$0xf]
      %v1730 = vld [vmem:[%s1717 + $0x30] sm:$0xf]
      %v1731 = vld [vmem:[%s1717 + $0x34] sm:$0xf]
      %v1732 = vld [vmem:[%s1717 + $0x38] sm:$0xf]
      %v1733 = vld [vmem:[%s1717 + $0x3c] sm:$0xf]
      %v1734 = vunpack.c.l.b16 %v1713
      %v1735 = vunpack.c.l.b16 %v1716
      %v1736 = vpack.c.b16 %v1735, %v1734
      %v1754 = vunpack.c.l.b16 %v1718
      %v1755 = vunpack.c.l.b16 %v1719
      %v1756 = vunpack.c.l.b16 %v1720
      %v1757 = vunpack.c.l.b16 %v1721
      %v1758 = vunpack.c.l.b16 %v1722
      %v1759 = vunpack.c.l.b16 %v1723
      %v1760 = vunpack.c.l.b16 %v1724
      %v1761 = vunpack.c.l.b16 %v1725
      %v1762 = vunpack.c.l.b16 %v1726
      %v1763 = vunpack.c.l.b16 %v1727
      %v1764 = vunpack.c.l.b16 %v1728
      %v1765 = vunpack.c.l.b16 %v1729
      %v1766 = vunpack.c.l.b16 %v1730
      %v1767 = vunpack.c.l.b16 %v1731
      %v1768 = vunpack.c.l.b16 %v1732
      %v1769 = vunpack.c.l.b16 %v1733
      %v1770 = vpack.c.b16 %v1755, %v1754
      %v1771 = vpack.c.b16 %v1757, %v1756
      %v1772 = vpack.c.b16 %v1759, %v1758
      %v1773 = vpack.c.b16 %v1761, %v1760
      %v1774 = vpack.c.b16 %v1763, %v1762
      %v1775 = vpack.c.b16 %v1765, %v1764
      %v1776 = vpack.c.b16 %v1767, %v1766
      %v1777 = vpack.c.b16 %v1769, %v1768
      %1786 = vmatprep.subr.bf16.mxu0 0
      %1787 = vmatpush1.bf16.msra.mxu0 %v1770
      %1788 = vmatprep.subr.bf16.mxu0 0
      %1789 = vmatpush1.bf16.msra.mxu0 %v1771
      %1790 = vmatprep.subr.bf16.mxu0 0
      %1791 = vmatpush1.bf16.msra.mxu0 %v1772
      %1792 = vmatprep.subr.bf16.mxu0 0
      %1793 = vmatpush1.bf16.msra.mxu0 %v1773
      %1794 = vmatprep.subr.bf16.mxu0 0
      %1795 = vmatpush1.bf16.msra.mxu0 %v1774
      %1796 = vmatprep.subr.bf16.mxu0 0
      %1797 = vmatpush1.bf16.msra.mxu0 %v1775
      %1798 = vmatprep.subr.bf16.mxu0 0
      %1799 = vmatpush1.bf16.msra.mxu0 %v1776
      %1800 = vmatprep.subr.bf16.mxu0 0
      %1801 = vmatpush1.bf16.msra.mxu0 %v1777
      %1802 = vmatprep.subr.bf16.mxu0 0
      %1803 = vmatpush1.bf16.msra.mxu0 0
      %1804 = vmatprep.subr.bf16.mxu0 0
      %1805 = vmatpush1.bf16.msra.mxu0 0
      %1806 = vmatprep.subr.bf16.mxu0 0
      %1807 = vmatpush1.bf16.msra.mxu0 0
      %1808 = vmatprep.subr.bf16.mxu0 0
      %1809 = vmatpush1.bf16.msra.mxu0 0
      %1810 = vmatprep.subr.bf16.mxu0 0
      %1811 = vmatpush1.bf16.msra.mxu0 0
      %1812 = vmatprep.subr.bf16.mxu0 0
      %1813 = vmatpush1.bf16.msra.mxu0 0
      %1814 = vmatprep.subr.bf16.mxu0 0
      %1815 = vmatpush1.bf16.msra.mxu0 0
      %1816 = vmatprep.subr.bf16.mxu0 0
      %1817 = vmatpush1.bf16.msra.mxu0 0
      %1818 = vmatprep.mubr.bf16.mxu0 0
      %1819 = vmatmul.mubr.bf16.gmra.mrb[0].mxu0 %v1143
      %v1820 = vpop.f32.mrb[0].mxu0
      %v1821 = vadd.f32 0.0, %v1820
      %v1822 = vpop.f32.mrb[0].mxu0
      %v1823 = vpop.f32.mrb[0].mxu0
      %v1824 = vadd.f32 0.0, %v1823
      %v1825 = vpop.f32.mrb[0].mxu0
      %1826 = vmatprep.mubr.bf16.mxu0 0
      %1827 = vmatmul.mubr.bf16.gmra.mrb[0].mxu0 %v1144
      %v1828 = vpop.f32.mrb[0].mxu0
      %v1829 = vadd.f32 0.0, %v1828
      %v1830 = vpop.f32.mrb[0].mxu0
      %v1831 = vpop.f32.mrb[0].mxu0
      %v1832 = vadd.f32 0.0, %v1831
      %v1833 = vpop.f32.mrb[0].mxu0
      %1834 = vmatprep.mubr.bf16.mxu0 0
      %1835 = vmatmul.mubr.bf16.gmra.mrb[0].mxu0 %v1145
      %v1836 = vpop.f32.mrb[0].mxu0
      %v1837 = vadd.f32 0.0, %v1836
      %v1838 = vpop.f32.mrb[0].mxu0
      %v1839 = vpop.f32.mrb[0].mxu0
      %v1840 = vadd.f32 0.0, %v1839
      %v1841 = vpop.f32.mrb[0].mxu0
      %1842 = vmatprep.mubr.bf16.mxu0 0
      %1843 = vmatmul.mubr.bf16.gmra.mrb[0].mxu0 %v1146
      %v1844 = vpop.f32.mrb[0].mxu0
      %v1845 = vadd.f32 0.0, %v1844
      %v1846 = vpop.f32.mrb[0].mxu0
      %v1847 = vpop.f32.mrb[0].mxu0
      %v1848 = vadd.f32 0.0, %v1847
      %v1849 = vpop.f32.mrb[0].mxu0
      %1850 = vmatprep.mubr.bf16.mxu0 0
      %1851 = vmatmul.mubr.bf16.gmra.mrb[0].mxu0 %v1147
      %v1852 = vpop.f32.mrb[0].mxu0
      %v1853 = vadd.f32 0.0, %v1852
      %v1854 = vpop.f32.mrb[0].mxu0
      %v1855 = vpop.f32.mrb[0].mxu0
      %v1856 = vadd.f32 0.0, %v1855
      %v1857 = vpop.f32.mrb[0].mxu0
      %1858 = vmatprep.mubr.bf16.mxu0 0
      %1859 = vmatmul.mubr.bf16.gmra.mrb[0].mxu0 %v1148
      %v1860 = vpop.f32.mrb[0].mxu0
      %v1861 = vadd.f32 0.0, %v1860
      %v1862 = vpop.f32.mrb[0].mxu0
      %v1863 = vpop.f32.mrb[0].mxu0
      %v1864 = vadd.f32 0.0, %v1863
      %v1865 = vpop.f32.mrb[0].mxu0
      %1866 = vmatprep.mubr.bf16.mxu0 0
      %1867 = vmatmul.mubr.bf16.gmra.mrb[0].mxu0 %v1149
      %v1868 = vpop.f32.mrb[0].mxu0
      %v1869 = vadd.f32 0.0, %v1868
      %v1870 = vpop.f32.mrb[0].mxu0
      %v1871 = vpop.f32.mrb[0].mxu0
      %v1872 = vadd.f32 0.0, %v1871
      %v1873 = vpop.f32.mrb[0].mxu0
      %1874 = vmatprep.mubr.bf16.mxu0 0
      %1875 = vmatmul.mubr.bf16.gmra.mrb[0].mxu0 %v1736
      %v1876 = vpop.f32.mrb[0].mxu0
      %v1877 = vadd.f32 0.0, %v1876
      %v1878 = vpop.f32.mrb[0].mxu0
      %v1879 = vpop.f32.mrb[0].mxu0
      %v1880 = vadd.f32 0.0, %v1879
      %v1881 = vpop.f32.mrb[0].mxu0
      %1882 = vdwg.mxu0
      %v1883 = vadd.f32 %v1693, %v1821
      %v1884 = vadd.f32 %v1694, %v1824
      %v1885 = vadd.f32 %v1695, %v1829
      %v1886 = vadd.f32 %v1696, %v1832
      %v1887 = vadd.f32 %v1697, %v1837
      %v1888 = vadd.f32 %v1698, %v1840
      %v1889 = vadd.f32 %v1699, %v1845
      %v1890 = vadd.f32 %v1700, %v1848
      %v1891 = vadd.f32 %v1701, %v1853
      %v1892 = vadd.f32 %v1702, %v1856
      %v1893 = vadd.f32 %v1703, %v1861
      %v1894 = vadd.f32 %v1704, %v1864
      %v1895 = vadd.f32 %v1705, %v1869
      %v1896 = vadd.f32 %v1706, %v1872
      %v1897 = vadd.f32 %v1707, %v1877
      %v1898 = vadd.f32 %v1708, %v1880
      %s1899 = scalar_lea.vmem %s2, 384
      %v1900 = vld [vmem:[%s1899] sm:$0xf]
      %v1901 = vld [vmem:[%s1899 + $0x4] sm:$0xf]
      %v1902 = vld [vmem:[%s1899 + $0x8] sm:$0xf]
      %v1903 = vld [vmem:[%s1899 + $0xc] sm:$0xf]
      %v1904 = vld [vmem:[%s1899 + $0x10] sm:$0xf]
      %v1905 = vld [vmem:[%s1899 + $0x14] sm:$0xf]
      %v1906 = vld [vmem:[%s1899 + $0x18] sm:$0xf]
      %v1907 = vld [vmem:[%s1899 + $0x1c] sm:$0xf]
      %v1908 = vld [vmem:[%s1899 + $0x20] sm:$0xf]
      %v1909 = vld [vmem:[%s1899 + $0x24] sm:$0xf]
      %v1910 = vld [vmem:[%s1899 + $0x28] sm:$0xf]
      %v1911 = vld [vmem:[%s1899 + $0x2c] sm:$0xf]
      %v1912 = vld [vmem:[%s1899 + $0x30] sm:$0xf]
      %v1913 = vld [vmem:[%s1899 + $0x34] sm:$0xf]
      %v1914 = vld [vmem:[%s1899 + $0x38] sm:$0xf]
      %v1915 = vld [vmem:[%s1899 + $0x3c] sm:$0xf]
      %v1918 = vunpack.c.l.b16 %v441
      %v1919 = vunpack.c.l.b16 %v442
      %v1920 = vpack.c.b16 %v1919, %v1918
      %v1938 = vunpack.c.l.b16 %v1900
      %v1939 = vunpack.c.l.b16 %v1901
      %v1940 = vunpack.c.l.b16 %v1902
      %v1941 = vunpack.c.l.b16 %v1903
      %v1942 = vunpack.c.l.b16 %v1904
      %v1943 = vunpack.c.l.b16 %v1905
      %v1944 = vunpack.c.l.b16 %v1906
      %v1945 = vunpack.c.l.b16 %v1907
      %v1946 = vunpack.c.l.b16 %v1908
      %v1947 = vunpack.c.l.b16 %v1909
      %v1948 = vunpack.c.l.b16 %v1910
      %v1949 = vunpack.c.l.b16 %v1911
      %v1950 = vunpack.c.l.b16 %v1912
      %v1951 = vunpack.c.l.b16 %v1913
      %v1952 = vunpack.c.l.b16 %v1914
      %v1953 = vunpack.c.l.b16 %v1915
      %v1954 = vpack.c.b16 %v1939, %v1938
      %v1955 = vpack.c.b16 %v1941, %v1940
      %v1956 = vpack.c.b16 %v1943, %v1942
      %v1957 = vpack.c.b16 %v1945, %v1944
      %v1958 = vpack.c.b16 %v1947, %v1946
      %v1959 = vpack.c.b16 %v1949, %v1948
      %v1960 = vpack.c.b16 %v1951, %v1950
      %v1961 = vpack.c.b16 %v1953, %v1952
      %1970 = vmatprep.subr.bf16.mxu0 0
      %1971 = vmatpush1.bf16.msra.mxu0 %v1954
      %1972 = vmatprep.subr.bf16.mxu0 0
      %1973 = vmatpush1.bf16.msra.mxu0 %v1955
      %1974 = vmatprep.subr.bf16.mxu0 0
      %1975 = vmatpush1.bf16.msra.mxu0 %v1956
      %1976 = vmatprep.subr.bf16.mxu0 0
      %1977 = vmatpush1.bf16.msra.mxu0 %v1957
      %1978 = vmatprep.subr.bf16.mxu0 0
      %1979 = vmatpush1.bf16.msra.mxu0 %v1958
      %1980 = vmatprep.subr.bf16.mxu0 0
      %1981 = vmatpush1.bf16.msra.mxu0 %v1959
      %1982 = vmatprep.subr.bf16.mxu0 0
      %1983 = vmatpush1.bf16.msra.mxu0 %v1960
      %1984 = vmatprep.subr.bf16.mxu0 0
      %1985 = vmatpush1.bf16.msra.mxu0 %v1961
      %1986 = vmatprep.subr.bf16.mxu0 0
      %1987 = vmatpush1.bf16.msra.mxu0 0
      %1988 = vmatprep.subr.bf16.mxu0 0
      %1989 = vmatpush1.bf16.msra.mxu0 0
      %1990 = vmatprep.subr.bf16.mxu0 0
      %1991 = vmatpush1.bf16.msra.mxu0 0
      %1992 = vmatprep.subr.bf16.mxu0 0
      %1993 = vmatpush1.bf16.msra.mxu0 0
      %1994 = vmatprep.subr.bf16.mxu0 0
      %1995 = vmatpush1.bf16.msra.mxu0 0
      %1996 = vmatprep.subr.bf16.mxu0 0
      %1997 = vmatpush1.bf16.msra.mxu0 0
      %1998 = vmatprep.subr.bf16.mxu0 0
      %1999 = vmatpush1.bf16.msra.mxu0 0
      %2000 = vmatprep.subr.bf16.mxu0 0
      %2001 = vmatpush1.bf16.msra.mxu0 0
      %2002 = vmatprep.mubr.bf16.mxu0 0
      %2003 = vmatmul.mubr.bf16.gmra.mrb[0].mxu0 %v883
      %v2004 = vpop.f32.mrb[0].mxu0
      %v2005 = vadd.f32 0.0, %v2004
      %v2006 = vpop.f32.mrb[0].mxu0
      %v2007 = vpop.f32.mrb[0].mxu0
      %v2008 = vadd.f32 0.0, %v2007
      %v2009 = vpop.f32.mrb[0].mxu0
      %2010 = vmatprep.mubr.bf16.mxu0 0
      %2011 = vmatmul.mubr.bf16.gmra.mrb[0].mxu0 %v884
      %v2012 = vpop.f32.mrb[0].mxu0
      %v2013 = vadd.f32 0.0, %v2012
      %v2014 = vpop.f32.mrb[0].mxu0
      %v2015 = vpop.f32.mrb[0].mxu0
      %v2016 = vadd.f32 0.0, %v2015
      %v2017 = vpop.f32.mrb[0].mxu0
      %2018 = vmatprep.mubr.bf16.mxu0 0
      %2019 = vmatmul.mubr.bf16.gmra.mrb[0].mxu0 %v885
      %v2020 = vpop.f32.mrb[0].mxu0
      %v2021 = vadd.f32 0.0, %v2020
      %v2022 = vpop.f32.mrb[0].mxu0
      %v2023 = vpop.f32.mrb[0].mxu0
      %v2024 = vadd.f32 0.0, %v2023
      %v2025 = vpop.f32.mrb[0].mxu0
      %2026 = vmatprep.mubr.bf16.mxu0 0
      %2027 = vmatmul.mubr.bf16.gmra.mrb[0].mxu0 %v886
      %v2028 = vpop.f32.mrb[0].mxu0
      %v2029 = vadd.f32 0.0, %v2028
      %v2030 = vpop.f32.mrb[0].mxu0
      %v2031 = vpop.f32.mrb[0].mxu0
      %v2032 = vadd.f32 0.0, %v2031
      %v2033 = vpop.f32.mrb[0].mxu0
      %2034 = vmatprep.mubr.bf16.mxu0 0
      %2035 = vmatmul.mubr.bf16.gmra.mrb[0].mxu0 %v887
      %v2036 = vpop.f32.mrb[0].mxu0
      %v2037 = vadd.f32 0.0, %v2036
      %v2038 = vpop.f32.mrb[0].mxu0
      %v2039 = vpop.f32.mrb[0].mxu0
      %v2040 = vadd.f32 0.0, %v2039
      %v2041 = vpop.f32.mrb[0].mxu0
      %2042 = vmatprep.mubr.bf16.mxu0 0
      %2043 = vmatmul.mubr.bf16.gmra.mrb[0].mxu0 %v888
      %v2044 = vpop.f32.mrb[0].mxu0
      %v2045 = vadd.f32 0.0, %v2044
      %v2046 = vpop.f32.mrb[0].mxu0
      %v2047 = vpop.f32.mrb[0].mxu0
      %v2048 = vadd.f32 0.0, %v2047
      %v2049 = vpop.f32.mrb[0].mxu0
      %2050 = vmatprep.mubr.bf16.mxu0 0
      %2051 = vmatmul.mubr.bf16.gmra.mrb[0].mxu0 %v1340
      %v2052 = vpop.f32.mrb[0].mxu0
      %v2053 = vadd.f32 0.0, %v2052
      %v2054 = vpop.f32.mrb[0].mxu0
      %v2055 = vpop.f32.mrb[0].mxu0
      %v2056 = vadd.f32 0.0, %v2055
      %v2057 = vpop.f32.mrb[0].mxu0
      %2058 = vmatprep.mubr.bf16.mxu0 0
      %2059 = vmatmul.mubr.bf16.gmra.mrb[0].mxu0 %v1920
      %v2060 = vpop.f32.mrb[0].mxu0
      %v2061 = vadd.f32 0.0, %v2060
      %v2062 = vpop.f32.mrb[0].mxu0
      %v2063 = vpop.f32.mrb[0].mxu0
      %v2064 = vadd.f32 0.0, %v2063
      %v2065 = vpop.f32.mrb[0].mxu0
      %2066 = vdwg.mxu0
      %v2067 = vadd.f32 %v1883, %v2005
      %v2068 = vadd.f32 %v1884, %v2008
      %v2069 = vadd.f32 %v1885, %v2013
      %v2070 = vadd.f32 %v1886, %v2016
      %v2071 = vadd.f32 %v1887, %v2021
      %v2072 = vadd.f32 %v1888, %v2024
      %v2073 = vadd.f32 %v1889, %v2029
      %v2074 = vadd.f32 %v1890, %v2032
      %v2075 = vadd.f32 %v1891, %v2037
      %v2076 = vadd.f32 %v1892, %v2040
      %v2077 = vadd.f32 %v1893, %v2045
      %v2078 = vadd.f32 %v1894, %v2048
      %v2079 = vadd.f32 %v1895, %v2053
      %v2080 = vadd.f32 %v1896, %v2056
      %v2081 = vadd.f32 %v1897, %v2061
      %v2082 = vadd.f32 %v1898, %v2064
      %v2084 = vshrl.u32 %v441, 16
      %v2086 = vrot.slane %v2084, 4
      %v2087 = vshll.u32 %v441, 16
      %v2089 = vrot.slane %v2087, 5
      %v2090 = vor.u32 %v2086, %v2089
      %v2091 = vrot.slane %v2090, 4
      %v2093 = vshll.u32 %v442, 16
      %v2095 = vrot.slane %v2093, 5
      %v2096 = vsel %vm462, %v2091, %v2095
      %v2097 = vshrl.u32 %v442, 16
      %v2099 = vrot.slane %v2097, 4
      %v2100 = vor.u32 %v2099, %v2095
      %v2101 = vrot.slane %v2100, 4
      %v2103 = vshll.u32 %v443, 16
      %v2105 = vrot.slane %v2103, 5
      %v2106 = vsel %vm462, %v2101, %v2105
      %s2107 = scalar_lea.vmem %s2, 448
      %v2108 = vld [vmem:[%s2107] sm:$0xf]
      %v2109 = vld [vmem:[%s2107 + $0x4] sm:$0xf]
      %v2110 = vld [vmem:[%s2107 + $0x8] sm:$0xf]
      %v2111 = vld [vmem:[%s2107 + $0xc] sm:$0xf]
      %v2112 = vld [vmem:[%s2107 + $0x10] sm:$0xf]
      %v2113 = vld [vmem:[%s2107 + $0x14] sm:$0xf]
      %v2114 = vld [vmem:[%s2107 + $0x18] sm:$0xf]
      %v2115 = vld [vmem:[%s2107 + $0x1c] sm:$0xf]
      %v2116 = vld [vmem:[%s2107 + $0x20] sm:$0xf]
      %v2117 = vld [vmem:[%s2107 + $0x24] sm:$0xf]
      %v2118 = vld [vmem:[%s2107 + $0x28] sm:$0xf]
      %v2119 = vld [vmem:[%s2107 + $0x2c] sm:$0xf]
      %v2120 = vld [vmem:[%s2107 + $0x30] sm:$0xf]
      %v2121 = vld [vmem:[%s2107 + $0x34] sm:$0xf]
      %v2122 = vld [vmem:[%s2107 + $0x38] sm:$0xf]
      %v2123 = vld [vmem:[%s2107 + $0x3c] sm:$0xf]
      %v2124 = vunpack.c.l.b16 %v2096
      %v2125 = vunpack.c.l.b16 %v2106
      %v2126 = vpack.c.b16 %v2125, %v2124
      %v2144 = vunpack.c.l.b16 %v2108
      %v2145 = vunpack.c.l.b16 %v2109
      %v2146 = vunpack.c.l.b16 %v2110
      %v2147 = vunpack.c.l.b16 %v2111
      %v2148 = vunpack.c.l.b16 %v2112
      %v2149 = vunpack.c.l.b16 %v2113
      %v2150 = vunpack.c.l.b16 %v2114
      %v2151 = vunpack.c.l.b16 %v2115
      %v2152 = vunpack.c.l.b16 %v2116
      %v2153 = vunpack.c.l.b16 %v2117
      %v2154 = vunpack.c.l.b16 %v2118
      %v2155 = vunpack.c.l.b16 %v2119
      %v2156 = vunpack.c.l.b16 %v2120
      %v2157 = vunpack.c.l.b16 %v2121
      %v2158 = vunpack.c.l.b16 %v2122
      %v2159 = vunpack.c.l.b16 %v2123
      %v2160 = vpack.c.b16 %v2145, %v2144
      %v2161 = vpack.c.b16 %v2147, %v2146
      %v2162 = vpack.c.b16 %v2149, %v2148
      %v2163 = vpack.c.b16 %v2151, %v2150
      %v2164 = vpack.c.b16 %v2153, %v2152
      %v2165 = vpack.c.b16 %v2155, %v2154
      %v2166 = vpack.c.b16 %v2157, %v2156
      %v2167 = vpack.c.b16 %v2159, %v2158
      %2176 = vmatprep.subr.bf16.mxu0 0
      %2177 = vmatpush1.bf16.msra.mxu0 %v2160
      %2178 = vmatprep.subr.bf16.mxu0 0
      %2179 = vmatpush1.bf16.msra.mxu0 %v2161
      %2180 = vmatprep.subr.bf16.mxu0 0
      %2181 = vmatpush1.bf16.msra.mxu0 %v2162
      %2182 = vmatprep.subr.bf16.mxu0 0
      %2183 = vmatpush1.bf16.msra.mxu0 %v2163
      %2184 = vmatprep.subr.bf16.mxu0 0
      %2185 = vmatpush1.bf16.msra.mxu0 %v2164
      %2186 = vmatprep.subr.bf16.mxu0 0
      %2187 = vmatpush1.bf16.msra.mxu0 %v2165
      %2188 = vmatprep.subr.bf16.mxu0 0
      %2189 = vmatpush1.bf16.msra.mxu0 %v2166
      %2190 = vmatprep.subr.bf16.mxu0 0
      %2191 = vmatpush1.bf16.msra.mxu0 %v2167
      %2192 = vmatprep.subr.bf16.mxu0 0
      %2193 = vmatpush1.bf16.msra.mxu0 0
      %2194 = vmatprep.subr.bf16.mxu0 0
      %2195 = vmatpush1.bf16.msra.mxu0 0
      %2196 = vmatprep.subr.bf16.mxu0 0
      %2197 = vmatpush1.bf16.msra.mxu0 0
      %2198 = vmatprep.subr.bf16.mxu0 0
      %2199 = vmatpush1.bf16.msra.mxu0 0
      %2200 = vmatprep.subr.bf16.mxu0 0
      %2201 = vmatpush1.bf16.msra.mxu0 0
      %2202 = vmatprep.subr.bf16.mxu0 0
      %2203 = vmatpush1.bf16.msra.mxu0 0
      %2204 = vmatprep.subr.bf16.mxu0 0
      %2205 = vmatpush1.bf16.msra.mxu0 0
      %2206 = vmatprep.subr.bf16.mxu0 0
      %2207 = vmatpush1.bf16.msra.mxu0 0
      %2208 = vmatprep.mubr.bf16.mxu0 0
      %2209 = vmatmul.mubr.bf16.gmra.mrb[0].mxu0 %v690
      %v2210 = vpop.f32.mrb[0].mxu0
      %v2211 = vadd.f32 0.0, %v2210
      %v2212 = vpop.f32.mrb[0].mxu0
      %v2213 = vpop.f32.mrb[0].mxu0
      %v2214 = vadd.f32 0.0, %v2213
      %v2215 = vpop.f32.mrb[0].mxu0
      %2216 = vmatprep.mubr.bf16.mxu0 0
      %2217 = vmatmul.mubr.bf16.gmra.mrb[0].mxu0 %v691
      %v2218 = vpop.f32.mrb[0].mxu0
      %v2219 = vadd.f32 0.0, %v2218
      %v2220 = vpop.f32.mrb[0].mxu0
      %v2221 = vpop.f32.mrb[0].mxu0
      %v2222 = vadd.f32 0.0, %v2221
      %v2223 = vpop.f32.mrb[0].mxu0
      %2224 = vmatprep.mubr.bf16.mxu0 0
      %2225 = vmatmul.mubr.bf16.gmra.mrb[0].mxu0 %v692
      %v2226 = vpop.f32.mrb[0].mxu0
      %v2227 = vadd.f32 0.0, %v2226
      %v2228 = vpop.f32.mrb[0].mxu0
      %v2229 = vpop.f32.mrb[0].mxu0
      %v2230 = vadd.f32 0.0, %v2229
      %v2231 = vpop.f32.mrb[0].mxu0
      %2232 = vmatprep.mubr.bf16.mxu0 0
      %2233 = vmatmul.mubr.bf16.gmra.mrb[0].mxu0 %v693
      %v2234 = vpop.f32.mrb[0].mxu0
      %v2235 = vadd.f32 0.0, %v2234
      %v2236 = vpop.f32.mrb[0].mxu0
      %v2237 = vpop.f32.mrb[0].mxu0
      %v2238 = vadd.f32 0.0, %v2237
      %v2239 = vpop.f32.mrb[0].mxu0
      %2240 = vmatprep.mubr.bf16.mxu0 0
      %2241 = vmatmul.mubr.bf16.gmra.mrb[0].mxu0 %v694
      %v2242 = vpop.f32.mrb[0].mxu0
      %v2243 = vadd.f32 0.0, %v2242
      %v2244 = vpop.f32.mrb[0].mxu0
      %v2245 = vpop.f32.mrb[0].mxu0
      %v2246 = vadd.f32 0.0, %v2245
      %v2247 = vpop.f32.mrb[0].mxu0
      %2248 = vmatprep.mubr.bf16.mxu0 0
      %2249 = vmatmul.mubr.bf16.gmra.mrb[0].mxu0 %v695
      %v2250 = vpop.f32.mrb[0].mxu0
      %v2251 = vadd.f32 0.0, %v2250
      %v2252 = vpop.f32.mrb[0].mxu0
      %v2253 = vpop.f32.mrb[0].mxu0
      %v2254 = vadd.f32 0.0, %v2253
      %v2255 = vpop.f32.mrb[0].mxu0
      %2256 = vmatprep.mubr.bf16.mxu0 0
      %2257 = vmatmul.mubr.bf16.gmra.mrb[0].mxu0 %v1546
      %v2258 = vpop.f32.mrb[0].mxu0
      %v2259 = vadd.f32 0.0, %v2258
      %v2260 = vpop.f32.mrb[0].mxu0
      %v2261 = vpop.f32.mrb[0].mxu0
      %v2262 = vadd.f32 0.0, %v2261
      %v2263 = vpop.f32.mrb[0].mxu0
      %2264 = vmatprep.mubr.bf16.mxu0 0
      %2265 = vmatmul.mubr.bf16.gmra.mrb[0].mxu0 %v2126
      %v2266 = vpop.f32.mrb[0].mxu0
      %v2267 = vadd.f32 0.0, %v2266
      %v2268 = vpop.f32.mrb[0].mxu0
      %v2269 = vpop.f32.mrb[0].mxu0
      %v2270 = vadd.f32 0.0, %v2269
      %v2271 = vpop.f32.mrb[0].mxu0
      %2272 = vdwg.mxu0
      %v2273 = vadd.f32 %v2067, %v2211
      %v2274 = vadd.f32 %v2068, %v2214
      %v2275 = vadd.f32 %v2069, %v2219
      %v2276 = vadd.f32 %v2070, %v2222
      %v2277 = vadd.f32 %v2071, %v2227
      %v2278 = vadd.f32 %v2072, %v2230
      %v2279 = vadd.f32 %v2073, %v2235
      %v2280 = vadd.f32 %v2074, %v2238
      %v2281 = vadd.f32 %v2075, %v2243
      %v2282 = vadd.f32 %v2076, %v2246
      %v2283 = vadd.f32 %v2077, %v2251
      %v2284 = vadd.f32 %v2078, %v2254
      %v2285 = vadd.f32 %v2079, %v2259
      %v2286 = vadd.f32 %v2080, %v2262
      %v2287 = vadd.f32 %v2081, %v2267
      %v2288 = vadd.f32 %v2082, %v2270
      %v2290 = vrot.slane %v441, 5
      %v2291 = vrot.slane %v2290, 4
      %v2292 = vrot.slane %v442, 5
      %v2293 = vsel %vm1052, %v2291, %v2292
      %v2294 = vrot.slane %v2292, 4
      %v2295 = vrot.slane %v443, 5
      %v2296 = vsel %vm1052, %v2294, %v2295
      %s2297 = scalar_lea.vmem %s2, 512
      %v2298 = vld [vmem:[%s2297] sm:$0xf]
      %v2299 = vld [vmem:[%s2297 + $0x4] sm:$0xf]
      %v2300 = vld [vmem:[%s2297 + $0x8] sm:$0xf]
      %v2301 = vld [vmem:[%s2297 + $0xc] sm:$0xf]
      %v2302 = vld [vmem:[%s2297 + $0x10] sm:$0xf]
      %v2303 = vld [vmem:[%s2297 + $0x14] sm:$0xf]
      %v2304 = vld [vmem:[%s2297 + $0x18] sm:$0xf]
      %v2305 = vld [vmem:[%s2297 + $0x1c] sm:$0xf]
      %v2306 = vld [vmem:[%s2297 + $0x20] sm:$0xf]
      %v2307 = vld [vmem:[%s2297 + $0x24] sm:$0xf]
      %v2308 = vld [vmem:[%s2297 + $0x28] sm:$0xf]
      %v2309 = vld [vmem:[%s2297 + $0x2c] sm:$0xf]
      %v2310 = vld [vmem:[%s2297 + $0x30] sm:$0xf]
      %v2311 = vld [vmem:[%s2297 + $0x34] sm:$0xf]
      %v2312 = vld [vmem:[%s2297 + $0x38] sm:$0xf]
      %v2313 = vld [vmem:[%s2297 + $0x3c] sm:$0xf]
      %v2314 = vunpack.c.l.b16 %v2293
      %v2315 = vunpack.c.l.b16 %v2296
      %v2316 = vpack.c.b16 %v2315, %v2314
      %v2334 = vunpack.c.l.b16 %v2298
      %v2335 = vunpack.c.l.b16 %v2299
      %v2336 = vunpack.c.l.b16 %v2300
      %v2337 = vunpack.c.l.b16 %v2301
      %v2338 = vunpack.c.l.b16 %v2302
      %v2339 = vunpack.c.l.b16 %v2303
      %v2340 = vunpack.c.l.b16 %v2304
      %v2341 = vunpack.c.l.b16 %v2305
      %v2342 = vunpack.c.l.b16 %v2306
      %v2343 = vunpack.c.l.b16 %v2307
      %v2344 = vunpack.c.l.b16 %v2308
      %v2345 = vunpack.c.l.b16 %v2309
      %v2346 = vunpack.c.l.b16 %v2310
      %v2347 = vunpack.c.l.b16 %v2311
      %v2348 = vunpack.c.l.b16 %v2312
      %v2349 = vunpack.c.l.b16 %v2313
      %v2350 = vpack.c.b16 %v2335, %v2334
      %v2351 = vpack.c.b16 %v2337, %v2336
      %v2352 = vpack.c.b16 %v2339, %v2338
      %v2353 = vpack.c.b16 %v2341, %v2340
      %v2354 = vpack.c.b16 %v2343, %v2342
      %v2355 = vpack.c.b16 %v2345, %v2344
      %v2356 = vpack.c.b16 %v2347, %v2346
      %v2357 = vpack.c.b16 %v2349, %v2348
      %2366 = vmatprep.subr.bf16.mxu0 0
      %2367 = vmatpush1.bf16.msra.mxu0 %v2350
      %2368 = vmatprep.subr.bf16.mxu0 0
      %2369 = vmatpush1.bf16.msra.mxu0 %v2351
      %2370 = vmatprep.subr.bf16.mxu0 0
      %2371 = vmatpush1.bf16.msra.mxu0 %v2352
      %2372 = vmatprep.subr.bf16.mxu0 0
      %2373 = vmatpush1.bf16.msra.mxu0 %v2353
      %2374 = vmatprep.subr.bf16.mxu0 0
      %2375 = vmatpush1.bf16.msra.mxu0 %v2354
      %2376 = vmatprep.subr.bf16.mxu0 0
      %2377 = vmatpush1.bf16.msra.mxu0 %v2355
      %2378 = vmatprep.subr.bf16.mxu0 0
      %2379 = vmatpush1.bf16.msra.mxu0 %v2356
      %2380 = vmatprep.subr.bf16.mxu0 0
      %2381 = vmatpush1.bf16.msra.mxu0 %v2357
      %2382 = vmatprep.subr.bf16.mxu0 0
      %2383 = vmatpush1.bf16.msra.mxu0 0
      %2384 = vmatprep.subr.bf16.mxu0 0
      %2385 = vmatpush1.bf16.msra.mxu0 0
      %2386 = vmatprep.subr.bf16.mxu0 0
      %2387 = vmatpush1.bf16.msra.mxu0 0
      %2388 = vmatprep.subr.bf16.mxu0 0
      %2389 = vmatpush1.bf16.msra.mxu0 0
      %2390 = vmatprep.subr.bf16.mxu0 0
      %2391 = vmatpush1.bf16.msra.mxu0 0
      %2392 = vmatprep.subr.bf16.mxu0 0
      %2393 = vmatpush1.bf16.msra.mxu0 0
      %2394 = vmatprep.subr.bf16.mxu0 0
      %2395 = vmatpush1.bf16.msra.mxu0 0
      %2396 = vmatprep.subr.bf16.mxu0 0
      %2397 = vmatpush1.bf16.msra.mxu0 0
      %2398 = vmatprep.mubr.bf16.mxu0 0
      %2399 = vmatmul.mubr.bf16.gmra.mrb[0].mxu0 %v1144
      %v2400 = vpop.f32.mrb[0].mxu0
      %v2401 = vadd.f32 0.0, %v2400
      %v2402 = vpop.f32.mrb[0].mxu0
      %v2403 = vpop.f32.mrb[0].mxu0
      %v2404 = vadd.f32 0.0, %v2403
      %v2405 = vpop.f32.mrb[0].mxu0
      %2406 = vmatprep.mubr.bf16.mxu0 0
      %2407 = vmatmul.mubr.bf16.gmra.mrb[0].mxu0 %v1145
      %v2408 = vpop.f32.mrb[0].mxu0
      %v2409 = vadd.f32 0.0, %v2408
      %v2410 = vpop.f32.mrb[0].mxu0
      %v2411 = vpop.f32.mrb[0].mxu0
      %v2412 = vadd.f32 0.0, %v2411
      %v2413 = vpop.f32.mrb[0].mxu0
      %2414 = vmatprep.mubr.bf16.mxu0 0
      %2415 = vmatmul.mubr.bf16.gmra.mrb[0].mxu0 %v1146
      %v2416 = vpop.f32.mrb[0].mxu0
      %v2417 = vadd.f32 0.0, %v2416
      %v2418 = vpop.f32.mrb[0].mxu0
      %v2419 = vpop.f32.mrb[0].mxu0
      %v2420 = vadd.f32 0.0, %v2419
      %v2421 = vpop.f32.mrb[0].mxu0
      %2422 = vmatprep.mubr.bf16.mxu0 0
      %2423 = vmatmul.mubr.bf16.gmra.mrb[0].mxu0 %v1147
      %v2424 = vpop.f32.mrb[0].mxu0
      %v2425 = vadd.f32 0.0, %v2424
      %v2426 = vpop.f32.mrb[0].mxu0
      %v2427 = vpop.f32.mrb[0].mxu0
      %v2428 = vadd.f32 0.0, %v2427
      %v2429 = vpop.f32.mrb[0].mxu0
      %2430 = vmatprep.mubr.bf16.mxu0 0
      %2431 = vmatmul.mubr.bf16.gmra.mrb[0].mxu0 %v1148
      %v2432 = vpop.f32.mrb[0].mxu0
      %v2433 = vadd.f32 0.0, %v2432
      %v2434 = vpop.f32.mrb[0].mxu0
      %v2435 = vpop.f32.mrb[0].mxu0
      %v2436 = vadd.f32 0.0, %v2435
      %v2437 = vpop.f32.mrb[0].mxu0
      %2438 = vmatprep.mubr.bf16.mxu0 0
      %2439 = vmatmul.mubr.bf16.gmra.mrb[0].mxu0 %v1149
      %v2440 = vpop.f32.mrb[0].mxu0
      %v2441 = vadd.f32 0.0, %v2440
      %v2442 = vpop.f32.mrb[0].mxu0
      %v2443 = vpop.f32.mrb[0].mxu0
      %v2444 = vadd.f32 0.0, %v2443
      %v2445 = vpop.f32.mrb[0].mxu0
      %2446 = vmatprep.mubr.bf16.mxu0 0
      %2447 = vmatmul.mubr.bf16.gmra.mrb[0].mxu0 %v1736
      %v2448 = vpop.f32.mrb[0].mxu0
      %v2449 = vadd.f32 0.0, %v2448
      %v2450 = vpop.f32.mrb[0].mxu0
      %v2451 = vpop.f32.mrb[0].mxu0
      %v2452 = vadd.f32 0.0, %v2451
      %v2453 = vpop.f32.mrb[0].mxu0
      %2454 = vmatprep.mubr.bf16.mxu0 0
      %2455 = vmatmul.mubr.bf16.gmra.mrb[0].mxu0 %v2316
      %v2456 = vpop.f32.mrb[0].mxu0
      %v2457 = vadd.f32 0.0, %v2456
      %v2458 = vpop.f32.mrb[0].mxu0
      %v2459 = vpop.f32.mrb[0].mxu0
      %v2460 = vadd.f32 0.0, %v2459
      %v2461 = vpop.f32.mrb[0].mxu0
      %2462 = vdwg.mxu0
      %v2463 = vadd.f32 %v2273, %v2401
      %v2464 = vadd.f32 %v2274, %v2404
      %v2465 = vadd.f32 %v2275, %v2409
      %v2466 = vadd.f32 %v2276, %v2412
      %v2467 = vadd.f32 %v2277, %v2417
      %v2468 = vadd.f32 %v2278, %v2420
      %v2469 = vadd.f32 %v2279, %v2425
      %v2470 = vadd.f32 %v2280, %v2428
      %v2471 = vadd.f32 %v2281, %v2433
      %v2472 = vadd.f32 %v2282, %v2436
      %v2473 = vadd.f32 %v2283, %v2441
      %v2474 = vadd.f32 %v2284, %v2444
      %v2475 = vadd.f32 %v2285, %v2449
      %v2476 = vadd.f32 %v2286, %v2452
      %v2477 = vadd.f32 %v2287, %v2457
      %v2478 = vadd.f32 %v2288, %v2460
      %v2479 = vld [vmem:[%s3] sm:$0x1]
      %v2481 = vlaneseq
      %v2482 = vshrl.u32 %v2481, 7
      %v2483 = vsub.s32 0, %v2482
      %v2484 = vrot.slane %v2479, %v2483
      %v2486 = vmul.f32 %v2463, %v2484
      %v2487 = vmul.f32 %v2464, %v2484
      %v2488 = vmul.f32 %v2465, %v2484
      %v2489 = vmul.f32 %v2466, %v2484
      %v2490 = vmul.f32 %v2467, %v2484
      %v2491 = vmul.f32 %v2468, %v2484
      %v2492 = vmul.f32 %v2469, %v2484
      %v2493 = vmul.f32 %v2470, %v2484
      %v2494 = vmul.f32 %v2471, %v2484
      %v2495 = vmul.f32 %v2472, %v2484
      %v2496 = vmul.f32 %v2473, %v2484
      %v2497 = vmul.f32 %v2474, %v2484
      %v2498 = vmul.f32 %v2475, %v2484
      %v2499 = vmul.f32 %v2476, %v2484
      %v2500 = vmul.f32 %v2477, %v2484
      %v2501 = vmul.f32 %v2478, %v2484
      %v2502 = vld [vmem:[%s4] sm:$0x1]
      %v2504 = vlaneseq
      %v2505 = vshrl.u32 %v2504, 7
      %v2506 = vsub.s32 0, %v2505
      %v2507 = vrot.slane %v2502, %v2506
      %v2509 = vadd.f32 %v2486, %v2507
      %v2510 = vadd.f32 %v2487, %v2507
      %v2511 = vadd.f32 %v2488, %v2507
      %v2512 = vadd.f32 %v2489, %v2507
      %v2513 = vadd.f32 %v2490, %v2507
      %v2514 = vadd.f32 %v2491, %v2507
      %v2515 = vadd.f32 %v2492, %v2507
      %v2516 = vadd.f32 %v2493, %v2507
      %v2517 = vadd.f32 %v2494, %v2507
      %v2518 = vadd.f32 %v2495, %v2507
      %v2519 = vadd.f32 %v2496, %v2507
      %v2520 = vadd.f32 %v2497, %v2507
      %v2521 = vadd.f32 %v2498, %v2507
      %v2522 = vadd.f32 %v2499, %v2507
      %v2523 = vadd.f32 %v2500, %v2507
      %v2524 = vadd.f32 %v2501, %v2507
      %v2525 = vadd.f32 %v2509, 3.0
      %v2526 = vadd.f32 %v2510, 3.0
      %v2527 = vadd.f32 %v2511, 3.0
      %v2528 = vadd.f32 %v2512, 3.0
      %v2529 = vadd.f32 %v2513, 3.0
      %v2530 = vadd.f32 %v2514, 3.0
      %v2531 = vadd.f32 %v2515, 3.0
      %v2532 = vadd.f32 %v2516, 3.0
      %v2533 = vadd.f32 %v2517, 3.0
      %v2534 = vadd.f32 %v2518, 3.0
      %v2535 = vadd.f32 %v2519, 3.0
      %v2536 = vadd.f32 %v2520, 3.0
      %v2537 = vadd.f32 %v2521, 3.0
      %v2538 = vadd.f32 %v2522, 3.0
      %v2539 = vadd.f32 %v2523, 3.0
      %v2540 = vadd.f32 %v2524, 3.0
      %v2541 = vmax.f32 %v2525, 0.0
      %v2542 = vmax.f32 %v2526, 0.0
      %v2543 = vmax.f32 %v2527, 0.0
      %v2544 = vmax.f32 %v2528, 0.0
      %v2545 = vmax.f32 %v2529, 0.0
      %v2546 = vmax.f32 %v2530, 0.0
      %v2547 = vmax.f32 %v2531, 0.0
      %v2548 = vmax.f32 %v2532, 0.0
      %v2549 = vmax.f32 %v2533, 0.0
      %v2550 = vmax.f32 %v2534, 0.0
      %v2551 = vmax.f32 %v2535, 0.0
      %v2552 = vmax.f32 %v2536, 0.0
      %v2553 = vmax.f32 %v2537, 0.0
      %v2554 = vmax.f32 %v2538, 0.0
      %v2555 = vmax.f32 %v2539, 0.0
      %v2556 = vmax.f32 %v2540, 0.0
      %v2557 = vmin.f32 %v2541, 6.0
      %v2558 = vmin.f32 %v2542, 6.0
      %v2559 = vmin.f32 %v2543, 6.0
      %v2560 = vmin.f32 %v2544, 6.0
      %v2561 = vmin.f32 %v2545, 6.0
      %v2562 = vmin.f32 %v2546, 6.0
      %v2563 = vmin.f32 %v2547, 6.0
      %v2564 = vmin.f32 %v2548, 6.0
      %v2565 = vmin.f32 %v2549, 6.0
      %v2566 = vmin.f32 %v2550, 6.0
      %v2567 = vmin.f32 %v2551, 6.0
      %v2568 = vmin.f32 %v2552, 6.0
      %v2569 = vmin.f32 %v2553, 6.0
      %v2570 = vmin.f32 %v2554, 6.0
      %v2571 = vmin.f32 %v2555, 6.0
      %v2572 = vmin.f32 %v2556, 6.0
      %v2573 = vmul.f32 %v2509, %v2557
      %v2574 = vmul.f32 %v2510, %v2558
      %v2575 = vmul.f32 %v2511, %v2559
      %v2576 = vmul.f32 %v2512, %v2560
      %v2577 = vmul.f32 %v2513, %v2561
      %v2578 = vmul.f32 %v2514, %v2562
      %v2579 = vmul.f32 %v2515, %v2563
      %v2580 = vmul.f32 %v2516, %v2564
      %v2581 = vmul.f32 %v2517, %v2565
      %v2582 = vmul.f32 %v2518, %v2566
      %v2583 = vmul.f32 %v2519, %v2567
      %v2584 = vmul.f32 %v2520, %v2568
      %v2585 = vmul.f32 %v2521, %v2569
      %v2586 = vmul.f32 %v2522, %v2570
      %v2587 = vmul.f32 %v2523, %v2571
      %v2588 = vmul.f32 %v2524, %v2572
      %v2589 = vmul.f32 %v2573, 0.16666667
      %v2590 = vmul.f32 %v2574, 0.16666667
      %v2591 = vmul.f32 %v2575, 0.16666667
      %v2592 = vmul.f32 %v2576, 0.16666667
      %v2593 = vmul.f32 %v2577, 0.16666667
      %v2594 = vmul.f32 %v2578, 0.16666667
      %v2595 = vmul.f32 %v2579, 0.16666667
      %v2596 = vmul.f32 %v2580, 0.16666667
      %v2597 = vmul.f32 %v2581, 0.16666667
      %v2598 = vmul.f32 %v2582, 0.16666667
      %v2599 = vmul.f32 %v2583, 0.16666667
      %v2600 = vmul.f32 %v2584, 0.16666667
      %v2601 = vmul.f32 %v2585, 0.16666667
      %v2602 = vmul.f32 %v2586, 0.16666667
      %v2603 = vmul.f32 %v2587, 0.16666667
      %v2604 = vmul.f32 %v2588, 0.16666667
      %v2605 = vld [vmem:[%s400] sm:$0xf]
      %v2606 = vld [vmem:[%s400 + $0x4] sm:$0xf]
      %v2607 = vld [vmem:[%s400 + $0x8] sm:$0xf]
      %v2608 = vld [vmem:[%s400 + $0xc] sm:$0xf]
      %v2609 = vld [vmem:[%s400 + $0x10] sm:$0xf]
      %v2610 = vld [vmem:[%s400 + $0x14] sm:$0xf]
      %v2611 = vld [vmem:[%s400 + $0x18] sm:$0xf]
      %v2612 = vld [vmem:[%s400 + $0x1c] sm:$0xf]
      %v2613 = vld [vmem:[%s400 + $0x20] sm:$0xf]
      %v2614 = vld [vmem:[%s400 + $0x24] sm:$0xf]
      %v2615 = vld [vmem:[%s400 + $0x28] sm:$0xf]
      %v2616 = vld [vmem:[%s400 + $0x2c] sm:$0xf]
      %v2617 = vld [vmem:[%s400 + $0x30] sm:$0xf]
      %v2618 = vld [vmem:[%s400 + $0x34] sm:$0xf]
      %v2619 = vld [vmem:[%s400 + $0x38] sm:$0xf]
      %v2620 = vld [vmem:[%s400 + $0x3c] sm:$0xf]
      %v2621 = vunpack.c.l.bf16 %v2605
      %v2622 = vunpack.c.l.bf16 %v2606
      %v2623 = vunpack.c.l.bf16 %v2607
      %v2624 = vunpack.c.l.bf16 %v2608
      %v2625 = vunpack.c.l.bf16 %v2609
      %v2626 = vunpack.c.l.bf16 %v2610
      %v2627 = vunpack.c.l.bf16 %v2611
      %v2628 = vunpack.c.l.bf16 %v2612
      %v2629 = vunpack.c.l.bf16 %v2613
      %v2630 = vunpack.c.l.bf16 %v2614
      %v2631 = vunpack.c.l.bf16 %v2615
      %v2632 = vunpack.c.l.bf16 %v2616
      %v2633 = vunpack.c.l.bf16 %v2617
      %v2634 = vunpack.c.l.bf16 %v2618
      %v2635 = vunpack.c.l.bf16 %v2619
      %v2636 = vunpack.c.l.bf16 %v2620
      %v2637 = vadd.f32 %v2589, %v2621
      %v2638 = vadd.f32 %v2590, %v2622
      %v2639 = vadd.f32 %v2591, %v2623
      %v2640 = vadd.f32 %v2592, %v2624
      %v2641 = vadd.f32 %v2593, %v2625
      %v2642 = vadd.f32 %v2594, %v2626
      %v2643 = vadd.f32 %v2595, %v2627
      %v2644 = vadd.f32 %v2596, %v2628
      %v2645 = vadd.f32 %v2597, %v2629
      %v2646 = vadd.f32 %v2598, %v2630
      %v2647 = vadd.f32 %v2599, %v2631
      %v2648 = vadd.f32 %v2600, %v2632
      %v2649 = vadd.f32 %v2601, %v2633
      %v2650 = vadd.f32 %v2602, %v2634
      %v2651 = vadd.f32 %v2603, %v2635
      %v2652 = vadd.f32 %v2604, %v2636
      %v2653 = vpack.c.bf16 %v2638, %v2637
      %v2654 = vpack.c.bf16 %v2640, %v2639
      %v2655 = vpack.c.bf16 %v2642, %v2641
      %v2656 = vpack.c.bf16 %v2644, %v2643
      %v2657 = vpack.c.bf16 %v2646, %v2645
      %v2658 = vpack.c.bf16 %v2648, %v2647
      %v2659 = vpack.c.bf16 %v2650, %v2649
      %v2660 = vpack.c.bf16 %v2652, %v2651
      %v2669 = vunpack.c.l.b16 %v2653
      %v2670 = vunpack.c.h.b16 %v2653
      %v2671 = vunpack.c.l.b16 %v2654
      %v2672 = vunpack.c.h.b16 %v2654
      %v2673 = vunpack.c.l.b16 %v2655
      %v2674 = vunpack.c.h.b16 %v2655
      %v2675 = vunpack.c.l.b16 %v2656
      %v2676 = vunpack.c.h.b16 %v2656
      %v2677 = vunpack.c.l.b16 %v2657
      %v2678 = vunpack.c.h.b16 %v2657
      %v2679 = vunpack.c.l.b16 %v2658
      %v2680 = vunpack.c.h.b16 %v2658
      %v2681 = vunpack.c.l.b16 %v2659
      %v2682 = vunpack.c.h.b16 %v2659
      %v2683 = vunpack.c.l.b16 %v2660
      %v2684 = vunpack.c.h.b16 %v2660
      %v2685 = vpack.c.b16 %v2669, %v2669
      %v2686 = vpack.c.b16 %v2670, %v2670
      %v2687 = vpack.c.b16 %v2671, %v2671
      %v2688 = vpack.c.b16 %v2672, %v2672
      %v2689 = vpack.c.b16 %v2673, %v2673
      %v2690 = vpack.c.b16 %v2674, %v2674
      %v2691 = vpack.c.b16 %v2675, %v2675
      %v2692 = vpack.c.b16 %v2676, %v2676
      %v2693 = vpack.c.b16 %v2677, %v2677
      %v2694 = vpack.c.b16 %v2678, %v2678
      %v2695 = vpack.c.b16 %v2679, %v2679
      %v2696 = vpack.c.b16 %v2680, %v2680
      %v2697 = vpack.c.b16 %v2681, %v2681
      %v2698 = vpack.c.b16 %v2682, %v2682
      %v2699 = vpack.c.b16 %v2683, %v2683
      %v2700 = vpack.c.b16 %v2684, %v2684
      %2717 = vst [vmem:[%s411] sm:$0xf] %v2685
      %2718 = vst [vmem:[%s411 + $0x4] sm:$0xf] %v2686
      %2719 = vst [vmem:[%s411 + $0x8] sm:$0xf] %v2687
      %2720 = vst [vmem:[%s411 + $0xc] sm:$0xf] %v2688
      %2721 = vst [vmem:[%s411 + $0x10] sm:$0xf] %v2689
      %2722 = vst [vmem:[%s411 + $0x14] sm:$0xf] %v2690
      %2723 = vst [vmem:[%s411 + $0x18] sm:$0xf] %v2691
      %2724 = vst [vmem:[%s411 + $0x1c] sm:$0xf] %v2692
      %2725 = vst [vmem:[%s411 + $0x20] sm:$0xf] %v2693
      %2726 = vst [vmem:[%s411 + $0x24] sm:$0xf] %v2694
      %2727 = vst [vmem:[%s411 + $0x28] sm:$0xf] %v2695
      %2728 = vst [vmem:[%s411 + $0x2c] sm:$0xf] %v2696
      %2729 = vst [vmem:[%s411 + $0x30] sm:$0xf] %v2697
      %2730 = vst [vmem:[%s411 + $0x34] sm:$0xf] %v2698
      %2731 = vst [vmem:[%s411 + $0x38] sm:$0xf] %v2699
      %2732 = vst [vmem:[%s411 + $0x3c] sm:$0xf] %v2700
      %s2733 = smul.u32 8, %s22
      %p2734 = scmp.lt.s32.totalorder %s21, 1
      %s2735 = scalar_select %p2734, %s21, 1
      %p2736 = scmp.lt.s32.totalorder %s2733, 15
      %s2737 = scalar_select %p2736, %s2733, 15
      %s2738 = smul.addr %s2737, 2
      %s2739 = smul.addr %s2735, 32
      %s2740 = sadd.s32 %s2738, %s2739
      %s2741 = smul.addr %s2740, 4
      %s2742 = scalar_lea.vmem %s6, %s2741
      // Predicated region
      $region45: #{_lambda_.6} parent=43 // pred_check
        %p2743 = pneg %p200
      $region46: #{_lambda_.6} parent=43 // pred_check_branch
        %2745 = sbr.rel (%p2743) target = $region48
      $region47: #{_lambda_.6} parent=43 // pred_region
        %s2746 = smul.u32 8, %s22
      $region48: #{_lambda_.6} parent=43 // pred_fallthru
        _
    $region44: #{_lambda_.6} parent=5 // pred_fallthru
      _
    %p2747 = scmp.le.s32.totalorder 2, %s12
    // Predicated region
    $region49: #{_lambda_.6} parent=5 // pred_check
      %p2748 = pneg %p2747
    $region50: #{_lambda_.6} parent=5 // pred_check_branch
      %2750 = sbr.rel (%p2748) target = $region52
    $region51: #{_lambda_.6} parent=5 // pred_region
      %s2751 = ssub.s32 %s12, 2
      // Predicated region
      $region53: #{_lambda_.6} parent=51 // pred_check
        %p2752 = pneg %p206
      $region54: #{_lambda_.6} parent=51 // pred_check_branch
        %2754 = sbr.rel (%p2752) target = $region56
      $region55: #{_lambda_.6} parent=51 // pred_region
        %s2755 = smul.u32 8, %s24
        %p2756 = scmp.lt.s32.totalorder %s23, 1
        %s2757 = scalar_select %p2756, %s23, 1
        %p2758 = scmp.lt.s32.totalorder %s2755, 15
        %s2759 = scalar_select %p2758, %s2755, 15
        %s2760 = smul.addr %s2759, 2
        %s2761 = smul.addr %s2757, 32
        %s2762 = sadd.s32 %s2760, %s2761
        %s2763 = smul.addr %s2762, 4
        %s2764 = scalar_lea.vmem %s6, %s2763
      $region56: #{_lambda_.6} parent=51 // pred_fallthru
        _
    $region52: #{_lambda_.6} parent=5 // pred_fallthru
      _
  $region6: #{_lambda_.6} parent=0 // loop_footer
    %s16 = sadd.s32 1, %s12
  $region7: #{_lambda_.6} parent=0 // loop_footer_branch
    %11 = sbr.rel target = $region3
  $region8: #{_lambda_.6} parent=0 // loop_exit
    _

// kernel: _lambda_.7
$region0: #{_lambda_.7}
  #allocation0 [shape = 'u32[]', space=smem, size = 0x4, offset = 0x4, fixed_abs, tag = 'smem constant byte address 0x4 - core index']
  #allocation1 [shape = 'u32[144,128]{1,0:T(1,128)}', space=vmem, size = 0x12000, scoped, tag = 'internal scratch']
  %s0 = inlined_call_operand.vmem [shape: bf16[512,128], index: 0, kind: input, shape index: {}]
  %s1 = inlined_call_operand.vmem [shape: bf16[512,128], index: 1, kind: input, shape index: {}]
  %s2 = inlined_call_operand.vmem [shape: bf16[128,128], index: 2, kind: input, shape index: {}]
  %s3 = inlined_call_operand.vmem [shape: bf16[128,128], index: 3, kind: input, shape index: {}]
  %s4 = inlined_call_operand.vmem [shape: f32[1,128], index: 4, kind: input, shape index: {}]
  %s5 = inlined_call_operand.vmem [shape: f32[1,128], index: 5, kind: input, shape index: {}]
  %s6 = inlined_call_operand.vmem [shape: f32[1,128], index: 6, kind: input, shape index: {}]
  %s7 = inlined_call_operand.vmem [shape: f32[1,128], index: 7, kind: input, shape index: {}]
  %s8 = inlined_call_operand.vmem [shape: bf16[128,128], index: 8, kind: input, shape index: {}]
  %s9 = inlined_call_operand.vmem [shape: bf16[128,128], index: 9, kind: input, shape index: {}]
  %s10 = inlined_call_operand.vmem [shape: f32[1,128], index: 10, kind: input, shape index: {}]
  %s11 = inlined_call_operand.vmem [shape: f32[1,128], index: 11, kind: input, shape index: {}]
  %s12 = inlined_call_operand.vmem [shape: f32[512,128], index: 12, kind: output, shape index: {}]
  %s13 = sld [smem:[#allocation0]]
  $region58: #{_lambda_.7} parent=0
    _
  %s15 = ssub.s32 1, %s13
  %s16 = scalar_select 0, %s15, %s13
  // Predicated region
  $region2: #{_lambda_.7} parent=0 // pred_check
    _
  $region3: #{_lambda_.7} parent=0 // pred_check_branch
    %18 = sbr.rel (0) target = $region5
  $region4: #{_lambda_.7} parent=0 // pred_region
    _
  $region5: #{_lambda_.7} parent=0 // pred_fallthru
    _
  // Predicated region
  $region6: #{_lambda_.7} parent=0 // pred_check
    _
  $region7: #{_lambda_.7} parent=0 // pred_check_branch
    %20 = sbr.rel (0) target = $region9
  $region8: #{_lambda_.7} parent=0 // pred_region
    _
  $region9: #{_lambda_.7} parent=0 // pred_fallthru
    _
  // Predicated region
  $region10: #{_lambda_.7} parent=0 // pred_check
    _
  $region11: #{_lambda_.7} parent=0 // pred_check_branch
    %22 = sbr.rel (0) target = $region13
  $region12: #{_lambda_.7} parent=0 // pred_region
    _
  $region13: #{_lambda_.7} parent=0 // pred_fallthru
    _
  // Predicated region
  $region14: #{_lambda_.7} parent=0 // pred_check
    _
  $region15: #{_lambda_.7} parent=0 // pred_check_branch
    %24 = sbr.rel (0) target = $region17
  $region16: #{_lambda_.7} parent=0 // pred_region
    _
  $region17: #{_lambda_.7} parent=0 // pred_fallthru
    _
  // Predicated region
  $region18: #{_lambda_.7} parent=0 // pred_check
    _
  $region19: #{_lambda_.7} parent=0 // pred_check_branch
    %26 = sbr.rel (0) target = $region21
  $region20: #{_lambda_.7} parent=0 // pred_region
    _
  $region21: #{_lambda_.7} parent=0 // pred_fallthru
    _
  // Predicated region
  $region22: #{_lambda_.7} parent=0 // pred_check
    _
  $region23: #{_lambda_.7} parent=0 // pred_check_branch
    %28 = sbr.rel (0) target = $region25
  $region24: #{_lambda_.7} parent=0 // pred_region
    _
  $region25: #{_lambda_.7} parent=0 // pred_fallthru
    _
  // Predicated region
  $region26: #{_lambda_.7} parent=0 // pred_check
    _
  $region27: #{_lambda_.7} parent=0 // pred_check_branch
    %30 = sbr.rel (0) target = $region29
  $region28: #{_lambda_.7} parent=0 // pred_region
    _
  $region29: #{_lambda_.7} parent=0 // pred_fallthru
    _
  // Predicated region
  $region30: #{_lambda_.7} parent=0 // pred_check
    _
  $region31: #{_lambda_.7} parent=0 // pred_check_branch
    %32 = sbr.rel (0) target = $region33
  $region32: #{_lambda_.7} parent=0 // pred_region
    _
  $region33: #{_lambda_.7} parent=0 // pred_fallthru
    _
  // Predicated region
  $region34: #{_lambda_.7} parent=0 // pred_check
    _
  $region35: #{_lambda_.7} parent=0 // pred_check_branch
    %34 = sbr.rel (0) target = $region37
  $region36: #{_lambda_.7} parent=0 // pred_region
    _
  $region37: #{_lambda_.7} parent=0 // pred_fallthru
    _
  // Predicated region
  $region38: #{_lambda_.7} parent=0 // pred_check
    _
  $region39: #{_lambda_.7} parent=0 // pred_check_branch
    %36 = sbr.rel (0) target = $region41
  $region40: #{_lambda_.7} parent=0 // pred_region
    _
  $region41: #{_lambda_.7} parent=0 // pred_fallthru
    _
  // Predicated region
  $region42: #{_lambda_.7} parent=0 // pred_check
    _
  $region43: #{_lambda_.7} parent=0 // pred_check_branch
    %38 = sbr.rel (0) target = $region45
  $region44: #{_lambda_.7} parent=0 // pred_region
    _
  $region45: #{_lambda_.7} parent=0 // pred_fallthru
    _
  // Predicated region
  $region46: #{_lambda_.7} parent=0 // pred_check
    _
  $region47: #{_lambda_.7} parent=0 // pred_check_branch
    %40 = sbr.rel (0) target = $region49
  $region48: #{_lambda_.7} parent=0 // pred_region
    _
  $region49: #{_lambda_.7} parent=0 // pred_fallthru
    _
  %v42 = vld [vmem:[%s0] sm:$0xf]
  %v43 = vld [vmem:[%s0 + $0x4] sm:$0xf]
  %v44 = vld [vmem:[%s0 + $0x8] sm:$0xf]
  %v45 = vld [vmem:[%s0 + $0xc] sm:$0xf]
  %v46 = vld [vmem:[%s0 + $0x10] sm:$0xf]
  %v47 = vld [vmem:[%s0 + $0x14] sm:$0xf]
  %v48 = vld [vmem:[%s0 + $0x18] sm:$0xf]
  %v49 = vld [vmem:[%s0 + $0x1c] sm:$0xf]
  %v50 = vld [vmem:[%s0 + $0x20] sm:$0xf]
  %v51 = vld [vmem:[%s0 + $0x24] sm:$0xf]
  %v52 = vld [vmem:[%s0 + $0x28] sm:$0xf]
  %v53 = vld [vmem:[%s0 + $0x2c] sm:$0xf]
  %v54 = vld [vmem:[%s0 + $0x30] sm:$0xf]
  %v55 = vld [vmem:[%s0 + $0x34] sm:$0xf]
  %v56 = vld [vmem:[%s0 + $0x38] sm:$0xf]
  %v57 = vld [vmem:[%s0 + $0x3c] sm:$0xf]
  %v58 = vld [vmem:[%s0 + $0x40] sm:$0xf]
  %v59 = vld [vmem:[%s0 + $0x44] sm:$0xf]
  %v60 = vld [vmem:[%s0 + $0x48] sm:$0xf]
  %v61 = vld [vmem:[%s0 + $0x4c] sm:$0xf]
  %v62 = vld [vmem:[%s0 + $0x50] sm:$0xf]
  %v63 = vld [vmem:[%s0 + $0x54] sm:$0xf]
  %v64 = vld [vmem:[%s0 + $0x58] sm:$0xf]
  %v65 = vld [vmem:[%s0 + $0x5c] sm:$0xf]
  %v66 = vld [vmem:[%s0 + $0x60] sm:$0xf]
  %v67 = vld [vmem:[%s0 + $0x64] sm:$0xf]
  %v68 = vld [vmem:[%s0 + $0x68] sm:$0xf]
  %v69 = vld [vmem:[%s0 + $0x6c] sm:$0xf]
  %v70 = vld [vmem:[%s0 + $0x70] sm:$0xf]
  %v71 = vld [vmem:[%s0 + $0x74] sm:$0xf]
  %v72 = vld [vmem:[%s0 + $0x78] sm:$0xf]
  %v73 = vld [vmem:[%s0 + $0x7c] sm:$0xf]
  %v74 = vld [vmem:[%s0 + $0x80] sm:$0xf]
  %v75 = vld [vmem:[%s0 + $0x84] sm:$0xf]
  %v76 = vld [vmem:[%s0 + $0x88] sm:$0xf]
  %v77 = vld [vmem:[%s0 + $0x8c] sm:$0xf]
  %v78 = vld [vmem:[%s0 + $0x90] sm:$0xf]
  %v79 = vld [vmem:[%s0 + $0x94] sm:$0xf]
  %v80 = vld [vmem:[%s0 + $0x98] sm:$0xf]
  %v81 = vld [vmem:[%s0 + $0x9c] sm:$0xf]
  %v82 = vld [vmem:[%s0 + $0xa0] sm:$0xf]
  %v83 = vld [vmem:[%s0 + $0xa4] sm:$0xf]
  %v84 = vld [vmem:[%s0 + $0xa8] sm:$0xf]
  %v85 = vld [vmem:[%s0 + $0xac] sm:$0xf]
  %v86 = vld [vmem:[%s0 + $0xb0] sm:$0xf]
  %v87 = vld [vmem:[%s0 + $0xb4] sm:$0xf]
  %v88 = vld [vmem:[%s0 + $0xb8] sm:$0xf]
  %v89 = vld [vmem:[%s0 + $0xbc] sm:$0xf]
  %v90 = vld [vmem:[%s0 + $0xc0] sm:$0xf]
  %v91 = vld [vmem:[%s0 + $0xc4] sm:$0xf]
  %v92 = vld [vmem:[%s0 + $0xc8] sm:$0xf]
  %v93 = vld [vmem:[%s0 + $0xcc] sm:$0xf]
  %v94 = vld [vmem:[%s0 + $0xd0] sm:$0xf]
  %v95 = vld [vmem:[%s0 + $0xd4] sm:$0xf]
  %v96 = vld [vmem:[%s0 + $0xd8] sm:$0xf]
  %v97 = vld [vmem:[%s0 + $0xdc] sm:$0xf]
  %v98 = vld [vmem:[%s0 + $0xe0] sm:$0xf]
  %v99 = vld [vmem:[%s0 + $0xe4] sm:$0xf]
  %v100 = vld [vmem:[%s0 + $0xe8] sm:$0xf]
  %v101 = vld [vmem:[%s0 + $0xec] sm:$0xf]
  %v102 = vld [vmem:[%s0 + $0xf0] sm:$0xf]
  %v103 = vld [vmem:[%s0 + $0xf4] sm:$0xf]
  %v104 = vld [vmem:[%s0 + $0xf8] sm:$0xf]
  %v105 = vld [vmem:[%s0 + $0xfc] sm:$0xf]
  %v106 = vld [vmem:[%s2] sm:$0xf]
  %v107 = vld [vmem:[%s2 + $0x4] sm:$0xf]
  %v108 = vld [vmem:[%s2 + $0x8] sm:$0xf]
  %v109 = vld [vmem:[%s2 + $0xc] sm:$0xf]
  %v110 = vld [vmem:[%s2 + $0x10] sm:$0xf]
  %v111 = vld [vmem:[%s2 + $0x14] sm:$0xf]
  %v112 = vld [vmem:[%s2 + $0x18] sm:$0xf]
  %v113 = vld [vmem:[%s2 + $0x1c] sm:$0xf]
  %v114 = vld [vmem:[%s2 + $0x20] sm:$0xf]
  %v115 = vld [vmem:[%s2 + $0x24] sm:$0xf]
  %v116 = vld [vmem:[%s2 + $0x28] sm:$0xf]
  %v117 = vld [vmem:[%s2 + $0x2c] sm:$0xf]
  %v118 = vld [vmem:[%s2 + $0x30] sm:$0xf]
  %v119 = vld [vmem:[%s2 + $0x34] sm:$0xf]
  %v120 = vld [vmem:[%s2 + $0x38] sm:$0xf]
  %v121 = vld [vmem:[%s2 + $0x3c] sm:$0xf]
  %v186 = vunpack.c.l.b16 %v42
  %v187 = vunpack.c.l.b16 %v43
  %v188 = vunpack.c.l.b16 %v44
  %v189 = vunpack.c.l.b16 %v45
  %v190 = vunpack.c.l.b16 %v46
  %v191 = vunpack.c.l.b16 %v47
  %v192 = vunpack.c.l.b16 %v48
  %v193 = vunpack.c.l.b16 %v49
  %v194 = vunpack.c.l.b16 %v50
  %v195 = vunpack.c.l.b16 %v51
  %v196 = vunpack.c.l.b16 %v52
  %v197 = vunpack.c.l.b16 %v53
  %v198 = vunpack.c.l.b16 %v54
  %v199 = vunpack.c.l.b16 %v55
  %v200 = vunpack.c.l.b16 %v56
  %v201 = vunpack.c.l.b16 %v57
  %v202 = vunpack.c.l.b16 %v58
  %v203 = vunpack.c.l.b16 %v59
  %v204 = vunpack.c.l.b16 %v60
  %v205 = vunpack.c.l.b16 %v61
  %v206 = vunpack.c.l.b16 %v62
  %v207 = vunpack.c.l.b16 %v63
  %v208 = vunpack.c.l.b16 %v64
  %v209 = vunpack.c.l.b16 %v65
  %v210 = vunpack.c.l.b16 %v66
  %v211 = vunpack.c.l.b16 %v67
  %v212 = vunpack.c.l.b16 %v68
  %v213 = vunpack.c.l.b16 %v69
  %v214 = vunpack.c.l.b16 %v70
  %v215 = vunpack.c.l.b16 %v71
  %v216 = vunpack.c.l.b16 %v72
  %v217 = vunpack.c.l.b16 %v73
  %v218 = vunpack.c.l.b16 %v74
  %v219 = vunpack.c.l.b16 %v75
  %v220 = vunpack.c.l.b16 %v76
  %v221 = vunpack.c.l.b16 %v77
  %v222 = vunpack.c.l.b16 %v78
  %v223 = vunpack.c.l.b16 %v79
  %v224 = vunpack.c.l.b16 %v80
  %v225 = vunpack.c.l.b16 %v81
  %v226 = vunpack.c.l.b16 %v82
  %v227 = vunpack.c.l.b16 %v83
  %v228 = vunpack.c.l.b16 %v84
  %v229 = vunpack.c.l.b16 %v85
  %v230 = vunpack.c.l.b16 %v86
  %v231 = vunpack.c.l.b16 %v87
  %v232 = vunpack.c.l.b16 %v88
  %v233 = vunpack.c.l.b16 %v89
  %v234 = vunpack.c.l.b16 %v90
  %v235 = vunpack.c.l.b16 %v91
  %v236 = vunpack.c.l.b16 %v92
  %v237 = vunpack.c.l.b16 %v93
  %v238 = vunpack.c.l.b16 %v94
  %v239 = vunpack.c.l.b16 %v95
  %v240 = vunpack.c.l.b16 %v96
  %v241 = vunpack.c.l.b16 %v97
  %v242 = vunpack.c.l.b16 %v98
  %v243 = vunpack.c.l.b16 %v99
  %v244 = vunpack.c.l.b16 %v100
  %v245 = vunpack.c.l.b16 %v101
  %v246 = vunpack.c.l.b16 %v102
  %v247 = vunpack.c.l.b16 %v103
  %v248 = vunpack.c.l.b16 %v104
  %v249 = vunpack.c.l.b16 %v105
  %v250 = vpack.c.b16 %v187, %v186
  %v251 = vpack.c.b16 %v189, %v188
  %v252 = vpack.c.b16 %v191, %v190
  %v253 = vpack.c.b16 %v193, %v192
  %v254 = vpack.c.b16 %v195, %v194
  %v255 = vpack.c.b16 %v197, %v196
  %v256 = vpack.c.b16 %v199, %v198
  %v257 = vpack.c.b16 %v201, %v200
  %v258 = vpack.c.b16 %v203, %v202
  %v259 = vpack.c.b16 %v205, %v204
  %v260 = vpack.c.b16 %v207, %v206
  %v261 = vpack.c.b16 %v209, %v208
  %v262 = vpack.c.b16 %v211, %v210
  %v263 = vpack.c.b16 %v213, %v212
  %v264 = vpack.c.b16 %v215, %v214
  %v265 = vpack.c.b16 %v217, %v216
  %v266 = vpack.c.b16 %v219, %v218
  %v267 = vpack.c.b16 %v221, %v220
  %v268 = vpack.c.b16 %v223, %v222
  %v269 = vpack.c.b16 %v225, %v224
  %v270 = vpack.c.b16 %v227, %v226
  %v271 = vpack.c.b16 %v229, %v228
  %v272 = vpack.c.b16 %v231, %v230
  %v273 = vpack.c.b16 %v233, %v232
  %v274 = vpack.c.b16 %v235, %v234
  %v275 = vpack.c.b16 %v237, %v236
  %v276 = vpack.c.b16 %v239, %v238
  %v277 = vpack.c.b16 %v241, %v240
  %v278 = vpack.c.b16 %v243, %v242
  %v279 = vpack.c.b16 %v245, %v244
  %v280 = vpack.c.b16 %v247, %v246
  %v281 = vpack.c.b16 %v249, %v248
  %v330 = vunpack.c.l.b16 %v106
  %v331 = vunpack.c.l.b16 %v107
  %v332 = vunpack.c.l.b16 %v108
  %v333 = vunpack.c.l.b16 %v109
  %v334 = vunpack.c.l.b16 %v110
  %v335 = vunpack.c.l.b16 %v111
  %v336 = vunpack.c.l.b16 %v112
  %v337 = vunpack.c.l.b16 %v113
  %v338 = vunpack.c.l.b16 %v114
  %v339 = vunpack.c.l.b16 %v115
  %v340 = vunpack.c.l.b16 %v116
  %v341 = vunpack.c.l.b16 %v117
  %v342 = vunpack.c.l.b16 %v118
  %v343 = vunpack.c.l.b16 %v119
  %v344 = vunpack.c.l.b16 %v120
  %v345 = vunpack.c.l.b16 %v121
  %v346 = vpack.c.b16 %v331, %v330
  %v347 = vpack.c.b16 %v333, %v332
  %v348 = vpack.c.b16 %v335, %v334
  %v349 = vpack.c.b16 %v337, %v336
  %v350 = vpack.c.b16 %v339, %v338
  %v351 = vpack.c.b16 %v341, %v340
  %v352 = vpack.c.b16 %v343, %v342
  %v353 = vpack.c.b16 %v345, %v344
  %362 = vmatprep.subr.bf16.mxu0 0
  %363 = vmatpush1.bf16.msra.mxu0 %v346
  %364 = vmatprep.subr.bf16.mxu0 0
  %365 = vmatpush1.bf16.msra.mxu0 %v347
  %366 = vmatprep.subr.bf16.mxu0 0
  %367 = vmatpush1.bf16.msra.mxu0 %v348
  %368 = vmatprep.subr.bf16.mxu0 0
  %369 = vmatpush1.bf16.msra.mxu0 %v349
  %370 = vmatprep.subr.bf16.mxu0 0
  %371 = vmatpush1.bf16.msra.mxu0 %v350
  %372 = vmatprep.subr.bf16.mxu0 0
  %373 = vmatpush1.bf16.msra.mxu0 %v351
  %374 = vmatprep.subr.bf16.mxu0 0
  %375 = vmatpush1.bf16.msra.mxu0 %v352
  %376 = vmatprep.subr.bf16.mxu0 0
  %377 = vmatpush1.bf16.msra.mxu0 %v353
  %378 = vmatprep.subr.bf16.mxu0 0
  %379 = vmatpush1.bf16.msra.mxu0 0
  %380 = vmatprep.subr.bf16.mxu0 0
  %381 = vmatpush1.bf16.msra.mxu0 0
  %382 = vmatprep.subr.bf16.mxu0 0
  %383 = vmatpush1.bf16.msra.mxu0 0
  %384 = vmatprep.subr.bf16.mxu0 0
  %385 = vmatpush1.bf16.msra.mxu0 0
  %386 = vmatprep.subr.bf16.mxu0 0
  %387 = vmatpush1.bf16.msra.mxu0 0
  %388 = vmatprep.subr.bf16.mxu0 0
  %389 = vmatpush1.bf16.msra.mxu0 0
  %390 = vmatprep.subr.bf16.mxu0 0
  %391 = vmatpush1.bf16.msra.mxu0 0
  %392 = vmatprep.subr.bf16.mxu0 0
  %393 = vmatpush1.bf16.msra.mxu0 0
  %394 = vmatprep.mubr.bf16.mxu0 0
  %395 = vmatmul.mubr.bf16.gmra.mrb[0].mxu0 %v250
  %v396 = vpop.f32.mrb[0].mxu0
  %v397 = vadd.f32 0.0, %v396
  %v398 = vpop.f32.mrb[0].mxu0
  %v399 = vpop.f32.mrb[0].mxu0
  %v400 = vadd.f32 0.0, %v399
  %v401 = vpop.f32.mrb[0].mxu0
  %402 = vmatprep.mubr.bf16.mxu0 0
  %403 = vmatmul.mubr.bf16.gmra.mrb[0].mxu0 %v251
  %v404 = vpop.f32.mrb[0].mxu0
  %v405 = vadd.f32 0.0, %v404
  %v406 = vpop.f32.mrb[0].mxu0
  %v407 = vpop.f32.mrb[0].mxu0
  %v408 = vadd.f32 0.0, %v407
  %v409 = vpop.f32.mrb[0].mxu0
  %410 = vmatprep.mubr.bf16.mxu0 0
  %411 = vmatmul.mubr.bf16.gmra.mrb[0].mxu0 %v252
  %v412 = vpop.f32.mrb[0].mxu0
  %v413 = vadd.f32 0.0, %v412
  %v414 = vpop.f32.mrb[0].mxu0
  %v415 = vpop.f32.mrb[0].mxu0
  %v416 = vadd.f32 0.0, %v415
  %v417 = vpop.f32.mrb[0].mxu0
  %418 = vmatprep.mubr.bf16.mxu0 0
  %419 = vmatmul.mubr.bf16.gmra.mrb[0].mxu0 %v253
  %v420 = vpop.f32.mrb[0].mxu0
  %v421 = vadd.f32 0.0, %v420
  %v422 = vpop.f32.mrb[0].mxu0
  %v423 = vpop.f32.mrb[0].mxu0
  %v424 = vadd.f32 0.0, %v423
  %v425 = vpop.f32.mrb[0].mxu0
  %426 = vmatprep.mubr.bf16.mxu0 0
  %427 = vmatmul.mubr.bf16.gmra.mrb[0].mxu0 %v254
  %v428 = vpop.f32.mrb[0].mxu0
  %v429 = vadd.f32 0.0, %v428
  %v430 = vpop.f32.mrb[0].mxu0
  %v431 = vpop.f32.mrb[0].mxu0
  %v432 = vadd.f32 0.0, %v431
  %v433 = vpop.f32.mrb[0].mxu0
  %434 = vmatprep.mubr.bf16.mxu0 0
  %435 = vmatmul.mubr.bf16.gmra.mrb[0].mxu0 %v255
  %v436 = vpop.f32.mrb[0].mxu0
  %v437 = vadd.f32 0.0, %v436
  %v438 = vpop.f32.mrb[0].mxu0
  %v439 = vpop.f32.mrb[0].mxu0
  %v440 = vadd.f32 0.0, %v439
  %v441 = vpop.f32.mrb[0].mxu0
  %442 = vmatprep.mubr.bf16.mxu0 0
  %443 = vmatmul.mubr.bf16.gmra.mrb[0].mxu0 %v256
  %v444 = vpop.f32.mrb[0].mxu0
  %v445 = vadd.f32 0.0, %v444
  %v446 = vpop.f32.mrb[0].mxu0
  %v447 = vpop.f32.mrb[0].mxu0
  %v448 = vadd.f32 0.0, %v447
  %v449 = vpop.f32.mrb[0].mxu0
  %450 = vmatprep.mubr.bf16.mxu0 0
  %451 = vmatmul.mubr.bf16.gmra.mrb[0].mxu0 %v257
  %v452 = vpop.f32.mrb[0].mxu0
  %v453 = vadd.f32 0.0, %v452
  %v454 = vpop.f32.mrb[0].mxu0
  %v455 = vpop.f32.mrb[0].mxu0
  %v456 = vadd.f32 0.0, %v455
  %v457 = vpop.f32.mrb[0].mxu0
  %458 = vmatprep.mubr.bf16.mxu0 0
  %459 = vmatmul.mubr.bf16.gmra.mrb[0].mxu0 %v258
  %v460 = vpop.f32.mrb[0].mxu0
  %v461 = vadd.f32 0.0, %v460
  %v462 = vpop.f32.mrb[0].mxu0
  %v463 = vpop.f32.mrb[0].mxu0
  %v464 = vadd.f32 0.0, %v463
  %v465 = vpop.f32.mrb[0].mxu0
  %466 = vmatprep.mubr.bf16.mxu0 0
  %467 = vmatmul.mubr.bf16.gmra.mrb[0].mxu0 %v259
  %v468 = vpop.f32.mrb[0].mxu0
  %v469 = vadd.f32 0.0, %v468
  %v470 = vpop.f32.mrb[0].mxu0
  %v471 = vpop.f32.mrb[0].mxu0
  %v472 = vadd.f32 0.0, %v471
  %v473 = vpop.f32.mrb[0].mxu0
  %474 = vmatprep.mubr.bf16.mxu0 0
  %475 = vmatmul.mubr.bf16.gmra.mrb[0].mxu0 %v260
  %v476 = vpop.f32.mrb[0].mxu0
  %v477 = vadd.f32 0.0, %v476
  %v478 = vpop.f32.mrb[0].mxu0
  %v479 = vpop.f32.mrb[0].mxu0
  %v480 = vadd.f32 0.0, %v479
  %v481 = vpop.f32.mrb[0].mxu0
  %482 = vmatprep.mubr.bf16.mxu0 0
  %483 = vmatmul.mubr.bf16.gmra.mrb[0].mxu0 %v261
  %v484 = vpop.f32.mrb[0].mxu0
  %v485 = vadd.f32 0.0, %v484
  %v486 = vpop.f32.mrb[0].mxu0
  %v487 = vpop.f32.mrb[0].mxu0
  %v488 = vadd.f32 0.0, %v487
  %v489 = vpop.f32.mrb[0].mxu0
  %490 = vmatprep.mubr.bf16.mxu0 0
  %491 = vmatmul.mubr.bf16.gmra.mrb[0].mxu0 %v262
  %v492 = vpop.f32.mrb[0].mxu0
  %v493 = vadd.f32 0.0, %v492
  %v494 = vpop.f32.mrb[0].mxu0
  %v495 = vpop.f32.mrb[0].mxu0
  %v496 = vadd.f32 0.0, %v495
  %v497 = vpop.f32.mrb[0].mxu0
  %498 = vmatprep.mubr.bf16.mxu0 0
  %499 = vmatmul.mubr.bf16.gmra.mrb[0].mxu0 %v263
  %v500 = vpop.f32.mrb[0].mxu0
  %v501 = vadd.f32 0.0, %v500
  %v502 = vpop.f32.mrb[0].mxu0
  %v503 = vpop.f32.mrb[0].mxu0
  %v504 = vadd.f32 0.0, %v503
  %v505 = vpop.f32.mrb[0].mxu0
  %506 = vmatprep.mubr.bf16.mxu0 0
  %507 = vmatmul.mubr.bf16.gmra.mrb[0].mxu0 %v264
  %v508 = vpop.f32.mrb[0].mxu0
  %v509 = vadd.f32 0.0, %v508
  %v510 = vpop.f32.mrb[0].mxu0
  %v511 = vpop.f32.mrb[0].mxu0
  %v512 = vadd.f32 0.0, %v511
  %v513 = vpop.f32.mrb[0].mxu0
  %514 = vmatprep.mubr.bf16.mxu0 0
  %515 = vmatmul.mubr.bf16.gmra.mrb[0].mxu0 %v265
  %v516 = vpop.f32.mrb[0].mxu0
  %v517 = vadd.f32 0.0, %v516
  %v518 = vpop.f32.mrb[0].mxu0
  %v519 = vpop.f32.mrb[0].mxu0
  %v520 = vadd.f32 0.0, %v519
  %v521 = vpop.f32.mrb[0].mxu0
  %522 = vmatprep.mubr.bf16.mxu0 0
  %523 = vmatmul.mubr.bf16.gmra.mrb[0].mxu0 %v266
  %v524 = vpop.f32.mrb[0].mxu0
  %v525 = vadd.f32 0.0, %v524
  %v526 = vpop.f32.mrb[0].mxu0
  %v527 = vpop.f32.mrb[0].mxu0
  %v528 = vadd.f32 0.0, %v527
  %v529 = vpop.f32.mrb[0].mxu0
  %530 = vmatprep.mubr.bf16.mxu0 0
  %531 = vmatmul.mubr.bf16.gmra.mrb[0].mxu0 %v267
  %v532 = vpop.f32.mrb[0].mxu0
  %v533 = vadd.f32 0.0, %v532
  %v534 = vpop.f32.mrb[0].mxu0
  %v535 = vpop.f32.mrb[0].mxu0
  %v536 = vadd.f32 0.0, %v535
  %v537 = vpop.f32.mrb[0].mxu0
  %538 = vmatprep.mubr.bf16.mxu0 0
  %539 = vmatmul.mubr.bf16.gmra.mrb[0].mxu0 %v268
  %v540 = vpop.f32.mrb[0].mxu0
  %v541 = vadd.f32 0.0, %v540
  %v542 = vpop.f32.mrb[0].mxu0
  %v543 = vpop.f32.mrb[0].mxu0
  %v544 = vadd.f32 0.0, %v543
  %v545 = vpop.f32.mrb[0].mxu0
  %546 = vmatprep.mubr.bf16.mxu0 0
  %547 = vmatmul.mubr.bf16.gmra.mrb[0].mxu0 %v269
  %v548 = vpop.f32.mrb[0].mxu0
  %v549 = vadd.f32 0.0, %v548
  %v550 = vpop.f32.mrb[0].mxu0
  %v551 = vpop.f32.mrb[0].mxu0
  %v552 = vadd.f32 0.0, %v551
  %v553 = vpop.f32.mrb[0].mxu0
  %554 = vmatprep.mubr.bf16.mxu0 0
  %555 = vmatmul.mubr.bf16.gmra.mrb[0].mxu0 %v270
  %v556 = vpop.f32.mrb[0].mxu0
  %v557 = vadd.f32 0.0, %v556
  %v558 = vpop.f32.mrb[0].mxu0
  %v559 = vpop.f32.mrb[0].mxu0
  %v560 = vadd.f32 0.0, %v559
  %v561 = vpop.f32.mrb[0].mxu0
  %562 = vmatprep.mubr.bf16.mxu0 0
  %563 = vmatmul.mubr.bf16.gmra.mrb[0].mxu0 %v271
  %v564 = vpop.f32.mrb[0].mxu0
  %v565 = vadd.f32 0.0, %v564
  %v566 = vpop.f32.mrb[0].mxu0
  %v567 = vpop.f32.mrb[0].mxu0
  %v568 = vadd.f32 0.0, %v567
  %v569 = vpop.f32.mrb[0].mxu0
  %570 = vmatprep.mubr.bf16.mxu0 0
  %571 = vmatmul.mubr.bf16.gmra.mrb[0].mxu0 %v272
  %v572 = vpop.f32.mrb[0].mxu0
  %v573 = vadd.f32 0.0, %v572
  %v574 = vpop.f32.mrb[0].mxu0
  %v575 = vpop.f32.mrb[0].mxu0
  %v576 = vadd.f32 0.0, %v575
  %v577 = vpop.f32.mrb[0].mxu0
  %578 = vmatprep.mubr.bf16.mxu0 0
  %579 = vmatmul.mubr.bf16.gmra.mrb[0].mxu0 %v273
  %v580 = vpop.f32.mrb[0].mxu0
  %v581 = vadd.f32 0.0, %v580
  %v582 = vpop.f32.mrb[0].mxu0
  %v583 = vpop.f32.mrb[0].mxu0
  %v584 = vadd.f32 0.0, %v583
  %v585 = vpop.f32.mrb[0].mxu0
  %586 = vmatprep.mubr.bf16.mxu0 0
  %587 = vmatmul.mubr.bf16.gmra.mrb[0].mxu0 %v274
  %v588 = vpop.f32.mrb[0].mxu0
  %v589 = vadd.f32 0.0, %v588
  %v590 = vpop.f32.mrb[0].mxu0
  %v591 = vpop.f32.mrb[0].mxu0
  %v592 = vadd.f32 0.0, %v591
  %v593 = vpop.f32.mrb[0].mxu0
  %594 = vmatprep.mubr.bf16.mxu0 0
  %595 = vmatmul.mubr.bf16.gmra.mrb[0].mxu0 %v275
  %v596 = vpop.f32.mrb[0].mxu0
  %v597 = vadd.f32 0.0, %v596
  %v598 = vpop.f32.mrb[0].mxu0
  %v599 = vpop.f32.mrb[0].mxu0
  %v600 = vadd.f32 0.0, %v599
  %v601 = vpop.f32.mrb[0].mxu0
  %602 = vmatprep.mubr.bf16.mxu0 0
  %603 = vmatmul.mubr.bf16.gmra.mrb[0].mxu0 %v276
  %v604 = vpop.f32.mrb[0].mxu0
  %v605 = vadd.f32 0.0, %v604
  %v606 = vpop.f32.mrb[0].mxu0
  %v607 = vpop.f32.mrb[0].mxu0
  %v608 = vadd.f32 0.0, %v607
  %v609 = vpop.f32.mrb[0].mxu0
  %610 = vmatprep.mubr.bf16.mxu0 0
  %611 = vmatmul.mubr.bf16.gmra.mrb[0].mxu0 %v277
  %v612 = vpop.f32.mrb[0].mxu0
  %v613 = vadd.f32 0.0, %v612
  %v614 = vpop.f32.mrb[0].mxu0
  %v615 = vpop.f32.mrb[0].mxu0
  %v616 = vadd.f32 0.0, %v615
  %v617 = vpop.f32.mrb[0].mxu0
  %618 = vmatprep.mubr.bf16.mxu0 0
  %619 = vmatmul.mubr.bf16.gmra.mrb[0].mxu0 %v278
  %v620 = vpop.f32.mrb[0].mxu0
  %v621 = vadd.f32 0.0, %v620
  %v622 = vpop.f32.mrb[0].mxu0
  %v623 = vpop.f32.mrb[0].mxu0
  %v624 = vadd.f32 0.0, %v623
  %v625 = vpop.f32.mrb[0].mxu0
  %626 = vmatprep.mubr.bf16.mxu0 0
  %627 = vmatmul.mubr.bf16.gmra.mrb[0].mxu0 %v279
  %v628 = vpop.f32.mrb[0].mxu0
  %v629 = vadd.f32 0.0, %v628
  %v630 = vpop.f32.mrb[0].mxu0
  %v631 = vpop.f32.mrb[0].mxu0
  %v632 = vadd.f32 0.0, %v631
  %v633 = vpop.f32.mrb[0].mxu0
  %634 = vmatprep.mubr.bf16.mxu0 0
  %635 = vmatmul.mubr.bf16.gmra.mrb[0].mxu0 %v280
  %v636 = vpop.f32.mrb[0].mxu0
  %v637 = vadd.f32 0.0, %v636
  %v638 = vpop.f32.mrb[0].mxu0
  %v639 = vpop.f32.mrb[0].mxu0
  %v640 = vadd.f32 0.0, %v639
  %v641 = vpop.f32.mrb[0].mxu0
  %642 = vmatprep.mubr.bf16.mxu0 0
  %643 = vmatmul.mubr.bf16.gmra.mrb[0].mxu0 %v281
  %v644 = vpop.f32.mrb[0].mxu0
  %v645 = vadd.f32 0.0, %v644
  %v646 = vpop.f32.mrb[0].mxu0
  %v647 = vpop.f32.mrb[0].mxu0
  %v648 = vadd.f32 0.0, %v647
  %v649 = vpop.f32.mrb[0].mxu0
  %650 = vdwg.mxu0
  %v651 = vld [vmem:[%s4] sm:$0x1]
  %v653 = vlaneseq
  %v654 = vshrl.u32 %v653, 7
  %v655 = vsub.s32 0, %v654
  %v656 = vrot.slane %v651, %v655
  %v658 = vmul.f32 %v397, %v656
  %v659 = vmul.f32 %v400, %v656
  %v660 = vmul.f32 %v405, %v656
  %v661 = vmul.f32 %v408, %v656
  %v662 = vmul.f32 %v413, %v656
  %v663 = vmul.f32 %v416, %v656
  %v664 = vmul.f32 %v421, %v656
  %v665 = vmul.f32 %v424, %v656
  %v666 = vmul.f32 %v429, %v656
  %v667 = vmul.f32 %v432, %v656
  %v668 = vmul.f32 %v437, %v656
  %v669 = vmul.f32 %v440, %v656
  %v670 = vmul.f32 %v445, %v656
  %v671 = vmul.f32 %v448, %v656
  %v672 = vmul.f32 %v453, %v656
  %v673 = vmul.f32 %v456, %v656
  %v674 = vmul.f32 %v461, %v656
  %v675 = vmul.f32 %v464, %v656
  %v676 = vmul.f32 %v469, %v656
  %v677 = vmul.f32 %v472, %v656
  %v678 = vmul.f32 %v477, %v656
  %v679 = vmul.f32 %v480, %v656
  %v680 = vmul.f32 %v485, %v656
  %v681 = vmul.f32 %v488, %v656
  %v682 = vmul.f32 %v493, %v656
  %v683 = vmul.f32 %v496, %v656
  %v684 = vmul.f32 %v501, %v656
  %v685 = vmul.f32 %v504, %v656
  %v686 = vmul.f32 %v509, %v656
  %v687 = vmul.f32 %v512, %v656
  %v688 = vmul.f32 %v517, %v656
  %v689 = vmul.f32 %v520, %v656
  %v690 = vmul.f32 %v525, %v656
  %v691 = vmul.f32 %v528, %v656
  %v692 = vmul.f32 %v533, %v656
  %v693 = vmul.f32 %v536, %v656
  %v694 = vmul.f32 %v541, %v656
  %v695 = vmul.f32 %v544, %v656
  %v696 = vmul.f32 %v549, %v656
  %v697 = vmul.f32 %v552, %v656
  %v698 = vmul.f32 %v557, %v656
  %v699 = vmul.f32 %v560, %v656
  %v700 = vmul.f32 %v565, %v656
  %v701 = vmul.f32 %v568, %v656
  %v702 = vmul.f32 %v573, %v656
  %v703 = vmul.f32 %v576, %v656
  %v704 = vmul.f32 %v581, %v656
  %v705 = vmul.f32 %v584, %v656
  %v706 = vmul.f32 %v589, %v656
  %v707 = vmul.f32 %v592, %v656
  %v708 = vmul.f32 %v597, %v656
  %v709 = vmul.f32 %v600, %v656
  %v710 = vmul.f32 %v605, %v656
  %v711 = vmul.f32 %v608, %v656
  %v712 = vmul.f32 %v613, %v656
  %v713 = vmul.f32 %v616, %v656
  %v714 = vmul.f32 %v621, %v656
  %v715 = vmul.f32 %v624, %v656
  %v716 = vmul.f32 %v629, %v656
  %v717 = vmul.f32 %v632, %v656
  %v718 = vmul.f32 %v637, %v656
  %v719 = vmul.f32 %v640, %v656
  %v720 = vmul.f32 %v645, %v656
  %v721 = vmul.f32 %v648, %v656
  %v722 = vld [vmem:[%s5] sm:$0x1]
  %v724 = vlaneseq
  %v725 = vshrl.u32 %v724, 7
  %v726 = vsub.s32 0, %v725
  %v727 = vrot.slane %v722, %v726
  %v729 = vadd.f32 %v658, %v727
  %v730 = vadd.f32 %v659, %v727
  %v731 = vadd.f32 %v660, %v727
  %v732 = vadd.f32 %v661, %v727
  %v733 = vadd.f32 %v662, %v727
  %v734 = vadd.f32 %v663, %v727
  %v735 = vadd.f32 %v664, %v727
  %v736 = vadd.f32 %v665, %v727
  %v737 = vadd.f32 %v666, %v727
  %v738 = vadd.f32 %v667, %v727
  %v739 = vadd.f32 %v668, %v727
  %v740 = vadd.f32 %v669, %v727
  %v741 = vadd.f32 %v670, %v727
  %v742 = vadd.f32 %v671, %v727
  %v743 = vadd.f32 %v672, %v727
  %v744 = vadd.f32 %v673, %v727
  %v745 = vadd.f32 %v674, %v727
  %v746 = vadd.f32 %v675, %v727
  %v747 = vadd.f32 %v676, %v727
  %v748 = vadd.f32 %v677, %v727
  %v749 = vadd.f32 %v678, %v727
  %v750 = vadd.f32 %v679, %v727
  %v751 = vadd.f32 %v680, %v727
  %v752 = vadd.f32 %v681, %v727
  %v753 = vadd.f32 %v682, %v727
  %v754 = vadd.f32 %v683, %v727
  %v755 = vadd.f32 %v684, %v727
  %v756 = vadd.f32 %v685, %v727
  %v757 = vadd.f32 %v686, %v727
  %v758 = vadd.f32 %v687, %v727
  %v759 = vadd.f32 %v688, %v727
  %v760 = vadd.f32 %v689, %v727
  %v761 = vadd.f32 %v690, %v727
  %v762 = vadd.f32 %v691, %v727
  %v763 = vadd.f32 %v692, %v727
  %v764 = vadd.f32 %v693, %v727
  %v765 = vadd.f32 %v694, %v727
  %v766 = vadd.f32 %v695, %v727
  %v767 = vadd.f32 %v696, %v727
  %v768 = vadd.f32 %v697, %v727
  %v769 = vadd.f32 %v698, %v727
  %v770 = vadd.f32 %v699, %v727
  %v771 = vadd.f32 %v700, %v727
  %v772 = vadd.f32 %v701, %v727
  %v773 = vadd.f32 %v702, %v727
  %v774 = vadd.f32 %v703, %v727
  %v775 = vadd.f32 %v704, %v727
  %v776 = vadd.f32 %v705, %v727
  %v777 = vadd.f32 %v706, %v727
  %v778 = vadd.f32 %v707, %v727
  %v779 = vadd.f32 %v708, %v727
  %v780 = vadd.f32 %v709, %v727
  %v781 = vadd.f32 %v710, %v727
  %v782 = vadd.f32 %v711, %v727
  %v783 = vadd.f32 %v712, %v727
  %v784 = vadd.f32 %v713, %v727
  %v785 = vadd.f32 %v714, %v727
  %v786 = vadd.f32 %v715, %v727
  %v787 = vadd.f32 %v716, %v727
  %v788 = vadd.f32 %v717, %v727
  %v789 = vadd.f32 %v718, %v727
  %v790 = vadd.f32 %v719, %v727
  %v791 = vadd.f32 %v720, %v727
  %v792 = vadd.f32 %v721, %v727
  %vm793 = vcmp.gt.f32.partialorder %v729, 0.0
  %vm794 = vcmp.gt.f32.partialorder %v730, 0.0
  %vm795 = vcmp.gt.f32.partialorder %v731, 0.0
  %vm796 = vcmp.gt.f32.partialorder %v732, 0.0
  %vm797 = vcmp.gt.f32.partialorder %v733, 0.0
  %vm798 = vcmp.gt.f32.partialorder %v734, 0.0
  %vm799 = vcmp.gt.f32.partialorder %v735, 0.0
  %vm800 = vcmp.gt.f32.partialorder %v736, 0.0
  %vm801 = vcmp.gt.f32.partialorder %v737, 0.0
  %vm802 = vcmp.gt.f32.partialorder %v738, 0.0
  %vm803 = vcmp.gt.f32.partialorder %v739, 0.0
  %vm804 = vcmp.gt.f32.partialorder %v740, 0.0
  %vm805 = vcmp.gt.f32.partialorder %v741, 0.0
  %vm806 = vcmp.gt.f32.partialorder %v742, 0.0
  %vm807 = vcmp.gt.f32.partialorder %v743, 0.0
  %vm808 = vcmp.gt.f32.partialorder %v744, 0.0
  %vm809 = vcmp.gt.f32.partialorder %v745, 0.0
  %vm810 = vcmp.gt.f32.partialorder %v746, 0.0
  %vm811 = vcmp.gt.f32.partialorder %v747, 0.0
  %vm812 = vcmp.gt.f32.partialorder %v748, 0.0
  %vm813 = vcmp.gt.f32.partialorder %v749, 0.0
  %vm814 = vcmp.gt.f32.partialorder %v750, 0.0
  %vm815 = vcmp.gt.f32.partialorder %v751, 0.0
  %vm816 = vcmp.gt.f32.partialorder %v752, 0.0
  %vm817 = vcmp.gt.f32.partialorder %v753, 0.0
  %vm818 = vcmp.gt.f32.partialorder %v754, 0.0
  %vm819 = vcmp.gt.f32.partialorder %v755, 0.0
  %vm820 = vcmp.gt.f32.partialorder %v756, 0.0
  %vm821 = vcmp.gt.f32.partialorder %v757, 0.0
  %vm822 = vcmp.gt.f32.partialorder %v758, 0.0
  %vm823 = vcmp.gt.f32.partialorder %v759, 0.0
  %vm824 = vcmp.gt.f32.partialorder %v760, 0.0
  %vm825 = vcmp.gt.f32.partialorder %v761, 0.0
  %vm826 = vcmp.gt.f32.partialorder %v762, 0.0
  %vm827 = vcmp.gt.f32.partialorder %v763, 0.0
  %vm828 = vcmp.gt.f32.partialorder %v764, 0.0
  %vm829 = vcmp.gt.f32.partialorder %v765, 0.0
  %vm830 = vcmp.gt.f32.partialorder %v766, 0.0
  %vm831 = vcmp.gt.f32.partialorder %v767, 0.0
  %vm832 = vcmp.gt.f32.partialorder %v768, 0.0
  %vm833 = vcmp.gt.f32.partialorder %v769, 0.0
  %vm834 = vcmp.gt.f32.partialorder %v770, 0.0
  %vm835 = vcmp.gt.f32.partialorder %v771, 0.0
  %vm836 = vcmp.gt.f32.partialorder %v772, 0.0
  %vm837 = vcmp.gt.f32.partialorder %v773, 0.0
  %vm838 = vcmp.gt.f32.partialorder %v774, 0.0
  %vm839 = vcmp.gt.f32.partialorder %v775, 0.0
  %vm840 = vcmp.gt.f32.partialorder %v776, 0.0
  %vm841 = vcmp.gt.f32.partialorder %v777, 0.0
  %vm842 = vcmp.gt.f32.partialorder %v778, 0.0
  %vm843 = vcmp.gt.f32.partialorder %v779, 0.0
  %vm844 = vcmp.gt.f32.partialorder %v780, 0.0
  %vm845 = vcmp.gt.f32.partialorder %v781, 0.0
  %vm846 = vcmp.gt.f32.partialorder %v782, 0.0
  %vm847 = vcmp.gt.f32.partialorder %v783, 0.0
  %vm848 = vcmp.gt.f32.partialorder %v784, 0.0
  %vm849 = vcmp.gt.f32.partialorder %v785, 0.0
  %vm850 = vcmp.gt.f32.partialorder %v786, 0.0
  %vm851 = vcmp.gt.f32.partialorder %v787, 0.0
  %vm852 = vcmp.gt.f32.partialorder %v788, 0.0
  %vm853 = vcmp.gt.f32.partialorder %v789, 0.0
  %vm854 = vcmp.gt.f32.partialorder %v790, 0.0
  %vm855 = vcmp.gt.f32.partialorder %v791, 0.0
  %vm856 = vcmp.gt.f32.partialorder %v792, 0.0
  %v857 = vmul.f32 %v729, 0.1
  %v858 = vmul.f32 %v730, 0.1
  %v859 = vmul.f32 %v731, 0.1
  %v860 = vmul.f32 %v732, 0.1
  %v861 = vmul.f32 %v733, 0.1
  %v862 = vmul.f32 %v734, 0.1
  %v863 = vmul.f32 %v735, 0.1
  %v864 = vmul.f32 %v736, 0.1
  %v865 = vmul.f32 %v737, 0.1
  %v866 = vmul.f32 %v738, 0.1
  %v867 = vmul.f32 %v739, 0.1
  %v868 = vmul.f32 %v740, 0.1
  %v869 = vmul.f32 %v741, 0.1
  %v870 = vmul.f32 %v742, 0.1
  %v871 = vmul.f32 %v743, 0.1
  %v872 = vmul.f32 %v744, 0.1
  %v873 = vmul.f32 %v745, 0.1
  %v874 = vmul.f32 %v746, 0.1
  %v875 = vmul.f32 %v747, 0.1
  %v876 = vmul.f32 %v748, 0.1
  %v877 = vmul.f32 %v749, 0.1
  %v878 = vmul.f32 %v750, 0.1
  %v879 = vmul.f32 %v751, 0.1
  %v880 = vmul.f32 %v752, 0.1
  %v881 = vmul.f32 %v753, 0.1
  %v882 = vmul.f32 %v754, 0.1
  %v883 = vmul.f32 %v755, 0.1
  %v884 = vmul.f32 %v756, 0.1
  %v885 = vmul.f32 %v757, 0.1
  %v886 = vmul.f32 %v758, 0.1
  %v887 = vmul.f32 %v759, 0.1
  %v888 = vmul.f32 %v760, 0.1
  %v889 = vmul.f32 %v761, 0.1
  %v890 = vmul.f32 %v762, 0.1
  %v891 = vmul.f32 %v763, 0.1
  %v892 = vmul.f32 %v764, 0.1
  %v893 = vmul.f32 %v765, 0.1
  %v894 = vmul.f32 %v766, 0.1
  %v895 = vmul.f32 %v767, 0.1
  %v896 = vmul.f32 %v768, 0.1
  %v897 = vmul.f32 %v769, 0.1
  %v898 = vmul.f32 %v770, 0.1
  %v899 = vmul.f32 %v771, 0.1
  %v900 = vmul.f32 %v772, 0.1
  %v901 = vmul.f32 %v773, 0.1
  %v902 = vmul.f32 %v774, 0.1
  %v903 = vmul.f32 %v775, 0.1
  %v904 = vmul.f32 %v776, 0.1
  %v905 = vmul.f32 %v777, 0.1
  %v906 = vmul.f32 %v778, 0.1
  %v907 = vmul.f32 %v779, 0.1
  %v908 = vmul.f32 %v780, 0.1
  %v909 = vmul.f32 %v781, 0.1
  %v910 = vmul.f32 %v782, 0.1
  %v911 = vmul.f32 %v783, 0.1
  %v912 = vmul.f32 %v784, 0.1
  %v913 = vmul.f32 %v785, 0.1
  %v914 = vmul.f32 %v786, 0.1
  %v915 = vmul.f32 %v787, 0.1
  %v916 = vmul.f32 %v788, 0.1
  %v917 = vmul.f32 %v789, 0.1
  %v918 = vmul.f32 %v790, 0.1
  %v919 = vmul.f32 %v791, 0.1
  %v920 = vmul.f32 %v792, 0.1
  %v921 = vsel %vm793, %v729, %v857
  %v922 = vsel %vm794, %v730, %v858
  %v923 = vsel %vm795, %v731, %v859
  %v924 = vsel %vm796, %v732, %v860
  %v925 = vsel %vm797, %v733, %v861
  %v926 = vsel %vm798, %v734, %v862
  %v927 = vsel %vm799, %v735, %v863
  %v928 = vsel %vm800, %v736, %v864
  %v929 = vsel %vm801, %v737, %v865
  %v930 = vsel %vm802, %v738, %v866
  %v931 = vsel %vm803, %v739, %v867
  %v932 = vsel %vm804, %v740, %v868
  %v933 = vsel %vm805, %v741, %v869
  %v934 = vsel %vm806, %v742, %v870
  %v935 = vsel %vm807, %v743, %v871
  %v936 = vsel %vm808, %v744, %v872
  %v937 = vsel %vm809, %v745, %v873
  %v938 = vsel %vm810, %v746, %v874
  %v939 = vsel %vm811, %v747, %v875
  %v940 = vsel %vm812, %v748, %v876
  %v941 = vsel %vm813, %v749, %v877
  %v942 = vsel %vm814, %v750, %v878
  %v943 = vsel %vm815, %v751, %v879
  %v944 = vsel %vm816, %v752, %v880
  %v945 = vsel %vm817, %v753, %v881
  %v946 = vsel %vm818, %v754, %v882
  %v947 = vsel %vm819, %v755, %v883
  %v948 = vsel %vm820, %v756, %v884
  %v949 = vsel %vm821, %v757, %v885
  %v950 = vsel %vm822, %v758, %v886
  %v951 = vsel %vm823, %v759, %v887
  %v952 = vsel %vm824, %v760, %v888
  %v953 = vsel %vm825, %v761, %v889
  %v954 = vsel %vm826, %v762, %v890
  %v955 = vsel %vm827, %v763, %v891
  %v956 = vsel %vm828, %v764, %v892
  %v957 = vsel %vm829, %v765, %v893
  %v958 = vsel %vm830, %v766, %v894
  %v959 = vsel %vm831, %v767, %v895
  %v960 = vsel %vm832, %v768, %v896
  %v961 = vsel %vm833, %v769, %v897
  %v962 = vsel %vm834, %v770, %v898
  %v963 = vsel %vm835, %v771, %v899
  %v964 = vsel %vm836, %v772, %v900
  %v965 = vsel %vm837, %v773, %v901
  %v966 = vsel %vm838, %v774, %v902
  %v967 = vsel %vm839, %v775, %v903
  %v968 = vsel %vm840, %v776, %v904
  %v969 = vsel %vm841, %v777, %v905
  %v970 = vsel %vm842, %v778, %v906
  %v971 = vsel %vm843, %v779, %v907
  %v972 = vsel %vm844, %v780, %v908
  %v973 = vsel %vm845, %v781, %v909
  %v974 = vsel %vm846, %v782, %v910
  %v975 = vsel %vm847, %v783, %v911
  %v976 = vsel %vm848, %v784, %v912
  %v977 = vsel %vm849, %v785, %v913
  %v978 = vsel %vm850, %v786, %v914
  %v979 = vsel %vm851, %v787, %v915
  %v980 = vsel %vm852, %v788, %v916
  %v981 = vsel %vm853, %v789, %v917
  %v982 = vsel %vm854, %v790, %v918
  %v983 = vsel %vm855, %v791, %v919
  %v984 = vsel %vm856, %v792, %v920
  %v985 = vld [vmem:[%s1] sm:$0xf]
  %v986 = vld [vmem:[%s1 + $0x4] sm:$0xf]
  %v987 = vld [vmem:[%s1 + $0x8] sm:$0xf]
  %v988 = vld [vmem:[%s1 + $0xc] sm:$0xf]
  %v989 = vld [vmem:[%s1 + $0x10] sm:$0xf]
  %v990 = vld [vmem:[%s1 + $0x14] sm:$0xf]
  %v991 = vld [vmem:[%s1 + $0x18] sm:$0xf]
  %v992 = vld [vmem:[%s1 + $0x1c] sm:$0xf]
  %v993 = vld [vmem:[%s1 + $0x20] sm:$0xf]
  %v994 = vld [vmem:[%s1 + $0x24] sm:$0xf]
  %v995 = vld [vmem:[%s1 + $0x28] sm:$0xf]
  %v996 = vld [vmem:[%s1 + $0x2c] sm:$0xf]
  %v997 = vld [vmem:[%s1 + $0x30] sm:$0xf]
  %v998 = vld [vmem:[%s1 + $0x34] sm:$0xf]
  %v999 = vld [vmem:[%s1 + $0x38] sm:$0xf]
  %v1000 = vld [vmem:[%s1 + $0x3c] sm:$0xf]
  %v1001 = vld [vmem:[%s1 + $0x40] sm:$0xf]
  %v1002 = vld [vmem:[%s1 + $0x44] sm:$0xf]
  %v1003 = vld [vmem:[%s1 + $0x48] sm:$0xf]
  %v1004 = vld [vmem:[%s1 + $0x4c] sm:$0xf]
  %v1005 = vld [vmem:[%s1 + $0x50] sm:$0xf]
  %v1006 = vld [vmem:[%s1 + $0x54] sm:$0xf]
  %v1007 = vld [vmem:[%s1 + $0x58] sm:$0xf]
  %v1008 = vld [vmem:[%s1 + $0x5c] sm:$0xf]
  %v1009 = vld [vmem:[%s1 + $0x60] sm:$0xf]
  %v1010 = vld [vmem:[%s1 + $0x64] sm:$0xf]
  %v1011 = vld [vmem:[%s1 + $0x68] sm:$0xf]
  %v1012 = vld [vmem:[%s1 + $0x6c] sm:$0xf]
  %v1013 = vld [vmem:[%s1 + $0x70] sm:$0xf]
  %v1014 = vld [vmem:[%s1 + $0x74] sm:$0xf]
  %v1015 = vld [vmem:[%s1 + $0x78] sm:$0xf]
  %v1016 = vld [vmem:[%s1 + $0x7c] sm:$0xf]
  %v1017 = vld [vmem:[%s1 + $0x80] sm:$0xf]
  %v1018 = vld [vmem:[%s1 + $0x84] sm:$0xf]
  %v1019 = vld [vmem:[%s1 + $0x88] sm:$0xf]
  %v1020 = vld [vmem:[%s1 + $0x8c] sm:$0xf]
  %v1021 = vld [vmem:[%s1 + $0x90] sm:$0xf]
  %v1022 = vld [vmem:[%s1 + $0x94] sm:$0xf]
  %v1023 = vld [vmem:[%s1 + $0x98] sm:$0xf]
  %v1024 = vld [vmem:[%s1 + $0x9c] sm:$0xf]
  %v1025 = vld [vmem:[%s1 + $0xa0] sm:$0xf]
  %v1026 = vld [vmem:[%s1 + $0xa4] sm:$0xf]
  %v1027 = vld [vmem:[%s1 + $0xa8] sm:$0xf]
  %v1028 = vld [vmem:[%s1 + $0xac] sm:$0xf]
  %v1029 = vld [vmem:[%s1 + $0xb0] sm:$0xf]
  %v1030 = vld [vmem:[%s1 + $0xb4] sm:$0xf]
  %v1031 = vld [vmem:[%s1 + $0xb8] sm:$0xf]
  %v1032 = vld [vmem:[%s1 + $0xbc] sm:$0xf]
  %v1033 = vld [vmem:[%s1 + $0xc0] sm:$0xf]
  %v1034 = vld [vmem:[%s1 + $0xc4] sm:$0xf]
  %v1035 = vld [vmem:[%s1 + $0xc8] sm:$0xf]
  %v1036 = vld [vmem:[%s1 + $0xcc] sm:$0xf]
  %v1037 = vld [vmem:[%s1 + $0xd0] sm:$0xf]
  %v1038 = vld [vmem:[%s1 + $0xd4] sm:$0xf]
  %v1039 = vld [vmem:[%s1 + $0xd8] sm:$0xf]
  %v1040 = vld [vmem:[%s1 + $0xdc] sm:$0xf]
  %v1041 = vld [vmem:[%s1 + $0xe0] sm:$0xf]
  %v1042 = vld [vmem:[%s1 + $0xe4] sm:$0xf]
  %v1043 = vld [vmem:[%s1 + $0xe8] sm:$0xf]
  %v1044 = vld [vmem:[%s1 + $0xec] sm:$0xf]
  %v1045 = vld [vmem:[%s1 + $0xf0] sm:$0xf]
  %v1046 = vld [vmem:[%s1 + $0xf4] sm:$0xf]
  %v1047 = vld [vmem:[%s1 + $0xf8] sm:$0xf]
  %v1048 = vld [vmem:[%s1 + $0xfc] sm:$0xf]
  %v1049 = vld [vmem:[%s3] sm:$0xf]
  %v1050 = vld [vmem:[%s3 + $0x4] sm:$0xf]
  %v1051 = vld [vmem:[%s3 + $0x8] sm:$0xf]
  %v1052 = vld [vmem:[%s3 + $0xc] sm:$0xf]
  %v1053 = vld [vmem:[%s3 + $0x10] sm:$0xf]
  %v1054 = vld [vmem:[%s3 + $0x14] sm:$0xf]
  %v1055 = vld [vmem:[%s3 + $0x18] sm:$0xf]
  %v1056 = vld [vmem:[%s3 + $0x1c] sm:$0xf]
  %v1057 = vld [vmem:[%s3 + $0x20] sm:$0xf]
  %v1058 = vld [vmem:[%s3 + $0x24] sm:$0xf]
  %v1059 = vld [vmem:[%s3 + $0x28] sm:$0xf]
  %v1060 = vld [vmem:[%s3 + $0x2c] sm:$0xf]
  %v1061 = vld [vmem:[%s3 + $0x30] sm:$0xf]
  %v1062 = vld [vmem:[%s3 + $0x34] sm:$0xf]
  %v1063 = vld [vmem:[%s3 + $0x38] sm:$0xf]
  %v1064 = vld [vmem:[%s3 + $0x3c] sm:$0xf]
  %v1129 = vunpack.c.l.b16 %v985
  %v1130 = vunpack.c.l.b16 %v986
  %v1131 = vunpack.c.l.b16 %v987
  %v1132 = vunpack.c.l.b16 %v988
  %v1133 = vunpack.c.l.b16 %v989
  %v1134 = vunpack.c.l.b16 %v990
  %v1135 = vunpack.c.l.b16 %v991
  %v1136 = vunpack.c.l.b16 %v992
  %v1137 = vunpack.c.l.b16 %v993
  %v1138 = vunpack.c.l.b16 %v994
  %v1139 = vunpack.c.l.b16 %v995
  %v1140 = vunpack.c.l.b16 %v996
  %v1141 = vunpack.c.l.b16 %v997
  %v1142 = vunpack.c.l.b16 %v998
  %v1143 = vunpack.c.l.b16 %v999
  %v1144 = vunpack.c.l.b16 %v1000
  %v1145 = vunpack.c.l.b16 %v1001
  %v1146 = vunpack.c.l.b16 %v1002
  %v1147 = vunpack.c.l.b16 %v1003
  %v1148 = vunpack.c.l.b16 %v1004
  %v1149 = vunpack.c.l.b16 %v1005
  %v1150 = vunpack.c.l.b16 %v1006
  %v1151 = vunpack.c.l.b16 %v1007
  %v1152 = vunpack.c.l.b16 %v1008
  %v1153 = vunpack.c.l.b16 %v1009
  %v1154 = vunpack.c.l.b16 %v1010
  %v1155 = vunpack.c.l.b16 %v1011
  %v1156 = vunpack.c.l.b16 %v1012
  %v1157 = vunpack.c.l.b16 %v1013
  %v1158 = vunpack.c.l.b16 %v1014
  %v1159 = vunpack.c.l.b16 %v1015
  %v1160 = vunpack.c.l.b16 %v1016
  %v1161 = vunpack.c.l.b16 %v1017
  %v1162 = vunpack.c.l.b16 %v1018
  %v1163 = vunpack.c.l.b16 %v1019
  %v1164 = vunpack.c.l.b16 %v1020
  %v1165 = vunpack.c.l.b16 %v1021
  %v1166 = vunpack.c.l.b16 %v1022
  %v1167 = vunpack.c.l.b16 %v1023
  %v1168 = vunpack.c.l.b16 %v1024
  %v1169 = vunpack.c.l.b16 %v1025
  %v1170 = vunpack.c.l.b16 %v1026
  %v1171 = vunpack.c.l.b16 %v1027
  %v1172 = vunpack.c.l.b16 %v1028
  %v1173 = vunpack.c.l.b16 %v1029
  %v1174 = vunpack.c.l.b16 %v1030
  %v1175 = vunpack.c.l.b16 %v1031
  %v1176 = vunpack.c.l.b16 %v1032
  %v1177 = vunpack.c.l.b16 %v1033
  %v1178 = vunpack.c.l.b16 %v1034
  %v1179 = vunpack.c.l.b16 %v1035
  %v1180 = vunpack.c.l.b16 %v1036
  %v1181 = vunpack.c.l.b16 %v1037
  %v1182 = vunpack.c.l.b16 %v1038
  %v1183 = vunpack.c.l.b16 %v1039
  %v1184 = vunpack.c.l.b16 %v1040
  %v1185 = vunpack.c.l.b16 %v1041
  %v1186 = vunpack.c.l.b16 %v1042
  %v1187 = vunpack.c.l.b16 %v1043
  %v1188 = vunpack.c.l.b16 %v1044
  %v1189 = vunpack.c.l.b16 %v1045
  %v1190 = vunpack.c.l.b16 %v1046
  %v1191 = vunpack.c.l.b16 %v1047
  %v1192 = vunpack.c.l.b16 %v1048
  %v1193 = vpack.c.b16 %v1130, %v1129
  %v1194 = vpack.c.b16 %v1132, %v1131
  %v1195 = vpack.c.b16 %v1134, %v1133
  %v1196 = vpack.c.b16 %v1136, %v1135
  %v1197 = vpack.c.b16 %v1138, %v1137
  %v1198 = vpack.c.b16 %v1140, %v1139
  %v1199 = vpack.c.b16 %v1142, %v1141
  %v1200 = vpack.c.b16 %v1144, %v1143
  %v1201 = vpack.c.b16 %v1146, %v1145
  %v1202 = vpack.c.b16 %v1148, %v1147
  %v1203 = vpack.c.b16 %v1150, %v1149
  %v1204 = vpack.c.b16 %v1152, %v1151
  %v1205 = vpack.c.b16 %v1154, %v1153
  %v1206 = vpack.c.b16 %v1156, %v1155
  %v1207 = vpack.c.b16 %v1158, %v1157
  %v1208 = vpack.c.b16 %v1160, %v1159
  %v1209 = vpack.c.b16 %v1162, %v1161
  %v1210 = vpack.c.b16 %v1164, %v1163
  %v1211 = vpack.c.b16 %v1166, %v1165
  %v1212 = vpack.c.b16 %v1168, %v1167
  %v1213 = vpack.c.b16 %v1170, %v1169
  %v1214 = vpack.c.b16 %v1172, %v1171
  %v1215 = vpack.c.b16 %v1174, %v1173
  %v1216 = vpack.c.b16 %v1176, %v1175
  %v1217 = vpack.c.b16 %v1178, %v1177
  %v1218 = vpack.c.b16 %v1180, %v1179
  %v1219 = vpack.c.b16 %v1182, %v1181
  %v1220 = vpack.c.b16 %v1184, %v1183
  %v1221 = vpack.c.b16 %v1186, %v1185
  %v1222 = vpack.c.b16 %v1188, %v1187
  %v1223 = vpack.c.b16 %v1190, %v1189
  %v1224 = vpack.c.b16 %v1192, %v1191
  %v1273 = vunpack.c.l.b16 %v1049
  %v1274 = vunpack.c.l.b16 %v1050
  %v1275 = vunpack.c.l.b16 %v1051
  %v1276 = vunpack.c.l.b16 %v1052
  %v1277 = vunpack.c.l.b16 %v1053
  %v1278 = vunpack.c.l.b16 %v1054
  %v1279 = vunpack.c.l.b16 %v1055
  %v1280 = vunpack.c.l.b16 %v1056
  %v1281 = vunpack.c.l.b16 %v1057
  %v1282 = vunpack.c.l.b16 %v1058
  %v1283 = vunpack.c.l.b16 %v1059
  %v1284 = vunpack.c.l.b16 %v1060
  %v1285 = vunpack.c.l.b16 %v1061
  %v1286 = vunpack.c.l.b16 %v1062
  %v1287 = vunpack.c.l.b16 %v1063
  %v1288 = vunpack.c.l.b16 %v1064
  %v1289 = vpack.c.b16 %v1274, %v1273
  %v1290 = vpack.c.b16 %v1276, %v1275
  %v1291 = vpack.c.b16 %v1278, %v1277
  %v1292 = vpack.c.b16 %v1280, %v1279
  %v1293 = vpack.c.b16 %v1282, %v1281
  %v1294 = vpack.c.b16 %v1284, %v1283
  %v1295 = vpack.c.b16 %v1286, %v1285
  %v1296 = vpack.c.b16 %v1288, %v1287
  %1305 = vmatprep.subr.bf16.mxu0 0
  %1306 = vmatpush1.bf16.msra.mxu0 %v1289
  %1307 = vmatprep.subr.bf16.mxu0 0
  %1308 = vmatpush1.bf16.msra.mxu0 %v1290
  %1309 = vmatprep.subr.bf16.mxu0 0
  %1310 = vmatpush1.bf16.msra.mxu0 %v1291
  %1311 = vmatprep.subr.bf16.mxu0 0
  %1312 = vmatpush1.bf16.msra.mxu0 %v1292
  %1313 = vmatprep.subr.bf16.mxu0 0
  %1314 = vmatpush1.bf16.msra.mxu0 %v1293
  %1315 = vmatprep.subr.bf16.mxu0 0
  %1316 = vmatpush1.bf16.msra.mxu0 %v1294
  %1317 = vmatprep.subr.bf16.mxu0 0
  %1318 = vmatpush1.bf16.msra.mxu0 %v1295
  %1319 = vmatprep.subr.bf16.mxu0 0
  %1320 = vmatpush1.bf16.msra.mxu0 %v1296
  %1321 = vmatprep.subr.bf16.mxu0 0
  %1322 = vmatpush1.bf16.msra.mxu0 0
  %1323 = vmatprep.subr.bf16.mxu0 0
  %1324 = vmatpush1.bf16.msra.mxu0 0
  %1325 = vmatprep.subr.bf16.mxu0 0
  %1326 = vmatpush1.bf16.msra.mxu0 0
  %1327 = vmatprep.subr.bf16.mxu0 0
  %1328 = vmatpush1.bf16.msra.mxu0 0
  %1329 = vmatprep.subr.bf16.mxu0 0
  %1330 = vmatpush1.bf16.msra.mxu0 0
  %1331 = vmatprep.subr.bf16.mxu0 0
  %1332 = vmatpush1.bf16.msra.mxu0 0
  %1333 = vmatprep.subr.bf16.mxu0 0
  %1334 = vmatpush1.bf16.msra.mxu0 0
  %1335 = vmatprep.subr.bf16.mxu0 0
  %1336 = vmatpush1.bf16.msra.mxu0 0
  %1337 = vmatprep.mubr.bf16.mxu0 0
  %1338 = vmatmul.mubr.bf16.gmra.mrb[0].mxu0 %v1193
  %v1339 = vpop.f32.mrb[0].mxu0
  %v1340 = vadd.f32 0.0, %v1339
  %v1341 = vpop.f32.mrb[0].mxu0
  %v1342 = vpop.f32.mrb[0].mxu0
  %v1343 = vadd.f32 0.0, %v1342
  %v1344 = vpop.f32.mrb[0].mxu0
  %1345 = vmatprep.mubr.bf16.mxu0 0
  %1346 = vmatmul.mubr.bf16.gmra.mrb[0].mxu0 %v1194
  %v1347 = vpop.f32.mrb[0].mxu0
  %v1348 = vadd.f32 0.0, %v1347
  %v1349 = vpop.f32.mrb[0].mxu0
  %v1350 = vpop.f32.mrb[0].mxu0
  %v1351 = vadd.f32 0.0, %v1350
  %v1352 = vpop.f32.mrb[0].mxu0
  %1353 = vmatprep.mubr.bf16.mxu0 0
  %1354 = vmatmul.mubr.bf16.gmra.mrb[0].mxu0 %v1195
  %v1355 = vpop.f32.mrb[0].mxu0
  %v1356 = vadd.f32 0.0, %v1355
  %v1357 = vpop.f32.mrb[0].mxu0
  %v1358 = vpop.f32.mrb[0].mxu0
  %v1359 = vadd.f32 0.0, %v1358
  %v1360 = vpop.f32.mrb[0].mxu0
  %1361 = vmatprep.mubr.bf16.mxu0 0
  %1362 = vmatmul.mubr.bf16.gmra.mrb[0].mxu0 %v1196
  %v1363 = vpop.f32.mrb[0].mxu0
  %v1364 = vadd.f32 0.0, %v1363
  %v1365 = vpop.f32.mrb[0].mxu0
  %v1366 = vpop.f32.mrb[0].mxu0
  %v1367 = vadd.f32 0.0, %v1366
  %v1368 = vpop.f32.mrb[0].mxu0
  %1369 = vmatprep.mubr.bf16.mxu0 0
  %1370 = vmatmul.mubr.bf16.gmra.mrb[0].mxu0 %v1197
  %v1371 = vpop.f32.mrb[0].mxu0
  %v1372 = vadd.f32 0.0, %v1371
  %v1373 = vpop.f32.mrb[0].mxu0
  %v1374 = vpop.f32.mrb[0].mxu0
  %v1375 = vadd.f32 0.0, %v1374
  %v1376 = vpop.f32.mrb[0].mxu0
  %1377 = vmatprep.mubr.bf16.mxu0 0
  %1378 = vmatmul.mubr.bf16.gmra.mrb[0].mxu0 %v1198
  %v1379 = vpop.f32.mrb[0].mxu0
  %v1380 = vadd.f32 0.0, %v1379
  %v1381 = vpop.f32.mrb[0].mxu0
  %v1382 = vpop.f32.mrb[0].mxu0
  %v1383 = vadd.f32 0.0, %v1382
  %v1384 = vpop.f32.mrb[0].mxu0
  %1385 = vmatprep.mubr.bf16.mxu0 0
  %1386 = vmatmul.mubr.bf16.gmra.mrb[0].mxu0 %v1199
  %v1387 = vpop.f32.mrb[0].mxu0
  %v1388 = vadd.f32 0.0, %v1387
  %v1389 = vpop.f32.mrb[0].mxu0
  %v1390 = vpop.f32.mrb[0].mxu0
  %v1391 = vadd.f32 0.0, %v1390
  %v1392 = vpop.f32.mrb[0].mxu0
  %1393 = vmatprep.mubr.bf16.mxu0 0
  %1394 = vmatmul.mubr.bf16.gmra.mrb[0].mxu0 %v1200
  %v1395 = vpop.f32.mrb[0].mxu0
  %v1396 = vadd.f32 0.0, %v1395
  %v1397 = vpop.f32.mrb[0].mxu0
  %v1398 = vpop.f32.mrb[0].mxu0
  %v1399 = vadd.f32 0.0, %v1398
  %v1400 = vpop.f32.mrb[0].mxu0
  %1401 = vmatprep.mubr.bf16.mxu0 0
  %1402 = vmatmul.mubr.bf16.gmra.mrb[0].mxu0 %v1201
  %v1403 = vpop.f32.mrb[0].mxu0
  %v1404 = vadd.f32 0.0, %v1403
  %v1405 = vpop.f32.mrb[0].mxu0
  %v1406 = vpop.f32.mrb[0].mxu0
  %v1407 = vadd.f32 0.0, %v1406
  %v1408 = vpop.f32.mrb[0].mxu0
  %1409 = vmatprep.mubr.bf16.mxu0 0
  %1410 = vmatmul.mubr.bf16.gmra.mrb[0].mxu0 %v1202
  %v1411 = vpop.f32.mrb[0].mxu0
  %v1412 = vadd.f32 0.0, %v1411
  %v1413 = vpop.f32.mrb[0].mxu0
  %v1414 = vpop.f32.mrb[0].mxu0
  %v1415 = vadd.f32 0.0, %v1414
  %v1416 = vpop.f32.mrb[0].mxu0
  %1417 = vmatprep.mubr.bf16.mxu0 0
  %1418 = vmatmul.mubr.bf16.gmra.mrb[0].mxu0 %v1203
  %v1419 = vpop.f32.mrb[0].mxu0
  %v1420 = vadd.f32 0.0, %v1419
  %v1421 = vpop.f32.mrb[0].mxu0
  %v1422 = vpop.f32.mrb[0].mxu0
  %v1423 = vadd.f32 0.0, %v1422
  %v1424 = vpop.f32.mrb[0].mxu0
  %1425 = vmatprep.mubr.bf16.mxu0 0
  %1426 = vmatmul.mubr.bf16.gmra.mrb[0].mxu0 %v1204
  %v1427 = vpop.f32.mrb[0].mxu0
  %v1428 = vadd.f32 0.0, %v1427
  %v1429 = vpop.f32.mrb[0].mxu0
  %v1430 = vpop.f32.mrb[0].mxu0
  %v1431 = vadd.f32 0.0, %v1430
  %v1432 = vpop.f32.mrb[0].mxu0
  %1433 = vmatprep.mubr.bf16.mxu0 0
  %1434 = vmatmul.mubr.bf16.gmra.mrb[0].mxu0 %v1205
  %v1435 = vpop.f32.mrb[0].mxu0
  %v1436 = vadd.f32 0.0, %v1435
  %v1437 = vpop.f32.mrb[0].mxu0
  %v1438 = vpop.f32.mrb[0].mxu0
  %v1439 = vadd.f32 0.0, %v1438
  %v1440 = vpop.f32.mrb[0].mxu0
  %1441 = vmatprep.mubr.bf16.mxu0 0
  %1442 = vmatmul.mubr.bf16.gmra.mrb[0].mxu0 %v1206
  %v1443 = vpop.f32.mrb[0].mxu0
  %v1444 = vadd.f32 0.0, %v1443
  %v1445 = vpop.f32.mrb[0].mxu0
  %v1446 = vpop.f32.mrb[0].mxu0
  %v1447 = vadd.f32 0.0, %v1446
  %v1448 = vpop.f32.mrb[0].mxu0
  %1449 = vmatprep.mubr.bf16.mxu0 0
  %1450 = vmatmul.mubr.bf16.gmra.mrb[0].mxu0 %v1207
  %v1451 = vpop.f32.mrb[0].mxu0
  %v1452 = vadd.f32 0.0, %v1451
  %v1453 = vpop.f32.mrb[0].mxu0
  %v1454 = vpop.f32.mrb[0].mxu0
  %v1455 = vadd.f32 0.0, %v1454
  %v1456 = vpop.f32.mrb[0].mxu0
  %1457 = vmatprep.mubr.bf16.mxu0 0
  %1458 = vmatmul.mubr.bf16.gmra.mrb[0].mxu0 %v1208
  %v1459 = vpop.f32.mrb[0].mxu0
  %v1460 = vadd.f32 0.0, %v1459
  %v1461 = vpop.f32.mrb[0].mxu0
  %v1462 = vpop.f32.mrb[0].mxu0
  %v1463 = vadd.f32 0.0, %v1462
  %v1464 = vpop.f32.mrb[0].mxu0
  %1465 = vmatprep.mubr.bf16.mxu0 0
  %1466 = vmatmul.mubr.bf16.gmra.mrb[0].mxu0 %v1209
  %v1467 = vpop.f32.mrb[0].mxu0
  %v1468 = vadd.f32 0.0, %v1467
  %v1469 = vpop.f32.mrb[0].mxu0
  %v1470 = vpop.f32.mrb[0].mxu0
  %v1471 = vadd.f32 0.0, %v1470
  %v1472 = vpop.f32.mrb[0].mxu0
  %1473 = vmatprep.mubr.bf16.mxu0 0
  %1474 = vmatmul.mubr.bf16.gmra.mrb[0].mxu0 %v1210
  %v1475 = vpop.f32.mrb[0].mxu0
  %v1476 = vadd.f32 0.0, %v1475
  %v1477 = vpop.f32.mrb[0].mxu0
  %v1478 = vpop.f32.mrb[0].mxu0
  %v1479 = vadd.f32 0.0, %v1478
  %v1480 = vpop.f32.mrb[0].mxu0
  %1481 = vmatprep.mubr.bf16.mxu0 0
  %1482 = vmatmul.mubr.bf16.gmra.mrb[0].mxu0 %v1211
  %v1483 = vpop.f32.mrb[0].mxu0
  %v1484 = vadd.f32 0.0, %v1483
  %v1485 = vpop.f32.mrb[0].mxu0
  %v1486 = vpop.f32.mrb[0].mxu0
  %v1487 = vadd.f32 0.0, %v1486
  %v1488 = vpop.f32.mrb[0].mxu0
  %1489 = vmatprep.mubr.bf16.mxu0 0
  %1490 = vmatmul.mubr.bf16.gmra.mrb[0].mxu0 %v1212
  %v1491 = vpop.f32.mrb[0].mxu0
  %v1492 = vadd.f32 0.0, %v1491
  %v1493 = vpop.f32.mrb[0].mxu0
  %v1494 = vpop.f32.mrb[0].mxu0
  %v1495 = vadd.f32 0.0, %v1494
  %v1496 = vpop.f32.mrb[0].mxu0
  %1497 = vmatprep.mubr.bf16.mxu0 0
  %1498 = vmatmul.mubr.bf16.gmra.mrb[0].mxu0 %v1213
  %v1499 = vpop.f32.mrb[0].mxu0
  %v1500 = vadd.f32 0.0, %v1499
  %v1501 = vpop.f32.mrb[0].mxu0
  %v1502 = vpop.f32.mrb[0].mxu0
  %v1503 = vadd.f32 0.0, %v1502
  %v1504 = vpop.f32.mrb[0].mxu0
  %1505 = vmatprep.mubr.bf16.mxu0 0
  %1506 = vmatmul.mubr.bf16.gmra.mrb[0].mxu0 %v1214
  %v1507 = vpop.f32.mrb[0].mxu0
  %v1508 = vadd.f32 0.0, %v1507
  %v1509 = vpop.f32.mrb[0].mxu0
  %v1510 = vpop.f32.mrb[0].mxu0
  %v1511 = vadd.f32 0.0, %v1510
  %v1512 = vpop.f32.mrb[0].mxu0
  %1513 = vmatprep.mubr.bf16.mxu0 0
  %1514 = vmatmul.mubr.bf16.gmra.mrb[0].mxu0 %v1215
  %v1515 = vpop.f32.mrb[0].mxu0
  %v1516 = vadd.f32 0.0, %v1515
  %v1517 = vpop.f32.mrb[0].mxu0
  %v1518 = vpop.f32.mrb[0].mxu0
  %v1519 = vadd.f32 0.0, %v1518
  %v1520 = vpop.f32.mrb[0].mxu0
  %1521 = vmatprep.mubr.bf16.mxu0 0
  %1522 = vmatmul.mubr.bf16.gmra.mrb[0].mxu0 %v1216
  %v1523 = vpop.f32.mrb[0].mxu0
  %v1524 = vadd.f32 0.0, %v1523
  %v1525 = vpop.f32.mrb[0].mxu0
  %v1526 = vpop.f32.mrb[0].mxu0
  %v1527 = vadd.f32 0.0, %v1526
  %v1528 = vpop.f32.mrb[0].mxu0
  %1529 = vmatprep.mubr.bf16.mxu0 0
  %1530 = vmatmul.mubr.bf16.gmra.mrb[0].mxu0 %v1217
  %v1531 = vpop.f32.mrb[0].mxu0
  %v1532 = vadd.f32 0.0, %v1531
  %v1533 = vpop.f32.mrb[0].mxu0
  %v1534 = vpop.f32.mrb[0].mxu0
  %v1535 = vadd.f32 0.0, %v1534
  %v1536 = vpop.f32.mrb[0].mxu0
  %1537 = vmatprep.mubr.bf16.mxu0 0
  %1538 = vmatmul.mubr.bf16.gmra.mrb[0].mxu0 %v1218
  %v1539 = vpop.f32.mrb[0].mxu0
  %v1540 = vadd.f32 0.0, %v1539
  %v1541 = vpop.f32.mrb[0].mxu0
  %v1542 = vpop.f32.mrb[0].mxu0
  %v1543 = vadd.f32 0.0, %v1542
  %v1544 = vpop.f32.mrb[0].mxu0
  %1545 = vmatprep.mubr.bf16.mxu0 0
  %1546 = vmatmul.mubr.bf16.gmra.mrb[0].mxu0 %v1219
  %v1547 = vpop.f32.mrb[0].mxu0
  %v1548 = vadd.f32 0.0, %v1547
  %v1549 = vpop.f32.mrb[0].mxu0
  %v1550 = vpop.f32.mrb[0].mxu0
  %v1551 = vadd.f32 0.0, %v1550
  %v1552 = vpop.f32.mrb[0].mxu0
  %1553 = vmatprep.mubr.bf16.mxu0 0
  %1554 = vmatmul.mubr.bf16.gmra.mrb[0].mxu0 %v1220
  %v1555 = vpop.f32.mrb[0].mxu0
  %v1556 = vadd.f32 0.0, %v1555
  %v1557 = vpop.f32.mrb[0].mxu0
  %v1558 = vpop.f32.mrb[0].mxu0
  %v1559 = vadd.f32 0.0, %v1558
  %v1560 = vpop.f32.mrb[0].mxu0
  %1561 = vmatprep.mubr.bf16.mxu0 0
  %1562 = vmatmul.mubr.bf16.gmra.mrb[0].mxu0 %v1221
  %v1563 = vpop.f32.mrb[0].mxu0
  %v1564 = vadd.f32 0.0, %v1563
  %v1565 = vpop.f32.mrb[0].mxu0
  %v1566 = vpop.f32.mrb[0].mxu0
  %v1567 = vadd.f32 0.0, %v1566
  %v1568 = vpop.f32.mrb[0].mxu0
  %1569 = vmatprep.mubr.bf16.mxu0 0
  %1570 = vmatmul.mubr.bf16.gmra.mrb[0].mxu0 %v1222
  %v1571 = vpop.f32.mrb[0].mxu0
  %v1572 = vadd.f32 0.0, %v1571
  %v1573 = vpop.f32.mrb[0].mxu0
  %v1574 = vpop.f32.mrb[0].mxu0
  %v1575 = vadd.f32 0.0, %v1574
  %v1576 = vpop.f32.mrb[0].mxu0
  %1577 = vmatprep.mubr.bf16.mxu0 0
  %1578 = vmatmul.mubr.bf16.gmra.mrb[0].mxu0 %v1223
  %v1579 = vpop.f32.mrb[0].mxu0
  %v1580 = vadd.f32 0.0, %v1579
  %v1581 = vpop.f32.mrb[0].mxu0
  %v1582 = vpop.f32.mrb[0].mxu0
  %v1583 = vadd.f32 0.0, %v1582
  %v1584 = vpop.f32.mrb[0].mxu0
  %1585 = vmatprep.mubr.bf16.mxu0 0
  %1586 = vmatmul.mubr.bf16.gmra.mrb[0].mxu0 %v1224
  %v1587 = vpop.f32.mrb[0].mxu0
  %v1588 = vadd.f32 0.0, %v1587
  %v1589 = vpop.f32.mrb[0].mxu0
  %v1590 = vpop.f32.mrb[0].mxu0
  %v1591 = vadd.f32 0.0, %v1590
  %v1592 = vpop.f32.mrb[0].mxu0
  %1593 = vdwg.mxu0
  %v1594 = vld [vmem:[%s6] sm:$0x1]
  %v1596 = vlaneseq
  %v1597 = vshrl.u32 %v1596, 7
  %v1598 = vsub.s32 0, %v1597
  %v1599 = vrot.slane %v1594, %v1598
  %v1601 = vmul.f32 %v1340, %v1599
  %v1602 = vmul.f32 %v1343, %v1599
  %v1603 = vmul.f32 %v1348, %v1599
  %v1604 = vmul.f32 %v1351, %v1599
  %v1605 = vmul.f32 %v1356, %v1599
  %v1606 = vmul.f32 %v1359, %v1599
  %v1607 = vmul.f32 %v1364, %v1599
  %v1608 = vmul.f32 %v1367, %v1599
  %v1609 = vmul.f32 %v1372, %v1599
  %v1610 = vmul.f32 %v1375, %v1599
  %v1611 = vmul.f32 %v1380, %v1599
  %v1612 = vmul.f32 %v1383, %v1599
  %v1613 = vmul.f32 %v1388, %v1599
  %v1614 = vmul.f32 %v1391, %v1599
  %v1615 = vmul.f32 %v1396, %v1599
  %v1616 = vmul.f32 %v1399, %v1599
  %v1617 = vmul.f32 %v1404, %v1599
  %v1618 = vmul.f32 %v1407, %v1599
  %v1619 = vmul.f32 %v1412, %v1599
  %v1620 = vmul.f32 %v1415, %v1599
  %v1621 = vmul.f32 %v1420, %v1599
  %v1622 = vmul.f32 %v1423, %v1599
  %v1623 = vmul.f32 %v1428, %v1599
  %v1624 = vmul.f32 %v1431, %v1599
  %v1625 = vmul.f32 %v1436, %v1599
  %v1626 = vmul.f32 %v1439, %v1599
  %v1627 = vmul.f32 %v1444, %v1599
  %v1628 = vmul.f32 %v1447, %v1599
  %v1629 = vmul.f32 %v1452, %v1599
  %v1630 = vmul.f32 %v1455, %v1599
  %v1631 = vmul.f32 %v1460, %v1599
  %v1632 = vmul.f32 %v1463, %v1599
  %v1633 = vmul.f32 %v1468, %v1599
  %v1634 = vmul.f32 %v1471, %v1599
  %v1635 = vmul.f32 %v1476, %v1599
  %v1636 = vmul.f32 %v1479, %v1599
  %v1637 = vmul.f32 %v1484, %v1599
  %v1638 = vmul.f32 %v1487, %v1599
  %v1639 = vmul.f32 %v1492, %v1599
  %v1640 = vmul.f32 %v1495, %v1599
  %v1641 = vmul.f32 %v1500, %v1599
  %v1642 = vmul.f32 %v1503, %v1599
  %v1643 = vmul.f32 %v1508, %v1599
  %v1644 = vmul.f32 %v1511, %v1599
  %v1645 = vmul.f32 %v1516, %v1599
  %v1646 = vmul.f32 %v1519, %v1599
  %v1647 = vmul.f32 %v1524, %v1599
  %v1648 = vmul.f32 %v1527, %v1599
  %v1649 = vmul.f32 %v1532, %v1599
  %v1650 = vmul.f32 %v1535, %v1599
  %v1651 = vmul.f32 %v1540, %v1599
  %v1652 = vmul.f32 %v1543, %v1599
  %v1653 = vmul.f32 %v1548, %v1599
  %v1654 = vmul.f32 %v1551, %v1599
  %v1655 = vmul.f32 %v1556, %v1599
  %v1656 = vmul.f32 %v1559, %v1599
  %v1657 = vmul.f32 %v1564, %v1599
  %v1658 = vmul.f32 %v1567, %v1599
  %v1659 = vmul.f32 %v1572, %v1599
  %v1660 = vmul.f32 %v1575, %v1599
  %v1661 = vmul.f32 %v1580, %v1599
  %v1662 = vmul.f32 %v1583, %v1599
  %v1663 = vmul.f32 %v1588, %v1599
  %v1664 = vmul.f32 %v1591, %v1599
  %v1665 = vld [vmem:[%s7] sm:$0x1]
  %v1667 = vlaneseq
  %v1668 = vshrl.u32 %v1667, 7
  %v1669 = vsub.s32 0, %v1668
  %v1670 = vrot.slane %v1665, %v1669
  %v1672 = vadd.f32 %v1601, %v1670
  %v1673 = vadd.f32 %v1602, %v1670
  %v1674 = vadd.f32 %v1603, %v1670
  %v1675 = vadd.f32 %v1604, %v1670
  %v1676 = vadd.f32 %v1605, %v1670
  %v1677 = vadd.f32 %v1606, %v1670
  %v1678 = vadd.f32 %v1607, %v1670
  %v1679 = vadd.f32 %v1608, %v1670
  %v1680 = vadd.f32 %v1609, %v1670
  %v1681 = vadd.f32 %v1610, %v1670
  %v1682 = vadd.f32 %v1611, %v1670
  %v1683 = vadd.f32 %v1612, %v1670
  %v1684 = vadd.f32 %v1613, %v1670
  %v1685 = vadd.f32 %v1614, %v1670
  %v1686 = vadd.f32 %v1615, %v1670
  %v1687 = vadd.f32 %v1616, %v1670
  %v1688 = vadd.f32 %v1617, %v1670
  %v1689 = vadd.f32 %v1618, %v1670
  %v1690 = vadd.f32 %v1619, %v1670
  %v1691 = vadd.f32 %v1620, %v1670
  %v1692 = vadd.f32 %v1621, %v1670
  %v1693 = vadd.f32 %v1622, %v1670
  %v1694 = vadd.f32 %v1623, %v1670
  %v1695 = vadd.f32 %v1624, %v1670
  %v1696 = vadd.f32 %v1625, %v1670
  %v1697 = vadd.f32 %v1626, %v1670
  %v1698 = vadd.f32 %v1627, %v1670
  %v1699 = vadd.f32 %v1628, %v1670
  %v1700 = vadd.f32 %v1629, %v1670
  %v1701 = vadd.f32 %v1630, %v1670
  %v1702 = vadd.f32 %v1631, %v1670
  %v1703 = vadd.f32 %v1632, %v1670
  %v1704 = vadd.f32 %v1633, %v1670
  %v1705 = vadd.f32 %v1634, %v1670
  %v1706 = vadd.f32 %v1635, %v1670
  %v1707 = vadd.f32 %v1636, %v1670
  %v1708 = vadd.f32 %v1637, %v1670
  %v1709 = vadd.f32 %v1638, %v1670
  %v1710 = vadd.f32 %v1639, %v1670
  %v1711 = vadd.f32 %v1640, %v1670
  %v1712 = vadd.f32 %v1641, %v1670
  %v1713 = vadd.f32 %v1642, %v1670
  %v1714 = vadd.f32 %v1643, %v1670
  %v1715 = vadd.f32 %v1644, %v1670
  %v1716 = vadd.f32 %v1645, %v1670
  %v1717 = vadd.f32 %v1646, %v1670
  %v1718 = vadd.f32 %v1647, %v1670
  %v1719 = vadd.f32 %v1648, %v1670
  %v1720 = vadd.f32 %v1649, %v1670
  %v1721 = vadd.f32 %v1650, %v1670
  %v1722 = vadd.f32 %v1651, %v1670
  %v1723 = vadd.f32 %v1652, %v1670
  %v1724 = vadd.f32 %v1653, %v1670
  %v1725 = vadd.f32 %v1654, %v1670
  %v1726 = vadd.f32 %v1655, %v1670
  %v1727 = vadd.f32 %v1656, %v1670
  %v1728 = vadd.f32 %v1657, %v1670
  %v1729 = vadd.f32 %v1658, %v1670
  %v1730 = vadd.f32 %v1659, %v1670
  %v1731 = vadd.f32 %v1660, %v1670
  %v1732 = vadd.f32 %v1661, %v1670
  %v1733 = vadd.f32 %v1662, %v1670
  %v1734 = vadd.f32 %v1663, %v1670
  %v1735 = vadd.f32 %v1664, %v1670
  %vm1736 = vcmp.gt.f32.partialorder %v1672, 0.0
  %vm1737 = vcmp.gt.f32.partialorder %v1673, 0.0
  %vm1738 = vcmp.gt.f32.partialorder %v1674, 0.0
  %vm1739 = vcmp.gt.f32.partialorder %v1675, 0.0
  %vm1740 = vcmp.gt.f32.partialorder %v1676, 0.0
  %vm1741 = vcmp.gt.f32.partialorder %v1677, 0.0
  %vm1742 = vcmp.gt.f32.partialorder %v1678, 0.0
  %vm1743 = vcmp.gt.f32.partialorder %v1679, 0.0
  %vm1744 = vcmp.gt.f32.partialorder %v1680, 0.0
  %vm1745 = vcmp.gt.f32.partialorder %v1681, 0.0
  %vm1746 = vcmp.gt.f32.partialorder %v1682, 0.0
  %vm1747 = vcmp.gt.f32.partialorder %v1683, 0.0
  %vm1748 = vcmp.gt.f32.partialorder %v1684, 0.0
  %vm1749 = vcmp.gt.f32.partialorder %v1685, 0.0
  %vm1750 = vcmp.gt.f32.partialorder %v1686, 0.0
  %vm1751 = vcmp.gt.f32.partialorder %v1687, 0.0
  %vm1752 = vcmp.gt.f32.partialorder %v1688, 0.0
  %vm1753 = vcmp.gt.f32.partialorder %v1689, 0.0
  %vm1754 = vcmp.gt.f32.partialorder %v1690, 0.0
  %vm1755 = vcmp.gt.f32.partialorder %v1691, 0.0
  %vm1756 = vcmp.gt.f32.partialorder %v1692, 0.0
  %vm1757 = vcmp.gt.f32.partialorder %v1693, 0.0
  %vm1758 = vcmp.gt.f32.partialorder %v1694, 0.0
  %vm1759 = vcmp.gt.f32.partialorder %v1695, 0.0
  %vm1760 = vcmp.gt.f32.partialorder %v1696, 0.0
  %vm1761 = vcmp.gt.f32.partialorder %v1697, 0.0
  %vm1762 = vcmp.gt.f32.partialorder %v1698, 0.0
  %vm1763 = vcmp.gt.f32.partialorder %v1699, 0.0
  %vm1764 = vcmp.gt.f32.partialorder %v1700, 0.0
  %vm1765 = vcmp.gt.f32.partialorder %v1701, 0.0
  %vm1766 = vcmp.gt.f32.partialorder %v1702, 0.0
  %vm1767 = vcmp.gt.f32.partialorder %v1703, 0.0
  %vm1768 = vcmp.gt.f32.partialorder %v1704, 0.0
  %vm1769 = vcmp.gt.f32.partialorder %v1705, 0.0
  %vm1770 = vcmp.gt.f32.partialorder %v1706, 0.0
  %vm1771 = vcmp.gt.f32.partialorder %v1707, 0.0
  %vm1772 = vcmp.gt.f32.partialorder %v1708, 0.0
  %vm1773 = vcmp.gt.f32.partialorder %v1709, 0.0
  %vm1774 = vcmp.gt.f32.partialorder %v1710, 0.0
  %vm1775 = vcmp.gt.f32.partialorder %v1711, 0.0
  %vm1776 = vcmp.gt.f32.partialorder %v1712, 0.0
  %vm1777 = vcmp.gt.f32.partialorder %v1713, 0.0
  %vm1778 = vcmp.gt.f32.partialorder %v1714, 0.0
  %vm1779 = vcmp.gt.f32.partialorder %v1715, 0.0
  %vm1780 = vcmp.gt.f32.partialorder %v1716, 0.0
  %vm1781 = vcmp.gt.f32.partialorder %v1717, 0.0
  %vm1782 = vcmp.gt.f32.partialorder %v1718, 0.0
  %vm1783 = vcmp.gt.f32.partialorder %v1719, 0.0
  %vm1784 = vcmp.gt.f32.partialorder %v1720, 0.0
  %vm1785 = vcmp.gt.f32.partialorder %v1721, 0.0
  %vm1786 = vcmp.gt.f32.partialorder %v1722, 0.0
  %vm1787 = vcmp.gt.f32.partialorder %v1723, 0.0
  %vm1788 = vcmp.gt.f32.partialorder %v1724, 0.0
  %vm1789 = vcmp.gt.f32.partialorder %v1725, 0.0
  %vm1790 = vcmp.gt.f32.partialorder %v1726, 0.0
  %vm1791 = vcmp.gt.f32.partialorder %v1727, 0.0
  %vm1792 = vcmp.gt.f32.partialorder %v1728, 0.0
  %vm1793 = vcmp.gt.f32.partialorder %v1729, 0.0
  %vm1794 = vcmp.gt.f32.partialorder %v1730, 0.0
  %vm1795 = vcmp.gt.f32.partialorder %v1731, 0.0
  %vm1796 = vcmp.gt.f32.partialorder %v1732, 0.0
  %vm1797 = vcmp.gt.f32.partialorder %v1733, 0.0
  %vm1798 = vcmp.gt.f32.partialorder %v1734, 0.0
  %vm1799 = vcmp.gt.f32.partialorder %v1735, 0.0
  %v1800 = vmul.f32 %v1672, 0.1
  %v1801 = vmul.f32 %v1673, 0.1
  %v1802 = vmul.f32 %v1674, 0.1
  %v1803 = vmul.f32 %v1675, 0.1
  %v1804 = vmul.f32 %v1676, 0.1
  %v1805 = vmul.f32 %v1677, 0.1
  %v1806 = vmul.f32 %v1678, 0.1
  %v1807 = vmul.f32 %v1679, 0.1
  %v1808 = vmul.f32 %v1680, 0.1
  %v1809 = vmul.f32 %v1681, 0.1
  %v1810 = vmul.f32 %v1682, 0.1
  %v1811 = vmul.f32 %v1683, 0.1
  %v1812 = vmul.f32 %v1684, 0.1
  %v1813 = vmul.f32 %v1685, 0.1
  %v1814 = vmul.f32 %v1686, 0.1
  %v1815 = vmul.f32 %v1687, 0.1
  %v1816 = vmul.f32 %v1688, 0.1
  %v1817 = vmul.f32 %v1689, 0.1
  %v1818 = vmul.f32 %v1690, 0.1
  %v1819 = vmul.f32 %v1691, 0.1
  %v1820 = vmul.f32 %v1692, 0.1
  %v1821 = vmul.f32 %v1693, 0.1
  %v1822 = vmul.f32 %v1694, 0.1
  %v1823 = vmul.f32 %v1695, 0.1
  %v1824 = vmul.f32 %v1696, 0.1
  %v1825 = vmul.f32 %v1697, 0.1
  %v1826 = vmul.f32 %v1698, 0.1
  %v1827 = vmul.f32 %v1699, 0.1
  %v1828 = vmul.f32 %v1700, 0.1
  %v1829 = vmul.f32 %v1701, 0.1
  %v1830 = vmul.f32 %v1702, 0.1
  %v1831 = vmul.f32 %v1703, 0.1
  %v1832 = vmul.f32 %v1704, 0.1
  %v1833 = vmul.f32 %v1705, 0.1
  %v1834 = vmul.f32 %v1706, 0.1
  %v1835 = vmul.f32 %v1707, 0.1
  %v1836 = vmul.f32 %v1708, 0.1
  %v1837 = vmul.f32 %v1709, 0.1
  %v1838 = vmul.f32 %v1710, 0.1
  %v1839 = vmul.f32 %v1711, 0.1
  %v1840 = vmul.f32 %v1712, 0.1
  %v1841 = vmul.f32 %v1713, 0.1
  %v1842 = vmul.f32 %v1714, 0.1
  %v1843 = vmul.f32 %v1715, 0.1
  %v1844 = vmul.f32 %v1716, 0.1
  %v1845 = vmul.f32 %v1717, 0.1
  %v1846 = vmul.f32 %v1718, 0.1
  %v1847 = vmul.f32 %v1719, 0.1
  %v1848 = vmul.f32 %v1720, 0.1
  %v1849 = vmul.f32 %v1721, 0.1
  %v1850 = vmul.f32 %v1722, 0.1
  %v1851 = vmul.f32 %v1723, 0.1
  %v1852 = vmul.f32 %v1724, 0.1
  %v1853 = vmul.f32 %v1725, 0.1
  %v1854 = vmul.f32 %v1726, 0.1
  %v1855 = vmul.f32 %v1727, 0.1
  %v1856 = vmul.f32 %v1728, 0.1
  %v1857 = vmul.f32 %v1729, 0.1
  %v1858 = vmul.f32 %v1730, 0.1
  %v1859 = vmul.f32 %v1731, 0.1
  %v1860 = vmul.f32 %v1732, 0.1
  %v1861 = vmul.f32 %v1733, 0.1
  %v1862 = vmul.f32 %v1734, 0.1
  %v1863 = vmul.f32 %v1735, 0.1
  %v1864 = vsel %vm1736, %v1672, %v1800
  %v1865 = vsel %vm1737, %v1673, %v1801
  %v1866 = vsel %vm1738, %v1674, %v1802
  %v1867 = vsel %vm1739, %v1675, %v1803
  %v1868 = vsel %vm1740, %v1676, %v1804
  %v1869 = vsel %vm1741, %v1677, %v1805
  %v1870 = vsel %vm1742, %v1678, %v1806
  %v1871 = vsel %vm1743, %v1679, %v1807
  %v1872 = vsel %vm1744, %v1680, %v1808
  %v1873 = vsel %vm1745, %v1681, %v1809
  %v1874 = vsel %vm1746, %v1682, %v1810
  %v1875 = vsel %vm1747, %v1683, %v1811
  %v1876 = vsel %vm1748, %v1684, %v1812
  %v1877 = vsel %vm1749, %v1685, %v1813
  %v1878 = vsel %vm1750, %v1686, %v1814
  %v1879 = vsel %vm1751, %v1687, %v1815
  %v1880 = vsel %vm1752, %v1688, %v1816
  %v1881 = vsel %vm1753, %v1689, %v1817
  %v1882 = vsel %vm1754, %v1690, %v1818
  %v1883 = vsel %vm1755, %v1691, %v1819
  %v1884 = vsel %vm1756, %v1692, %v1820
  %v1885 = vsel %vm1757, %v1693, %v1821
  %v1886 = vsel %vm1758, %v1694, %v1822
  %v1887 = vsel %vm1759, %v1695, %v1823
  %v1888 = vsel %vm1760, %v1696, %v1824
  %v1889 = vsel %vm1761, %v1697, %v1825
  %v1890 = vsel %vm1762, %v1698, %v1826
  %v1891 = vsel %vm1763, %v1699, %v1827
  %v1892 = vsel %vm1764, %v1700, %v1828
  %v1893 = vsel %vm1765, %v1701, %v1829
  %v1894 = vsel %vm1766, %v1702, %v1830
  %v1895 = vsel %vm1767, %v1703, %v1831
  %v1896 = vsel %vm1768, %v1704, %v1832
  %v1897 = vsel %vm1769, %v1705, %v1833
  %v1898 = vsel %vm1770, %v1706, %v1834
  %v1899 = vsel %vm1771, %v1707, %v1835
  %v1900 = vsel %vm1772, %v1708, %v1836
  %v1901 = vsel %vm1773, %v1709, %v1837
  %v1902 = vsel %vm1774, %v1710, %v1838
  %v1903 = vsel %vm1775, %v1711, %v1839
  %v1904 = vsel %vm1776, %v1712, %v1840
  %v1905 = vsel %vm1777, %v1713, %v1841
  %v1906 = vsel %vm1778, %v1714, %v1842
  %v1907 = vsel %vm1779, %v1715, %v1843
  %v1908 = vsel %vm1780, %v1716, %v1844
  %v1909 = vsel %vm1781, %v1717, %v1845
  %v1910 = vsel %vm1782, %v1718, %v1846
  %v1911 = vsel %vm1783, %v1719, %v1847
  %v1912 = vsel %vm1784, %v1720, %v1848
  %v1913 = vsel %vm1785, %v1721, %v1849
  %v1914 = vsel %vm1786, %v1722, %v1850
  %v1915 = vsel %vm1787, %v1723, %v1851
  %v1916 = vsel %vm1788, %v1724, %v1852
  %v1917 = vsel %vm1789, %v1725, %v1853
  %v1918 = vsel %vm1790, %v1726, %v1854
  %v1919 = vsel %vm1791, %v1727, %v1855
  %v1920 = vsel %vm1792, %v1728, %v1856
  %v1921 = vsel %vm1793, %v1729, %v1857
  %v1922 = vsel %vm1794, %v1730, %v1858
  %v1923 = vsel %vm1795, %v1731, %v1859
  %v1924 = vsel %vm1796, %v1732, %v1860
  %v1925 = vsel %vm1797, %v1733, %v1861
  %v1926 = vsel %vm1798, %v1734, %v1862
  %v1927 = vsel %vm1799, %v1735, %v1863
  %v1928 = vpack.c.bf16 %v922, %v921
  %v1929 = vpack.c.bf16 %v924, %v923
  %v1930 = vpack.c.bf16 %v926, %v925
  %v1931 = vpack.c.bf16 %v928, %v927
  %v1932 = vpack.c.bf16 %v930, %v929
  %v1933 = vpack.c.bf16 %v932, %v931
  %v1934 = vpack.c.bf16 %v934, %v933
  %v1935 = vpack.c.bf16 %v936, %v935
  %v1936 = vpack.c.bf16 %v938, %v937
  %v1937 = vpack.c.bf16 %v940, %v939
  %v1938 = vpack.c.bf16 %v942, %v941
  %v1939 = vpack.c.bf16 %v944, %v943
  %v1940 = vpack.c.bf16 %v946, %v945
  %v1941 = vpack.c.bf16 %v948, %v947
  %v1942 = vpack.c.bf16 %v950, %v949
  %v1943 = vpack.c.bf16 %v952, %v951
  %v1944 = vpack.c.bf16 %v954, %v953
  %v1945 = vpack.c.bf16 %v956, %v955
  %v1946 = vpack.c.bf16 %v958, %v957
  %v1947 = vpack.c.bf16 %v960, %v959
  %v1948 = vpack.c.bf16 %v962, %v961
  %v1949 = vpack.c.bf16 %v964, %v963
  %v1950 = vpack.c.bf16 %v966, %v965
  %v1951 = vpack.c.bf16 %v968, %v967
  %v1952 = vpack.c.bf16 %v970, %v969
  %v1953 = vpack.c.bf16 %v972, %v971
  %v1954 = vpack.c.bf16 %v974, %v973
  %v1955 = vpack.c.bf16 %v976, %v975
  %v1956 = vpack.c.bf16 %v978, %v977
  %v1957 = vpack.c.bf16 %v980, %v979
  %v1958 = vpack.c.bf16 %v982, %v981
  %v1959 = vpack.c.bf16 %v984, %v983
  %v1960 = vld [vmem:[%s8] sm:$0xf]
  %v1961 = vld [vmem:[%s8 + $0x4] sm:$0xf]
  %v1962 = vld [vmem:[%s8 + $0x8] sm:$0xf]
  %v1963 = vld [vmem:[%s8 + $0xc] sm:$0xf]
  %v1964 = vld [vmem:[%s8 + $0x10] sm:$0xf]
  %v1965 = vld [vmem:[%s8 + $0x14] sm:$0xf]
  %v1966 = vld [vmem:[%s8 + $0x18] sm:$0xf]
  %v1967 = vld [vmem:[%s8 + $0x1c] sm:$0xf]
  %v1968 = vld [vmem:[%s8 + $0x20] sm:$0xf]
  %v1969 = vld [vmem:[%s8 + $0x24] sm:$0xf]
  %v1970 = vld [vmem:[%s8 + $0x28] sm:$0xf]
  %v1971 = vld [vmem:[%s8 + $0x2c] sm:$0xf]
  %v1972 = vld [vmem:[%s8 + $0x30] sm:$0xf]
  %v1973 = vld [vmem:[%s8 + $0x34] sm:$0xf]
  %v1974 = vld [vmem:[%s8 + $0x38] sm:$0xf]
  %v1975 = vld [vmem:[%s8 + $0x3c] sm:$0xf]
  %v1976 = vpack.c.bf16 %v1865, %v1864
  %v1977 = vpack.c.bf16 %v1867, %v1866
  %v1978 = vpack.c.bf16 %v1869, %v1868
  %v1979 = vpack.c.bf16 %v1871, %v1870
  %v1980 = vpack.c.bf16 %v1873, %v1872
  %v1981 = vpack.c.bf16 %v1875, %v1874
  %v1982 = vpack.c.bf16 %v1877, %v1876
  %v1983 = vpack.c.bf16 %v1879, %v1878
  %v1984 = vpack.c.bf16 %v1881, %v1880
  %v1985 = vpack.c.bf16 %v1883, %v1882
  %v1986 = vpack.c.bf16 %v1885, %v1884
  %v1987 = vpack.c.bf16 %v1887, %v1886
  %v1988 = vpack.c.bf16 %v1889, %v1888
  %v1989 = vpack.c.bf16 %v1891, %v1890
  %v1990 = vpack.c.bf16 %v1893, %v1892
  %v1991 = vpack.c.bf16 %v1895, %v1894
  %v1992 = vpack.c.bf16 %v1897, %v1896
  %v1993 = vpack.c.bf16 %v1899, %v1898
  %v1994 = vpack.c.bf16 %v1901, %v1900
  %v1995 = vpack.c.bf16 %v1903, %v1902
  %v1996 = vpack.c.bf16 %v1905, %v1904
  %v1997 = vpack.c.bf16 %v1907, %v1906
  %v1998 = vpack.c.bf16 %v1909, %v1908
  %v1999 = vpack.c.bf16 %v1911, %v1910
  %v2000 = vpack.c.bf16 %v1913, %v1912
  %v2001 = vpack.c.bf16 %v1915, %v1914
  %v2002 = vpack.c.bf16 %v1917, %v1916
  %v2003 = vpack.c.bf16 %v1919, %v1918
  %v2004 = vpack.c.bf16 %v1921, %v1920
  %v2005 = vpack.c.bf16 %v1923, %v1922
  %v2006 = vpack.c.bf16 %v1925, %v1924
  %v2007 = vpack.c.bf16 %v1927, %v1926
  %v2008 = vld [vmem:[%s9] sm:$0xf]
  %v2009 = vld [vmem:[%s9 + $0x4] sm:$0xf]
  %v2010 = vld [vmem:[%s9 + $0x8] sm:$0xf]
  %v2011 = vld [vmem:[%s9 + $0xc] sm:$0xf]
  %v2012 = vld [vmem:[%s9 + $0x10] sm:$0xf]
  %v2013 = vld [vmem:[%s9 + $0x14] sm:$0xf]
  %v2014 = vld [vmem:[%s9 + $0x18] sm:$0xf]
  %v2015 = vld [vmem:[%s9 + $0x1c] sm:$0xf]
  %v2016 = vld [vmem:[%s9 + $0x20] sm:$0xf]
  %v2017 = vld [vmem:[%s9 + $0x24] sm:$0xf]
  %v2018 = vld [vmem:[%s9 + $0x28] sm:$0xf]
  %v2019 = vld [vmem:[%s9 + $0x2c] sm:$0xf]
  %v2020 = vld [vmem:[%s9 + $0x30] sm:$0xf]
  %v2021 = vld [vmem:[%s9 + $0x34] sm:$0xf]
  %v2022 = vld [vmem:[%s9 + $0x38] sm:$0xf]
  %v2023 = vld [vmem:[%s9 + $0x3c] sm:$0xf]
  %v2040 = vunpack.c.l.b16 %v2008
  %v2041 = vunpack.c.l.b16 %v2009
  %v2042 = vunpack.c.l.b16 %v2010
  %v2043 = vunpack.c.l.b16 %v2011
  %v2044 = vunpack.c.l.b16 %v2012
  %v2045 = vunpack.c.l.b16 %v2013
  %v2046 = vunpack.c.l.b16 %v2014
  %v2047 = vunpack.c.l.b16 %v2015
  %v2048 = vunpack.c.l.b16 %v2016
  %v2049 = vunpack.c.l.b16 %v2017
  %v2050 = vunpack.c.l.b16 %v2018
  %v2051 = vunpack.c.l.b16 %v2019
  %v2052 = vunpack.c.l.b16 %v2020
  %v2053 = vunpack.c.l.b16 %v2021
  %v2054 = vunpack.c.l.b16 %v2022
  %v2055 = vunpack.c.l.b16 %v2023
  %v2056 = vpack.c.b16 %v2041, %v2040
  %v2057 = vpack.c.b16 %v2043, %v2042
  %v2058 = vpack.c.b16 %v2045, %v2044
  %v2059 = vpack.c.b16 %v2047, %v2046
  %v2060 = vpack.c.b16 %v2049, %v2048
  %v2061 = vpack.c.b16 %v2051, %v2050
  %v2062 = vpack.c.b16 %v2053, %v2052
  %v2063 = vpack.c.b16 %v2055, %v2054
  %2072 = vmatprep.subr.bf16.mxu0 0
  %2073 = vmatpush1.bf16.msra.mxu0 %v2056
  %2074 = vmatprep.subr.bf16.mxu0 0
  %2075 = vmatpush1.bf16.msra.mxu0 %v2057
  %2076 = vmatprep.subr.bf16.mxu0 0
  %2077 = vmatpush1.bf16.msra.mxu0 %v2058
  %2078 = vmatprep.subr.bf16.mxu0 0
  %2079 = vmatpush1.bf16.msra.mxu0 %v2059
  %2080 = vmatprep.subr.bf16.mxu0 0
  %2081 = vmatpush1.bf16.msra.mxu0 %v2060
  %2082 = vmatprep.subr.bf16.mxu0 0
  %2083 = vmatpush1.bf16.msra.mxu0 %v2061
  %2084 = vmatprep.subr.bf16.mxu0 0
  %2085 = vmatpush1.bf16.msra.mxu0 %v2062
  %2086 = vmatprep.subr.bf16.mxu0 0
  %2087 = vmatpush1.bf16.msra.mxu0 %v2063
  %2088 = vmatprep.subr.bf16.mxu0 0
  %2089 = vmatpush1.bf16.msra.mxu0 0
  %2090 = vmatprep.subr.bf16.mxu0 0
  %2091 = vmatpush1.bf16.msra.mxu0 0
  %2092 = vmatprep.subr.bf16.mxu0 0
  %2093 = vmatpush1.bf16.msra.mxu0 0
  %2094 = vmatprep.subr.bf16.mxu0 0
  %2095 = vmatpush1.bf16.msra.mxu0 0
  %2096 = vmatprep.subr.bf16.mxu0 0
  %2097 = vmatpush1.bf16.msra.mxu0 0
  %2098 = vmatprep.subr.bf16.mxu0 0
  %2099 = vmatpush1.bf16.msra.mxu0 0
  %2100 = vmatprep.subr.bf16.mxu0 0
  %2101 = vmatpush1.bf16.msra.mxu0 0
  %2102 = vmatprep.subr.bf16.mxu0 0
  %2103 = vmatpush1.bf16.msra.mxu0 0
  %2104 = vmatprep.mubr.bf16.mxu0 0
  %2105 = vmatmul.mubr.bf16.gmra.mrb[0].mxu0 %v1976
  %v2106 = vpop.f32.mrb[0].mxu0
  %v2107 = vadd.f32 0.0, %v2106
  %v2108 = vpop.f32.mrb[0].mxu0
  %v2109 = vpop.f32.mrb[0].mxu0
  %v2110 = vadd.f32 0.0, %v2109
  %v2111 = vpop.f32.mrb[0].mxu0
  %2112 = vmatprep.mubr.bf16.mxu0 0
  %2113 = vmatmul.mubr.bf16.gmra.mrb[0].mxu0 %v1977
  %v2114 = vpop.f32.mrb[0].mxu0
  %v2115 = vadd.f32 0.0, %v2114
  %v2116 = vpop.f32.mrb[0].mxu0
  %v2117 = vpop.f32.mrb[0].mxu0
  %v2118 = vadd.f32 0.0, %v2117
  %v2119 = vpop.f32.mrb[0].mxu0
  %2120 = vmatprep.mubr.bf16.mxu0 0
  %2121 = vmatmul.mubr.bf16.gmra.mrb[0].mxu0 %v1978
  %v2122 = vpop.f32.mrb[0].mxu0
  %v2123 = vadd.f32 0.0, %v2122
  %v2124 = vpop.f32.mrb[0].mxu0
  %v2125 = vpop.f32.mrb[0].mxu0
  %v2126 = vadd.f32 0.0, %v2125
  %v2127 = vpop.f32.mrb[0].mxu0
  %2128 = vmatprep.mubr.bf16.mxu0 0
  %2129 = vmatmul.mubr.bf16.gmra.mrb[0].mxu0 %v1979
  %v2130 = vpop.f32.mrb[0].mxu0
  %v2131 = vadd.f32 0.0, %v2130
  %v2132 = vpop.f32.mrb[0].mxu0
  %v2133 = vpop.f32.mrb[0].mxu0
  %v2134 = vadd.f32 0.0, %v2133
  %v2135 = vpop.f32.mrb[0].mxu0
  %2136 = vmatprep.mubr.bf16.mxu0 0
  %2137 = vmatmul.mubr.bf16.gmra.mrb[0].mxu0 %v1980
  %v2138 = vpop.f32.mrb[0].mxu0
  %v2139 = vadd.f32 0.0, %v2138
  %v2140 = vpop.f32.mrb[0].mxu0
  %v2141 = vpop.f32.mrb[0].mxu0
  %v2142 = vadd.f32 0.0, %v2141
  %v2143 = vpop.f32.mrb[0].mxu0
  %2144 = vmatprep.mubr.bf16.mxu0 0
  %2145 = vmatmul.mubr.bf16.gmra.mrb[0].mxu0 %v1981
  %v2146 = vpop.f32.mrb[0].mxu0
  %v2147 = vadd.f32 0.0, %v2146
  %v2148 = vpop.f32.mrb[0].mxu0
  %v2149 = vpop.f32.mrb[0].mxu0
  %v2150 = vadd.f32 0.0, %v2149
  %v2151 = vpop.f32.mrb[0].mxu0
  %2152 = vmatprep.mubr.bf16.mxu0 0
  %2153 = vmatmul.mubr.bf16.gmra.mrb[0].mxu0 %v1982
  %v2154 = vpop.f32.mrb[0].mxu0
  %v2155 = vadd.f32 0.0, %v2154
  %v2156 = vpop.f32.mrb[0].mxu0
  %v2157 = vpop.f32.mrb[0].mxu0
  %v2158 = vadd.f32 0.0, %v2157
  %v2159 = vpop.f32.mrb[0].mxu0
  %2160 = vmatprep.mubr.bf16.mxu0 0
  %2161 = vmatmul.mubr.bf16.gmra.mrb[0].mxu0 %v1983
  %v2162 = vpop.f32.mrb[0].mxu0
  %v2163 = vadd.f32 0.0, %v2162
  %v2164 = vpop.f32.mrb[0].mxu0
  %v2165 = vpop.f32.mrb[0].mxu0
  %v2166 = vadd.f32 0.0, %v2165
  %v2167 = vpop.f32.mrb[0].mxu0
  %2168 = vmatprep.mubr.bf16.mxu0 0
  %2169 = vmatmul.mubr.bf16.gmra.mrb[0].mxu0 %v1984
  %v2170 = vpop.f32.mrb[0].mxu0
  %v2171 = vadd.f32 0.0, %v2170
  %v2172 = vpop.f32.mrb[0].mxu0
  %v2173 = vpop.f32.mrb[0].mxu0
  %v2174 = vadd.f32 0.0, %v2173
  %v2175 = vpop.f32.mrb[0].mxu0
  %2176 = vmatprep.mubr.bf16.mxu0 0
  %2177 = vmatmul.mubr.bf16.gmra.mrb[0].mxu0 %v1985
  %v2178 = vpop.f32.mrb[0].mxu0
  %v2179 = vadd.f32 0.0, %v2178
  %v2180 = vpop.f32.mrb[0].mxu0
  %v2181 = vpop.f32.mrb[0].mxu0
  %v2182 = vadd.f32 0.0, %v2181
  %v2183 = vpop.f32.mrb[0].mxu0
  %2184 = vmatprep.mubr.bf16.mxu0 0
  %2185 = vmatmul.mubr.bf16.gmra.mrb[0].mxu0 %v1986
  %v2186 = vpop.f32.mrb[0].mxu0
  %v2187 = vadd.f32 0.0, %v2186
  %v2188 = vpop.f32.mrb[0].mxu0
  %v2189 = vpop.f32.mrb[0].mxu0
  %v2190 = vadd.f32 0.0, %v2189
  %v2191 = vpop.f32.mrb[0].mxu0
  %2192 = vmatprep.mubr.bf16.mxu0 0
  %2193 = vmatmul.mubr.bf16.gmra.mrb[0].mxu0 %v1987
  %v2194 = vpop.f32.mrb[0].mxu0
  %v2195 = vadd.f32 0.0, %v2194
  %v2196 = vpop.f32.mrb[0].mxu0
  %v2197 = vpop.f32.mrb[0].mxu0
  %v2198 = vadd.f32 0.0, %v2197
  %v2199 = vpop.f32.mrb[0].mxu0
  %2200 = vmatprep.mubr.bf16.mxu0 0
  %2201 = vmatmul.mubr.bf16.gmra.mrb[0].mxu0 %v1988
  %v2202 = vpop.f32.mrb[0].mxu0
  %v2203 = vadd.f32 0.0, %v2202
  %v2204 = vpop.f32.mrb[0].mxu0
  %v2205 = vpop.f32.mrb[0].mxu0
  %v2206 = vadd.f32 0.0, %v2205
  %v2207 = vpop.f32.mrb[0].mxu0
  %2208 = vmatprep.mubr.bf16.mxu0 0
  %2209 = vmatmul.mubr.bf16.gmra.mrb[0].mxu0 %v1989
  %v2210 = vpop.f32.mrb[0].mxu0
  %v2211 = vadd.f32 0.0, %v2210
  %v2212 = vpop.f32.mrb[0].mxu0
  %v2213 = vpop.f32.mrb[0].mxu0
  %v2214 = vadd.f32 0.0, %v2213
  %v2215 = vpop.f32.mrb[0].mxu0
  %2216 = vmatprep.mubr.bf16.mxu0 0
  %2217 = vmatmul.mubr.bf16.gmra.mrb[0].mxu0 %v1990
  %v2218 = vpop.f32.mrb[0].mxu0
  %v2219 = vadd.f32 0.0, %v2218
  %v2220 = vpop.f32.mrb[0].mxu0
  %v2221 = vpop.f32.mrb[0].mxu0
  %v2222 = vadd.f32 0.0, %v2221
  %v2223 = vpop.f32.mrb[0].mxu0
  %2224 = vmatprep.mubr.bf16.mxu0 0
  %2225 = vmatmul.mubr.bf16.gmra.mrb[0].mxu0 %v1991
  %v2226 = vpop.f32.mrb[0].mxu0
  %v2227 = vadd.f32 0.0, %v2226
  %v2228 = vpop.f32.mrb[0].mxu0
  %v2229 = vpop.f32.mrb[0].mxu0
  %v2230 = vadd.f32 0.0, %v2229
  %v2231 = vpop.f32.mrb[0].mxu0
  %2232 = vmatprep.mubr.bf16.mxu0 0
  %2233 = vmatmul.mubr.bf16.gmra.mrb[0].mxu0 %v1992
  %v2234 = vpop.f32.mrb[0].mxu0
  %v2235 = vadd.f32 0.0, %v2234
  %v2236 = vpop.f32.mrb[0].mxu0
  %v2237 = vpop.f32.mrb[0].mxu0
  %v2238 = vadd.f32 0.0, %v2237
  %v2239 = vpop.f32.mrb[0].mxu0
  %2240 = vmatprep.mubr.bf16.mxu0 0
  %2241 = vmatmul.mubr.bf16.gmra.mrb[0].mxu0 %v1993
  %v2242 = vpop.f32.mrb[0].mxu0
  %v2243 = vadd.f32 0.0, %v2242
  %v2244 = vpop.f32.mrb[0].mxu0
  %v2245 = vpop.f32.mrb[0].mxu0
  %v2246 = vadd.f32 0.0, %v2245
  %v2247 = vpop.f32.mrb[0].mxu0
  %2248 = vmatprep.mubr.bf16.mxu0 0
  %2249 = vmatmul.mubr.bf16.gmra.mrb[0].mxu0 %v1994
  %v2250 = vpop.f32.mrb[0].mxu0
  %v2251 = vadd.f32 0.0, %v2250
  %v2252 = vpop.f32.mrb[0].mxu0
  %v2253 = vpop.f32.mrb[0].mxu0
  %v2254 = vadd.f32 0.0, %v2253
  %v2255 = vpop.f32.mrb[0].mxu0
  %2256 = vmatprep.mubr.bf16.mxu0 0
  %2257 = vmatmul.mubr.bf16.gmra.mrb[0].mxu0 %v1995
  %v2258 = vpop.f32.mrb[0].mxu0
  %v2259 = vadd.f32 0.0, %v2258
  %v2260 = vpop.f32.mrb[0].mxu0
  %v2261 = vpop.f32.mrb[0].mxu0
  %v2262 = vadd.f32 0.0, %v2261
  %v2263 = vpop.f32.mrb[0].mxu0
  %2264 = vmatprep.mubr.bf16.mxu0 0
  %2265 = vmatmul.mubr.bf16.gmra.mrb[0].mxu0 %v1996
  %v2266 = vpop.f32.mrb[0].mxu0
  %v2267 = vadd.f32 0.0, %v2266
  %v2268 = vpop.f32.mrb[0].mxu0
  %v2269 = vpop.f32.mrb[0].mxu0
  %v2270 = vadd.f32 0.0, %v2269
  %v2271 = vpop.f32.mrb[0].mxu0
  %2272 = vmatprep.mubr.bf16.mxu0 0
  %2273 = vmatmul.mubr.bf16.gmra.mrb[0].mxu0 %v1997
  %v2274 = vpop.f32.mrb[0].mxu0
  %v2275 = vadd.f32 0.0, %v2274
  %v2276 = vpop.f32.mrb[0].mxu0
  %v2277 = vpop.f32.mrb[0].mxu0
  %v2278 = vadd.f32 0.0, %v2277
  %v2279 = vpop.f32.mrb[0].mxu0
  %2280 = vmatprep.mubr.bf16.mxu0 0
  %2281 = vmatmul.mubr.bf16.gmra.mrb[0].mxu0 %v1998
  %v2282 = vpop.f32.mrb[0].mxu0
  %v2283 = vadd.f32 0.0, %v2282
  %v2284 = vpop.f32.mrb[0].mxu0
  %v2285 = vpop.f32.mrb[0].mxu0
  %v2286 = vadd.f32 0.0, %v2285
  %v2287 = vpop.f32.mrb[0].mxu0
  %2288 = vmatprep.mubr.bf16.mxu0 0
  %2289 = vmatmul.mubr.bf16.gmra.mrb[0].mxu0 %v1999
  %v2290 = vpop.f32.mrb[0].mxu0
  %v2291 = vadd.f32 0.0, %v2290
  %v2292 = vpop.f32.mrb[0].mxu0
  %v2293 = vpop.f32.mrb[0].mxu0
  %v2294 = vadd.f32 0.0, %v2293
  %v2295 = vpop.f32.mrb[0].mxu0
  %2296 = vmatprep.mubr.bf16.mxu0 0
  %2297 = vmatmul.mubr.bf16.gmra.mrb[0].mxu0 %v2000
  %v2298 = vpop.f32.mrb[0].mxu0
  %v2299 = vadd.f32 0.0, %v2298
  %v2300 = vpop.f32.mrb[0].mxu0
  %v2301 = vpop.f32.mrb[0].mxu0
  %v2302 = vadd.f32 0.0, %v2301
  %v2303 = vpop.f32.mrb[0].mxu0
  %2304 = vmatprep.mubr.bf16.mxu0 0
  %2305 = vmatmul.mubr.bf16.gmra.mrb[0].mxu0 %v2001
  %v2306 = vpop.f32.mrb[0].mxu0
  %v2307 = vadd.f32 0.0, %v2306
  %v2308 = vpop.f32.mrb[0].mxu0
  %v2309 = vpop.f32.mrb[0].mxu0
  %v2310 = vadd.f32 0.0, %v2309
  %v2311 = vpop.f32.mrb[0].mxu0
  %2312 = vmatprep.mubr.bf16.mxu0 0
  %2313 = vmatmul.mubr.bf16.gmra.mrb[0].mxu0 %v2002
  %v2314 = vpop.f32.mrb[0].mxu0
  %v2315 = vadd.f32 0.0, %v2314
  %v2316 = vpop.f32.mrb[0].mxu0
  %v2317 = vpop.f32.mrb[0].mxu0
  %v2318 = vadd.f32 0.0, %v2317
  %v2319 = vpop.f32.mrb[0].mxu0
  %2320 = vmatprep.mubr.bf16.mxu0 0
  %2321 = vmatmul.mubr.bf16.gmra.mrb[0].mxu0 %v2003
  %v2322 = vpop.f32.mrb[0].mxu0
  %v2323 = vadd.f32 0.0, %v2322
  %v2324 = vpop.f32.mrb[0].mxu0
  %v2325 = vpop.f32.mrb[0].mxu0
  %v2326 = vadd.f32 0.0, %v2325
  %v2327 = vpop.f32.mrb[0].mxu0
  %2328 = vmatprep.mubr.bf16.mxu0 0
  %2329 = vmatmul.mubr.bf16.gmra.mrb[0].mxu0 %v2004
  %v2330 = vpop.f32.mrb[0].mxu0
  %v2331 = vadd.f32 0.0, %v2330
  %v2332 = vpop.f32.mrb[0].mxu0
  %v2333 = vpop.f32.mrb[0].mxu0
  %v2334 = vadd.f32 0.0, %v2333
  %v2335 = vpop.f32.mrb[0].mxu0
  %2336 = vmatprep.mubr.bf16.mxu0 0
  %2337 = vmatmul.mubr.bf16.gmra.mrb[0].mxu0 %v2005
  %v2338 = vpop.f32.mrb[0].mxu0
  %v2339 = vadd.f32 0.0, %v2338
  %v2340 = vpop.f32.mrb[0].mxu0
  %v2341 = vpop.f32.mrb[0].mxu0
  %v2342 = vadd.f32 0.0, %v2341
  %v2343 = vpop.f32.mrb[0].mxu0
  %2344 = vmatprep.mubr.bf16.mxu0 0
  %2345 = vmatmul.mubr.bf16.gmra.mrb[0].mxu0 %v2006
  %v2346 = vpop.f32.mrb[0].mxu0
  %v2347 = vadd.f32 0.0, %v2346
  %v2348 = vpop.f32.mrb[0].mxu0
  %v2349 = vpop.f32.mrb[0].mxu0
  %v2350 = vadd.f32 0.0, %v2349
  %v2351 = vpop.f32.mrb[0].mxu0
  %2352 = vmatprep.mubr.bf16.mxu0 0
  %2353 = vmatmul.mubr.bf16.gmra.mrb[0].mxu0 %v2007
  %v2354 = vpop.f32.mrb[0].mxu0
  %v2355 = vadd.f32 0.0, %v2354
  %v2356 = vpop.f32.mrb[0].mxu0
  %v2357 = vpop.f32.mrb[0].mxu0
  %v2358 = vadd.f32 0.0, %v2357
  %v2359 = vpop.f32.mrb[0].mxu0
  %2360 = vdwg.mxu0
  %v2377 = vunpack.c.l.b16 %v1960
  %v2378 = vunpack.c.l.b16 %v1961
  %v2379 = vunpack.c.l.b16 %v1962
  %v2380 = vunpack.c.l.b16 %v1963
  %v2381 = vunpack.c.l.b16 %v1964
  %v2382 = vunpack.c.l.b16 %v1965
  %v2383 = vunpack.c.l.b16 %v1966
  %v2384 = vunpack.c.l.b16 %v1967
  %v2385 = vunpack.c.l.b16 %v1968
  %v2386 = vunpack.c.l.b16 %v1969
  %v2387 = vunpack.c.l.b16 %v1970
  %v2388 = vunpack.c.l.b16 %v1971
  %v2389 = vunpack.c.l.b16 %v1972
  %v2390 = vunpack.c.l.b16 %v1973
  %v2391 = vunpack.c.l.b16 %v1974
  %v2392 = vunpack.c.l.b16 %v1975
  %v2393 = vpack.c.b16 %v2378, %v2377
  %v2394 = vpack.c.b16 %v2380, %v2379
  %v2395 = vpack.c.b16 %v2382, %v2381
  %v2396 = vpack.c.b16 %v2384, %v2383
  %v2397 = vpack.c.b16 %v2386, %v2385
  %v2398 = vpack.c.b16 %v2388, %v2387
  %v2399 = vpack.c.b16 %v2390, %v2389
  %v2400 = vpack.c.b16 %v2392, %v2391
  %2409 = vmatprep.subr.bf16.mxu0 0
  %2410 = vmatpush1.bf16.msra.mxu0 %v2393
  %2411 = vmatprep.subr.bf16.mxu0 0
  %2412 = vmatpush1.bf16.msra.mxu0 %v2394
  %2413 = vmatprep.subr.bf16.mxu0 0
  %2414 = vmatpush1.bf16.msra.mxu0 %v2395
  %2415 = vmatprep.subr.bf16.mxu0 0
  %2416 = vmatpush1.bf16.msra.mxu0 %v2396
  %2417 = vmatprep.subr.bf16.mxu0 0
  %2418 = vmatpush1.bf16.msra.mxu0 %v2397
  %2419 = vmatprep.subr.bf16.mxu0 0
  %2420 = vmatpush1.bf16.msra.mxu0 %v2398
  %2421 = vmatprep.subr.bf16.mxu0 0
  %2422 = vmatpush1.bf16.msra.mxu0 %v2399
  %2423 = vmatprep.subr.bf16.mxu0 0
  %2424 = vmatpush1.bf16.msra.mxu0 %v2400
  %2425 = vmatprep.subr.bf16.mxu0 0
  %2426 = vmatpush1.bf16.msra.mxu0 0
  %2427 = vmatprep.subr.bf16.mxu0 0
  %2428 = vmatpush1.bf16.msra.mxu0 0
  %2429 = vmatprep.subr.bf16.mxu0 0
  %2430 = vmatpush1.bf16.msra.mxu0 0
  %2431 = vmatprep.subr.bf16.mxu0 0
  %2432 = vmatpush1.bf16.msra.mxu0 0
  %2433 = vmatprep.subr.bf16.mxu0 0
  %2434 = vmatpush1.bf16.msra.mxu0 0
  %2435 = vmatprep.subr.bf16.mxu0 0
  %2436 = vmatpush1.bf16.msra.mxu0 0
  %2437 = vmatprep.subr.bf16.mxu0 0
  %2438 = vmatpush1.bf16.msra.mxu0 0
  %2439 = vmatprep.subr.bf16.mxu0 0
  %2440 = vmatpush1.bf16.msra.mxu0 0
  %2441 = vmatprep.mubr.bf16.mxu0 0
  %2442 = vmatmul.mubr.bf16.gmra.mrb[0].mxu0 %v1928
  %v2443 = vpop.f32.mrb[0].mxu0
  %v2444 = vadd.f32 %v2107, %v2443
  %v2445 = vpop.f32.mrb[0].mxu0
  %v2446 = vpop.f32.mrb[0].mxu0
  %v2447 = vadd.f32 %v2110, %v2446
  %v2448 = vpop.f32.mrb[0].mxu0
  %2449 = vmatprep.mubr.bf16.mxu0 0
  %2450 = vmatmul.mubr.bf16.gmra.mrb[0].mxu0 %v1929
  %v2451 = vpop.f32.mrb[0].mxu0
  %v2452 = vadd.f32 %v2115, %v2451
  %v2453 = vpop.f32.mrb[0].mxu0
  %v2454 = vpop.f32.mrb[0].mxu0
  %v2455 = vadd.f32 %v2118, %v2454
  %v2456 = vpop.f32.mrb[0].mxu0
  %2457 = vmatprep.mubr.bf16.mxu0 0
  %2458 = vmatmul.mubr.bf16.gmra.mrb[0].mxu0 %v1930
  %v2459 = vpop.f32.mrb[0].mxu0
  %v2460 = vadd.f32 %v2123, %v2459
  %v2461 = vpop.f32.mrb[0].mxu0
  %v2462 = vpop.f32.mrb[0].mxu0
  %v2463 = vadd.f32 %v2126, %v2462
  %v2464 = vpop.f32.mrb[0].mxu0
  %2465 = vmatprep.mubr.bf16.mxu0 0
  %2466 = vmatmul.mubr.bf16.gmra.mrb[0].mxu0 %v1931
  %v2467 = vpop.f32.mrb[0].mxu0
  %v2468 = vadd.f32 %v2131, %v2467
  %v2469 = vpop.f32.mrb[0].mxu0
  %v2470 = vpop.f32.mrb[0].mxu0
  %v2471 = vadd.f32 %v2134, %v2470
  %v2472 = vpop.f32.mrb[0].mxu0
  %2473 = vmatprep.mubr.bf16.mxu0 0
  %2474 = vmatmul.mubr.bf16.gmra.mrb[0].mxu0 %v1932
  %v2475 = vpop.f32.mrb[0].mxu0
  %v2476 = vadd.f32 %v2139, %v2475
  %v2477 = vpop.f32.mrb[0].mxu0
  %v2478 = vpop.f32.mrb[0].mxu0
  %v2479 = vadd.f32 %v2142, %v2478
  %v2480 = vpop.f32.mrb[0].mxu0
  %2481 = vmatprep.mubr.bf16.mxu0 0
  %2482 = vmatmul.mubr.bf16.gmra.mrb[0].mxu0 %v1933
  %v2483 = vpop.f32.mrb[0].mxu0
  %v2484 = vadd.f32 %v2147, %v2483
  %v2485 = vpop.f32.mrb[0].mxu0
  %v2486 = vpop.f32.mrb[0].mxu0
  %v2487 = vadd.f32 %v2150, %v2486
  %v2488 = vpop.f32.mrb[0].mxu0
  %2489 = vmatprep.mubr.bf16.mxu0 0
  %2490 = vmatmul.mubr.bf16.gmra.mrb[0].mxu0 %v1934
  %v2491 = vpop.f32.mrb[0].mxu0
  %v2492 = vadd.f32 %v2155, %v2491
  %v2493 = vpop.f32.mrb[0].mxu0
  %v2494 = vpop.f32.mrb[0].mxu0
  %v2495 = vadd.f32 %v2158, %v2494
  %v2496 = vpop.f32.mrb[0].mxu0
  %2497 = vmatprep.mubr.bf16.mxu0 0
  %2498 = vmatmul.mubr.bf16.gmra.mrb[0].mxu0 %v1935
  %v2499 = vpop.f32.mrb[0].mxu0
  %v2500 = vadd.f32 %v2163, %v2499
  %v2501 = vpop.f32.mrb[0].mxu0
  %v2502 = vpop.f32.mrb[0].mxu0
  %v2503 = vadd.f32 %v2166, %v2502
  %v2504 = vpop.f32.mrb[0].mxu0
  %2505 = vmatprep.mubr.bf16.mxu0 0
  %2506 = vmatmul.mubr.bf16.gmra.mrb[0].mxu0 %v1936
  %v2507 = vpop.f32.mrb[0].mxu0
  %v2508 = vadd.f32 %v2171, %v2507
  %v2509 = vpop.f32.mrb[0].mxu0
  %v2510 = vpop.f32.mrb[0].mxu0
  %v2511 = vadd.f32 %v2174, %v2510
  %v2512 = vpop.f32.mrb[0].mxu0
  %2513 = vmatprep.mubr.bf16.mxu0 0
  %2514 = vmatmul.mubr.bf16.gmra.mrb[0].mxu0 %v1937
  %v2515 = vpop.f32.mrb[0].mxu0
  %v2516 = vadd.f32 %v2179, %v2515
  %v2517 = vpop.f32.mrb[0].mxu0
  %v2518 = vpop.f32.mrb[0].mxu0
  %v2519 = vadd.f32 %v2182, %v2518
  %v2520 = vpop.f32.mrb[0].mxu0
  %2521 = vmatprep.mubr.bf16.mxu0 0
  %2522 = vmatmul.mubr.bf16.gmra.mrb[0].mxu0 %v1938
  %v2523 = vpop.f32.mrb[0].mxu0
  %v2524 = vadd.f32 %v2187, %v2523
  %v2525 = vpop.f32.mrb[0].mxu0
  %v2526 = vpop.f32.mrb[0].mxu0
  %v2527 = vadd.f32 %v2190, %v2526
  %v2528 = vpop.f32.mrb[0].mxu0
  %2529 = vmatprep.mubr.bf16.mxu0 0
  %2530 = vmatmul.mubr.bf16.gmra.mrb[0].mxu0 %v1939
  %v2531 = vpop.f32.mrb[0].mxu0
  %v2532 = vadd.f32 %v2195, %v2531
  %v2533 = vpop.f32.mrb[0].mxu0
  %v2534 = vpop.f32.mrb[0].mxu0
  %v2535 = vadd.f32 %v2198, %v2534
  %v2536 = vpop.f32.mrb[0].mxu0
  %2537 = vmatprep.mubr.bf16.mxu0 0
  %2538 = vmatmul.mubr.bf16.gmra.mrb[0].mxu0 %v1940
  %v2539 = vpop.f32.mrb[0].mxu0
  %v2540 = vadd.f32 %v2203, %v2539
  %v2541 = vpop.f32.mrb[0].mxu0
  %v2542 = vpop.f32.mrb[0].mxu0
  %v2543 = vadd.f32 %v2206, %v2542
  %v2544 = vpop.f32.mrb[0].mxu0
  %2545 = vmatprep.mubr.bf16.mxu0 0
  %2546 = vmatmul.mubr.bf16.gmra.mrb[0].mxu0 %v1941
  %v2547 = vpop.f32.mrb[0].mxu0
  %v2548 = vadd.f32 %v2211, %v2547
  %v2549 = vpop.f32.mrb[0].mxu0
  %v2550 = vpop.f32.mrb[0].mxu0
  %v2551 = vadd.f32 %v2214, %v2550
  %v2552 = vpop.f32.mrb[0].mxu0
  %2553 = vmatprep.mubr.bf16.mxu0 0
  %2554 = vmatmul.mubr.bf16.gmra.mrb[0].mxu0 %v1942
  %v2555 = vpop.f32.mrb[0].mxu0
  %v2556 = vadd.f32 %v2219, %v2555
  %v2557 = vpop.f32.mrb[0].mxu0
  %v2558 = vpop.f32.mrb[0].mxu0
  %v2559 = vadd.f32 %v2222, %v2558
  %v2560 = vpop.f32.mrb[0].mxu0
  %2561 = vmatprep.mubr.bf16.mxu0 0
  %2562 = vmatmul.mubr.bf16.gmra.mrb[0].mxu0 %v1943
  %v2563 = vpop.f32.mrb[0].mxu0
  %v2564 = vadd.f32 %v2227, %v2563
  %v2565 = vpop.f32.mrb[0].mxu0
  %v2566 = vpop.f32.mrb[0].mxu0
  %v2567 = vadd.f32 %v2230, %v2566
  %v2568 = vpop.f32.mrb[0].mxu0
  %2569 = vmatprep.mubr.bf16.mxu0 0
  %2570 = vmatmul.mubr.bf16.gmra.mrb[0].mxu0 %v1944
  %v2571 = vpop.f32.mrb[0].mxu0
  %v2572 = vadd.f32 %v2235, %v2571
  %v2573 = vpop.f32.mrb[0].mxu0
  %v2574 = vpop.f32.mrb[0].mxu0
  %v2575 = vadd.f32 %v2238, %v2574
  %v2576 = vpop.f32.mrb[0].mxu0
  %2577 = vmatprep.mubr.bf16.mxu0 0
  %2578 = vmatmul.mubr.bf16.gmra.mrb[0].mxu0 %v1945
  %v2579 = vpop.f32.mrb[0].mxu0
  %v2580 = vadd.f32 %v2243, %v2579
  %v2581 = vpop.f32.mrb[0].mxu0
  %v2582 = vpop.f32.mrb[0].mxu0
  %v2583 = vadd.f32 %v2246, %v2582
  %v2584 = vpop.f32.mrb[0].mxu0
  %2585 = vmatprep.mubr.bf16.mxu0 0
  %2586 = vmatmul.mubr.bf16.gmra.mrb[0].mxu0 %v1946
  %v2587 = vpop.f32.mrb[0].mxu0
  %v2588 = vadd.f32 %v2251, %v2587
  %v2589 = vpop.f32.mrb[0].mxu0
  %v2590 = vpop.f32.mrb[0].mxu0
  %v2591 = vadd.f32 %v2254, %v2590
  %v2592 = vpop.f32.mrb[0].mxu0
  %2593 = vmatprep.mubr.bf16.mxu0 0
  %2594 = vmatmul.mubr.bf16.gmra.mrb[0].mxu0 %v1947
  %v2595 = vpop.f32.mrb[0].mxu0
  %v2596 = vadd.f32 %v2259, %v2595
  %v2597 = vpop.f32.mrb[0].mxu0
  %v2598 = vpop.f32.mrb[0].mxu0
  %v2599 = vadd.f32 %v2262, %v2598
  %v2600 = vpop.f32.mrb[0].mxu0
  %2601 = vmatprep.mubr.bf16.mxu0 0
  %2602 = vmatmul.mubr.bf16.gmra.mrb[0].mxu0 %v1948
  %v2603 = vpop.f32.mrb[0].mxu0
  %v2604 = vadd.f32 %v2267, %v2603
  %v2605 = vpop.f32.mrb[0].mxu0
  %v2606 = vpop.f32.mrb[0].mxu0
  %v2607 = vadd.f32 %v2270, %v2606
  %v2608 = vpop.f32.mrb[0].mxu0
  %2609 = vmatprep.mubr.bf16.mxu0 0
  %2610 = vmatmul.mubr.bf16.gmra.mrb[0].mxu0 %v1949
  %v2611 = vpop.f32.mrb[0].mxu0
  %v2612 = vadd.f32 %v2275, %v2611
  %v2613 = vpop.f32.mrb[0].mxu0
  %v2614 = vpop.f32.mrb[0].mxu0
  %v2615 = vadd.f32 %v2278, %v2614
  %v2616 = vpop.f32.mrb[0].mxu0
  %2617 = vmatprep.mubr.bf16.mxu0 0
  %2618 = vmatmul.mubr.bf16.gmra.mrb[0].mxu0 %v1950
  %v2619 = vpop.f32.mrb[0].mxu0
  %v2620 = vadd.f32 %v2283, %v2619
  %v2621 = vpop.f32.mrb[0].mxu0
  %v2622 = vpop.f32.mrb[0].mxu0
  %v2623 = vadd.f32 %v2286, %v2622
  %v2624 = vpop.f32.mrb[0].mxu0
  %2625 = vmatprep.mubr.bf16.mxu0 0
  %2626 = vmatmul.mubr.bf16.gmra.mrb[0].mxu0 %v1951
  %v2627 = vpop.f32.mrb[0].mxu0
  %v2628 = vadd.f32 %v2291, %v2627
  %v2629 = vpop.f32.mrb[0].mxu0
  %v2630 = vpop.f32.mrb[0].mxu0
  %v2631 = vadd.f32 %v2294, %v2630
  %v2632 = vpop.f32.mrb[0].mxu0
  %2633 = vmatprep.mubr.bf16.mxu0 0
  %2634 = vmatmul.mubr.bf16.gmra.mrb[0].mxu0 %v1952
  %v2635 = vpop.f32.mrb[0].mxu0
  %v2636 = vadd.f32 %v2299, %v2635
  %v2637 = vpop.f32.mrb[0].mxu0
  %v2638 = vpop.f32.mrb[0].mxu0
  %v2639 = vadd.f32 %v2302, %v2638
  %v2640 = vpop.f32.mrb[0].mxu0
  %2641 = vmatprep.mubr.bf16.mxu0 0
  %2642 = vmatmul.mubr.bf16.gmra.mrb[0].mxu0 %v1953
  %v2643 = vpop.f32.mrb[0].mxu0
  %v2644 = vadd.f32 %v2307, %v2643
  %v2645 = vpop.f32.mrb[0].mxu0
  %v2646 = vpop.f32.mrb[0].mxu0
  %v2647 = vadd.f32 %v2310, %v2646
  %v2648 = vpop.f32.mrb[0].mxu0
  %2649 = vmatprep.mubr.bf16.mxu0 0
  %2650 = vmatmul.mubr.bf16.gmra.mrb[0].mxu0 %v1954
  %v2651 = vpop.f32.mrb[0].mxu0
  %v2652 = vadd.f32 %v2315, %v2651
  %v2653 = vpop.f32.mrb[0].mxu0
  %v2654 = vpop.f32.mrb[0].mxu0
  %v2655 = vadd.f32 %v2318, %v2654
  %v2656 = vpop.f32.mrb[0].mxu0
  %2657 = vmatprep.mubr.bf16.mxu0 0
  %2658 = vmatmul.mubr.bf16.gmra.mrb[0].mxu0 %v1955
  %v2659 = vpop.f32.mrb[0].mxu0
  %v2660 = vadd.f32 %v2323, %v2659
  %v2661 = vpop.f32.mrb[0].mxu0
  %v2662 = vpop.f32.mrb[0].mxu0
  %v2663 = vadd.f32 %v2326, %v2662
  %v2664 = vpop.f32.mrb[0].mxu0
  %2665 = vmatprep.mubr.bf16.mxu0 0
  %2666 = vmatmul.mubr.bf16.gmra.mrb[0].mxu0 %v1956
  %v2667 = vpop.f32.mrb[0].mxu0
  %v2668 = vadd.f32 %v2331, %v2667
  %v2669 = vpop.f32.mrb[0].mxu0
  %v2670 = vpop.f32.mrb[0].mxu0
  %v2671 = vadd.f32 %v2334, %v2670
  %v2672 = vpop.f32.mrb[0].mxu0
  %2673 = vmatprep.mubr.bf16.mxu0 0
  %2674 = vmatmul.mubr.bf16.gmra.mrb[0].mxu0 %v1957
  %v2675 = vpop.f32.mrb[0].mxu0
  %v2676 = vadd.f32 %v2339, %v2675
  %v2677 = vpop.f32.mrb[0].mxu0
  %v2678 = vpop.f32.mrb[0].mxu0
  %v2679 = vadd.f32 %v2342, %v2678
  %v2680 = vpop.f32.mrb[0].mxu0
  %2681 = vmatprep.mubr.bf16.mxu0 0
  %2682 = vmatmul.mubr.bf16.gmra.mrb[0].mxu0 %v1958
  %v2683 = vpop.f32.mrb[0].mxu0
  %v2684 = vadd.f32 %v2347, %v2683
  %v2685 = vpop.f32.mrb[0].mxu0
  %v2686 = vpop.f32.mrb[0].mxu0
  %v2687 = vadd.f32 %v2350, %v2686
  %v2688 = vpop.f32.mrb[0].mxu0
  %2689 = vmatprep.mubr.bf16.mxu0 0
  %2690 = vmatmul.mubr.bf16.gmra.mrb[0].mxu0 %v1959
  %v2691 = vpop.f32.mrb[0].mxu0
  %v2692 = vadd.f32 %v2355, %v2691
  %v2693 = vpop.f32.mrb[0].mxu0
  %v2694 = vpop.f32.mrb[0].mxu0
  %v2695 = vadd.f32 %v2358, %v2694
  %v2696 = vpop.f32.mrb[0].mxu0
  %2697 = vdwg.mxu0
  %v2698 = vld [vmem:[%s10] sm:$0x1]
  %v2700 = vlaneseq
  %v2701 = vshrl.u32 %v2700, 7
  %v2702 = vsub.s32 0, %v2701
  %v2703 = vrot.slane %v2698, %v2702
  %v2705 = vmul.f32 %v2444, %v2703
  %v2706 = vmul.f32 %v2447, %v2703
  %v2707 = vmul.f32 %v2452, %v2703
  %v2708 = vmul.f32 %v2455, %v2703
  %v2709 = vmul.f32 %v2460, %v2703
  %v2710 = vmul.f32 %v2463, %v2703
  %v2711 = vmul.f32 %v2468, %v2703
  %v2712 = vmul.f32 %v2471, %v2703
  %v2713 = vmul.f32 %v2476, %v2703
  %v2714 = vmul.f32 %v2479, %v2703
  %v2715 = vmul.f32 %v2484, %v2703
  %v2716 = vmul.f32 %v2487, %v2703
  %v2717 = vmul.f32 %v2492, %v2703
  %v2718 = vmul.f32 %v2495, %v2703
  %v2719 = vmul.f32 %v2500, %v2703
  %v2720 = vmul.f32 %v2503, %v2703
  %v2721 = vmul.f32 %v2508, %v2703
  %v2722 = vmul.f32 %v2511, %v2703
  %v2723 = vmul.f32 %v2516, %v2703
  %v2724 = vmul.f32 %v2519, %v2703
  %v2725 = vmul.f32 %v2524, %v2703
  %v2726 = vmul.f32 %v2527, %v2703
  %v2727 = vmul.f32 %v2532, %v2703
  %v2728 = vmul.f32 %v2535, %v2703
  %v2729 = vmul.f32 %v2540, %v2703
  %v2730 = vmul.f32 %v2543, %v2703
  %v2731 = vmul.f32 %v2548, %v2703
  %v2732 = vmul.f32 %v2551, %v2703
  %v2733 = vmul.f32 %v2556, %v2703
  %v2734 = vmul.f32 %v2559, %v2703
  %v2735 = vmul.f32 %v2564, %v2703
  %v2736 = vmul.f32 %v2567, %v2703
  %v2737 = vmul.f32 %v2572, %v2703
  %v2738 = vmul.f32 %v2575, %v2703
  %v2739 = vmul.f32 %v2580, %v2703
  %v2740 = vmul.f32 %v2583, %v2703
  %v2741 = vmul.f32 %v2588, %v2703
  %v2742 = vmul.f32 %v2591, %v2703
  %v2743 = vmul.f32 %v2596, %v2703
  %v2744 = vmul.f32 %v2599, %v2703
  %v2745 = vmul.f32 %v2604, %v2703
  %v2746 = vmul.f32 %v2607, %v2703
  %v2747 = vmul.f32 %v2612, %v2703
  %v2748 = vmul.f32 %v2615, %v2703
  %v2749 = vmul.f32 %v2620, %v2703
  %v2750 = vmul.f32 %v2623, %v2703
  %v2751 = vmul.f32 %v2628, %v2703
  %v2752 = vmul.f32 %v2631, %v2703
  %v2753 = vmul.f32 %v2636, %v2703
  %v2754 = vmul.f32 %v2639, %v2703
  %v2755 = vmul.f32 %v2644, %v2703
  %v2756 = vmul.f32 %v2647, %v2703
  %v2757 = vmul.f32 %v2652, %v2703
  %v2758 = vmul.f32 %v2655, %v2703
  %v2759 = vmul.f32 %v2660, %v2703
  %v2760 = vmul.f32 %v2663, %v2703
  %v2761 = vmul.f32 %v2668, %v2703
  %v2762 = vmul.f32 %v2671, %v2703
  %v2763 = vmul.f32 %v2676, %v2703
  %v2764 = vmul.f32 %v2679, %v2703
  %v2765 = vmul.f32 %v2684, %v2703
  %v2766 = vmul.f32 %v2687, %v2703
  %v2767 = vmul.f32 %v2692, %v2703
  %v2768 = vmul.f32 %v2695, %v2703
  %v2769 = vld [vmem:[%s11] sm:$0x1]
  %v2771 = vlaneseq
  %v2772 = vshrl.u32 %v2771, 7
  %v2773 = vsub.s32 0, %v2772
  %v2774 = vrot.slane %v2769, %v2773
  %v2776 = vadd.f32 %v2705, %v2774
  %v2777 = vadd.f32 %v2706, %v2774
  %v2778 = vadd.f32 %v2707, %v2774
  %v2779 = vadd.f32 %v2708, %v2774
  %v2780 = vadd.f32 %v2709, %v2774
  %v2781 = vadd.f32 %v2710, %v2774
  %v2782 = vadd.f32 %v2711, %v2774
  %v2783 = vadd.f32 %v2712, %v2774
  %v2784 = vadd.f32 %v2713, %v2774
  %v2785 = vadd.f32 %v2714, %v2774
  %v2786 = vadd.f32 %v2715, %v2774
  %v2787 = vadd.f32 %v2716, %v2774
  %v2788 = vadd.f32 %v2717, %v2774
  %v2789 = vadd.f32 %v2718, %v2774
  %v2790 = vadd.f32 %v2719, %v2774
  %v2791 = vadd.f32 %v2720, %v2774
  %v2792 = vadd.f32 %v2721, %v2774
  %v2793 = vadd.f32 %v2722, %v2774
  %v2794 = vadd.f32 %v2723, %v2774
  %v2795 = vadd.f32 %v2724, %v2774
  %v2796 = vadd.f32 %v2725, %v2774
  %v2797 = vadd.f32 %v2726, %v2774
  %v2798 = vadd.f32 %v2727, %v2774
  %v2799 = vadd.f32 %v2728, %v2774
  %v2800 = vadd.f32 %v2729, %v2774
  %v2801 = vadd.f32 %v2730, %v2774
  %v2802 = vadd.f32 %v2731, %v2774
  %v2803 = vadd.f32 %v2732, %v2774
  %v2804 = vadd.f32 %v2733, %v2774
  %v2805 = vadd.f32 %v2734, %v2774
  %v2806 = vadd.f32 %v2735, %v2774
  %v2807 = vadd.f32 %v2736, %v2774
  %v2808 = vadd.f32 %v2737, %v2774
  %v2809 = vadd.f32 %v2738, %v2774
  %v2810 = vadd.f32 %v2739, %v2774
  %v2811 = vadd.f32 %v2740, %v2774
  %v2812 = vadd.f32 %v2741, %v2774
  %v2813 = vadd.f32 %v2742, %v2774
  %v2814 = vadd.f32 %v2743, %v2774
  %v2815 = vadd.f32 %v2744, %v2774
  %v2816 = vadd.f32 %v2745, %v2774
  %v2817 = vadd.f32 %v2746, %v2774
  %v2818 = vadd.f32 %v2747, %v2774
  %v2819 = vadd.f32 %v2748, %v2774
  %v2820 = vadd.f32 %v2749, %v2774
  %v2821 = vadd.f32 %v2750, %v2774
  %v2822 = vadd.f32 %v2751, %v2774
  %v2823 = vadd.f32 %v2752, %v2774
  %v2824 = vadd.f32 %v2753, %v2774
  %v2825 = vadd.f32 %v2754, %v2774
  %v2826 = vadd.f32 %v2755, %v2774
  %v2827 = vadd.f32 %v2756, %v2774
  %v2828 = vadd.f32 %v2757, %v2774
  %v2829 = vadd.f32 %v2758, %v2774
  %v2830 = vadd.f32 %v2759, %v2774
  %v2831 = vadd.f32 %v2760, %v2774
  %v2832 = vadd.f32 %v2761, %v2774
  %v2833 = vadd.f32 %v2762, %v2774
  %v2834 = vadd.f32 %v2763, %v2774
  %v2835 = vadd.f32 %v2764, %v2774
  %v2836 = vadd.f32 %v2765, %v2774
  %v2837 = vadd.f32 %v2766, %v2774
  %v2838 = vadd.f32 %v2767, %v2774
  %v2839 = vadd.f32 %v2768, %v2774
  %v2840 = vadd.f32 %v2776, 3.0
  %v2841 = vadd.f32 %v2777, 3.0
  %v2842 = vadd.f32 %v2778, 3.0
  %v2843 = vadd.f32 %v2779, 3.0
  %v2844 = vadd.f32 %v2780, 3.0
  %v2845 = vadd.f32 %v2781, 3.0
  %v2846 = vadd.f32 %v2782, 3.0
  %v2847 = vadd.f32 %v2783, 3.0
  %v2848 = vadd.f32 %v2784, 3.0
  %v2849 = vadd.f32 %v2785, 3.0
  %v2850 = vadd.f32 %v2786, 3.0
  %v2851 = vadd.f32 %v2787, 3.0
  %v2852 = vadd.f32 %v2788, 3.0
  %v2853 = vadd.f32 %v2789, 3.0
  %v2854 = vadd.f32 %v2790, 3.0
  %v2855 = vadd.f32 %v2791, 3.0
  %v2856 = vadd.f32 %v2792, 3.0
  %v2857 = vadd.f32 %v2793, 3.0
  %v2858 = vadd.f32 %v2794, 3.0
  %v2859 = vadd.f32 %v2795, 3.0
  %v2860 = vadd.f32 %v2796, 3.0
  %v2861 = vadd.f32 %v2797, 3.0
  %v2862 = vadd.f32 %v2798, 3.0
  %v2863 = vadd.f32 %v2799, 3.0
  %v2864 = vadd.f32 %v2800, 3.0
  %v2865 = vadd.f32 %v2801, 3.0
  %v2866 = vadd.f32 %v2802, 3.0
  %v2867 = vadd.f32 %v2803, 3.0
  %v2868 = vadd.f32 %v2804, 3.0
  %v2869 = vadd.f32 %v2805, 3.0
  %v2870 = vadd.f32 %v2806, 3.0
  %v2871 = vadd.f32 %v2807, 3.0
  %v2872 = vadd.f32 %v2808, 3.0
  %v2873 = vadd.f32 %v2809, 3.0
  %v2874 = vadd.f32 %v2810, 3.0
  %v2875 = vadd.f32 %v2811, 3.0
  %v2876 = vadd.f32 %v2812, 3.0
  %v2877 = vadd.f32 %v2813, 3.0
  %v2878 = vadd.f32 %v2814, 3.0
  %v2879 = vadd.f32 %v2815, 3.0
  %v2880 = vadd.f32 %v2816, 3.0
  %v2881 = vadd.f32 %v2817, 3.0
  %v2882 = vadd.f32 %v2818, 3.0
  %v2883 = vadd.f32 %v2819, 3.0
  %v2884 = vadd.f32 %v2820, 3.0
  %v2885 = vadd.f32 %v2821, 3.0
  %v2886 = vadd.f32 %v2822, 3.0
  %v2887 = vadd.f32 %v2823, 3.0
  %v2888 = vadd.f32 %v2824, 3.0
  %v2889 = vadd.f32 %v2825, 3.0
  %v2890 = vadd.f32 %v2826, 3.0
  %v2891 = vadd.f32 %v2827, 3.0
  %v2892 = vadd.f32 %v2828, 3.0
  %v2893 = vadd.f32 %v2829, 3.0
  %v2894 = vadd.f32 %v2830, 3.0
  %v2895 = vadd.f32 %v2831, 3.0
  %v2896 = vadd.f32 %v2832, 3.0
  %v2897 = vadd.f32 %v2833, 3.0
  %v2898 = vadd.f32 %v2834, 3.0
  %v2899 = vadd.f32 %v2835, 3.0
  %v2900 = vadd.f32 %v2836, 3.0
  %v2901 = vadd.f32 %v2837, 3.0
  %v2902 = vadd.f32 %v2838, 3.0
  %v2903 = vadd.f32 %v2839, 3.0
  %v2904 = vmax.f32 %v2840, 0.0
  %v2905 = vmax.f32 %v2841, 0.0
  %v2906 = vmax.f32 %v2842, 0.0
  %v2907 = vmax.f32 %v2843, 0.0
  %v2908 = vmax.f32 %v2844, 0.0
  %v2909 = vmax.f32 %v2845, 0.0
  %v2910 = vmax.f32 %v2846, 0.0
  %v2911 = vmax.f32 %v2847, 0.0
  %v2912 = vmax.f32 %v2848, 0.0
  %v2913 = vmax.f32 %v2849, 0.0
  %v2914 = vmax.f32 %v2850, 0.0
  %v2915 = vmax.f32 %v2851, 0.0
  %v2916 = vmax.f32 %v2852, 0.0
  %v2917 = vmax.f32 %v2853, 0.0
  %v2918 = vmax.f32 %v2854, 0.0
  %v2919 = vmax.f32 %v2855, 0.0
  %v2920 = vmax.f32 %v2856, 0.0
  %v2921 = vmax.f32 %v2857, 0.0
  %v2922 = vmax.f32 %v2858, 0.0
  %v2923 = vmax.f32 %v2859, 0.0
  %v2924 = vmax.f32 %v2860, 0.0
  %v2925 = vmax.f32 %v2861, 0.0
  %v2926 = vmax.f32 %v2862, 0.0
  %v2927 = vmax.f32 %v2863, 0.0
  %v2928 = vmax.f32 %v2864, 0.0
  %v2929 = vmax.f32 %v2865, 0.0
  %v2930 = vmax.f32 %v2866, 0.0
  %v2931 = vmax.f32 %v2867, 0.0
  %v2932 = vmax.f32 %v2868, 0.0
  %v2933 = vmax.f32 %v2869, 0.0
  %v2934 = vmax.f32 %v2870, 0.0
  %v2935 = vmax.f32 %v2871, 0.0
  %v2936 = vmax.f32 %v2872, 0.0
  %v2937 = vmax.f32 %v2873, 0.0
  %v2938 = vmax.f32 %v2874, 0.0
  %v2939 = vmax.f32 %v2875, 0.0
  %v2940 = vmax.f32 %v2876, 0.0
  %v2941 = vmax.f32 %v2877, 0.0
  %v2942 = vmax.f32 %v2878, 0.0
  %v2943 = vmax.f32 %v2879, 0.0
  %v2944 = vmax.f32 %v2880, 0.0
  %v2945 = vmax.f32 %v2881, 0.0
  %v2946 = vmax.f32 %v2882, 0.0
  %v2947 = vmax.f32 %v2883, 0.0
  %v2948 = vmax.f32 %v2884, 0.0
  %v2949 = vmax.f32 %v2885, 0.0
  %v2950 = vmax.f32 %v2886, 0.0
  %v2951 = vmax.f32 %v2887, 0.0
  %v2952 = vmax.f32 %v2888, 0.0
  %v2953 = vmax.f32 %v2889, 0.0
  %v2954 = vmax.f32 %v2890, 0.0
  %v2955 = vmax.f32 %v2891, 0.0
  %v2956 = vmax.f32 %v2892, 0.0
  %v2957 = vmax.f32 %v2893, 0.0
  %v2958 = vmax.f32 %v2894, 0.0
  %v2959 = vmax.f32 %v2895, 0.0
  %v2960 = vmax.f32 %v2896, 0.0
  %v2961 = vmax.f32 %v2897, 0.0
  %v2962 = vmax.f32 %v2898, 0.0
  %v2963 = vmax.f32 %v2899, 0.0
  %v2964 = vmax.f32 %v2900, 0.0
  %v2965 = vmax.f32 %v2901, 0.0
  %v2966 = vmax.f32 %v2902, 0.0
  %v2967 = vmax.f32 %v2903, 0.0
  %v2968 = vmin.f32 %v2904, 6.0
  %v2969 = vmin.f32 %v2905, 6.0
  %v2970 = vmin.f32 %v2906, 6.0
  %v2971 = vmin.f32 %v2907, 6.0
  %v2972 = vmin.f32 %v2908, 6.0
  %v2973 = vmin.f32 %v2909, 6.0
  %v2974 = vmin.f32 %v2910, 6.0
  %v2975 = vmin.f32 %v2911, 6.0
  %v2976 = vmin.f32 %v2912, 6.0
  %v2977 = vmin.f32 %v2913, 6.0
  %v2978 = vmin.f32 %v2914, 6.0
  %v2979 = vmin.f32 %v2915, 6.0
  %v2980 = vmin.f32 %v2916, 6.0
  %v2981 = vmin.f32 %v2917, 6.0
  %v2982 = vmin.f32 %v2918, 6.0
  %v2983 = vmin.f32 %v2919, 6.0
  %v2984 = vmin.f32 %v2920, 6.0
  %v2985 = vmin.f32 %v2921, 6.0
  %v2986 = vmin.f32 %v2922, 6.0
  %v2987 = vmin.f32 %v2923, 6.0
  %v2988 = vmin.f32 %v2924, 6.0
  %v2989 = vmin.f32 %v2925, 6.0
  %v2990 = vmin.f32 %v2926, 6.0
  %v2991 = vmin.f32 %v2927, 6.0
  %v2992 = vmin.f32 %v2928, 6.0
  %v2993 = vmin.f32 %v2929, 6.0
  %v2994 = vmin.f32 %v2930, 6.0
  %v2995 = vmin.f32 %v2931, 6.0
  %v2996 = vmin.f32 %v2932, 6.0
  %v2997 = vmin.f32 %v2933, 6.0
  %v2998 = vmin.f32 %v2934, 6.0
  %v2999 = vmin.f32 %v2935, 6.0
  %v3000 = vmin.f32 %v2936, 6.0
  %v3001 = vmin.f32 %v2937, 6.0
  %v3002 = vmin.f32 %v2938, 6.0
  %v3003 = vmin.f32 %v2939, 6.0
  %v3004 = vmin.f32 %v2940, 6.0
  %v3005 = vmin.f32 %v2941, 6.0
  %v3006 = vmin.f32 %v2942, 6.0
  %v3007 = vmin.f32 %v2943, 6.0
  %v3008 = vmin.f32 %v2944, 6.0
  %v3009 = vmin.f32 %v2945, 6.0
  %v3010 = vmin.f32 %v2946, 6.0
  %v3011 = vmin.f32 %v2947, 6.0
  %v3012 = vmin.f32 %v2948, 6.0
  %v3013 = vmin.f32 %v2949, 6.0
  %v3014 = vmin.f32 %v2950, 6.0
  %v3015 = vmin.f32 %v2951, 6.0
  %v3016 = vmin.f32 %v2952, 6.0
  %v3017 = vmin.f32 %v2953, 6.0
  %v3018 = vmin.f32 %v2954, 6.0
  %v3019 = vmin.f32 %v2955, 6.0
  %v3020 = vmin.f32 %v2956, 6.0
  %v3021 = vmin.f32 %v2957, 6.0
  %v3022 = vmin.f32 %v2958, 6.0
  %v3023 = vmin.f32 %v2959, 6.0
  %v3024 = vmin.f32 %v2960, 6.0
  %v3025 = vmin.f32 %v2961, 6.0
  %v3026 = vmin.f32 %v2962, 6.0
  %v3027 = vmin.f32 %v2963, 6.0
  %v3028 = vmin.f32 %v2964, 6.0
  %v3029 = vmin.f32 %v2965, 6.0
  %v3030 = vmin.f32 %v2966, 6.0
  %v3031 = vmin.f32 %v2967, 6.0
  %v3032 = vmul.f32 %v2776, %v2968
  %v3033 = vmul.f32 %v2777, %v2969
  %v3034 = vmul.f32 %v2778, %v2970
  %v3035 = vmul.f32 %v2779, %v2971
  %v3036 = vmul.f32 %v2780, %v2972
  %v3037 = vmul.f32 %v2781, %v2973
  %v3038 = vmul.f32 %v2782, %v2974
  %v3039 = vmul.f32 %v2783, %v2975
  %v3040 = vmul.f32 %v2784, %v2976
  %v3041 = vmul.f32 %v2785, %v2977
  %v3042 = vmul.f32 %v2786, %v2978
  %v3043 = vmul.f32 %v2787, %v2979
  %v3044 = vmul.f32 %v2788, %v2980
  %v3045 = vmul.f32 %v2789, %v2981
  %v3046 = vmul.f32 %v2790, %v2982
  %v3047 = vmul.f32 %v2791, %v2983
  %v3048 = vmul.f32 %v2792, %v2984
  %v3049 = vmul.f32 %v2793, %v2985
  %v3050 = vmul.f32 %v2794, %v2986
  %v3051 = vmul.f32 %v2795, %v2987
  %v3052 = vmul.f32 %v2796, %v2988
  %v3053 = vmul.f32 %v2797, %v2989
  %v3054 = vmul.f32 %v2798, %v2990
  %v3055 = vmul.f32 %v2799, %v2991
  %v3056 = vmul.f32 %v2800, %v2992
  %v3057 = vmul.f32 %v2801, %v2993
  %v3058 = vmul.f32 %v2802, %v2994
  %v3059 = vmul.f32 %v2803, %v2995
  %v3060 = vmul.f32 %v2804, %v2996
  %v3061 = vmul.f32 %v2805, %v2997
  %v3062 = vmul.f32 %v2806, %v2998
  %v3063 = vmul.f32 %v2807, %v2999
  %v3064 = vmul.f32 %v2808, %v3000
  %v3065 = vmul.f32 %v2809, %v3001
  %v3066 = vmul.f32 %v2810, %v3002
  %v3067 = vmul.f32 %v2811, %v3003
  %v3068 = vmul.f32 %v2812, %v3004
  %v3069 = vmul.f32 %v2813, %v3005
  %v3070 = vmul.f32 %v2814, %v3006
  %v3071 = vmul.f32 %v2815, %v3007
  %v3072 = vmul.f32 %v2816, %v3008
  %v3073 = vmul.f32 %v2817, %v3009
  %v3074 = vmul.f32 %v2818, %v3010
  %v3075 = vmul.f32 %v2819, %v3011
  %v3076 = vmul.f32 %v2820, %v3012
  %v3077 = vmul.f32 %v2821, %v3013
  %v3078 = vmul.f32 %v2822, %v3014
  %v3079 = vmul.f32 %v2823, %v3015
  %v3080 = vmul.f32 %v2824, %v3016
  %v3081 = vmul.f32 %v2825, %v3017
  %v3082 = vmul.f32 %v2826, %v3018
  %v3083 = vmul.f32 %v2827, %v3019
  %v3084 = vmul.f32 %v2828, %v3020
  %v3085 = vmul.f32 %v2829, %v3021
  %v3086 = vmul.f32 %v2830, %v3022
  %v3087 = vmul.f32 %v2831, %v3023
  %v3088 = vmul.f32 %v2832, %v3024
  %v3089 = vmul.f32 %v2833, %v3025
  %v3090 = vmul.f32 %v2834, %v3026
  %v3091 = vmul.f32 %v2835, %v3027
  %v3092 = vmul.f32 %v2836, %v3028
  %v3093 = vmul.f32 %v2837, %v3029
  %v3094 = vmul.f32 %v2838, %v3030
  %v3095 = vmul.f32 %v2839, %v3031
  %v3096 = vmul.f32 %v3032, 0.16666667
  %v3097 = vmul.f32 %v3033, 0.16666667
  %v3098 = vmul.f32 %v3034, 0.16666667
  %v3099 = vmul.f32 %v3035, 0.16666667
  %v3100 = vmul.f32 %v3036, 0.16666667
  %v3101 = vmul.f32 %v3037, 0.16666667
  %v3102 = vmul.f32 %v3038, 0.16666667
  %v3103 = vmul.f32 %v3039, 0.16666667
  %v3104 = vmul.f32 %v3040, 0.16666667
  %v3105 = vmul.f32 %v3041, 0.16666667
  %v3106 = vmul.f32 %v3042, 0.16666667
  %v3107 = vmul.f32 %v3043, 0.16666667
  %v3108 = vmul.f32 %v3044, 0.16666667
  %v3109 = vmul.f32 %v3045, 0.16666667
  %v3110 = vmul.f32 %v3046, 0.16666667
  %v3111 = vmul.f32 %v3047, 0.16666667
  %v3112 = vmul.f32 %v3048, 0.16666667
  %v3113 = vmul.f32 %v3049, 0.16666667
  %v3114 = vmul.f32 %v3050, 0.16666667
  %v3115 = vmul.f32 %v3051, 0.16666667
  %v3116 = vmul.f32 %v3052, 0.16666667
  %v3117 = vmul.f32 %v3053, 0.16666667
  %v3118 = vmul.f32 %v3054, 0.16666667
  %v3119 = vmul.f32 %v3055, 0.16666667
  %v3120 = vmul.f32 %v3056, 0.16666667
  %v3121 = vmul.f32 %v3057, 0.16666667
  %v3122 = vmul.f32 %v3058, 0.16666667
  %v3123 = vmul.f32 %v3059, 0.16666667
  %v3124 = vmul.f32 %v3060, 0.16666667
  %v3125 = vmul.f32 %v3061, 0.16666667
  %v3126 = vmul.f32 %v3062, 0.16666667
  %v3127 = vmul.f32 %v3063, 0.16666667
  %v3128 = vmul.f32 %v3064, 0.16666667
  %v3129 = vmul.f32 %v3065, 0.16666667
  %v3130 = vmul.f32 %v3066, 0.16666667
  %v3131 = vmul.f32 %v3067, 0.16666667
  %v3132 = vmul.f32 %v3068, 0.16666667
  %v3133 = vmul.f32 %v3069, 0.16666667
  %v3134 = vmul.f32 %v3070, 0.16666667
  %v3135 = vmul.f32 %v3071, 0.16666667
  %v3136 = vmul.f32 %v3072, 0.16666667
  %v3137 = vmul.f32 %v3073, 0.16666667
  %v3138 = vmul.f32 %v3074, 0.16666667
  %v3139 = vmul.f32 %v3075, 0.16666667
  %v3140 = vmul.f32 %v3076, 0.16666667
  %v3141 = vmul.f32 %v3077, 0.16666667
  %v3142 = vmul.f32 %v3078, 0.16666667
  %v3143 = vmul.f32 %v3079, 0.16666667
  %v3144 = vmul.f32 %v3080, 0.16666667
  %v3145 = vmul.f32 %v3081, 0.16666667
  %v3146 = vmul.f32 %v3082, 0.16666667
  %v3147 = vmul.f32 %v3083, 0.16666667
  %v3148 = vmul.f32 %v3084, 0.16666667
  %v3149 = vmul.f32 %v3085, 0.16666667
  %v3150 = vmul.f32 %v3086, 0.16666667
  %v3151 = vmul.f32 %v3087, 0.16666667
  %v3152 = vmul.f32 %v3088, 0.16666667
  %v3153 = vmul.f32 %v3089, 0.16666667
  %v3154 = vmul.f32 %v3090, 0.16666667
  %v3155 = vmul.f32 %v3091, 0.16666667
  %v3156 = vmul.f32 %v3092, 0.16666667
  %v3157 = vmul.f32 %v3093, 0.16666667
  %v3158 = vmul.f32 %v3094, 0.16666667
  %v3159 = vmul.f32 %v3095, 0.16666667
  %3160 = vst [vmem:[%s12] sm:$0xff] %v3096
  %3161 = vst [vmem:[%s12 + $0x8] sm:$0xff] %v3097
  %3162 = vst [vmem:[%s12 + $0x10] sm:$0xff] %v3098
  %3163 = vst [vmem:[%s12 + $0x18] sm:$0xff] %v3099
  %3164 = vst [vmem:[%s12 + $0x20] sm:$0xff] %v3100
  %3165 = vst [vmem:[%s12 + $0x28] sm:$0xff] %v3101
  %3166 = vst [vmem:[%s12 + $0x30] sm:$0xff] %v3102
  %3167 = vst [vmem:[%s12 + $0x38] sm:$0xff] %v3103
  %3168 = vst [vmem:[%s12 + $0x40] sm:$0xff] %v3104
  %3169 = vst [vmem:[%s12 + $0x48] sm:$0xff] %v3105
  %3170 = vst [vmem:[%s12 + $0x50] sm:$0xff] %v3106
  %3171 = vst [vmem:[%s12 + $0x58] sm:$0xff] %v3107
  %3172 = vst [vmem:[%s12 + $0x60] sm:$0xff] %v3108
  %3173 = vst [vmem:[%s12 + $0x68] sm:$0xff] %v3109
  %3174 = vst [vmem:[%s12 + $0x70] sm:$0xff] %v3110
  %3175 = vst [vmem:[%s12 + $0x78] sm:$0xff] %v3111
  %3176 = vst [vmem:[%s12 + $0x80] sm:$0xff] %v3112
  %3177 = vst [vmem:[%s12 + $0x88] sm:$0xff] %v3113
  %3178 = vst [vmem:[%s12 + $0x90] sm:$0xff] %v3114
  %3179 = vst [vmem:[%s12 + $0x98] sm:$0xff] %v3115
  %3180 = vst [vmem:[%s12 + $0xa0] sm:$0xff] %v3116
  %3181 = vst [vmem:[%s12 + $0xa8] sm:$0xff] %v3117
  %3182 = vst [vmem:[%s12 + $0xb0] sm:$0xff] %v3118
  %3183 = vst [vmem:[%s12 + $0xb8] sm:$0xff] %v3119
  %3184 = vst [vmem:[%s12 + $0xc0] sm:$0xff] %v3120
  %3185 = vst [vmem:[%s12 + $0xc8] sm:$0xff] %v3121
  %3186 = vst [vmem:[%s12 + $0xd0] sm:$0xff] %v3122
  %3187 = vst [vmem:[%s12 + $0xd8] sm:$0xff] %v3123
  %3188 = vst [vmem:[%s12 + $0xe0] sm:$0xff] %v3124
  %3189 = vst [vmem:[%s12 + $0xe8] sm:$0xff] %v3125
  %3190 = vst [vmem:[%s12 + $0xf0] sm:$0xff] %v3126
  %3191 = vst [vmem:[%s12 + $0xf8] sm:$0xff] %v3127
  %3192 = vst [vmem:[%s12 + $0x100] sm:$0xff] %v3128
  %3193 = vst [vmem:[%s12 + $0x108] sm:$0xff] %v3129
  %3194 = vst [vmem:[%s12 + $0x110] sm:$0xff] %v3130
  %3195 = vst [vmem:[%s12 + $0x118] sm:$0xff] %v3131
  %3196 = vst [vmem:[%s12 + $0x120] sm:$0xff] %v3132
  %3197 = vst [vmem:[%s12 + $0x128] sm:$0xff] %v3133
  %3198 = vst [vmem:[%s12 + $0x130] sm:$0xff] %v3134
  %3199 = vst [vmem:[%s12 + $0x138] sm:$0xff] %v3135
  %3200 = vst [vmem:[%s12 + $0x140] sm:$0xff] %v3136
  %3201 = vst [vmem:[%s12 + $0x148] sm:$0xff] %v3137
  %3202 = vst [vmem:[%s12 + $0x150] sm:$0xff] %v3138
  %3203 = vst [vmem:[%s12 + $0x158] sm:$0xff] %v3139
  %3204 = vst [vmem:[%s12 + $0x160] sm:$0xff] %v3140
  %3205 = vst [vmem:[%s12 + $0x168] sm:$0xff] %v3141
  %3206 = vst [vmem:[%s12 + $0x170] sm:$0xff] %v3142
  %3207 = vst [vmem:[%s12 + $0x178] sm:$0xff] %v3143
  %3208 = vst [vmem:[%s12 + $0x180] sm:$0xff] %v3144
  %3209 = vst [vmem:[%s12 + $0x188] sm:$0xff] %v3145
  %3210 = vst [vmem:[%s12 + $0x190] sm:$0xff] %v3146
  %3211 = vst [vmem:[%s12 + $0x198] sm:$0xff] %v3147
  %3212 = vst [vmem:[%s12 + $0x1a0] sm:$0xff] %v3148
  %3213 = vst [vmem:[%s12 + $0x1a8] sm:$0xff] %v3149
  %3214 = vst [vmem:[%s12 + $0x1b0] sm:$0xff] %v3150
  %3215 = vst [vmem:[%s12 + $0x1b8] sm:$0xff] %v3151
  %3216 = vst [vmem:[%s12 + $0x1c0] sm:$0xff] %v3152
  %3217 = vst [vmem:[%s12 + $0x1c8] sm:$0xff] %v3153
  %3218 = vst [vmem:[%s12 + $0x1d0] sm:$0xff] %v3154
  %3219 = vst [vmem:[%s12 + $0x1d8] sm:$0xff] %v3155
  %3220 = vst [vmem:[%s12 + $0x1e0] sm:$0xff] %v3156
  %3221 = vst [vmem:[%s12 + $0x1e8] sm:$0xff] %v3157
  %3222 = vst [vmem:[%s12 + $0x1f0] sm:$0xff] %v3158
  %3223 = vst [vmem:[%s12 + $0x1f8] sm:$0xff] %v3159
  // Predicated region
  $region50: #{_lambda_.7} parent=0 // pred_check
    _
  $region51: #{_lambda_.7} parent=0 // pred_check_branch
    %3225 = sbr.rel (0) target = $region53
  $region52: #{_lambda_.7} parent=0 // pred_region
    _
  $region53: #{_lambda_.7} parent=0 // pred_fallthru
    _
  // Predicated region
  $region54: #{_lambda_.7} parent=0 // pred_check
    _
  $region55: #{_lambda_.7} parent=0 // pred_check_branch
    %3227 = sbr.rel (0) target = $region57
  $region56: #{_lambda_.7} parent=0 // pred_region
    _
  $region57: #{_lambda_.7} parent=0 // pred_fallthru
    _

</llo_original>
